<compile_context>
chip_gen: v7x
topology: tpu7x:2x2x1
jax: 0.10.0
libtpu: 0.0.40
codegen_flags: <defaults>
</compile_context>

<pallas_src>
import math
import functools

import jax
import jax.numpy as jnp
from jax import lax
from jax.experimental import pallas as pl
from jax.experimental.pallas import tpu as pltpu

_HALF_LOG_2PI = 0.5 * math.log(2.0 * math.pi)


def _softplus(x):
    # numerically stable softplus (beta=1), matches torch.nn.functional.softplus
    return jnp.maximum(x, 0.0) + jnp.log1p(jnp.exp(-jnp.abs(x)))


def _sigmoid(x):
    # logistic sigmoid via tanh: stable for all x, same math as torch.sigmoid
    return 0.5 * (jnp.tanh(0.5 * x) + 1.0)


def _round_up(x, m):
    return (x + m - 1) // m * m


def rglstm_kernel(prex_ref, epsh_ref, epsc_ref, h0_ref, c0_ref,
                  whh_ref, wg_ref, bgh_ref, bgc_ref,
                  hseq_ref, cseq_ref, hmu_ref, hstd_ref, cmu_ref, cstd_ref,
                  h_state, c_state, *, hidden, chunk, unroll, act_dtype):
    """One grid step = one (batch tile, chunk of `chunk` timesteps).

    prex_ref : (chunk, tb, 4H)  x_t @ W_ih^T + b_ih + b_hh  (hoisted, stream dtype)
    epsh/epsc: (chunk, tb, H)   N(0,1) reparameterization noise
    h0/c0    : (tb, H)          initial states (consumed at t == 0 only)
    whh_ref  : (H, 4H)          W_hh^T              (compute dtype, grid-invariant)
    wg_ref   : (H, 4H)          [W_gh^T | W_gc^T]   fused std|mu heads, grid-invariant
    bgh/bgc  : (1, 2H)          sampler biases (f32)
    h_state/c_state : (tb, H)   f32 scratch carrying the SAMPLED states across chunks
    """
    H = hidden
    f32 = jnp.float32
    tb = h_state.shape[0]
    t = pl.program_id(1)                 # sequential ("arbitrary") time-chunk axis

    @pl.when(t == 0)
    def _():
        h_state[...] = h0_ref[...]
        c_state[...] = c0_ref[...]

    cdt = whh_ref.dtype                  # MXU operand dtype (bf16 or f32)
    # Tiny sampler biases: hoist only these SMALL reads out of the unrolled loop.
    # The large weight reads stay inside step() (read from the VMEM refs per
    # matmul) so they are streamed instead of pinned in vregs across the chunk.
    bgh = bgh_ref[...]
    bgc = bgc_ref[...]

    def step(tc, carry):
        h_prev, c_prev = carry                                   # f32 (tb, H)
        gates = prex_ref[tc].astype(f32) + jnp.dot(
            h_prev.astype(cdt), whh_ref[...], preferred_element_type=f32)
        ga = gates.astype(act_dtype)     # bf16 gate nonlinearities on v6e/v7x only
        i = _sigmoid(ga[:, 0 * H:1 * H]).astype(f32)
        f = _sigmoid(ga[:, 1 * H:2 * H]).astype(f32)
        g = jnp.tanh(ga[:, 2 * H:3 * H]).astype(f32)
        o = _sigmoid(ga[:, 3 * H:4 * H]).astype(f32)
        c_cell = f * c_prev + i * g
        h_cell = o * jnp.tanh(c_cell)

        # Single fused Gaussian-head matmul on the serial critical path:
        # [h_cell; c_cell] (2tb, H) @ [W_gh^T | W_gc^T] (H, 4H); keep the two
        # diagonal (tb, 2H) blocks (off-diagonal FLOPs are free while
        # 2*tb <= MXU rows).
        hc = jnp.concatenate([h_cell, c_cell], axis=0).astype(cdt)
        stats = jnp.dot(hc, wg_ref[...], preferred_element_type=f32)
        h_stats = stats[:tb, 0:2 * H] + bgh
        c_stats = stats[tb:, 2 * H:4 * H] + bgc

        h_std = _softplus(h_stats[:, :H])     # softplus kept in f32 (std feeds log-prob)
        h_mu = h_stats[:, H:]
        c_std = _softplus(c_stats[:, :H])
        c_mu = c_stats[:, H:]
        h_s = h_mu + h_std * epsh_ref[tc].astype(f32)
        c_s = c_mu + c_std * epsc_ref[tc].astype(f32)

        hseq_ref[tc] = h_s
        cseq_ref[tc] = c_s
        hmu_ref[tc] = h_mu.astype(hmu_ref.dtype)
        hstd_ref[tc] = h_std.astype(hstd_ref.dtype)
        cmu_ref[tc] = c_mu.astype(cmu_ref.dtype)
        cstd_ref[tc] = c_std.astype(cstd_ref.dtype)
        return h_s, c_s

    h_last, c_last = lax.fori_loop(0, chunk, step,
                                   (h_state[...], c_state[...]), unroll=unroll)
    h_state[...] = h_last
    c_state[...] = c_last


def rglstm_forward(x, eps_h, eps_c, params, init_states=None, *,
                   chunk=None, batch_tiles=1,
                   param_dtype=jnp.bfloat16, stream_dtype=None,
                   aux_dtype=jnp.bfloat16, act_dtype=jnp.float32,
                   batch_first=True, vmem_budget_bytes=None,
                   single_buffer_weights=True):
    """x: (bs, seq, inp); eps_h/eps_c: (bs, seq, H) standard-normal noise.

    param_dtype  : matmul operand dtype (bf16 = MXU-native; f32 = strict mode)
    stream_dtype : dtype of streamed pre_x / eps blocks (default: param_dtype)
    aux_dtype    : dtype of the mu / std outputs (h_seq/c_seq stay f32)
    act_dtype    : dtype for the LSTM gate nonlinearities (f32 = v5e-safe;
                   bf16 relieves the EUP slot on v6e/v7x)
    batch_tiles  : 1 on v5e/v6e (serial grid); 2 on v7x (one tile per TensorCore)
    batch_first  : True -> PyTorch layout (bs, seq, H); False keeps the kernel's
                   time-major layout and skips six full-array transposes.

    Returns (h_seq, c_seq, h_probs, c_probs, ((h_mus, h_stds), (c_mus, c_stds)))
    with the same semantics as the PyTorch module.
    """
    bs, seq, _ = x.shape
    H = params["w_hh"].shape[1]
    assert params["w_hh"].shape == (4 * H, H)
    f32 = jnp.float32
    cdt = param_dtype
    sdt = param_dtype if stream_dtype is None else stream_dtype

    # ---- batch tiling: maximize the tile (fills MXU rows); the grid is a
    # serial loop on one TensorCore, so extra tiles only pay on v7x megacore.
    n_btiles = max(1, int(batch_tiles))
    bs_p = _round_up(bs, 8)
    tb = _round_up(-(-bs_p // n_btiles), 8)
    bs_p = tb * n_btiles

    # ---- VMEM-budgeted chunk of timesteps per grid step ---------------------
    if vmem_budget_bytes is None:
        # fits under v7x's 64 MiB physical VMEM with headroom; also raises the
        # 16/32 MiB scoped defaults on v5e/v6e (128 MiB physical there).
        vmem_budget_bytes = 48 * 1024 * 1024
    sb = jnp.dtype(sdt).itemsize
    ab = jnp.dtype(aux_dtype).itemsize
    pb = jnp.dtype(cdt).itemsize
    if chunk is None:
        wbuf = 1 if single_buffer_weights else 2
        fixed = wbuf * (8 * H * H * pb + 4 * H * 4)             # W_hh^T + fused W_g^T + biases
        fixed += (2 * 2 + 2) * tb * H * 4                       # h0/c0 blocks + state scratch
        per_t = 2 * tb * (6 * H * sb + 2 * H * 4 + 4 * H * ab)  # double-buffered blocks/step
        chunk = max(1, min(seq, (int(0.8 * vmem_budget_bytes) - fixed) // per_t))
        while seq % chunk:                                      # keep the grid exact
            chunk -= 1
    assert seq % chunk == 0
    n_chunks = seq // chunk
    unroll = min(chunk, 8)       # integer unroll: overlap step t stores / eps loads
                                 # with step t+1's MXU push (LLO visibility)

    # ---- hoist the input projection out of the sequential recurrence --------
    # (pad x BEFORE the 4H-wide projection: 4x cheaper than padding pre_x)
    def pad_tm(a, dt):           # (bs, seq, d) -> (seq, bs_p, d) in dtype dt
        a = jnp.pad(a, ((0, bs_p - bs), (0, 0), (0, 0)))
        return jnp.transpose(a, (1, 0, 2)).astype(dt)

    wih_T = params["w_ih"].T.astype(cdt)                            # (inp, 4H)
    b_rnn = (params["b_ih"] + params["b_hh"]).astype(f32)           # (4H,)
    pre_x = (jnp.dot(pad_tm(x, cdt), wih_T, preferred_element_type=f32)
             + b_rnn).astype(sdt)                                   # (seq, bs_p, 4H)
    eps_h_tm = pad_tm(eps_h, sdt)
    eps_c_tm = pad_tm(eps_c, sdt)

    whh_T = params["w_hh"].T.astype(cdt)                            # (H, 4H)
    wg_T = jnp.concatenate([params["w_gh"].T, params["w_gc"].T],
                           axis=1).astype(cdt)                      # (H, 4H) fused heads
    bgh = params["b_gh"].reshape(1, 2 * H).astype(f32)
    bgc = params["b_gc"].reshape(1, 2 * H).astype(f32)

    if init_states is None:
        h0 = jnp.zeros((bs_p, H), f32)
        c0 = jnp.zeros((bs_p, H), f32)
    else:
        h0 = jnp.pad(init_states[0].astype(f32), ((0, bs_p - bs), (0, 0)))
        c0 = jnp.pad(init_states[1].astype(f32), ((0, bs_p - bs), (0, 0)))

    out_shapes = (
        jax.ShapeDtypeStruct((seq, bs_p, H), f32),        # sampled h_seq
        jax.ShapeDtypeStruct((seq, bs_p, H), f32),        # sampled c_seq
        jax.ShapeDtypeStruct((seq, bs_p, H), aux_dtype),  # h_mus
        jax.ShapeDtypeStruct((seq, bs_p, H), aux_dtype),  # h_stds
        jax.ShapeDtypeStruct((seq, bs_p, H), aux_dtype),  # c_mus
        jax.ShapeDtypeStruct((seq, bs_p, H), aux_dtype),  # c_stds
    )

    seq_blk = lambda b, t: (t, b, 0)
    const2d = lambda b, t: (0, 0)
    state_blk = lambda b, t: (b, 0)

    kernel = functools.partial(rglstm_kernel, hidden=H, chunk=chunk,
                               unroll=unroll, act_dtype=act_dtype)

    def run(weight_buffers):
        # Grid-invariant weights/biases: single-buffer them to halve their VMEM
        # footprint and drop the redundant prefetch (matters most on v7x / 64 MiB).
        if weight_buffers == 1:
            wspec = lambda shape: pl.BlockSpec(shape, const2d,
                                               pipeline_mode=pl.Buffered(1))
        else:
            wspec = lambda shape: pl.BlockSpec(shape, const2d)
        grid_spec = pltpu.PrefetchScalarGridSpec(
            num_scalar_prefetch=0,
            grid=(n_btiles, n_chunks),            # (parallel batch, sequential time)
            in_specs=[
                pl.BlockSpec((chunk, tb, 4 * H), seq_blk),   # pre_x
                pl.BlockSpec((chunk, tb, H), seq_blk),       # eps_h
                pl.BlockSpec((chunk, tb, H), seq_blk),       # eps_c
                pl.BlockSpec((tb, H), state_blk),            # h0
                pl.BlockSpec((tb, H), state_blk),            # c0
                wspec((H, 4 * H)),                           # W_hh^T
                wspec((H, 4 * H)),                           # [W_gh^T | W_gc^T]
                wspec((1, 2 * H)),                           # b_gh
                wspec((1, 2 * H)),                           # b_gc
            ],
            out_specs=[pl.BlockSpec((chunk, tb, H), seq_blk)] * 6,
            scratch_shapes=[pltpu.VMEM((tb, H), f32),        # carried sampled h
                            pltpu.VMEM((tb, H), f32)],       # carried sampled c
        )
        return pl.pallas_call(
            kernel, out_shape=out_shapes, grid_spec=grid_spec,
            compiler_params=pltpu.CompilerParams(
                dimension_semantics=("parallel", "arbitrary"),
                vmem_limit_bytes=int(vmem_budget_bytes)),
        )(pre_x, eps_h_tm, eps_c_tm, h0, c0, whh_T, wg_T, bgh, bgc)

    try:
        outs = run(1 if single_buffer_weights else 2)
    except Exception:
        # pl.Buffered(1) not supported by this jax version -> default buffering.
        if not single_buffer_weights:
            raise
        outs = run(2)

    h_seq_tm, c_seq_tm, h_mus_tm, h_stds_tm, c_mus_tm, c_stds_tm = outs

    # Log-probs via cheap reductions (no kernel-side XLU reduce / width-1 output
    # and no full-array transposes on this path). For s = mu + std*eps:
    #   Normal(mu, std).log_prob(s) = -0.5*eps^2 - log(std) - 0.5*log(2*pi)
    eps_sq_h = jnp.sum(jnp.square(eps_h.astype(f32)), axis=-1)            # (bs, seq)
    eps_sq_c = jnp.sum(jnp.square(eps_c.astype(f32)), axis=-1)
    logstd_h = jnp.sum(jnp.log(h_stds_tm[:, :bs].astype(f32)), axis=-1)   # (seq, bs)
    logstd_c = jnp.sum(jnp.log(c_stds_tm[:, :bs].astype(f32)), axis=-1)
    h_probs = -0.5 * eps_sq_h - logstd_h.T - H * _HALF_LOG_2PI            # (bs, seq)
    c_probs = -0.5 * eps_sq_c - logstd_c.T - H * _HALF_LOG_2PI

    if batch_first:
        # PyTorch layout. Each transpose is a full HBM pass over the output
        # volume; pass batch_first=False to keep the kernel's time-major layout.
        cvt = lambda o: jnp.transpose(o, (1, 0, 2))[:bs]
    else:
        cvt = lambda o: o[:, :bs]
        h_probs, c_probs = h_probs.T, c_probs.T                           # (seq, bs)

    h_seq, c_seq = cvt(h_seq_tm), cvt(c_seq_tm)
    h_mus, h_stds = cvt(h_mus_tm), cvt(h_stds_tm)
    c_mus, c_stds = cvt(c_mus_tm), cvt(c_stds_tm)

    return h_seq, c_seq, h_probs, c_probs, ((h_mus, h_stds), (c_mus, c_stds))


def rglstm_reference(x, eps_h, eps_c, params, mm_dtype=jnp.float32):
    """Pure-JAX reference of the same forward (matmul operands in mm_dtype)."""
    bs, seq, _ = x.shape
    H = params["w_hh"].shape[1]
    f32 = jnp.float32

    def mm(a, w_T):
        return jnp.dot(a.astype(mm_dtype), w_T.astype(mm_dtype),
                       preferred_element_type=f32)

    def sampler(state, w, b, eps):
        stats = mm(state, w.T) + b
        std = _softplus(stats[:, :H])
        mu = stats[:, H:]
        s = mu + std * eps
        lp = jnp.sum(-0.5 * eps * eps - jnp.log(std) - _HALF_LOG_2PI, axis=-1)
        return mu, std, s, lp

    b_rnn = params["b_ih"] + params["b_hh"]
    h = jnp.zeros((bs, H), f32)
    c = jnp.zeros((bs, H), f32)
    hs, cs, hps, cps, hms, hss, cms, css = ([] for _ in range(8))
    for t in range(seq):
        gates = mm(x[:, t, :], params["w_ih"].T) + b_rnn + mm(h, params["w_hh"].T)
        i = _sigmoid(gates[:, :H])
        f = _sigmoid(gates[:, H:2 * H])
        g = jnp.tanh(gates[:, 2 * H:3 * H])
        o = _sigmoid(gates[:, 3 * H:])
        c_cell = f * c + i * g
        h_cell = o * jnp.tanh(c_cell)
        h_mu, h_std, h, h_lp = sampler(h_cell, params["w_gh"], params["b_gh"],
                                       eps_h[:, t, :])
        c_mu, c_std, c, c_lp = sampler(c_cell, params["w_gc"], params["b_gc"],
                                       eps_c[:, t, :])
        hs.append(h); cs.append(c); hps.append(h_lp); cps.append(c_lp)
        hms.append(h_mu); hss.append(h_std); cms.append(c_mu); css.append(c_std)

    st = lambda xs: jnp.stack(xs, axis=1)
    return (st(hs), st(cs), st(hps), st(cps),
            ((st(hms), st(hss)), (st(cms), st(css))))


def xavier_uniform(key, shape):
    fan_out, fan_in = shape
    bound = math.sqrt(6.0 / (fan_in + fan_out))
    return jax.random.uniform(key, shape, jnp.float32, -bound, bound)


def init_params(key, input_sz, hidden_sz):
    ks = jax.random.split(key, 8)
    H = hidden_sz
    return {
        # torch.nn.LSTM parameters, gate order (i, f, g, o)
        "w_ih": xavier_uniform(ks[0], (4 * H, input_sz)),
        "w_hh": xavier_uniform(ks[1], (4 * H, H)),
        # module zero-inits biases; use small non-zero values to exercise the path
        "b_ih": 0.1 * jax.random.normal(ks[2], (4 * H,), jnp.float32),
        "b_hh": 0.1 * jax.random.normal(ks[3], (4 * H,), jnp.float32),
        # GaussianSampler linears: hidden -> 2*hidden (first half std, second mu)
        "w_gh": xavier_uniform(ks[4], (2 * H, H)),
        "b_gh": 0.1 * jax.random.normal(ks[5], (2 * H,), jnp.float32),
        "w_gc": xavier_uniform(ks[6], (2 * H, H)),
        "b_gc": 0.1 * jax.random.normal(ks[7], (2 * H,), jnp.float32),
    }


def _compare(out, ref, tol_val, tol_prob):
    (h_seq, c_seq, h_p, c_p, ((h_m, h_s), (c_m, c_s))) = out
    (rh_seq, rc_seq, rh_p, rc_p, ((rh_m, rh_s), (rc_m, rc_s))) = ref
    for a, b in ((h_seq, rh_seq), (c_seq, rc_seq), (h_m, rh_m), (h_s, rh_s),
                 (c_m, rc_m), (c_s, rc_s)):
        assert a.shape == b.shape, (a.shape, b.shape)
        assert jnp.allclose(a, b, atol=tol_val, rtol=tol_val), \
            float(jnp.max(jnp.abs(a.astype(jnp.float32) - b)))
    for a, b in ((h_p, rh_p), (c_p, rc_p)):
        assert a.shape == b.shape, (a.shape, b.shape)
        assert jnp.allclose(a, b, atol=tol_prob, rtol=tol_val), \
            float(jnp.max(jnp.abs(a - b)))


if __name__ == "__main__":
    key = jax.random.PRNGKey(0)
    k_param, k_x, k_eh, k_ec = jax.random.split(key, 4)

    batch, seq, input_sz, hidden_sz = 2, 8, 4, 32
    params = init_params(k_param, input_sz, hidden_sz)
    x = jax.random.normal(k_x, (batch, seq, input_sz), jnp.float32)
    # Explicit reparameterization noise for Normal.rsample (deterministic here).
    eps_h = jax.random.normal(k_eh, (batch, seq, hidden_sz), jnp.float32)
    eps_c = jax.random.normal(k_ec, (batch, seq, hidden_sz), jnp.float32)

    # 1) Strict semantic check: f32 everywhere vs pure-JAX f32 reference.
    out_f32 = jax.block_until_ready(
        rglstm_forward(x, eps_h, eps_c, params,
                       param_dtype=jnp.float32, aux_dtype=jnp.float32))
    ref_f32 = rglstm_reference(x, eps_h, eps_c, params, mm_dtype=jnp.float32)
    _compare(out_f32, ref_f32, tol_val=2e-3, tol_prob=1e-2)

    # 2) Fast path: bf16 weights, bf16-streamed pre_x/eps, bf16 mu/std outputs
    #    (f32 carried state & sampled sequences), validated at loose tolerance.
    out_bf16 = jax.block_until_ready(
        rglstm_forward(x, eps_h, eps_c, params))
    ref_bf16 = rglstm_reference(x, eps_h, eps_c, params, mm_dtype=jnp.bfloat16)
    _compare(out_bf16, ref_bf16, tol_val=1e-1, tol_prob=1.0)

    h_seq, c_seq, h_probs, c_probs, ((h_mus, h_stds), (c_mus, c_stds)) = out_f32
    assert h_seq.shape == (batch, seq, hidden_sz)
    assert c_seq.shape == (batch, seq, hidden_sz)
    assert h_probs.shape == (batch, seq)
    assert c_probs.shape == (batch, seq)
    assert h_mus.shape == (batch, seq, hidden_sz)
    assert c_stds.shape == (batch, seq, hidden_sz)

    print("KERNEL_OK")
</pallas_src>

<mosaic_0001>
module attributes {stable_mosaic.version = 11 : i64} {
  func.func @rglstm_kernel(%arg0: i32, %arg1: i32, %arg2: memref<8x8x128xf32, #tpu.memory_space<vmem>>, %arg3: memref<8x8x32xf32, #tpu.memory_space<vmem>>, %arg4: memref<8x8x32xf32, #tpu.memory_space<vmem>>, %arg5: memref<8x32xf32, #tpu.memory_space<vmem>>, %arg6: memref<8x32xf32, #tpu.memory_space<vmem>>, %arg7: memref<32x128xf32, #tpu.memory_space<vmem>>, %arg8: memref<32x128xf32, #tpu.memory_space<vmem>>, %arg9: memref<1x64xf32, #tpu.memory_space<vmem>>, %arg10: memref<1x64xf32, #tpu.memory_space<vmem>>, %arg11: memref<8x8x32xf32, #tpu.memory_space<vmem>>, %arg12: memref<8x8x32xf32, #tpu.memory_space<vmem>>, %arg13: memref<8x8x32xf32, #tpu.memory_space<vmem>>, %arg14: memref<8x8x32xf32, #tpu.memory_space<vmem>>, %arg15: memref<8x8x32xf32, #tpu.memory_space<vmem>>, %arg16: memref<8x8x32xf32, #tpu.memory_space<vmem>>, %arg17: memref<8x32xf32, #tpu.memory_space<vmem>>, %arg18: memref<8x32xf32, #tpu.memory_space<vmem>>) attributes {dimension_semantics = [#tpu.dimension_semantics<parallel>, #tpu.dimension_semantics<arbitrary>], iteration_bounds = array<i64: 1, 1>, scalar_prefetch = 0 : i64, scratch_operands = 2 : i64, tpu.core_type = #tpu.core_type<tc>, window_params = [{transform_indices = @transform_0, window_bounds = array<i64: 8, 8, 128>}, {transform_indices = @transform_1, window_bounds = array<i64: 8, 8, 32>}, {transform_indices = @transform_2, window_bounds = array<i64: 8, 8, 32>}, {transform_indices = @transform_3, window_bounds = array<i64: 8, 32>}, {transform_indices = @transform_4, window_bounds = array<i64: 8, 32>}, {pipeline_mode = #tpu.pipeline_mode<synchronous>, transform_indices = @transform_5, window_bounds = array<i64: 32, 128>}, {pipeline_mode = #tpu.pipeline_mode<synchronous>, transform_indices = @transform_6, window_bounds = array<i64: 32, 128>}, {pipeline_mode = #tpu.pipeline_mode<synchronous>, transform_indices = @transform_7, window_bounds = array<i64: 1, 64>}, {pipeline_mode = #tpu.pipeline_mode<synchronous>, transform_indices = @transform_8, window_bounds = array<i64: 1, 64>}, {transform_indices = @transform_9, window_bounds = array<i64: 8, 8, 32>}, {transform_indices = @transform_10, window_bounds = array<i64: 8, 8, 32>}, {transform_indices = @transform_11, window_bounds = array<i64: 8, 8, 32>}, {transform_indices = @transform_12, window_bounds = array<i64: 8, 8, 32>}, {transform_indices = @transform_13, window_bounds = array<i64: 8, 8, 32>}, {transform_indices = @transform_14, window_bounds = array<i64: 8, 8, 32>}]} {
    %c0_i32 = arith.constant 0 : i32
    %0 = arith.cmpi eq, %arg1, %c0_i32 : i32
    %1 = arith.extui %0 : i1 to i32
    %c0_i32_0 = arith.constant 0 : i32
    %2 = arith.cmpi ne, %1, %c0_i32_0 : i32
    scf.if %2 {
      %c0_308 = arith.constant 0 : index
      %c0_309 = arith.constant 0 : index
      %809 = vector.load %arg5[%c0_308, %c0_309] : memref<8x32xf32, #tpu.memory_space<vmem>>, vector<8x32xf32>
      %c0_310 = arith.constant 0 : index
      %c0_311 = arith.constant 0 : index
      %810 = vector.load %arg17[%c0_310, %c0_311] : memref<8x32xf32, #tpu.memory_space<vmem>>, vector<8x32xf32>
      tpu.vector_store %arg17[%c0_310, %c0_311], %809 {strides = array<i32>} : memref<8x32xf32, #tpu.memory_space<vmem>>, vector<8x32xf32>,
      %c0_312 = arith.constant 0 : index
      %c0_313 = arith.constant 0 : index
      %811 = vector.load %arg6[%c0_312, %c0_313] : memref<8x32xf32, #tpu.memory_space<vmem>>, vector<8x32xf32>
      %c0_314 = arith.constant 0 : index
      %c0_315 = arith.constant 0 : index
      %812 = vector.load %arg18[%c0_314, %c0_315] : memref<8x32xf32, #tpu.memory_space<vmem>>, vector<8x32xf32>
      tpu.vector_store %arg18[%c0_314, %c0_315], %811 {strides = array<i32>} : memref<8x32xf32, #tpu.memory_space<vmem>>, vector<8x32xf32>,
    } else {
    }
    %c0 = arith.constant 0 : index
    %c0_1 = arith.constant 0 : index
    %3 = vector.load %arg9[%c0, %c0_1] : memref<1x64xf32, #tpu.memory_space<vmem>>, vector<1x64xf32>
    %c0_2 = arith.constant 0 : index
    %c0_3 = arith.constant 0 : index
    %4 = vector.load %arg10[%c0_2, %c0_3] : memref<1x64xf32, #tpu.memory_space<vmem>>, vector<1x64xf32>
    %c0_4 = arith.constant 0 : index
    %c0_5 = arith.constant 0 : index
    %5 = vector.load %arg17[%c0_4, %c0_5] : memref<8x32xf32, #tpu.memory_space<vmem>>, vector<8x32xf32>
    %c0_6 = arith.constant 0 : index
    %c0_7 = arith.constant 0 : index
    %6 = vector.load %arg18[%c0_6, %c0_7] : memref<8x32xf32, #tpu.memory_space<vmem>>, vector<8x32xf32>
    %c0_i32_8 = arith.constant 0 : i32
    %7 = arith.index_cast %c0_i32_8 : i32 to index
    %c0_9 = arith.constant 0 : index
    %c0_10 = arith.constant 0 : index
    %8 = vector.load %arg2[%7, %c0_9, %c0_10] : memref<8x8x128xf32, #tpu.memory_space<vmem>>, vector<1x8x128xf32>
    %9 = vector.shape_cast %8 : vector<1x8x128xf32> to vector<8x128xf32>
    %c0_11 = arith.constant 0 : index
    %c0_12 = arith.constant 0 : index
    %10 = vector.load %arg7[%c0_11, %c0_12] : memref<32x128xf32, #tpu.memory_space<vmem>>, vector<32x128xf32>
    %cst = arith.constant dense<0.000000e+00> : vector<8x128xf32>
    %11 = tpu.matmul %5, %10, %cst {dimension_numbers = #tpu.dot_dimension_numbers<[1], [0], [0], [1], [0, 0, 1, 1], [], []>} : vector<8x32xf32>, vector<32x128xf32>, vector<8x128xf32> -> vector<8x128xf32>
    %12 = arith.addf %9, %11 : vector<8x128xf32>
    %13 = vector.extract_strided_slice %12 {offsets = [0, 0], sizes = [8, 32], strides = [1, 1]} : vector<8x128xf32> to vector<8x32xf32>
    %cst_13 = arith.constant 5.000000e-01 : f32
    %14 = vector.broadcast %cst_13 : f32 to vector<8x32xf32>
    %15 = arith.mulf %14, %13 : vector<8x32xf32>
    %16 = math.tanh %15 : vector<8x32xf32>
    %cst_14 = arith.constant 1.000000e+00 : f32
    %17 = vector.broadcast %cst_14 : f32 to vector<8x32xf32>
    %18 = arith.addf %16, %17 : vector<8x32xf32>
    %cst_15 = arith.constant 5.000000e-01 : f32
    %19 = vector.broadcast %cst_15 : f32 to vector<8x32xf32>
    %20 = arith.mulf %19, %18 : vector<8x32xf32>
    %21 = vector.extract_strided_slice %12 {offsets = [0, 32], sizes = [8, 32], strides = [1, 1]} : vector<8x128xf32> to vector<8x32xf32>
    %cst_16 = arith.constant 5.000000e-01 : f32
    %22 = vector.broadcast %cst_16 : f32 to vector<8x32xf32>
    %23 = arith.mulf %22, %21 : vector<8x32xf32>
    %24 = math.tanh %23 : vector<8x32xf32>
    %cst_17 = arith.constant 1.000000e+00 : f32
    %25 = vector.broadcast %cst_17 : f32 to vector<8x32xf32>
    %26 = arith.addf %24, %25 : vector<8x32xf32>
    %cst_18 = arith.constant 5.000000e-01 : f32
    %27 = vector.broadcast %cst_18 : f32 to vector<8x32xf32>
    %28 = arith.mulf %27, %26 : vector<8x32xf32>
    %29 = vector.extract_strided_slice %12 {offsets = [0, 64], sizes = [8, 32], strides = [1, 1]} : vector<8x128xf32> to vector<8x32xf32>
    %30 = math.tanh %29 : vector<8x32xf32>
    %31 = vector.extract_strided_slice %12 {offsets = [0, 96], sizes = [8, 32], strides = [1, 1]} : vector<8x128xf32> to vector<8x32xf32>
    %cst_19 = arith.constant 5.000000e-01 : f32
    %32 = vector.broadcast %cst_19 : f32 to vector<8x32xf32>
    %33 = arith.mulf %32, %31 : vector<8x32xf32>
    %34 = math.tanh %33 : vector<8x32xf32>
    %cst_20 = arith.constant 1.000000e+00 : f32
    %35 = vector.broadcast %cst_20 : f32 to vector<8x32xf32>
    %36 = arith.addf %34, %35 : vector<8x32xf32>
    %cst_21 = arith.constant 5.000000e-01 : f32
    %37 = vector.broadcast %cst_21 : f32 to vector<8x32xf32>
    %38 = arith.mulf %37, %36 : vector<8x32xf32>
    %39 = arith.mulf %28, %6 : vector<8x32xf32>
    %40 = arith.mulf %20, %30 : vector<8x32xf32>
    %41 = arith.addf %39, %40 : vector<8x32xf32>
    %42 = math.tanh %41 : vector<8x32xf32>
    %43 = arith.mulf %38, %42 : vector<8x32xf32>
    %44 = tpu.concatenate %43, %41 in 0 : vector<8x32xf32>, vector<8x32xf32> -> vector<16x32xf32>
    %c0_22 = arith.constant 0 : index
    %c0_23 = arith.constant 0 : index
    %45 = vector.load %arg8[%c0_22, %c0_23] : memref<32x128xf32, #tpu.memory_space<vmem>>, vector<32x128xf32>
    %cst_24 = arith.constant dense<0.000000e+00> : vector<16x128xf32>
    %46 = tpu.matmul %44, %45, %cst_24 {dimension_numbers = #tpu.dot_dimension_numbers<[1], [0], [0], [1], [0, 0, 1, 1], [], []>} : vector<16x32xf32>, vector<32x128xf32>, vector<16x128xf32> -> vector<16x128xf32>
    %47 = vector.extract_strided_slice %46 {offsets = [0, 0], sizes = [8, 64], strides = [1, 1]} : vector<16x128xf32> to vector<8x64xf32>
    %48 = vector.broadcast %3 : vector<1x64xf32> to vector<8x64xf32>
    %49 = arith.addf %47, %48 : vector<8x64xf32>
    %50 = vector.extract_strided_slice %46 {offsets = [8, 64], sizes = [8, 64], strides = [1, 1]} : vector<16x128xf32> to vector<8x64xf32>
    %51 = vector.broadcast %4 : vector<1x64xf32> to vector<8x64xf32>
    %52 = arith.addf %50, %51 : vector<8x64xf32>
    %53 = vector.extract_strided_slice %49 {offsets = [0, 0], sizes = [8, 32], strides = [1, 1]} : vector<8x64xf32> to vector<8x32xf32>
    %cst_25 = arith.constant 0.000000e+00 : f32
    %54 = vector.broadcast %cst_25 : f32 to vector<8x32xf32>
    %55 = arith.maximumf %53, %54 : vector<8x32xf32>
    %56 = math.absf %53 : vector<8x32xf32>
    %cst_26 = arith.constant 0.000000e+00 : f32
    %57 = vector.broadcast %cst_26 : f32 to vector<8x32xf32>
    %58 = arith.subf %57, %56 : vector<8x32xf32>
    %59 = math.exp %58 : vector<8x32xf32>
    %60 = math.log1p %59 : vector<8x32xf32>
    %61 = arith.addf %55, %60 : vector<8x32xf32>
    %62 = vector.extract_strided_slice %49 {offsets = [0, 32], sizes = [8, 32], strides = [1, 1]} : vector<8x64xf32> to vector<8x32xf32>
    %63 = vector.extract_strided_slice %52 {offsets = [0, 0], sizes = [8, 32], strides = [1, 1]} : vector<8x64xf32> to vector<8x32xf32>
    %cst_27 = arith.constant 0.000000e+00 : f32
    %64 = vector.broadcast %cst_27 : f32 to vector<8x32xf32>
    %65 = arith.maximumf %63, %64 : vector<8x32xf32>
    %66 = math.absf %63 : vector<8x32xf32>
    %cst_28 = arith.constant 0.000000e+00 : f32
    %67 = vector.broadcast %cst_28 : f32 to vector<8x32xf32>
    %68 = arith.subf %67, %66 : vector<8x32xf32>
    %69 = math.exp %68 : vector<8x32xf32>
    %70 = math.log1p %69 : vector<8x32xf32>
    %71 = arith.addf %65, %70 : vector<8x32xf32>
    %72 = vector.extract_strided_slice %52 {offsets = [0, 32], sizes = [8, 32], strides = [1, 1]} : vector<8x64xf32> to vector<8x32xf32>
    %73 = arith.index_cast %c0_i32_8 : i32 to index
    %c0_29 = arith.constant 0 : index
    %c0_30 = arith.constant 0 : index
    %74 = vector.load %arg3[%73, %c0_29, %c0_30] : memref<8x8x32xf32, #tpu.memory_space<vmem>>, vector<1x8x32xf32>
    %75 = vector.shape_cast %74 : vector<1x8x32xf32> to vector<8x32xf32>
    %76 = arith.mulf %61, %75 : vector<8x32xf32>
    %77 = arith.addf %62, %76 : vector<8x32xf32>
    %78 = arith.index_cast %c0_i32_8 : i32 to index
    %c0_31 = arith.constant 0 : index
    %c0_32 = arith.constant 0 : index
    %79 = vector.load %arg4[%78, %c0_31, %c0_32] : memref<8x8x32xf32, #tpu.memory_space<vmem>>, vector<1x8x32xf32>
    %80 = vector.shape_cast %79 : vector<1x8x32xf32> to vector<8x32xf32>
    %81 = arith.mulf %71, %80 : vector<8x32xf32>
    %82 = arith.addf %72, %81 : vector<8x32xf32>
    %83 = arith.index_cast %c0_i32_8 : i32 to index
    %c0_33 = arith.constant 0 : index
    %c0_34 = arith.constant 0 : index
    %84 = vector.load %arg11[%83, %c0_33, %c0_34] : memref<8x8x32xf32, #tpu.memory_space<vmem>>, vector<1x8x32xf32>
    %85 = vector.shape_cast %84 : vector<1x8x32xf32> to vector<8x32xf32>
    %86 = vector.shape_cast %77 : vector<8x32xf32> to vector<1x8x32xf32>
    tpu.vector_store %arg11[%83, %c0_33, %c0_34], %86 {strides = array<i32>} : memref<8x8x32xf32, #tpu.memory_space<vmem>>, vector<1x8x32xf32>,
    %87 = arith.index_cast %c0_i32_8 : i32 to index
    %c0_35 = arith.constant 0 : index
    %c0_36 = arith.constant 0 : index
    %88 = vector.load %arg12[%87, %c0_35, %c0_36] : memref<8x8x32xf32, #tpu.memory_space<vmem>>, vector<1x8x32xf32>
    %89 = vector.shape_cast %88 : vector<1x8x32xf32> to vector<8x32xf32>
    %90 = vector.shape_cast %82 : vector<8x32xf32> to vector<1x8x32xf32>
    tpu.vector_store %arg12[%87, %c0_35, %c0_36], %90 {strides = array<i32>} : memref<8x8x32xf32, #tpu.memory_space<vmem>>, vector<1x8x32xf32>,
    %91 = arith.index_cast %c0_i32_8 : i32 to index
    %c0_37 = arith.constant 0 : index
    %c0_38 = arith.constant 0 : index
    %92 = vector.load %arg13[%91, %c0_37, %c0_38] : memref<8x8x32xf32, #tpu.memory_space<vmem>>, vector<1x8x32xf32>
    %93 = vector.shape_cast %92 : vector<1x8x32xf32> to vector<8x32xf32>
    %94 = vector.shape_cast %62 : vector<8x32xf32> to vector<1x8x32xf32>
    tpu.vector_store %arg13[%91, %c0_37, %c0_38], %94 {strides = array<i32>} : memref<8x8x32xf32, #tpu.memory_space<vmem>>, vector<1x8x32xf32>,
    %95 = arith.index_cast %c0_i32_8 : i32 to index
    %c0_39 = arith.constant 0 : index
    %c0_40 = arith.constant 0 : index
    %96 = vector.load %arg14[%95, %c0_39, %c0_40] : memref<8x8x32xf32, #tpu.memory_space<vmem>>, vector<1x8x32xf32>
    %97 = vector.shape_cast %96 : vector<1x8x32xf32> to vector<8x32xf32>
    %98 = vector.shape_cast %61 : vector<8x32xf32> to vector<1x8x32xf32>
    tpu.vector_store %arg14[%95, %c0_39, %c0_40], %98 {strides = array<i32>} : memref<8x8x32xf32, #tpu.memory_space<vmem>>, vector<1x8x32xf32>,
    %99 = arith.index_cast %c0_i32_8 : i32 to index
    %c0_41 = arith.constant 0 : index
    %c0_42 = arith.constant 0 : index
    %100 = vector.load %arg15[%99, %c0_41, %c0_42] : memref<8x8x32xf32, #tpu.memory_space<vmem>>, vector<1x8x32xf32>
    %101 = vector.shape_cast %100 : vector<1x8x32xf32> to vector<8x32xf32>
    %102 = vector.shape_cast %72 : vector<8x32xf32> to vector<1x8x32xf32>
    tpu.vector_store %arg15[%99, %c0_41, %c0_42], %102 {strides = array<i32>} : memref<8x8x32xf32, #tpu.memory_space<vmem>>, vector<1x8x32xf32>,
    %103 = arith.index_cast %c0_i32_8 : i32 to index
    %c0_43 = arith.constant 0 : index
    %c0_44 = arith.constant 0 : index
    %104 = vector.load %arg16[%103, %c0_43, %c0_44] : memref<8x8x32xf32, #tpu.memory_space<vmem>>, vector<1x8x32xf32>
    %105 = vector.shape_cast %104 : vector<1x8x32xf32> to vector<8x32xf32>
    %106 = vector.shape_cast %71 : vector<8x32xf32> to vector<1x8x32xf32>
    tpu.vector_store %arg16[%103, %c0_43, %c0_44], %106 {strides = array<i32>} : memref<8x8x32xf32, #tpu.memory_space<vmem>>, vector<1x8x32xf32>,
    %c1_i32 = arith.constant 1 : i32
    %107 = arith.index_cast %c1_i32 : i32 to index
    %c0_45 = arith.constant 0 : index
    %c0_46 = arith.constant 0 : index
    %108 = vector.load %arg2[%107, %c0_45, %c0_46] : memref<8x8x128xf32, #tpu.memory_space<vmem>>, vector<1x8x128xf32>
    %109 = vector.shape_cast %108 : vector<1x8x128xf32> to vector<8x128xf32>
    %c0_47 = arith.constant 0 : index
    %c0_48 = arith.constant 0 : index
    %110 = vector.load %arg7[%c0_47, %c0_48] : memref<32x128xf32, #tpu.memory_space<vmem>>, vector<32x128xf32>
    %cst_49 = arith.constant dense<0.000000e+00> : vector<8x128xf32>
    %111 = tpu.matmul %77, %110, %cst_49 {dimension_numbers = #tpu.dot_dimension_numbers<[1], [0], [0], [1], [0, 0, 1, 1], [], []>} : vector<8x32xf32>, vector<32x128xf32>, vector<8x128xf32> -> vector<8x128xf32>
    %112 = arith.addf %109, %111 : vector<8x128xf32>
    %113 = vector.extract_strided_slice %112 {offsets = [0, 0], sizes = [8, 32], strides = [1, 1]} : vector<8x128xf32> to vector<8x32xf32>
    %cst_50 = arith.constant 5.000000e-01 : f32
    %114 = vector.broadcast %cst_50 : f32 to vector<8x32xf32>
    %115 = arith.mulf %114, %113 : vector<8x32xf32>
    %116 = math.tanh %115 : vector<8x32xf32>
    %cst_51 = arith.constant 1.000000e+00 : f32
    %117 = vector.broadcast %cst_51 : f32 to vector<8x32xf32>
    %118 = arith.addf %116, %117 : vector<8x32xf32>
    %cst_52 = arith.constant 5.000000e-01 : f32
    %119 = vector.broadcast %cst_52 : f32 to vector<8x32xf32>
    %120 = arith.mulf %119, %118 : vector<8x32xf32>
    %121 = vector.extract_strided_slice %112 {offsets = [0, 32], sizes = [8, 32], strides = [1, 1]} : vector<8x128xf32> to vector<8x32xf32>
    %cst_53 = arith.constant 5.000000e-01 : f32
    %122 = vector.broadcast %cst_53 : f32 to vector<8x32xf32>
    %123 = arith.mulf %122, %121 : vector<8x32xf32>
    %124 = math.tanh %123 : vector<8x32xf32>
    %cst_54 = arith.constant 1.000000e+00 : f32
    %125 = vector.broadcast %cst_54 : f32 to vector<8x32xf32>
    %126 = arith.addf %124, %125 : vector<8x32xf32>
    %cst_55 = arith.constant 5.000000e-01 : f32
    %127 = vector.broadcast %cst_55 : f32 to vector<8x32xf32>
    %128 = arith.mulf %127, %126 : vector<8x32xf32>
    %129 = vector.extract_strided_slice %112 {offsets = [0, 64], sizes = [8, 32], strides = [1, 1]} : vector<8x128xf32> to vector<8x32xf32>
    %130 = math.tanh %129 : vector<8x32xf32>
    %131 = vector.extract_strided_slice %112 {offsets = [0, 96], sizes = [8, 32], strides = [1, 1]} : vector<8x128xf32> to vector<8x32xf32>
    %cst_56 = arith.constant 5.000000e-01 : f32
    %132 = vector.broadcast %cst_56 : f32 to vector<8x32xf32>
    %133 = arith.mulf %132, %131 : vector<8x32xf32>
    %134 = math.tanh %133 : vector<8x32xf32>
    %cst_57 = arith.constant 1.000000e+00 : f32
    %135 = vector.broadcast %cst_57 : f32 to vector<8x32xf32>
    %136 = arith.addf %134, %135 : vector<8x32xf32>
    %cst_58 = arith.constant 5.000000e-01 : f32
    %137 = vector.broadcast %cst_58 : f32 to vector<8x32xf32>
    %138 = arith.mulf %137, %136 : vector<8x32xf32>
    %139 = arith.mulf %128, %82 : vector<8x32xf32>
    %140 = arith.mulf %120, %130 : vector<8x32xf32>
    %141 = arith.addf %139, %140 : vector<8x32xf32>
    %142 = math.tanh %141 : vector<8x32xf32>
    %143 = arith.mulf %138, %142 : vector<8x32xf32>
    %144 = tpu.concatenate %143, %141 in 0 : vector<8x32xf32>, vector<8x32xf32> -> vector<16x32xf32>
    %c0_59 = arith.constant 0 : index
    %c0_60 = arith.constant 0 : index
    %145 = vector.load %arg8[%c0_59, %c0_60] : memref<32x128xf32, #tpu.memory_space<vmem>>, vector<32x128xf32>
    %cst_61 = arith.constant dense<0.000000e+00> : vector<16x128xf32>
    %146 = tpu.matmul %144, %145, %cst_61 {dimension_numbers = #tpu.dot_dimension_numbers<[1], [0], [0], [1], [0, 0, 1, 1], [], []>} : vector<16x32xf32>, vector<32x128xf32>, vector<16x128xf32> -> vector<16x128xf32>
    %147 = vector.extract_strided_slice %146 {offsets = [0, 0], sizes = [8, 64], strides = [1, 1]} : vector<16x128xf32> to vector<8x64xf32>
    %148 = vector.broadcast %3 : vector<1x64xf32> to vector<8x64xf32>
    %149 = arith.addf %147, %148 : vector<8x64xf32>
    %150 = vector.extract_strided_slice %146 {offsets = [8, 64], sizes = [8, 64], strides = [1, 1]} : vector<16x128xf32> to vector<8x64xf32>
    %151 = vector.broadcast %4 : vector<1x64xf32> to vector<8x64xf32>
    %152 = arith.addf %150, %151 : vector<8x64xf32>
    %153 = vector.extract_strided_slice %149 {offsets = [0, 0], sizes = [8, 32], strides = [1, 1]} : vector<8x64xf32> to vector<8x32xf32>
    %cst_62 = arith.constant 0.000000e+00 : f32
    %154 = vector.broadcast %cst_62 : f32 to vector<8x32xf32>
    %155 = arith.maximumf %153, %154 : vector<8x32xf32>
    %156 = math.absf %153 : vector<8x32xf32>
    %cst_63 = arith.constant 0.000000e+00 : f32
    %157 = vector.broadcast %cst_63 : f32 to vector<8x32xf32>
    %158 = arith.subf %157, %156 : vector<8x32xf32>
    %159 = math.exp %158 : vector<8x32xf32>
    %160 = math.log1p %159 : vector<8x32xf32>
    %161 = arith.addf %155, %160 : vector<8x32xf32>
    %162 = vector.extract_strided_slice %149 {offsets = [0, 32], sizes = [8, 32], strides = [1, 1]} : vector<8x64xf32> to vector<8x32xf32>
    %163 = vector.extract_strided_slice %152 {offsets = [0, 0], sizes = [8, 32], strides = [1, 1]} : vector<8x64xf32> to vector<8x32xf32>
    %cst_64 = arith.constant 0.000000e+00 : f32
    %164 = vector.broadcast %cst_64 : f32 to vector<8x32xf32>
    %165 = arith.maximumf %163, %164 : vector<8x32xf32>
    %166 = math.absf %163 : vector<8x32xf32>
    %cst_65 = arith.constant 0.000000e+00 : f32
    %167 = vector.broadcast %cst_65 : f32 to vector<8x32xf32>
    %168 = arith.subf %167, %166 : vector<8x32xf32>
    %169 = math.exp %168 : vector<8x32xf32>
    %170 = math.log1p %169 : vector<8x32xf32>
    %171 = arith.addf %165, %170 : vector<8x32xf32>
    %172 = vector.extract_strided_slice %152 {offsets = [0, 32], sizes = [8, 32], strides = [1, 1]} : vector<8x64xf32> to vector<8x32xf32>
    %173 = arith.index_cast %c1_i32 : i32 to index
    %c0_66 = arith.constant 0 : index
    %c0_67 = arith.constant 0 : index
    %174 = vector.load %arg3[%173, %c0_66, %c0_67] : memref<8x8x32xf32, #tpu.memory_space<vmem>>, vector<1x8x32xf32>
    %175 = vector.shape_cast %174 : vector<1x8x32xf32> to vector<8x32xf32>
    %176 = arith.mulf %161, %175 : vector<8x32xf32>
    %177 = arith.addf %162, %176 : vector<8x32xf32>
    %178 = arith.index_cast %c1_i32 : i32 to index
    %c0_68 = arith.constant 0 : index
    %c0_69 = arith.constant 0 : index
    %179 = vector.load %arg4[%178, %c0_68, %c0_69] : memref<8x8x32xf32, #tpu.memory_space<vmem>>, vector<1x8x32xf32>
    %180 = vector.shape_cast %179 : vector<1x8x32xf32> to vector<8x32xf32>
    %181 = arith.mulf %171, %180 : vector<8x32xf32>
    %182 = arith.addf %172, %181 : vector<8x32xf32>
    %183 = arith.index_cast %c1_i32 : i32 to index
    %c0_70 = arith.constant 0 : index
    %c0_71 = arith.constant 0 : index
    %184 = vector.load %arg11[%183, %c0_70, %c0_71] : memref<8x8x32xf32, #tpu.memory_space<vmem>>, vector<1x8x32xf32>
    %185 = vector.shape_cast %184 : vector<1x8x32xf32> to vector<8x32xf32>
    %186 = vector.shape_cast %177 : vector<8x32xf32> to vector<1x8x32xf32>
    tpu.vector_store %arg11[%183, %c0_70, %c0_71], %186 {strides = array<i32>} : memref<8x8x32xf32, #tpu.memory_space<vmem>>, vector<1x8x32xf32>,
    %187 = arith.index_cast %c1_i32 : i32 to index
    %c0_72 = arith.constant 0 : index
    %c0_73 = arith.constant 0 : index
    %188 = vector.load %arg12[%187, %c0_72, %c0_73] : memref<8x8x32xf32, #tpu.memory_space<vmem>>, vector<1x8x32xf32>
    %189 = vector.shape_cast %188 : vector<1x8x32xf32> to vector<8x32xf32>
    %190 = vector.shape_cast %182 : vector<8x32xf32> to vector<1x8x32xf32>
    tpu.vector_store %arg12[%187, %c0_72, %c0_73], %190 {strides = array<i32>} : memref<8x8x32xf32, #tpu.memory_space<vmem>>, vector<1x8x32xf32>,
    %191 = arith.index_cast %c1_i32 : i32 to index
    %c0_74 = arith.constant 0 : index
    %c0_75 = arith.constant 0 : index
    %192 = vector.load %arg13[%191, %c0_74, %c0_75] : memref<8x8x32xf32, #tpu.memory_space<vmem>>, vector<1x8x32xf32>
    %193 = vector.shape_cast %192 : vector<1x8x32xf32> to vector<8x32xf32>
    %194 = vector.shape_cast %162 : vector<8x32xf32> to vector<1x8x32xf32>
    tpu.vector_store %arg13[%191, %c0_74, %c0_75], %194 {strides = array<i32>} : memref<8x8x32xf32, #tpu.memory_space<vmem>>, vector<1x8x32xf32>,
    %195 = arith.index_cast %c1_i32 : i32 to index
    %c0_76 = arith.constant 0 : index
    %c0_77 = arith.constant 0 : index
    %196 = vector.load %arg14[%195, %c0_76, %c0_77] : memref<8x8x32xf32, #tpu.memory_space<vmem>>, vector<1x8x32xf32>
    %197 = vector.shape_cast %196 : vector<1x8x32xf32> to vector<8x32xf32>
    %198 = vector.shape_cast %161 : vector<8x32xf32> to vector<1x8x32xf32>
    tpu.vector_store %arg14[%195, %c0_76, %c0_77], %198 {strides = array<i32>} : memref<8x8x32xf32, #tpu.memory_space<vmem>>, vector<1x8x32xf32>,
    %199 = arith.index_cast %c1_i32 : i32 to index
    %c0_78 = arith.constant 0 : index
    %c0_79 = arith.constant 0 : index
    %200 = vector.load %arg15[%199, %c0_78, %c0_79] : memref<8x8x32xf32, #tpu.memory_space<vmem>>, vector<1x8x32xf32>
    %201 = vector.shape_cast %200 : vector<1x8x32xf32> to vector<8x32xf32>
    %202 = vector.shape_cast %172 : vector<8x32xf32> to vector<1x8x32xf32>
    tpu.vector_store %arg15[%199, %c0_78, %c0_79], %202 {strides = array<i32>} : memref<8x8x32xf32, #tpu.memory_space<vmem>>, vector<1x8x32xf32>,
    %203 = arith.index_cast %c1_i32 : i32 to index
    %c0_80 = arith.constant 0 : index
    %c0_81 = arith.constant 0 : index
    %204 = vector.load %arg16[%203, %c0_80, %c0_81] : memref<8x8x32xf32, #tpu.memory_space<vmem>>, vector<1x8x32xf32>
    %205 = vector.shape_cast %204 : vector<1x8x32xf32> to vector<8x32xf32>
    %206 = vector.shape_cast %171 : vector<8x32xf32> to vector<1x8x32xf32>
    tpu.vector_store %arg16[%203, %c0_80, %c0_81], %206 {strides = array<i32>} : memref<8x8x32xf32, #tpu.memory_space<vmem>>, vector<1x8x32xf32>,
    %c2_i32 = arith.constant 2 : i32
    %207 = arith.index_cast %c2_i32 : i32 to index
    %c0_82 = arith.constant 0 : index
    %c0_83 = arith.constant 0 : index
    %208 = vector.load %arg2[%207, %c0_82, %c0_83] : memref<8x8x128xf32, #tpu.memory_space<vmem>>, vector<1x8x128xf32>
    %209 = vector.shape_cast %208 : vector<1x8x128xf32> to vector<8x128xf32>
    %c0_84 = arith.constant 0 : index
    %c0_85 = arith.constant 0 : index
    %210 = vector.load %arg7[%c0_84, %c0_85] : memref<32x128xf32, #tpu.memory_space<vmem>>, vector<32x128xf32>
    %cst_86 = arith.constant dense<0.000000e+00> : vector<8x128xf32>
    %211 = tpu.matmul %177, %210, %cst_86 {dimension_numbers = #tpu.dot_dimension_numbers<[1], [0], [0], [1], [0, 0, 1, 1], [], []>} : vector<8x32xf32>, vector<32x128xf32>, vector<8x128xf32> -> vector<8x128xf32>
    %212 = arith.addf %209, %211 : vector<8x128xf32>
    %213 = vector.extract_strided_slice %212 {offsets = [0, 0], sizes = [8, 32], strides = [1, 1]} : vector<8x128xf32> to vector<8x32xf32>
    %cst_87 = arith.constant 5.000000e-01 : f32
    %214 = vector.broadcast %cst_87 : f32 to vector<8x32xf32>
    %215 = arith.mulf %214, %213 : vector<8x32xf32>
    %216 = math.tanh %215 : vector<8x32xf32>
    %cst_88 = arith.constant 1.000000e+00 : f32
    %217 = vector.broadcast %cst_88 : f32 to vector<8x32xf32>
    %218 = arith.addf %216, %217 : vector<8x32xf32>
    %cst_89 = arith.constant 5.000000e-01 : f32
    %219 = vector.broadcast %cst_89 : f32 to vector<8x32xf32>
    %220 = arith.mulf %219, %218 : vector<8x32xf32>
    %221 = vector.extract_strided_slice %212 {offsets = [0, 32], sizes = [8, 32], strides = [1, 1]} : vector<8x128xf32> to vector<8x32xf32>
    %cst_90 = arith.constant 5.000000e-01 : f32
    %222 = vector.broadcast %cst_90 : f32 to vector<8x32xf32>
    %223 = arith.mulf %222, %221 : vector<8x32xf32>
    %224 = math.tanh %223 : vector<8x32xf32>
    %cst_91 = arith.constant 1.000000e+00 : f32
    %225 = vector.broadcast %cst_91 : f32 to vector<8x32xf32>
    %226 = arith.addf %224, %225 : vector<8x32xf32>
    %cst_92 = arith.constant 5.000000e-01 : f32
    %227 = vector.broadcast %cst_92 : f32 to vector<8x32xf32>
    %228 = arith.mulf %227, %226 : vector<8x32xf32>
    %229 = vector.extract_strided_slice %212 {offsets = [0, 64], sizes = [8, 32], strides = [1, 1]} : vector<8x128xf32> to vector<8x32xf32>
    %230 = math.tanh %229 : vector<8x32xf32>
    %231 = vector.extract_strided_slice %212 {offsets = [0, 96], sizes = [8, 32], strides = [1, 1]} : vector<8x128xf32> to vector<8x32xf32>
    %cst_93 = arith.constant 5.000000e-01 : f32
    %232 = vector.broadcast %cst_93 : f32 to vector<8x32xf32>
    %233 = arith.mulf %232, %231 : vector<8x32xf32>
    %234 = math.tanh %233 : vector<8x32xf32>
    %cst_94 = arith.constant 1.000000e+00 : f32
    %235 = vector.broadcast %cst_94 : f32 to vector<8x32xf32>
    %236 = arith.addf %234, %235 : vector<8x32xf32>
    %cst_95 = arith.constant 5.000000e-01 : f32
    %237 = vector.broadcast %cst_95 : f32 to vector<8x32xf32>
    %238 = arith.mulf %237, %236 : vector<8x32xf32>
    %239 = arith.mulf %228, %182 : vector<8x32xf32>
    %240 = arith.mulf %220, %230 : vector<8x32xf32>
    %241 = arith.addf %239, %240 : vector<8x32xf32>
    %242 = math.tanh %241 : vector<8x32xf32>
    %243 = arith.mulf %238, %242 : vector<8x32xf32>
    %244 = tpu.concatenate %243, %241 in 0 : vector<8x32xf32>, vector<8x32xf32> -> vector<16x32xf32>
    %c0_96 = arith.constant 0 : index
    %c0_97 = arith.constant 0 : index
    %245 = vector.load %arg8[%c0_96, %c0_97] : memref<32x128xf32, #tpu.memory_space<vmem>>, vector<32x128xf32>
    %cst_98 = arith.constant dense<0.000000e+00> : vector<16x128xf32>
    %246 = tpu.matmul %244, %245, %cst_98 {dimension_numbers = #tpu.dot_dimension_numbers<[1], [0], [0], [1], [0, 0, 1, 1], [], []>} : vector<16x32xf32>, vector<32x128xf32>, vector<16x128xf32> -> vector<16x128xf32>
    %247 = vector.extract_strided_slice %246 {offsets = [0, 0], sizes = [8, 64], strides = [1, 1]} : vector<16x128xf32> to vector<8x64xf32>
    %248 = vector.broadcast %3 : vector<1x64xf32> to vector<8x64xf32>
    %249 = arith.addf %247, %248 : vector<8x64xf32>
    %250 = vector.extract_strided_slice %246 {offsets = [8, 64], sizes = [8, 64], strides = [1, 1]} : vector<16x128xf32> to vector<8x64xf32>
    %251 = vector.broadcast %4 : vector<1x64xf32> to vector<8x64xf32>
    %252 = arith.addf %250, %251 : vector<8x64xf32>
    %253 = vector.extract_strided_slice %249 {offsets = [0, 0], sizes = [8, 32], strides = [1, 1]} : vector<8x64xf32> to vector<8x32xf32>
    %cst_99 = arith.constant 0.000000e+00 : f32
    %254 = vector.broadcast %cst_99 : f32 to vector<8x32xf32>
    %255 = arith.maximumf %253, %254 : vector<8x32xf32>
    %256 = math.absf %253 : vector<8x32xf32>
    %cst_100 = arith.constant 0.000000e+00 : f32
    %257 = vector.broadcast %cst_100 : f32 to vector<8x32xf32>
    %258 = arith.subf %257, %256 : vector<8x32xf32>
    %259 = math.exp %258 : vector<8x32xf32>
    %260 = math.log1p %259 : vector<8x32xf32>
    %261 = arith.addf %255, %260 : vector<8x32xf32>
    %262 = vector.extract_strided_slice %249 {offsets = [0, 32], sizes = [8, 32], strides = [1, 1]} : vector<8x64xf32> to vector<8x32xf32>
    %263 = vector.extract_strided_slice %252 {offsets = [0, 0], sizes = [8, 32], strides = [1, 1]} : vector<8x64xf32> to vector<8x32xf32>
    %cst_101 = arith.constant 0.000000e+00 : f32
    %264 = vector.broadcast %cst_101 : f32 to vector<8x32xf32>
    %265 = arith.maximumf %263, %264 : vector<8x32xf32>
    %266 = math.absf %263 : vector<8x32xf32>
    %cst_102 = arith.constant 0.000000e+00 : f32
    %267 = vector.broadcast %cst_102 : f32 to vector<8x32xf32>
    %268 = arith.subf %267, %266 : vector<8x32xf32>
    %269 = math.exp %268 : vector<8x32xf32>
    %270 = math.log1p %269 : vector<8x32xf32>
    %271 = arith.addf %265, %270 : vector<8x32xf32>
    %272 = vector.extract_strided_slice %252 {offsets = [0, 32], sizes = [8, 32], strides = [1, 1]} : vector<8x64xf32> to vector<8x32xf32>
    %273 = arith.index_cast %c2_i32 : i32 to index
    %c0_103 = arith.constant 0 : index
    %c0_104 = arith.constant 0 : index
    %274 = vector.load %arg3[%273, %c0_103, %c0_104] : memref<8x8x32xf32, #tpu.memory_space<vmem>>, vector<1x8x32xf32>
    %275 = vector.shape_cast %274 : vector<1x8x32xf32> to vector<8x32xf32>
    %276 = arith.mulf %261, %275 : vector<8x32xf32>
    %277 = arith.addf %262, %276 : vector<8x32xf32>
    %278 = arith.index_cast %c2_i32 : i32 to index
    %c0_105 = arith.constant 0 : index
    %c0_106 = arith.constant 0 : index
    %279 = vector.load %arg4[%278, %c0_105, %c0_106] : memref<8x8x32xf32, #tpu.memory_space<vmem>>, vector<1x8x32xf32>
    %280 = vector.shape_cast %279 : vector<1x8x32xf32> to vector<8x32xf32>
    %281 = arith.mulf %271, %280 : vector<8x32xf32>
    %282 = arith.addf %272, %281 : vector<8x32xf32>
    %283 = arith.index_cast %c2_i32 : i32 to index
    %c0_107 = arith.constant 0 : index
    %c0_108 = arith.constant 0 : index
    %284 = vector.load %arg11[%283, %c0_107, %c0_108] : memref<8x8x32xf32, #tpu.memory_space<vmem>>, vector<1x8x32xf32>
    %285 = vector.shape_cast %284 : vector<1x8x32xf32> to vector<8x32xf32>
    %286 = vector.shape_cast %277 : vector<8x32xf32> to vector<1x8x32xf32>
    tpu.vector_store %arg11[%283, %c0_107, %c0_108], %286 {strides = array<i32>} : memref<8x8x32xf32, #tpu.memory_space<vmem>>, vector<1x8x32xf32>,
    %287 = arith.index_cast %c2_i32 : i32 to index
    %c0_109 = arith.constant 0 : index
    %c0_110 = arith.constant 0 : index
    %288 = vector.load %arg12[%287, %c0_109, %c0_110] : memref<8x8x32xf32, #tpu.memory_space<vmem>>, vector<1x8x32xf32>
    %289 = vector.shape_cast %288 : vector<1x8x32xf32> to vector<8x32xf32>
    %290 = vector.shape_cast %282 : vector<8x32xf32> to vector<1x8x32xf32>
    tpu.vector_store %arg12[%287, %c0_109, %c0_110], %290 {strides = array<i32>} : memref<8x8x32xf32, #tpu.memory_space<vmem>>, vector<1x8x32xf32>,
    %291 = arith.index_cast %c2_i32 : i32 to index
    %c0_111 = arith.constant 0 : index
    %c0_112 = arith.constant 0 : index
    %292 = vector.load %arg13[%291, %c0_111, %c0_112] : memref<8x8x32xf32, #tpu.memory_space<vmem>>, vector<1x8x32xf32>
    %293 = vector.shape_cast %292 : vector<1x8x32xf32> to vector<8x32xf32>
    %294 = vector.shape_cast %262 : vector<8x32xf32> to vector<1x8x32xf32>
    tpu.vector_store %arg13[%291, %c0_111, %c0_112], %294 {strides = array<i32>} : memref<8x8x32xf32, #tpu.memory_space<vmem>>, vector<1x8x32xf32>,
    %295 = arith.index_cast %c2_i32 : i32 to index
    %c0_113 = arith.constant 0 : index
    %c0_114 = arith.constant 0 : index
    %296 = vector.load %arg14[%295, %c0_113, %c0_114] : memref<8x8x32xf32, #tpu.memory_space<vmem>>, vector<1x8x32xf32>
    %297 = vector.shape_cast %296 : vector<1x8x32xf32> to vector<8x32xf32>
    %298 = vector.shape_cast %261 : vector<8x32xf32> to vector<1x8x32xf32>
    tpu.vector_store %arg14[%295, %c0_113, %c0_114], %298 {strides = array<i32>} : memref<8x8x32xf32, #tpu.memory_space<vmem>>, vector<1x8x32xf32>,
    %299 = arith.index_cast %c2_i32 : i32 to index
    %c0_115 = arith.constant 0 : index
    %c0_116 = arith.constant 0 : index
    %300 = vector.load %arg15[%299, %c0_115, %c0_116] : memref<8x8x32xf32, #tpu.memory_space<vmem>>, vector<1x8x32xf32>
    %301 = vector.shape_cast %300 : vector<1x8x32xf32> to vector<8x32xf32>
    %302 = vector.shape_cast %272 : vector<8x32xf32> to vector<1x8x32xf32>
    tpu.vector_store %arg15[%299, %c0_115, %c0_116], %302 {strides = array<i32>} : memref<8x8x32xf32, #tpu.memory_space<vmem>>, vector<1x8x32xf32>,
    %303 = arith.index_cast %c2_i32 : i32 to index
    %c0_117 = arith.constant 0 : index
    %c0_118 = arith.constant 0 : index
    %304 = vector.load %arg16[%303, %c0_117, %c0_118] : memref<8x8x32xf32, #tpu.memory_space<vmem>>, vector<1x8x32xf32>
    %305 = vector.shape_cast %304 : vector<1x8x32xf32> to vector<8x32xf32>
    %306 = vector.shape_cast %271 : vector<8x32xf32> to vector<1x8x32xf32>
    tpu.vector_store %arg16[%303, %c0_117, %c0_118], %306 {strides = array<i32>} : memref<8x8x32xf32, #tpu.memory_space<vmem>>, vector<1x8x32xf32>,
    %c3_i32 = arith.constant 3 : i32
    %307 = arith.index_cast %c3_i32 : i32 to index
    %c0_119 = arith.constant 0 : index
    %c0_120 = arith.constant 0 : index
    %308 = vector.load %arg2[%307, %c0_119, %c0_120] : memref<8x8x128xf32, #tpu.memory_space<vmem>>, vector<1x8x128xf32>
    %309 = vector.shape_cast %308 : vector<1x8x128xf32> to vector<8x128xf32>
    %c0_121 = arith.constant 0 : index
    %c0_122 = arith.constant 0 : index
    %310 = vector.load %arg7[%c0_121, %c0_122] : memref<32x128xf32, #tpu.memory_space<vmem>>, vector<32x128xf32>
    %cst_123 = arith.constant dense<0.000000e+00> : vector<8x128xf32>
    %311 = tpu.matmul %277, %310, %cst_123 {dimension_numbers = #tpu.dot_dimension_numbers<[1], [0], [0], [1], [0, 0, 1, 1], [], []>} : vector<8x32xf32>, vector<32x128xf32>, vector<8x128xf32> -> vector<8x128xf32>
    %312 = arith.addf %309, %311 : vector<8x128xf32>
    %313 = vector.extract_strided_slice %312 {offsets = [0, 0], sizes = [8, 32], strides = [1, 1]} : vector<8x128xf32> to vector<8x32xf32>
    %cst_124 = arith.constant 5.000000e-01 : f32
    %314 = vector.broadcast %cst_124 : f32 to vector<8x32xf32>
    %315 = arith.mulf %314, %313 : vector<8x32xf32>
    %316 = math.tanh %315 : vector<8x32xf32>
    %cst_125 = arith.constant 1.000000e+00 : f32
    %317 = vector.broadcast %cst_125 : f32 to vector<8x32xf32>
    %318 = arith.addf %316, %317 : vector<8x32xf32>
    %cst_126 = arith.constant 5.000000e-01 : f32
    %319 = vector.broadcast %cst_126 : f32 to vector<8x32xf32>
    %320 = arith.mulf %319, %318 : vector<8x32xf32>
    %321 = vector.extract_strided_slice %312 {offsets = [0, 32], sizes = [8, 32], strides = [1, 1]} : vector<8x128xf32> to vector<8x32xf32>
    %cst_127 = arith.constant 5.000000e-01 : f32
    %322 = vector.broadcast %cst_127 : f32 to vector<8x32xf32>
    %323 = arith.mulf %322, %321 : vector<8x32xf32>
    %324 = math.tanh %323 : vector<8x32xf32>
    %cst_128 = arith.constant 1.000000e+00 : f32
    %325 = vector.broadcast %cst_128 : f32 to vector<8x32xf32>
    %326 = arith.addf %324, %325 : vector<8x32xf32>
    %cst_129 = arith.constant 5.000000e-01 : f32
    %327 = vector.broadcast %cst_129 : f32 to vector<8x32xf32>
    %328 = arith.mulf %327, %326 : vector<8x32xf32>
    %329 = vector.extract_strided_slice %312 {offsets = [0, 64], sizes = [8, 32], strides = [1, 1]} : vector<8x128xf32> to vector<8x32xf32>
    %330 = math.tanh %329 : vector<8x32xf32>
    %331 = vector.extract_strided_slice %312 {offsets = [0, 96], sizes = [8, 32], strides = [1, 1]} : vector<8x128xf32> to vector<8x32xf32>
    %cst_130 = arith.constant 5.000000e-01 : f32
    %332 = vector.broadcast %cst_130 : f32 to vector<8x32xf32>
    %333 = arith.mulf %332, %331 : vector<8x32xf32>
    %334 = math.tanh %333 : vector<8x32xf32>
    %cst_131 = arith.constant 1.000000e+00 : f32
    %335 = vector.broadcast %cst_131 : f32 to vector<8x32xf32>
    %336 = arith.addf %334, %335 : vector<8x32xf32>
    %cst_132 = arith.constant 5.000000e-01 : f32
    %337 = vector.broadcast %cst_132 : f32 to vector<8x32xf32>
    %338 = arith.mulf %337, %336 : vector<8x32xf32>
    %339 = arith.mulf %328, %282 : vector<8x32xf32>
    %340 = arith.mulf %320, %330 : vector<8x32xf32>
    %341 = arith.addf %339, %340 : vector<8x32xf32>
    %342 = math.tanh %341 : vector<8x32xf32>
    %343 = arith.mulf %338, %342 : vector<8x32xf32>
    %344 = tpu.concatenate %343, %341 in 0 : vector<8x32xf32>, vector<8x32xf32> -> vector<16x32xf32>
    %c0_133 = arith.constant 0 : index
    %c0_134 = arith.constant 0 : index
    %345 = vector.load %arg8[%c0_133, %c0_134] : memref<32x128xf32, #tpu.memory_space<vmem>>, vector<32x128xf32>
    %cst_135 = arith.constant dense<0.000000e+00> : vector<16x128xf32>
    %346 = tpu.matmul %344, %345, %cst_135 {dimension_numbers = #tpu.dot_dimension_numbers<[1], [0], [0], [1], [0, 0, 1, 1], [], []>} : vector<16x32xf32>, vector<32x128xf32>, vector<16x128xf32> -> vector<16x128xf32>
    %347 = vector.extract_strided_slice %346 {offsets = [0, 0], sizes = [8, 64], strides = [1, 1]} : vector<16x128xf32> to vector<8x64xf32>
    %348 = vector.broadcast %3 : vector<1x64xf32> to vector<8x64xf32>
    %349 = arith.addf %347, %348 : vector<8x64xf32>
    %350 = vector.extract_strided_slice %346 {offsets = [8, 64], sizes = [8, 64], strides = [1, 1]} : vector<16x128xf32> to vector<8x64xf32>
    %351 = vector.broadcast %4 : vector<1x64xf32> to vector<8x64xf32>
    %352 = arith.addf %350, %351 : vector<8x64xf32>
    %353 = vector.extract_strided_slice %349 {offsets = [0, 0], sizes = [8, 32], strides = [1, 1]} : vector<8x64xf32> to vector<8x32xf32>
    %cst_136 = arith.constant 0.000000e+00 : f32
    %354 = vector.broadcast %cst_136 : f32 to vector<8x32xf32>
    %355 = arith.maximumf %353, %354 : vector<8x32xf32>
    %356 = math.absf %353 : vector<8x32xf32>
    %cst_137 = arith.constant 0.000000e+00 : f32
    %357 = vector.broadcast %cst_137 : f32 to vector<8x32xf32>
    %358 = arith.subf %357, %356 : vector<8x32xf32>
    %359 = math.exp %358 : vector<8x32xf32>
    %360 = math.log1p %359 : vector<8x32xf32>
    %361 = arith.addf %355, %360 : vector<8x32xf32>
    %362 = vector.extract_strided_slice %349 {offsets = [0, 32], sizes = [8, 32], strides = [1, 1]} : vector<8x64xf32> to vector<8x32xf32>
    %363 = vector.extract_strided_slice %352 {offsets = [0, 0], sizes = [8, 32], strides = [1, 1]} : vector<8x64xf32> to vector<8x32xf32>
    %cst_138 = arith.constant 0.000000e+00 : f32
    %364 = vector.broadcast %cst_138 : f32 to vector<8x32xf32>
    %365 = arith.maximumf %363, %364 : vector<8x32xf32>
    %366 = math.absf %363 : vector<8x32xf32>
    %cst_139 = arith.constant 0.000000e+00 : f32
    %367 = vector.broadcast %cst_139 : f32 to vector<8x32xf32>
    %368 = arith.subf %367, %366 : vector<8x32xf32>
    %369 = math.exp %368 : vector<8x32xf32>
    %370 = math.log1p %369 : vector<8x32xf32>
    %371 = arith.addf %365, %370 : vector<8x32xf32>
    %372 = vector.extract_strided_slice %352 {offsets = [0, 32], sizes = [8, 32], strides = [1, 1]} : vector<8x64xf32> to vector<8x32xf32>
    %373 = arith.index_cast %c3_i32 : i32 to index
    %c0_140 = arith.constant 0 : index
    %c0_141 = arith.constant 0 : index
    %374 = vector.load %arg3[%373, %c0_140, %c0_141] : memref<8x8x32xf32, #tpu.memory_space<vmem>>, vector<1x8x32xf32>
    %375 = vector.shape_cast %374 : vector<1x8x32xf32> to vector<8x32xf32>
    %376 = arith.mulf %361, %375 : vector<8x32xf32>
    %377 = arith.addf %362, %376 : vector<8x32xf32>
    %378 = arith.index_cast %c3_i32 : i32 to index
    %c0_142 = arith.constant 0 : index
    %c0_143 = arith.constant 0 : index
    %379 = vector.load %arg4[%378, %c0_142, %c0_143] : memref<8x8x32xf32, #tpu.memory_space<vmem>>, vector<1x8x32xf32>
    %380 = vector.shape_cast %379 : vector<1x8x32xf32> to vector<8x32xf32>
    %381 = arith.mulf %371, %380 : vector<8x32xf32>
    %382 = arith.addf %372, %381 : vector<8x32xf32>
    %383 = arith.index_cast %c3_i32 : i32 to index
    %c0_144 = arith.constant 0 : index
    %c0_145 = arith.constant 0 : index
    %384 = vector.load %arg11[%383, %c0_144, %c0_145] : memref<8x8x32xf32, #tpu.memory_space<vmem>>, vector<1x8x32xf32>
    %385 = vector.shape_cast %384 : vector<1x8x32xf32> to vector<8x32xf32>
    %386 = vector.shape_cast %377 : vector<8x32xf32> to vector<1x8x32xf32>
    tpu.vector_store %arg11[%383, %c0_144, %c0_145], %386 {strides = array<i32>} : memref<8x8x32xf32, #tpu.memory_space<vmem>>, vector<1x8x32xf32>,
    %387 = arith.index_cast %c3_i32 : i32 to index
    %c0_146 = arith.constant 0 : index
    %c0_147 = arith.constant 0 : index
    %388 = vector.load %arg12[%387, %c0_146, %c0_147] : memref<8x8x32xf32, #tpu.memory_space<vmem>>, vector<1x8x32xf32>
    %389 = vector.shape_cast %388 : vector<1x8x32xf32> to vector<8x32xf32>
    %390 = vector.shape_cast %382 : vector<8x32xf32> to vector<1x8x32xf32>
    tpu.vector_store %arg12[%387, %c0_146, %c0_147], %390 {strides = array<i32>} : memref<8x8x32xf32, #tpu.memory_space<vmem>>, vector<1x8x32xf32>,
    %391 = arith.index_cast %c3_i32 : i32 to index
    %c0_148 = arith.constant 0 : index
    %c0_149 = arith.constant 0 : index
    %392 = vector.load %arg13[%391, %c0_148, %c0_149] : memref<8x8x32xf32, #tpu.memory_space<vmem>>, vector<1x8x32xf32>
    %393 = vector.shape_cast %392 : vector<1x8x32xf32> to vector<8x32xf32>
    %394 = vector.shape_cast %362 : vector<8x32xf32> to vector<1x8x32xf32>
    tpu.vector_store %arg13[%391, %c0_148, %c0_149], %394 {strides = array<i32>} : memref<8x8x32xf32, #tpu.memory_space<vmem>>, vector<1x8x32xf32>,
    %395 = arith.index_cast %c3_i32 : i32 to index
    %c0_150 = arith.constant 0 : index
    %c0_151 = arith.constant 0 : index
    %396 = vector.load %arg14[%395, %c0_150, %c0_151] : memref<8x8x32xf32, #tpu.memory_space<vmem>>, vector<1x8x32xf32>
    %397 = vector.shape_cast %396 : vector<1x8x32xf32> to vector<8x32xf32>
    %398 = vector.shape_cast %361 : vector<8x32xf32> to vector<1x8x32xf32>
    tpu.vector_store %arg14[%395, %c0_150, %c0_151], %398 {strides = array<i32>} : memref<8x8x32xf32, #tpu.memory_space<vmem>>, vector<1x8x32xf32>,
    %399 = arith.index_cast %c3_i32 : i32 to index
    %c0_152 = arith.constant 0 : index
    %c0_153 = arith.constant 0 : index
    %400 = vector.load %arg15[%399, %c0_152, %c0_153] : memref<8x8x32xf32, #tpu.memory_space<vmem>>, vector<1x8x32xf32>
    %401 = vector.shape_cast %400 : vector<1x8x32xf32> to vector<8x32xf32>
    %402 = vector.shape_cast %372 : vector<8x32xf32> to vector<1x8x32xf32>
    tpu.vector_store %arg15[%399, %c0_152, %c0_153], %402 {strides = array<i32>} : memref<8x8x32xf32, #tpu.memory_space<vmem>>, vector<1x8x32xf32>,
    %403 = arith.index_cast %c3_i32 : i32 to index
    %c0_154 = arith.constant 0 : index
    %c0_155 = arith.constant 0 : index
    %404 = vector.load %arg16[%403, %c0_154, %c0_155] : memref<8x8x32xf32, #tpu.memory_space<vmem>>, vector<1x8x32xf32>
    %405 = vector.shape_cast %404 : vector<1x8x32xf32> to vector<8x32xf32>
    %406 = vector.shape_cast %371 : vector<8x32xf32> to vector<1x8x32xf32>
    tpu.vector_store %arg16[%403, %c0_154, %c0_155], %406 {strides = array<i32>} : memref<8x8x32xf32, #tpu.memory_space<vmem>>, vector<1x8x32xf32>,
    %c4_i32 = arith.constant 4 : i32
    %407 = arith.index_cast %c4_i32 : i32 to index
    %c0_156 = arith.constant 0 : index
    %c0_157 = arith.constant 0 : index
    %408 = vector.load %arg2[%407, %c0_156, %c0_157] : memref<8x8x128xf32, #tpu.memory_space<vmem>>, vector<1x8x128xf32>
    %409 = vector.shape_cast %408 : vector<1x8x128xf32> to vector<8x128xf32>
    %c0_158 = arith.constant 0 : index
    %c0_159 = arith.constant 0 : index
    %410 = vector.load %arg7[%c0_158, %c0_159] : memref<32x128xf32, #tpu.memory_space<vmem>>, vector<32x128xf32>
    %cst_160 = arith.constant dense<0.000000e+00> : vector<8x128xf32>
    %411 = tpu.matmul %377, %410, %cst_160 {dimension_numbers = #tpu.dot_dimension_numbers<[1], [0], [0], [1], [0, 0, 1, 1], [], []>} : vector<8x32xf32>, vector<32x128xf32>, vector<8x128xf32> -> vector<8x128xf32>
    %412 = arith.addf %409, %411 : vector<8x128xf32>
    %413 = vector.extract_strided_slice %412 {offsets = [0, 0], sizes = [8, 32], strides = [1, 1]} : vector<8x128xf32> to vector<8x32xf32>
    %cst_161 = arith.constant 5.000000e-01 : f32
    %414 = vector.broadcast %cst_161 : f32 to vector<8x32xf32>
    %415 = arith.mulf %414, %413 : vector<8x32xf32>
    %416 = math.tanh %415 : vector<8x32xf32>
    %cst_162 = arith.constant 1.000000e+00 : f32
    %417 = vector.broadcast %cst_162 : f32 to vector<8x32xf32>
    %418 = arith.addf %416, %417 : vector<8x32xf32>
    %cst_163 = arith.constant 5.000000e-01 : f32
    %419 = vector.broadcast %cst_163 : f32 to vector<8x32xf32>
    %420 = arith.mulf %419, %418 : vector<8x32xf32>
    %421 = vector.extract_strided_slice %412 {offsets = [0, 32], sizes = [8, 32], strides = [1, 1]} : vector<8x128xf32> to vector<8x32xf32>
    %cst_164 = arith.constant 5.000000e-01 : f32
    %422 = vector.broadcast %cst_164 : f32 to vector<8x32xf32>
    %423 = arith.mulf %422, %421 : vector<8x32xf32>
    %424 = math.tanh %423 : vector<8x32xf32>
    %cst_165 = arith.constant 1.000000e+00 : f32
    %425 = vector.broadcast %cst_165 : f32 to vector<8x32xf32>
    %426 = arith.addf %424, %425 : vector<8x32xf32>
    %cst_166 = arith.constant 5.000000e-01 : f32
    %427 = vector.broadcast %cst_166 : f32 to vector<8x32xf32>
    %428 = arith.mulf %427, %426 : vector<8x32xf32>
    %429 = vector.extract_strided_slice %412 {offsets = [0, 64], sizes = [8, 32], strides = [1, 1]} : vector<8x128xf32> to vector<8x32xf32>
    %430 = math.tanh %429 : vector<8x32xf32>
    %431 = vector.extract_strided_slice %412 {offsets = [0, 96], sizes = [8, 32], strides = [1, 1]} : vector<8x128xf32> to vector<8x32xf32>
    %cst_167 = arith.constant 5.000000e-01 : f32
    %432 = vector.broadcast %cst_167 : f32 to vector<8x32xf32>
    %433 = arith.mulf %432, %431 : vector<8x32xf32>
    %434 = math.tanh %433 : vector<8x32xf32>
    %cst_168 = arith.constant 1.000000e+00 : f32
    %435 = vector.broadcast %cst_168 : f32 to vector<8x32xf32>
    %436 = arith.addf %434, %435 : vector<8x32xf32>
    %cst_169 = arith.constant 5.000000e-01 : f32
    %437 = vector.broadcast %cst_169 : f32 to vector<8x32xf32>
    %438 = arith.mulf %437, %436 : vector<8x32xf32>
    %439 = arith.mulf %428, %382 : vector<8x32xf32>
    %440 = arith.mulf %420, %430 : vector<8x32xf32>
    %441 = arith.addf %439, %440 : vector<8x32xf32>
    %442 = math.tanh %441 : vector<8x32xf32>
    %443 = arith.mulf %438, %442 : vector<8x32xf32>
    %444 = tpu.concatenate %443, %441 in 0 : vector<8x32xf32>, vector<8x32xf32> -> vector<16x32xf32>
    %c0_170 = arith.constant 0 : index
    %c0_171 = arith.constant 0 : index
    %445 = vector.load %arg8[%c0_170, %c0_171] : memref<32x128xf32, #tpu.memory_space<vmem>>, vector<32x128xf32>
    %cst_172 = arith.constant dense<0.000000e+00> : vector<16x128xf32>
    %446 = tpu.matmul %444, %445, %cst_172 {dimension_numbers = #tpu.dot_dimension_numbers<[1], [0], [0], [1], [0, 0, 1, 1], [], []>} : vector<16x32xf32>, vector<32x128xf32>, vector<16x128xf32> -> vector<16x128xf32>
    %447 = vector.extract_strided_slice %446 {offsets = [0, 0], sizes = [8, 64], strides = [1, 1]} : vector<16x128xf32> to vector<8x64xf32>
    %448 = vector.broadcast %3 : vector<1x64xf32> to vector<8x64xf32>
    %449 = arith.addf %447, %448 : vector<8x64xf32>
    %450 = vector.extract_strided_slice %446 {offsets = [8, 64], sizes = [8, 64], strides = [1, 1]} : vector<16x128xf32> to vector<8x64xf32>
    %451 = vector.broadcast %4 : vector<1x64xf32> to vector<8x64xf32>
    %452 = arith.addf %450, %451 : vector<8x64xf32>
    %453 = vector.extract_strided_slice %449 {offsets = [0, 0], sizes = [8, 32], strides = [1, 1]} : vector<8x64xf32> to vector<8x32xf32>
    %cst_173 = arith.constant 0.000000e+00 : f32
    %454 = vector.broadcast %cst_173 : f32 to vector<8x32xf32>
    %455 = arith.maximumf %453, %454 : vector<8x32xf32>
    %456 = math.absf %453 : vector<8x32xf32>
    %cst_174 = arith.constant 0.000000e+00 : f32
    %457 = vector.broadcast %cst_174 : f32 to vector<8x32xf32>
    %458 = arith.subf %457, %456 : vector<8x32xf32>
    %459 = math.exp %458 : vector<8x32xf32>
    %460 = math.log1p %459 : vector<8x32xf32>
    %461 = arith.addf %455, %460 : vector<8x32xf32>
    %462 = vector.extract_strided_slice %449 {offsets = [0, 32], sizes = [8, 32], strides = [1, 1]} : vector<8x64xf32> to vector<8x32xf32>
    %463 = vector.extract_strided_slice %452 {offsets = [0, 0], sizes = [8, 32], strides = [1, 1]} : vector<8x64xf32> to vector<8x32xf32>
    %cst_175 = arith.constant 0.000000e+00 : f32
    %464 = vector.broadcast %cst_175 : f32 to vector<8x32xf32>
    %465 = arith.maximumf %463, %464 : vector<8x32xf32>
    %466 = math.absf %463 : vector<8x32xf32>
    %cst_176 = arith.constant 0.000000e+00 : f32
    %467 = vector.broadcast %cst_176 : f32 to vector<8x32xf32>
    %468 = arith.subf %467, %466 : vector<8x32xf32>
    %469 = math.exp %468 : vector<8x32xf32>
    %470 = math.log1p %469 : vector<8x32xf32>
    %471 = arith.addf %465, %470 : vector<8x32xf32>
    %472 = vector.extract_strided_slice %452 {offsets = [0, 32], sizes = [8, 32], strides = [1, 1]} : vector<8x64xf32> to vector<8x32xf32>
    %473 = arith.index_cast %c4_i32 : i32 to index
    %c0_177 = arith.constant 0 : index
    %c0_178 = arith.constant 0 : index
    %474 = vector.load %arg3[%473, %c0_177, %c0_178] : memref<8x8x32xf32, #tpu.memory_space<vmem>>, vector<1x8x32xf32>
    %475 = vector.shape_cast %474 : vector<1x8x32xf32> to vector<8x32xf32>
    %476 = arith.mulf %461, %475 : vector<8x32xf32>
    %477 = arith.addf %462, %476 : vector<8x32xf32>
    %478 = arith.index_cast %c4_i32 : i32 to index
    %c0_179 = arith.constant 0 : index
    %c0_180 = arith.constant 0 : index
    %479 = vector.load %arg4[%478, %c0_179, %c0_180] : memref<8x8x32xf32, #tpu.memory_space<vmem>>, vector<1x8x32xf32>
    %480 = vector.shape_cast %479 : vector<1x8x32xf32> to vector<8x32xf32>
    %481 = arith.mulf %471, %480 : vector<8x32xf32>
    %482 = arith.addf %472, %481 : vector<8x32xf32>
    %483 = arith.index_cast %c4_i32 : i32 to index
    %c0_181 = arith.constant 0 : index
    %c0_182 = arith.constant 0 : index
    %484 = vector.load %arg11[%483, %c0_181, %c0_182] : memref<8x8x32xf32, #tpu.memory_space<vmem>>, vector<1x8x32xf32>
    %485 = vector.shape_cast %484 : vector<1x8x32xf32> to vector<8x32xf32>
    %486 = vector.shape_cast %477 : vector<8x32xf32> to vector<1x8x32xf32>
    tpu.vector_store %arg11[%483, %c0_181, %c0_182], %486 {strides = array<i32>} : memref<8x8x32xf32, #tpu.memory_space<vmem>>, vector<1x8x32xf32>,
    %487 = arith.index_cast %c4_i32 : i32 to index
    %c0_183 = arith.constant 0 : index
    %c0_184 = arith.constant 0 : index
    %488 = vector.load %arg12[%487, %c0_183, %c0_184] : memref<8x8x32xf32, #tpu.memory_space<vmem>>, vector<1x8x32xf32>
    %489 = vector.shape_cast %488 : vector<1x8x32xf32> to vector<8x32xf32>
    %490 = vector.shape_cast %482 : vector<8x32xf32> to vector<1x8x32xf32>
    tpu.vector_store %arg12[%487, %c0_183, %c0_184], %490 {strides = array<i32>} : memref<8x8x32xf32, #tpu.memory_space<vmem>>, vector<1x8x32xf32>,
    %491 = arith.index_cast %c4_i32 : i32 to index
    %c0_185 = arith.constant 0 : index
    %c0_186 = arith.constant 0 : index
    %492 = vector.load %arg13[%491, %c0_185, %c0_186] : memref<8x8x32xf32, #tpu.memory_space<vmem>>, vector<1x8x32xf32>
    %493 = vector.shape_cast %492 : vector<1x8x32xf32> to vector<8x32xf32>
    %494 = vector.shape_cast %462 : vector<8x32xf32> to vector<1x8x32xf32>
    tpu.vector_store %arg13[%491, %c0_185, %c0_186], %494 {strides = array<i32>} : memref<8x8x32xf32, #tpu.memory_space<vmem>>, vector<1x8x32xf32>,
    %495 = arith.index_cast %c4_i32 : i32 to index
    %c0_187 = arith.constant 0 : index
    %c0_188 = arith.constant 0 : index
    %496 = vector.load %arg14[%495, %c0_187, %c0_188] : memref<8x8x32xf32, #tpu.memory_space<vmem>>, vector<1x8x32xf32>
    %497 = vector.shape_cast %496 : vector<1x8x32xf32> to vector<8x32xf32>
    %498 = vector.shape_cast %461 : vector<8x32xf32> to vector<1x8x32xf32>
    tpu.vector_store %arg14[%495, %c0_187, %c0_188], %498 {strides = array<i32>} : memref<8x8x32xf32, #tpu.memory_space<vmem>>, vector<1x8x32xf32>,
    %499 = arith.index_cast %c4_i32 : i32 to index
    %c0_189 = arith.constant 0 : index
    %c0_190 = arith.constant 0 : index
    %500 = vector.load %arg15[%499, %c0_189, %c0_190] : memref<8x8x32xf32, #tpu.memory_space<vmem>>, vector<1x8x32xf32>
    %501 = vector.shape_cast %500 : vector<1x8x32xf32> to vector<8x32xf32>
    %502 = vector.shape_cast %472 : vector<8x32xf32> to vector<1x8x32xf32>
    tpu.vector_store %arg15[%499, %c0_189, %c0_190], %502 {strides = array<i32>} : memref<8x8x32xf32, #tpu.memory_space<vmem>>, vector<1x8x32xf32>,
    %503 = arith.index_cast %c4_i32 : i32 to index
    %c0_191 = arith.constant 0 : index
    %c0_192 = arith.constant 0 : index
    %504 = vector.load %arg16[%503, %c0_191, %c0_192] : memref<8x8x32xf32, #tpu.memory_space<vmem>>, vector<1x8x32xf32>
    %505 = vector.shape_cast %504 : vector<1x8x32xf32> to vector<8x32xf32>
    %506 = vector.shape_cast %471 : vector<8x32xf32> to vector<1x8x32xf32>
    tpu.vector_store %arg16[%503, %c0_191, %c0_192], %506 {strides = array<i32>} : memref<8x8x32xf32, #tpu.memory_space<vmem>>, vector<1x8x32xf32>,
    %c5_i32 = arith.constant 5 : i32
    %507 = arith.index_cast %c5_i32 : i32 to index
    %c0_193 = arith.constant 0 : index
    %c0_194 = arith.constant 0 : index
    %508 = vector.load %arg2[%507, %c0_193, %c0_194] : memref<8x8x128xf32, #tpu.memory_space<vmem>>, vector<1x8x128xf32>
    %509 = vector.shape_cast %508 : vector<1x8x128xf32> to vector<8x128xf32>
    %c0_195 = arith.constant 0 : index
    %c0_196 = arith.constant 0 : index
    %510 = vector.load %arg7[%c0_195, %c0_196] : memref<32x128xf32, #tpu.memory_space<vmem>>, vector<32x128xf32>
    %cst_197 = arith.constant dense<0.000000e+00> : vector<8x128xf32>
    %511 = tpu.matmul %477, %510, %cst_197 {dimension_numbers = #tpu.dot_dimension_numbers<[1], [0], [0], [1], [0, 0, 1, 1], [], []>} : vector<8x32xf32>, vector<32x128xf32>, vector<8x128xf32> -> vector<8x128xf32>
    %512 = arith.addf %509, %511 : vector<8x128xf32>
    %513 = vector.extract_strided_slice %512 {offsets = [0, 0], sizes = [8, 32], strides = [1, 1]} : vector<8x128xf32> to vector<8x32xf32>
    %cst_198 = arith.constant 5.000000e-01 : f32
    %514 = vector.broadcast %cst_198 : f32 to vector<8x32xf32>
    %515 = arith.mulf %514, %513 : vector<8x32xf32>
    %516 = math.tanh %515 : vector<8x32xf32>
    %cst_199 = arith.constant 1.000000e+00 : f32
    %517 = vector.broadcast %cst_199 : f32 to vector<8x32xf32>
    %518 = arith.addf %516, %517 : vector<8x32xf32>
    %cst_200 = arith.constant 5.000000e-01 : f32
    %519 = vector.broadcast %cst_200 : f32 to vector<8x32xf32>
    %520 = arith.mulf %519, %518 : vector<8x32xf32>
    %521 = vector.extract_strided_slice %512 {offsets = [0, 32], sizes = [8, 32], strides = [1, 1]} : vector<8x128xf32> to vector<8x32xf32>
    %cst_201 = arith.constant 5.000000e-01 : f32
    %522 = vector.broadcast %cst_201 : f32 to vector<8x32xf32>
    %523 = arith.mulf %522, %521 : vector<8x32xf32>
    %524 = math.tanh %523 : vector<8x32xf32>
    %cst_202 = arith.constant 1.000000e+00 : f32
    %525 = vector.broadcast %cst_202 : f32 to vector<8x32xf32>
    %526 = arith.addf %524, %525 : vector<8x32xf32>
    %cst_203 = arith.constant 5.000000e-01 : f32
    %527 = vector.broadcast %cst_203 : f32 to vector<8x32xf32>
    %528 = arith.mulf %527, %526 : vector<8x32xf32>
    %529 = vector.extract_strided_slice %512 {offsets = [0, 64], sizes = [8, 32], strides = [1, 1]} : vector<8x128xf32> to vector<8x32xf32>
    %530 = math.tanh %529 : vector<8x32xf32>
    %531 = vector.extract_strided_slice %512 {offsets = [0, 96], sizes = [8, 32], strides = [1, 1]} : vector<8x128xf32> to vector<8x32xf32>
    %cst_204 = arith.constant 5.000000e-01 : f32
    %532 = vector.broadcast %cst_204 : f32 to vector<8x32xf32>
    %533 = arith.mulf %532, %531 : vector<8x32xf32>
    %534 = math.tanh %533 : vector<8x32xf32>
    %cst_205 = arith.constant 1.000000e+00 : f32
    %535 = vector.broadcast %cst_205 : f32 to vector<8x32xf32>
    %536 = arith.addf %534, %535 : vector<8x32xf32>
    %cst_206 = arith.constant 5.000000e-01 : f32
    %537 = vector.broadcast %cst_206 : f32 to vector<8x32xf32>
    %538 = arith.mulf %537, %536 : vector<8x32xf32>
    %539 = arith.mulf %528, %482 : vector<8x32xf32>
    %540 = arith.mulf %520, %530 : vector<8x32xf32>
    %541 = arith.addf %539, %540 : vector<8x32xf32>
    %542 = math.tanh %541 : vector<8x32xf32>
    %543 = arith.mulf %538, %542 : vector<8x32xf32>
    %544 = tpu.concatenate %543, %541 in 0 : vector<8x32xf32>, vector<8x32xf32> -> vector<16x32xf32>
    %c0_207 = arith.constant 0 : index
    %c0_208 = arith.constant 0 : index
    %545 = vector.load %arg8[%c0_207, %c0_208] : memref<32x128xf32, #tpu.memory_space<vmem>>, vector<32x128xf32>
    %cst_209 = arith.constant dense<0.000000e+00> : vector<16x128xf32>
    %546 = tpu.matmul %544, %545, %cst_209 {dimension_numbers = #tpu.dot_dimension_numbers<[1], [0], [0], [1], [0, 0, 1, 1], [], []>} : vector<16x32xf32>, vector<32x128xf32>, vector<16x128xf32> -> vector<16x128xf32>
    %547 = vector.extract_strided_slice %546 {offsets = [0, 0], sizes = [8, 64], strides = [1, 1]} : vector<16x128xf32> to vector<8x64xf32>
    %548 = vector.broadcast %3 : vector<1x64xf32> to vector<8x64xf32>
    %549 = arith.addf %547, %548 : vector<8x64xf32>
    %550 = vector.extract_strided_slice %546 {offsets = [8, 64], sizes = [8, 64], strides = [1, 1]} : vector<16x128xf32> to vector<8x64xf32>
    %551 = vector.broadcast %4 : vector<1x64xf32> to vector<8x64xf32>
    %552 = arith.addf %550, %551 : vector<8x64xf32>
    %553 = vector.extract_strided_slice %549 {offsets = [0, 0], sizes = [8, 32], strides = [1, 1]} : vector<8x64xf32> to vector<8x32xf32>
    %cst_210 = arith.constant 0.000000e+00 : f32
    %554 = vector.broadcast %cst_210 : f32 to vector<8x32xf32>
    %555 = arith.maximumf %553, %554 : vector<8x32xf32>
    %556 = math.absf %553 : vector<8x32xf32>
    %cst_211 = arith.constant 0.000000e+00 : f32
    %557 = vector.broadcast %cst_211 : f32 to vector<8x32xf32>
    %558 = arith.subf %557, %556 : vector<8x32xf32>
    %559 = math.exp %558 : vector<8x32xf32>
    %560 = math.log1p %559 : vector<8x32xf32>
    %561 = arith.addf %555, %560 : vector<8x32xf32>
    %562 = vector.extract_strided_slice %549 {offsets = [0, 32], sizes = [8, 32], strides = [1, 1]} : vector<8x64xf32> to vector<8x32xf32>
    %563 = vector.extract_strided_slice %552 {offsets = [0, 0], sizes = [8, 32], strides = [1, 1]} : vector<8x64xf32> to vector<8x32xf32>
    %cst_212 = arith.constant 0.000000e+00 : f32
    %564 = vector.broadcast %cst_212 : f32 to vector<8x32xf32>
    %565 = arith.maximumf %563, %564 : vector<8x32xf32>
    %566 = math.absf %563 : vector<8x32xf32>
    %cst_213 = arith.constant 0.000000e+00 : f32
    %567 = vector.broadcast %cst_213 : f32 to vector<8x32xf32>
    %568 = arith.subf %567, %566 : vector<8x32xf32>
    %569 = math.exp %568 : vector<8x32xf32>
    %570 = math.log1p %569 : vector<8x32xf32>
    %571 = arith.addf %565, %570 : vector<8x32xf32>
    %572 = vector.extract_strided_slice %552 {offsets = [0, 32], sizes = [8, 32], strides = [1, 1]} : vector<8x64xf32> to vector<8x32xf32>
    %573 = arith.index_cast %c5_i32 : i32 to index
    %c0_214 = arith.constant 0 : index
    %c0_215 = arith.constant 0 : index
    %574 = vector.load %arg3[%573, %c0_214, %c0_215] : memref<8x8x32xf32, #tpu.memory_space<vmem>>, vector<1x8x32xf32>
    %575 = vector.shape_cast %574 : vector<1x8x32xf32> to vector<8x32xf32>
    %576 = arith.mulf %561, %575 : vector<8x32xf32>
    %577 = arith.addf %562, %576 : vector<8x32xf32>
    %578 = arith.index_cast %c5_i32 : i32 to index
    %c0_216 = arith.constant 0 : index
    %c0_217 = arith.constant 0 : index
    %579 = vector.load %arg4[%578, %c0_216, %c0_217] : memref<8x8x32xf32, #tpu.memory_space<vmem>>, vector<1x8x32xf32>
    %580 = vector.shape_cast %579 : vector<1x8x32xf32> to vector<8x32xf32>
    %581 = arith.mulf %571, %580 : vector<8x32xf32>
    %582 = arith.addf %572, %581 : vector<8x32xf32>
    %583 = arith.index_cast %c5_i32 : i32 to index
    %c0_218 = arith.constant 0 : index
    %c0_219 = arith.constant 0 : index
    %584 = vector.load %arg11[%583, %c0_218, %c0_219] : memref<8x8x32xf32, #tpu.memory_space<vmem>>, vector<1x8x32xf32>
    %585 = vector.shape_cast %584 : vector<1x8x32xf32> to vector<8x32xf32>
    %586 = vector.shape_cast %577 : vector<8x32xf32> to vector<1x8x32xf32>
    tpu.vector_store %arg11[%583, %c0_218, %c0_219], %586 {strides = array<i32>} : memref<8x8x32xf32, #tpu.memory_space<vmem>>, vector<1x8x32xf32>,
    %587 = arith.index_cast %c5_i32 : i32 to index
    %c0_220 = arith.constant 0 : index
    %c0_221 = arith.constant 0 : index
    %588 = vector.load %arg12[%587, %c0_220, %c0_221] : memref<8x8x32xf32, #tpu.memory_space<vmem>>, vector<1x8x32xf32>
    %589 = vector.shape_cast %588 : vector<1x8x32xf32> to vector<8x32xf32>
    %590 = vector.shape_cast %582 : vector<8x32xf32> to vector<1x8x32xf32>
    tpu.vector_store %arg12[%587, %c0_220, %c0_221], %590 {strides = array<i32>} : memref<8x8x32xf32, #tpu.memory_space<vmem>>, vector<1x8x32xf32>,
    %591 = arith.index_cast %c5_i32 : i32 to index
    %c0_222 = arith.constant 0 : index
    %c0_223 = arith.constant 0 : index
    %592 = vector.load %arg13[%591, %c0_222, %c0_223] : memref<8x8x32xf32, #tpu.memory_space<vmem>>, vector<1x8x32xf32>
    %593 = vector.shape_cast %592 : vector<1x8x32xf32> to vector<8x32xf32>
    %594 = vector.shape_cast %562 : vector<8x32xf32> to vector<1x8x32xf32>
    tpu.vector_store %arg13[%591, %c0_222, %c0_223], %594 {strides = array<i32>} : memref<8x8x32xf32, #tpu.memory_space<vmem>>, vector<1x8x32xf32>,
    %595 = arith.index_cast %c5_i32 : i32 to index
    %c0_224 = arith.constant 0 : index
    %c0_225 = arith.constant 0 : index
    %596 = vector.load %arg14[%595, %c0_224, %c0_225] : memref<8x8x32xf32, #tpu.memory_space<vmem>>, vector<1x8x32xf32>
    %597 = vector.shape_cast %596 : vector<1x8x32xf32> to vector<8x32xf32>
    %598 = vector.shape_cast %561 : vector<8x32xf32> to vector<1x8x32xf32>
    tpu.vector_store %arg14[%595, %c0_224, %c0_225], %598 {strides = array<i32>} : memref<8x8x32xf32, #tpu.memory_space<vmem>>, vector<1x8x32xf32>,
    %599 = arith.index_cast %c5_i32 : i32 to index
    %c0_226 = arith.constant 0 : index
    %c0_227 = arith.constant 0 : index
    %600 = vector.load %arg15[%599, %c0_226, %c0_227] : memref<8x8x32xf32, #tpu.memory_space<vmem>>, vector<1x8x32xf32>
    %601 = vector.shape_cast %600 : vector<1x8x32xf32> to vector<8x32xf32>
    %602 = vector.shape_cast %572 : vector<8x32xf32> to vector<1x8x32xf32>
    tpu.vector_store %arg15[%599, %c0_226, %c0_227], %602 {strides = array<i32>} : memref<8x8x32xf32, #tpu.memory_space<vmem>>, vector<1x8x32xf32>,
    %603 = arith.index_cast %c5_i32 : i32 to index
    %c0_228 = arith.constant 0 : index
    %c0_229 = arith.constant 0 : index
    %604 = vector.load %arg16[%603, %c0_228, %c0_229] : memref<8x8x32xf32, #tpu.memory_space<vmem>>, vector<1x8x32xf32>
    %605 = vector.shape_cast %604 : vector<1x8x32xf32> to vector<8x32xf32>
    %606 = vector.shape_cast %571 : vector<8x32xf32> to vector<1x8x32xf32>
    tpu.vector_store %arg16[%603, %c0_228, %c0_229], %606 {strides = array<i32>} : memref<8x8x32xf32, #tpu.memory_space<vmem>>, vector<1x8x32xf32>,
    %c6_i32 = arith.constant 6 : i32
    %607 = arith.index_cast %c6_i32 : i32 to index
    %c0_230 = arith.constant 0 : index
    %c0_231 = arith.constant 0 : index
    %608 = vector.load %arg2[%607, %c0_230, %c0_231] : memref<8x8x128xf32, #tpu.memory_space<vmem>>, vector<1x8x128xf32>
    %609 = vector.shape_cast %608 : vector<1x8x128xf32> to vector<8x128xf32>
    %c0_232 = arith.constant 0 : index
    %c0_233 = arith.constant 0 : index
    %610 = vector.load %arg7[%c0_232, %c0_233] : memref<32x128xf32, #tpu.memory_space<vmem>>, vector<32x128xf32>
    %cst_234 = arith.constant dense<0.000000e+00> : vector<8x128xf32>
    %611 = tpu.matmul %577, %610, %cst_234 {dimension_numbers = #tpu.dot_dimension_numbers<[1], [0], [0], [1], [0, 0, 1, 1], [], []>} : vector<8x32xf32>, vector<32x128xf32>, vector<8x128xf32> -> vector<8x128xf32>
    %612 = arith.addf %609, %611 : vector<8x128xf32>
    %613 = vector.extract_strided_slice %612 {offsets = [0, 0], sizes = [8, 32], strides = [1, 1]} : vector<8x128xf32> to vector<8x32xf32>
    %cst_235 = arith.constant 5.000000e-01 : f32
    %614 = vector.broadcast %cst_235 : f32 to vector<8x32xf32>
    %615 = arith.mulf %614, %613 : vector<8x32xf32>
    %616 = math.tanh %615 : vector<8x32xf32>
    %cst_236 = arith.constant 1.000000e+00 : f32
    %617 = vector.broadcast %cst_236 : f32 to vector<8x32xf32>
    %618 = arith.addf %616, %617 : vector<8x32xf32>
    %cst_237 = arith.constant 5.000000e-01 : f32
    %619 = vector.broadcast %cst_237 : f32 to vector<8x32xf32>
    %620 = arith.mulf %619, %618 : vector<8x32xf32>
    %621 = vector.extract_strided_slice %612 {offsets = [0, 32], sizes = [8, 32], strides = [1, 1]} : vector<8x128xf32> to vector<8x32xf32>
    %cst_238 = arith.constant 5.000000e-01 : f32
    %622 = vector.broadcast %cst_238 : f32 to vector<8x32xf32>
    %623 = arith.mulf %622, %621 : vector<8x32xf32>
    %624 = math.tanh %623 : vector<8x32xf32>
    %cst_239 = arith.constant 1.000000e+00 : f32
    %625 = vector.broadcast %cst_239 : f32 to vector<8x32xf32>
    %626 = arith.addf %624, %625 : vector<8x32xf32>
    %cst_240 = arith.constant 5.000000e-01 : f32
    %627 = vector.broadcast %cst_240 : f32 to vector<8x32xf32>
    %628 = arith.mulf %627, %626 : vector<8x32xf32>
    %629 = vector.extract_strided_slice %612 {offsets = [0, 64], sizes = [8, 32], strides = [1, 1]} : vector<8x128xf32> to vector<8x32xf32>
    %630 = math.tanh %629 : vector<8x32xf32>
    %631 = vector.extract_strided_slice %612 {offsets = [0, 96], sizes = [8, 32], strides = [1, 1]} : vector<8x128xf32> to vector<8x32xf32>
    %cst_241 = arith.constant 5.000000e-01 : f32
    %632 = vector.broadcast %cst_241 : f32 to vector<8x32xf32>
    %633 = arith.mulf %632, %631 : vector<8x32xf32>
    %634 = math.tanh %633 : vector<8x32xf32>
    %cst_242 = arith.constant 1.000000e+00 : f32
    %635 = vector.broadcast %cst_242 : f32 to vector<8x32xf32>
    %636 = arith.addf %634, %635 : vector<8x32xf32>
    %cst_243 = arith.constant 5.000000e-01 : f32
    %637 = vector.broadcast %cst_243 : f32 to vector<8x32xf32>
    %638 = arith.mulf %637, %636 : vector<8x32xf32>
    %639 = arith.mulf %628, %582 : vector<8x32xf32>
    %640 = arith.mulf %620, %630 : vector<8x32xf32>
    %641 = arith.addf %639, %640 : vector<8x32xf32>
    %642 = math.tanh %641 : vector<8x32xf32>
    %643 = arith.mulf %638, %642 : vector<8x32xf32>
    %644 = tpu.concatenate %643, %641 in 0 : vector<8x32xf32>, vector<8x32xf32> -> vector<16x32xf32>
    %c0_244 = arith.constant 0 : index
    %c0_245 = arith.constant 0 : index
    %645 = vector.load %arg8[%c0_244, %c0_245] : memref<32x128xf32, #tpu.memory_space<vmem>>, vector<32x128xf32>
    %cst_246 = arith.constant dense<0.000000e+00> : vector<16x128xf32>
    %646 = tpu.matmul %644, %645, %cst_246 {dimension_numbers = #tpu.dot_dimension_numbers<[1], [0], [0], [1], [0, 0, 1, 1], [], []>} : vector<16x32xf32>, vector<32x128xf32>, vector<16x128xf32> -> vector<16x128xf32>
    %647 = vector.extract_strided_slice %646 {offsets = [0, 0], sizes = [8, 64], strides = [1, 1]} : vector<16x128xf32> to vector<8x64xf32>
    %648 = vector.broadcast %3 : vector<1x64xf32> to vector<8x64xf32>
    %649 = arith.addf %647, %648 : vector<8x64xf32>
    %650 = vector.extract_strided_slice %646 {offsets = [8, 64], sizes = [8, 64], strides = [1, 1]} : vector<16x128xf32> to vector<8x64xf32>
    %651 = vector.broadcast %4 : vector<1x64xf32> to vector<8x64xf32>
    %652 = arith.addf %650, %651 : vector<8x64xf32>
    %653 = vector.extract_strided_slice %649 {offsets = [0, 0], sizes = [8, 32], strides = [1, 1]} : vector<8x64xf32> to vector<8x32xf32>
    %cst_247 = arith.constant 0.000000e+00 : f32
    %654 = vector.broadcast %cst_247 : f32 to vector<8x32xf32>
    %655 = arith.maximumf %653, %654 : vector<8x32xf32>
    %656 = math.absf %653 : vector<8x32xf32>
    %cst_248 = arith.constant 0.000000e+00 : f32
    %657 = vector.broadcast %cst_248 : f32 to vector<8x32xf32>
    %658 = arith.subf %657, %656 : vector<8x32xf32>
    %659 = math.exp %658 : vector<8x32xf32>
    %660 = math.log1p %659 : vector<8x32xf32>
    %661 = arith.addf %655, %660 : vector<8x32xf32>
    %662 = vector.extract_strided_slice %649 {offsets = [0, 32], sizes = [8, 32], strides = [1, 1]} : vector<8x64xf32> to vector<8x32xf32>
    %663 = vector.extract_strided_slice %652 {offsets = [0, 0], sizes = [8, 32], strides = [1, 1]} : vector<8x64xf32> to vector<8x32xf32>
    %cst_249 = arith.constant 0.000000e+00 : f32
    %664 = vector.broadcast %cst_249 : f32 to vector<8x32xf32>
    %665 = arith.maximumf %663, %664 : vector<8x32xf32>
    %666 = math.absf %663 : vector<8x32xf32>
    %cst_250 = arith.constant 0.000000e+00 : f32
    %667 = vector.broadcast %cst_250 : f32 to vector<8x32xf32>
    %668 = arith.subf %667, %666 : vector<8x32xf32>
    %669 = math.exp %668 : vector<8x32xf32>
    %670 = math.log1p %669 : vector<8x32xf32>
    %671 = arith.addf %665, %670 : vector<8x32xf32>
    %672 = vector.extract_strided_slice %652 {offsets = [0, 32], sizes = [8, 32], strides = [1, 1]} : vector<8x64xf32> to vector<8x32xf32>
    %673 = arith.index_cast %c6_i32 : i32 to index
    %c0_251 = arith.constant 0 : index
    %c0_252 = arith.constant 0 : index
    %674 = vector.load %arg3[%673, %c0_251, %c0_252] : memref<8x8x32xf32, #tpu.memory_space<vmem>>, vector<1x8x32xf32>
    %675 = vector.shape_cast %674 : vector<1x8x32xf32> to vector<8x32xf32>
    %676 = arith.mulf %661, %675 : vector<8x32xf32>
    %677 = arith.addf %662, %676 : vector<8x32xf32>
    %678 = arith.index_cast %c6_i32 : i32 to index
    %c0_253 = arith.constant 0 : index
    %c0_254 = arith.constant 0 : index
    %679 = vector.load %arg4[%678, %c0_253, %c0_254] : memref<8x8x32xf32, #tpu.memory_space<vmem>>, vector<1x8x32xf32>
    %680 = vector.shape_cast %679 : vector<1x8x32xf32> to vector<8x32xf32>
    %681 = arith.mulf %671, %680 : vector<8x32xf32>
    %682 = arith.addf %672, %681 : vector<8x32xf32>
    %683 = arith.index_cast %c6_i32 : i32 to index
    %c0_255 = arith.constant 0 : index
    %c0_256 = arith.constant 0 : index
    %684 = vector.load %arg11[%683, %c0_255, %c0_256] : memref<8x8x32xf32, #tpu.memory_space<vmem>>, vector<1x8x32xf32>
    %685 = vector.shape_cast %684 : vector<1x8x32xf32> to vector<8x32xf32>
    %686 = vector.shape_cast %677 : vector<8x32xf32> to vector<1x8x32xf32>
    tpu.vector_store %arg11[%683, %c0_255, %c0_256], %686 {strides = array<i32>} : memref<8x8x32xf32, #tpu.memory_space<vmem>>, vector<1x8x32xf32>,
    %687 = arith.index_cast %c6_i32 : i32 to index
    %c0_257 = arith.constant 0 : index
    %c0_258 = arith.constant 0 : index
    %688 = vector.load %arg12[%687, %c0_257, %c0_258] : memref<8x8x32xf32, #tpu.memory_space<vmem>>, vector<1x8x32xf32>
    %689 = vector.shape_cast %688 : vector<1x8x32xf32> to vector<8x32xf32>
    %690 = vector.shape_cast %682 : vector<8x32xf32> to vector<1x8x32xf32>
    tpu.vector_store %arg12[%687, %c0_257, %c0_258], %690 {strides = array<i32>} : memref<8x8x32xf32, #tpu.memory_space<vmem>>, vector<1x8x32xf32>,
    %691 = arith.index_cast %c6_i32 : i32 to index
    %c0_259 = arith.constant 0 : index
    %c0_260 = arith.constant 0 : index
    %692 = vector.load %arg13[%691, %c0_259, %c0_260] : memref<8x8x32xf32, #tpu.memory_space<vmem>>, vector<1x8x32xf32>
    %693 = vector.shape_cast %692 : vector<1x8x32xf32> to vector<8x32xf32>
    %694 = vector.shape_cast %662 : vector<8x32xf32> to vector<1x8x32xf32>
    tpu.vector_store %arg13[%691, %c0_259, %c0_260], %694 {strides = array<i32>} : memref<8x8x32xf32, #tpu.memory_space<vmem>>, vector<1x8x32xf32>,
    %695 = arith.index_cast %c6_i32 : i32 to index
    %c0_261 = arith.constant 0 : index
    %c0_262 = arith.constant 0 : index
    %696 = vector.load %arg14[%695, %c0_261, %c0_262] : memref<8x8x32xf32, #tpu.memory_space<vmem>>, vector<1x8x32xf32>
    %697 = vector.shape_cast %696 : vector<1x8x32xf32> to vector<8x32xf32>
    %698 = vector.shape_cast %661 : vector<8x32xf32> to vector<1x8x32xf32>
    tpu.vector_store %arg14[%695, %c0_261, %c0_262], %698 {strides = array<i32>} : memref<8x8x32xf32, #tpu.memory_space<vmem>>, vector<1x8x32xf32>,
    %699 = arith.index_cast %c6_i32 : i32 to index
    %c0_263 = arith.constant 0 : index
    %c0_264 = arith.constant 0 : index
    %700 = vector.load %arg15[%699, %c0_263, %c0_264] : memref<8x8x32xf32, #tpu.memory_space<vmem>>, vector<1x8x32xf32>
    %701 = vector.shape_cast %700 : vector<1x8x32xf32> to vector<8x32xf32>
    %702 = vector.shape_cast %672 : vector<8x32xf32> to vector<1x8x32xf32>
    tpu.vector_store %arg15[%699, %c0_263, %c0_264], %702 {strides = array<i32>} : memref<8x8x32xf32, #tpu.memory_space<vmem>>, vector<1x8x32xf32>,
    %703 = arith.index_cast %c6_i32 : i32 to index
    %c0_265 = arith.constant 0 : index
    %c0_266 = arith.constant 0 : index
    %704 = vector.load %arg16[%703, %c0_265, %c0_266] : memref<8x8x32xf32, #tpu.memory_space<vmem>>, vector<1x8x32xf32>
    %705 = vector.shape_cast %704 : vector<1x8x32xf32> to vector<8x32xf32>
    %706 = vector.shape_cast %671 : vector<8x32xf32> to vector<1x8x32xf32>
    tpu.vector_store %arg16[%703, %c0_265, %c0_266], %706 {strides = array<i32>} : memref<8x8x32xf32, #tpu.memory_space<vmem>>, vector<1x8x32xf32>,
    %c7_i32 = arith.constant 7 : i32
    %707 = arith.index_cast %c7_i32 : i32 to index
    %c0_267 = arith.constant 0 : index
    %c0_268 = arith.constant 0 : index
    %708 = vector.load %arg2[%707, %c0_267, %c0_268] : memref<8x8x128xf32, #tpu.memory_space<vmem>>, vector<1x8x128xf32>
    %709 = vector.shape_cast %708 : vector<1x8x128xf32> to vector<8x128xf32>
    %c0_269 = arith.constant 0 : index
    %c0_270 = arith.constant 0 : index
    %710 = vector.load %arg7[%c0_269, %c0_270] : memref<32x128xf32, #tpu.memory_space<vmem>>, vector<32x128xf32>
    %cst_271 = arith.constant dense<0.000000e+00> : vector<8x128xf32>
    %711 = tpu.matmul %677, %710, %cst_271 {dimension_numbers = #tpu.dot_dimension_numbers<[1], [0], [0], [1], [0, 0, 1, 1], [], []>} : vector<8x32xf32>, vector<32x128xf32>, vector<8x128xf32> -> vector<8x128xf32>
    %712 = arith.addf %709, %711 : vector<8x128xf32>
    %713 = vector.extract_strided_slice %712 {offsets = [0, 0], sizes = [8, 32], strides = [1, 1]} : vector<8x128xf32> to vector<8x32xf32>
    %cst_272 = arith.constant 5.000000e-01 : f32
    %714 = vector.broadcast %cst_272 : f32 to vector<8x32xf32>
    %715 = arith.mulf %714, %713 : vector<8x32xf32>
    %716 = math.tanh %715 : vector<8x32xf32>
    %cst_273 = arith.constant 1.000000e+00 : f32
    %717 = vector.broadcast %cst_273 : f32 to vector<8x32xf32>
    %718 = arith.addf %716, %717 : vector<8x32xf32>
    %cst_274 = arith.constant 5.000000e-01 : f32
    %719 = vector.broadcast %cst_274 : f32 to vector<8x32xf32>
    %720 = arith.mulf %719, %718 : vector<8x32xf32>
    %721 = vector.extract_strided_slice %712 {offsets = [0, 32], sizes = [8, 32], strides = [1, 1]} : vector<8x128xf32> to vector<8x32xf32>
    %cst_275 = arith.constant 5.000000e-01 : f32
    %722 = vector.broadcast %cst_275 : f32 to vector<8x32xf32>
    %723 = arith.mulf %722, %721 : vector<8x32xf32>
    %724 = math.tanh %723 : vector<8x32xf32>
    %cst_276 = arith.constant 1.000000e+00 : f32
    %725 = vector.broadcast %cst_276 : f32 to vector<8x32xf32>
    %726 = arith.addf %724, %725 : vector<8x32xf32>
    %cst_277 = arith.constant 5.000000e-01 : f32
    %727 = vector.broadcast %cst_277 : f32 to vector<8x32xf32>
    %728 = arith.mulf %727, %726 : vector<8x32xf32>
    %729 = vector.extract_strided_slice %712 {offsets = [0, 64], sizes = [8, 32], strides = [1, 1]} : vector<8x128xf32> to vector<8x32xf32>
    %730 = math.tanh %729 : vector<8x32xf32>
    %731 = vector.extract_strided_slice %712 {offsets = [0, 96], sizes = [8, 32], strides = [1, 1]} : vector<8x128xf32> to vector<8x32xf32>
    %cst_278 = arith.constant 5.000000e-01 : f32
    %732 = vector.broadcast %cst_278 : f32 to vector<8x32xf32>
    %733 = arith.mulf %732, %731 : vector<8x32xf32>
    %734 = math.tanh %733 : vector<8x32xf32>
    %cst_279 = arith.constant 1.000000e+00 : f32
    %735 = vector.broadcast %cst_279 : f32 to vector<8x32xf32>
    %736 = arith.addf %734, %735 : vector<8x32xf32>
    %cst_280 = arith.constant 5.000000e-01 : f32
    %737 = vector.broadcast %cst_280 : f32 to vector<8x32xf32>
    %738 = arith.mulf %737, %736 : vector<8x32xf32>
    %739 = arith.mulf %728, %682 : vector<8x32xf32>
    %740 = arith.mulf %720, %730 : vector<8x32xf32>
    %741 = arith.addf %739, %740 : vector<8x32xf32>
    %742 = math.tanh %741 : vector<8x32xf32>
    %743 = arith.mulf %738, %742 : vector<8x32xf32>
    %744 = tpu.concatenate %743, %741 in 0 : vector<8x32xf32>, vector<8x32xf32> -> vector<16x32xf32>
    %c0_281 = arith.constant 0 : index
    %c0_282 = arith.constant 0 : index
    %745 = vector.load %arg8[%c0_281, %c0_282] : memref<32x128xf32, #tpu.memory_space<vmem>>, vector<32x128xf32>
    %cst_283 = arith.constant dense<0.000000e+00> : vector<16x128xf32>
    %746 = tpu.matmul %744, %745, %cst_283 {dimension_numbers = #tpu.dot_dimension_numbers<[1], [0], [0], [1], [0, 0, 1, 1], [], []>} : vector<16x32xf32>, vector<32x128xf32>, vector<16x128xf32> -> vector<16x128xf32>
    %747 = vector.extract_strided_slice %746 {offsets = [0, 0], sizes = [8, 64], strides = [1, 1]} : vector<16x128xf32> to vector<8x64xf32>
    %748 = vector.broadcast %3 : vector<1x64xf32> to vector<8x64xf32>
    %749 = arith.addf %747, %748 : vector<8x64xf32>
    %750 = vector.extract_strided_slice %746 {offsets = [8, 64], sizes = [8, 64], strides = [1, 1]} : vector<16x128xf32> to vector<8x64xf32>
    %751 = vector.broadcast %4 : vector<1x64xf32> to vector<8x64xf32>
    %752 = arith.addf %750, %751 : vector<8x64xf32>
    %753 = vector.extract_strided_slice %749 {offsets = [0, 0], sizes = [8, 32], strides = [1, 1]} : vector<8x64xf32> to vector<8x32xf32>
    %cst_284 = arith.constant 0.000000e+00 : f32
    %754 = vector.broadcast %cst_284 : f32 to vector<8x32xf32>
    %755 = arith.maximumf %753, %754 : vector<8x32xf32>
    %756 = math.absf %753 : vector<8x32xf32>
    %cst_285 = arith.constant 0.000000e+00 : f32
    %757 = vector.broadcast %cst_285 : f32 to vector<8x32xf32>
    %758 = arith.subf %757, %756 : vector<8x32xf32>
    %759 = math.exp %758 : vector<8x32xf32>
    %760 = math.log1p %759 : vector<8x32xf32>
    %761 = arith.addf %755, %760 : vector<8x32xf32>
    %762 = vector.extract_strided_slice %749 {offsets = [0, 32], sizes = [8, 32], strides = [1, 1]} : vector<8x64xf32> to vector<8x32xf32>
    %763 = vector.extract_strided_slice %752 {offsets = [0, 0], sizes = [8, 32], strides = [1, 1]} : vector<8x64xf32> to vector<8x32xf32>
    %cst_286 = arith.constant 0.000000e+00 : f32
    %764 = vector.broadcast %cst_286 : f32 to vector<8x32xf32>
    %765 = arith.maximumf %763, %764 : vector<8x32xf32>
    %766 = math.absf %763 : vector<8x32xf32>
    %cst_287 = arith.constant 0.000000e+00 : f32
    %767 = vector.broadcast %cst_287 : f32 to vector<8x32xf32>
    %768 = arith.subf %767, %766 : vector<8x32xf32>
    %769 = math.exp %768 : vector<8x32xf32>
    %770 = math.log1p %769 : vector<8x32xf32>
    %771 = arith.addf %765, %770 : vector<8x32xf32>
    %772 = vector.extract_strided_slice %752 {offsets = [0, 32], sizes = [8, 32], strides = [1, 1]} : vector<8x64xf32> to vector<8x32xf32>
    %773 = arith.index_cast %c7_i32 : i32 to index
    %c0_288 = arith.constant 0 : index
    %c0_289 = arith.constant 0 : index
    %774 = vector.load %arg3[%773, %c0_288, %c0_289] : memref<8x8x32xf32, #tpu.memory_space<vmem>>, vector<1x8x32xf32>
    %775 = vector.shape_cast %774 : vector<1x8x32xf32> to vector<8x32xf32>
    %776 = arith.mulf %761, %775 : vector<8x32xf32>
    %777 = arith.addf %762, %776 : vector<8x32xf32>
    %778 = arith.index_cast %c7_i32 : i32 to index
    %c0_290 = arith.constant 0 : index
    %c0_291 = arith.constant 0 : index
    %779 = vector.load %arg4[%778, %c0_290, %c0_291] : memref<8x8x32xf32, #tpu.memory_space<vmem>>, vector<1x8x32xf32>
    %780 = vector.shape_cast %779 : vector<1x8x32xf32> to vector<8x32xf32>
    %781 = arith.mulf %771, %780 : vector<8x32xf32>
    %782 = arith.addf %772, %781 : vector<8x32xf32>
    %783 = arith.index_cast %c7_i32 : i32 to index
    %c0_292 = arith.constant 0 : index
    %c0_293 = arith.constant 0 : index
    %784 = vector.load %arg11[%783, %c0_292, %c0_293] : memref<8x8x32xf32, #tpu.memory_space<vmem>>, vector<1x8x32xf32>
    %785 = vector.shape_cast %784 : vector<1x8x32xf32> to vector<8x32xf32>
    %786 = vector.shape_cast %777 : vector<8x32xf32> to vector<1x8x32xf32>
    tpu.vector_store %arg11[%783, %c0_292, %c0_293], %786 {strides = array<i32>} : memref<8x8x32xf32, #tpu.memory_space<vmem>>, vector<1x8x32xf32>,
    %787 = arith.index_cast %c7_i32 : i32 to index
    %c0_294 = arith.constant 0 : index
    %c0_295 = arith.constant 0 : index
    %788 = vector.load %arg12[%787, %c0_294, %c0_295] : memref<8x8x32xf32, #tpu.memory_space<vmem>>, vector<1x8x32xf32>
    %789 = vector.shape_cast %788 : vector<1x8x32xf32> to vector<8x32xf32>
    %790 = vector.shape_cast %782 : vector<8x32xf32> to vector<1x8x32xf32>
    tpu.vector_store %arg12[%787, %c0_294, %c0_295], %790 {strides = array<i32>} : memref<8x8x32xf32, #tpu.memory_space<vmem>>, vector<1x8x32xf32>,
    %791 = arith.index_cast %c7_i32 : i32 to index
    %c0_296 = arith.constant 0 : index
    %c0_297 = arith.constant 0 : index
    %792 = vector.load %arg13[%791, %c0_296, %c0_297] : memref<8x8x32xf32, #tpu.memory_space<vmem>>, vector<1x8x32xf32>
    %793 = vector.shape_cast %792 : vector<1x8x32xf32> to vector<8x32xf32>
    %794 = vector.shape_cast %762 : vector<8x32xf32> to vector<1x8x32xf32>
    tpu.vector_store %arg13[%791, %c0_296, %c0_297], %794 {strides = array<i32>} : memref<8x8x32xf32, #tpu.memory_space<vmem>>, vector<1x8x32xf32>,
    %795 = arith.index_cast %c7_i32 : i32 to index
    %c0_298 = arith.constant 0 : index
    %c0_299 = arith.constant 0 : index
    %796 = vector.load %arg14[%795, %c0_298, %c0_299] : memref<8x8x32xf32, #tpu.memory_space<vmem>>, vector<1x8x32xf32>
    %797 = vector.shape_cast %796 : vector<1x8x32xf32> to vector<8x32xf32>
    %798 = vector.shape_cast %761 : vector<8x32xf32> to vector<1x8x32xf32>
    tpu.vector_store %arg14[%795, %c0_298, %c0_299], %798 {strides = array<i32>} : memref<8x8x32xf32, #tpu.memory_space<vmem>>, vector<1x8x32xf32>,
    %799 = arith.index_cast %c7_i32 : i32 to index
    %c0_300 = arith.constant 0 : index
    %c0_301 = arith.constant 0 : index
    %800 = vector.load %arg15[%799, %c0_300, %c0_301] : memref<8x8x32xf32, #tpu.memory_space<vmem>>, vector<1x8x32xf32>
    %801 = vector.shape_cast %800 : vector<1x8x32xf32> to vector<8x32xf32>
    %802 = vector.shape_cast %772 : vector<8x32xf32> to vector<1x8x32xf32>
    tpu.vector_store %arg15[%799, %c0_300, %c0_301], %802 {strides = array<i32>} : memref<8x8x32xf32, #tpu.memory_space<vmem>>, vector<1x8x32xf32>,
    %803 = arith.index_cast %c7_i32 : i32 to index
    %c0_302 = arith.constant 0 : index
    %c0_303 = arith.constant 0 : index
    %804 = vector.load %arg16[%803, %c0_302, %c0_303] : memref<8x8x32xf32, #tpu.memory_space<vmem>>, vector<1x8x32xf32>
    %805 = vector.shape_cast %804 : vector<1x8x32xf32> to vector<8x32xf32>
    %806 = vector.shape_cast %771 : vector<8x32xf32> to vector<1x8x32xf32>
    tpu.vector_store %arg16[%803, %c0_302, %c0_303], %806 {strides = array<i32>} : memref<8x8x32xf32, #tpu.memory_space<vmem>>, vector<1x8x32xf32>,
    %c8_i32 = arith.constant 8 : i32
    %c0_304 = arith.constant 0 : index
    %c0_305 = arith.constant 0 : index
    %807 = vector.load %arg17[%c0_304, %c0_305] : memref<8x32xf32, #tpu.memory_space<vmem>>, vector<8x32xf32>
    tpu.vector_store %arg17[%c0_304, %c0_305], %777 {strides = array<i32>} : memref<8x32xf32, #tpu.memory_space<vmem>>, vector<8x32xf32>,
    %c0_306 = arith.constant 0 : index
    %c0_307 = arith.constant 0 : index
    %808 = vector.load %arg18[%c0_306, %c0_307] : memref<8x32xf32, #tpu.memory_space<vmem>>, vector<8x32xf32>
    tpu.vector_store %arg18[%c0_306, %c0_307], %782 {strides = array<i32>} : memref<8x32xf32, #tpu.memory_space<vmem>>, vector<8x32xf32>,
    return
  }
  func.func @transform_0(%arg0: i32, %arg1: i32) -> (i32, i32, i32) {
    %c0_i32 = arith.constant 0 : i32
    %c0_i32_0 = arith.constant 0 : i32
    return %arg1, %arg0, %c0_i32 : i32, i32, i32
  }
  func.func @transform_1(%arg0: i32, %arg1: i32) -> (i32, i32, i32) {
    %c0_i32 = arith.constant 0 : i32
    %c0_i32_0 = arith.constant 0 : i32
    return %arg1, %arg0, %c0_i32 : i32, i32, i32
  }
  func.func @transform_2(%arg0: i32, %arg1: i32) -> (i32, i32, i32) {
    %c0_i32 = arith.constant 0 : i32
    %c0_i32_0 = arith.constant 0 : i32
    return %arg1, %arg0, %c0_i32 : i32, i32, i32
  }
  func.func @transform_3(%arg0: i32, %arg1: i32) -> (i32, i32) {
    %c0_i32 = arith.constant 0 : i32
    %c0_i32_0 = arith.constant 0 : i32
    return %arg0, %c0_i32 : i32, i32
  }
  func.func @transform_4(%arg0: i32, %arg1: i32) -> (i32, i32) {
    %c0_i32 = arith.constant 0 : i32
    %c0_i32_0 = arith.constant 0 : i32
    return %arg0, %c0_i32 : i32, i32
  }
  func.func @transform_5(%arg0: i32, %arg1: i32) -> (i32, i32) {
    %c0_i32 = arith.constant 0 : i32
    %c0_i32_0 = arith.constant 0 : i32
    %c0_i32_1 = arith.constant 0 : i32
    return %c0_i32, %c0_i32_0 : i32, i32
  }
  func.func @transform_6(%arg0: i32, %arg1: i32) -> (i32, i32) {
    %c0_i32 = arith.constant 0 : i32
    %c0_i32_0 = arith.constant 0 : i32
    %c0_i32_1 = arith.constant 0 : i32
    return %c0_i32, %c0_i32_0 : i32, i32
  }
  func.func @transform_7(%arg0: i32, %arg1: i32) -> (i32, i32) {
    %c0_i32 = arith.constant 0 : i32
    %c0_i32_0 = arith.constant 0 : i32
    %c0_i32_1 = arith.constant 0 : i32
    return %c0_i32, %c0_i32_0 : i32, i32
  }
  func.func @transform_8(%arg0: i32, %arg1: i32) -> (i32, i32) {
    %c0_i32 = arith.constant 0 : i32
    %c0_i32_0 = arith.constant 0 : i32
    %c0_i32_1 = arith.constant 0 : i32
    return %c0_i32, %c0_i32_0 : i32, i32
  }
  func.func @transform_9(%arg0: i32, %arg1: i32) -> (i32, i32, i32) {
    %c0_i32 = arith.constant 0 : i32
    %c0_i32_0 = arith.constant 0 : i32
    return %arg1, %arg0, %c0_i32 : i32, i32, i32
  }
  func.func @transform_10(%arg0: i32, %arg1: i32) -> (i32, i32, i32) {
    %c0_i32 = arith.constant 0 : i32
    %c0_i32_0 = arith.constant 0 : i32
    return %arg1, %arg0, %c0_i32 : i32, i32, i32
  }
  func.func @transform_11(%arg0: i32, %arg1: i32) -> (i32, i32, i32) {
    %c0_i32 = arith.constant 0 : i32
    %c0_i32_0 = arith.constant 0 : i32
    return %arg1, %arg0, %c0_i32 : i32, i32, i32
  }
  func.func @transform_12(%arg0: i32, %arg1: i32) -> (i32, i32, i32) {
    %c0_i32 = arith.constant 0 : i32
    %c0_i32_0 = arith.constant 0 : i32
    return %arg1, %arg0, %c0_i32 : i32, i32, i32
  }
  func.func @transform_13(%arg0: i32, %arg1: i32) -> (i32, i32, i32) {
    %c0_i32 = arith.constant 0 : i32
    %c0_i32_0 = arith.constant 0 : i32
    return %arg1, %arg0, %c0_i32 : i32, i32, i32
  }
  func.func @transform_14(%arg0: i32, %arg1: i32) -> (i32, i32, i32) {
    %c0_i32 = arith.constant 0 : i32
    %c0_i32_0 = arith.constant 0 : i32
    return %arg1, %arg0, %c0_i32 : i32, i32, i32
  }
}

module attributes {stable_mosaic.version = 11 : i64} {
  func.func @rglstm_kernel(%arg0: i32, %arg1: i32, %arg2: memref<8x8x128xf32, #tpu.memory_space<vmem>>, %arg3: memref<8x8x32xf32, #tpu.memory_space<vmem>>, %arg4: memref<8x8x32xf32, #tpu.memory_space<vmem>>, %arg5: memref<8x32xf32, #tpu.memory_space<vmem>>, %arg6: memref<8x32xf32, #tpu.memory_space<vmem>>, %arg7: memref<32x128xf32, #tpu.memory_space<vmem>>, %arg8: memref<32x128xf32, #tpu.memory_space<vmem>>, %arg9: memref<1x64xf32, #tpu.memory_space<vmem>>, %arg10: memref<1x64xf32, #tpu.memory_space<vmem>>, %arg11: memref<8x8x32xf32, #tpu.memory_space<vmem>>, %arg12: memref<8x8x32xf32, #tpu.memory_space<vmem>>, %arg13: memref<8x8x32xf32, #tpu.memory_space<vmem>>, %arg14: memref<8x8x32xf32, #tpu.memory_space<vmem>>, %arg15: memref<8x8x32xf32, #tpu.memory_space<vmem>>, %arg16: memref<8x8x32xf32, #tpu.memory_space<vmem>>, %arg17: memref<8x32xf32, #tpu.memory_space<vmem>>, %arg18: memref<8x32xf32, #tpu.memory_space<vmem>>) attributes {dimension_semantics = [#tpu.dimension_semantics<parallel>, #tpu.dimension_semantics<arbitrary>], iteration_bounds = array<i64: 1, 1>, scalar_prefetch = 0 : i64, scratch_operands = 2 : i64, tpu.core_type = #tpu.core_type<tc>, window_params = [{transform_indices = @transform_0, window_bounds = array<i64: 8, 8, 128>}, {transform_indices = @transform_1, window_bounds = array<i64: 8, 8, 32>}, {transform_indices = @transform_2, window_bounds = array<i64: 8, 8, 32>}, {transform_indices = @transform_3, window_bounds = array<i64: 8, 32>}, {transform_indices = @transform_4, window_bounds = array<i64: 8, 32>}, {pipeline_mode = #tpu.pipeline_mode<synchronous>, transform_indices = @transform_5, window_bounds = array<i64: 32, 128>}, {pipeline_mode = #tpu.pipeline_mode<synchronous>, transform_indices = @transform_6, window_bounds = array<i64: 32, 128>}, {pipeline_mode = #tpu.pipeline_mode<synchronous>, transform_indices = @transform_7, window_bounds = array<i64: 1, 64>}, {pipeline_mode = #tpu.pipeline_mode<synchronous>, transform_indices = @transform_8, window_bounds = array<i64: 1, 64>}, {transform_indices = @transform_9, window_bounds = array<i64: 8, 8, 32>}, {transform_indices = @transform_10, window_bounds = array<i64: 8, 8, 32>}, {transform_indices = @transform_11, window_bounds = array<i64: 8, 8, 32>}, {transform_indices = @transform_12, window_bounds = array<i64: 8, 8, 32>}, {transform_indices = @transform_13, window_bounds = array<i64: 8, 8, 32>}, {transform_indices = @transform_14, window_bounds = array<i64: 8, 8, 32>}]} {
    %c0_i32 = arith.constant 0 : i32
    %0 = arith.cmpi eq, %arg1, %c0_i32 : i32
    %1 = arith.extui %0 : i1 to i32
    %c0_i32_0 = arith.constant 0 : i32
    %2 = arith.cmpi ne, %1, %c0_i32_0 : i32
    scf.if %2 {
      %c0_308 = arith.constant 0 : index
      %c0_309 = arith.constant 0 : index
      %809 = vector.load %arg5[%c0_308, %c0_309] : memref<8x32xf32, #tpu.memory_space<vmem>>, vector<8x32xf32>
      %c0_310 = arith.constant 0 : index
      %c0_311 = arith.constant 0 : index
      %810 = vector.load %arg17[%c0_310, %c0_311] : memref<8x32xf32, #tpu.memory_space<vmem>>, vector<8x32xf32>
      tpu.vector_store %arg17[%c0_310, %c0_311], %809 {strides = array<i32>} : memref<8x32xf32, #tpu.memory_space<vmem>>, vector<8x32xf32>,
      %c0_312 = arith.constant 0 : index
      %c0_313 = arith.constant 0 : index
      %811 = vector.load %arg6[%c0_312, %c0_313] : memref<8x32xf32, #tpu.memory_space<vmem>>, vector<8x32xf32>
      %c0_314 = arith.constant 0 : index
      %c0_315 = arith.constant 0 : index
      %812 = vector.load %arg18[%c0_314, %c0_315] : memref<8x32xf32, #tpu.memory_space<vmem>>, vector<8x32xf32>
      tpu.vector_store %arg18[%c0_314, %c0_315], %811 {strides = array<i32>} : memref<8x32xf32, #tpu.memory_space<vmem>>, vector<8x32xf32>,
    } else {
    }
    %c0 = arith.constant 0 : index
    %c0_1 = arith.constant 0 : index
    %3 = vector.load %arg9[%c0, %c0_1] : memref<1x64xf32, #tpu.memory_space<vmem>>, vector<1x64xf32>
    %c0_2 = arith.constant 0 : index
    %c0_3 = arith.constant 0 : index
    %4 = vector.load %arg10[%c0_2, %c0_3] : memref<1x64xf32, #tpu.memory_space<vmem>>, vector<1x64xf32>
    %c0_4 = arith.constant 0 : index
    %c0_5 = arith.constant 0 : index
    %5 = vector.load %arg17[%c0_4, %c0_5] : memref<8x32xf32, #tpu.memory_space<vmem>>, vector<8x32xf32>
    %c0_6 = arith.constant 0 : index
    %c0_7 = arith.constant 0 : index
    %6 = vector.load %arg18[%c0_6, %c0_7] : memref<8x32xf32, #tpu.memory_space<vmem>>, vector<8x32xf32>
    %c0_i32_8 = arith.constant 0 : i32
    %7 = arith.index_cast %c0_i32_8 : i32 to index
    %c0_9 = arith.constant 0 : index
    %c0_10 = arith.constant 0 : index
    %8 = vector.load %arg2[%7, %c0_9, %c0_10] : memref<8x8x128xf32, #tpu.memory_space<vmem>>, vector<1x8x128xf32>
    %9 = vector.shape_cast %8 : vector<1x8x128xf32> to vector<8x128xf32>
    %c0_11 = arith.constant 0 : index
    %c0_12 = arith.constant 0 : index
    %10 = vector.load %arg7[%c0_11, %c0_12] : memref<32x128xf32, #tpu.memory_space<vmem>>, vector<32x128xf32>
    %cst = arith.constant dense<0.000000e+00> : vector<8x128xf32>
    %11 = tpu.matmul %5, %10, %cst {dimension_numbers = #tpu.dot_dimension_numbers<[1], [0], [0], [1], [0, 0, 1, 1], [], []>} : vector<8x32xf32>, vector<32x128xf32>, vector<8x128xf32> -> vector<8x128xf32>
    %12 = arith.addf %9, %11 : vector<8x128xf32>
    %13 = vector.extract_strided_slice %12 {offsets = [0, 0], sizes = [8, 32], strides = [1, 1]} : vector<8x128xf32> to vector<8x32xf32>
    %cst_13 = arith.constant 5.000000e-01 : f32
    %14 = vector.broadcast %cst_13 : f32 to vector<8x32xf32>
    %15 = arith.mulf %14, %13 : vector<8x32xf32>
    %16 = math.tanh %15 : vector<8x32xf32>
    %cst_14 = arith.constant 1.000000e+00 : f32
    %17 = vector.broadcast %cst_14 : f32 to vector<8x32xf32>
    %18 = arith.addf %16, %17 : vector<8x32xf32>
    %cst_15 = arith.constant 5.000000e-01 : f32
    %19 = vector.broadcast %cst_15 : f32 to vector<8x32xf32>
    %20 = arith.mulf %19, %18 : vector<8x32xf32>
    %21 = vector.extract_strided_slice %12 {offsets = [0, 32], sizes = [8, 32], strides = [1, 1]} : vector<8x128xf32> to vector<8x32xf32>
    %cst_16 = arith.constant 5.000000e-01 : f32
    %22 = vector.broadcast %cst_16 : f32 to vector<8x32xf32>
    %23 = arith.mulf %22, %21 : vector<8x32xf32>
    %24 = math.tanh %23 : vector<8x32xf32>
    %cst_17 = arith.constant 1.000000e+00 : f32
    %25 = vector.broadcast %cst_17 : f32 to vector<8x32xf32>
    %26 = arith.addf %24, %25 : vector<8x32xf32>
    %cst_18 = arith.constant 5.000000e-01 : f32
    %27 = vector.broadcast %cst_18 : f32 to vector<8x32xf32>
    %28 = arith.mulf %27, %26 : vector<8x32xf32>
    %29 = vector.extract_strided_slice %12 {offsets = [0, 64], sizes = [8, 32], strides = [1, 1]} : vector<8x128xf32> to vector<8x32xf32>
    %30 = math.tanh %29 : vector<8x32xf32>
    %31 = vector.extract_strided_slice %12 {offsets = [0, 96], sizes = [8, 32], strides = [1, 1]} : vector<8x128xf32> to vector<8x32xf32>
    %cst_19 = arith.constant 5.000000e-01 : f32
    %32 = vector.broadcast %cst_19 : f32 to vector<8x32xf32>
    %33 = arith.mulf %32, %31 : vector<8x32xf32>
    %34 = math.tanh %33 : vector<8x32xf32>
    %cst_20 = arith.constant 1.000000e+00 : f32
    %35 = vector.broadcast %cst_20 : f32 to vector<8x32xf32>
    %36 = arith.addf %34, %35 : vector<8x32xf32>
    %cst_21 = arith.constant 5.000000e-01 : f32
    %37 = vector.broadcast %cst_21 : f32 to vector<8x32xf32>
    %38 = arith.mulf %37, %36 : vector<8x32xf32>
    %39 = arith.mulf %28, %6 : vector<8x32xf32>
    %40 = arith.mulf %20, %30 : vector<8x32xf32>
    %41 = arith.addf %39, %40 : vector<8x32xf32>
    %42 = math.tanh %41 : vector<8x32xf32>
    %43 = arith.mulf %38, %42 : vector<8x32xf32>
    %44 = tpu.concatenate %43, %41 in 0 : vector<8x32xf32>, vector<8x32xf32> -> vector<16x32xf32>
    %c0_22 = arith.constant 0 : index
    %c0_23 = arith.constant 0 : index
    %45 = vector.load %arg8[%c0_22, %c0_23] : memref<32x128xf32, #tpu.memory_space<vmem>>, vector<32x128xf32>
    %cst_24 = arith.constant dense<0.000000e+00> : vector<16x128xf32>
    %46 = tpu.matmul %44, %45, %cst_24 {dimension_numbers = #tpu.dot_dimension_numbers<[1], [0], [0], [1], [0, 0, 1, 1], [], []>} : vector<16x32xf32>, vector<32x128xf32>, vector<16x128xf32> -> vector<16x128xf32>
    %47 = vector.extract_strided_slice %46 {offsets = [0, 0], sizes = [8, 64], strides = [1, 1]} : vector<16x128xf32> to vector<8x64xf32>
    %48 = vector.broadcast %3 : vector<1x64xf32> to vector<8x64xf32>
    %49 = arith.addf %47, %48 : vector<8x64xf32>
    %50 = vector.extract_strided_slice %46 {offsets = [8, 64], sizes = [8, 64], strides = [1, 1]} : vector<16x128xf32> to vector<8x64xf32>
    %51 = vector.broadcast %4 : vector<1x64xf32> to vector<8x64xf32>
    %52 = arith.addf %50, %51 : vector<8x64xf32>
    %53 = vector.extract_strided_slice %49 {offsets = [0, 0], sizes = [8, 32], strides = [1, 1]} : vector<8x64xf32> to vector<8x32xf32>
    %cst_25 = arith.constant 0.000000e+00 : f32
    %54 = vector.broadcast %cst_25 : f32 to vector<8x32xf32>
    %55 = arith.maximumf %53, %54 : vector<8x32xf32>
    %56 = math.absf %53 : vector<8x32xf32>
    %cst_26 = arith.constant 0.000000e+00 : f32
    %57 = vector.broadcast %cst_26 : f32 to vector<8x32xf32>
    %58 = arith.subf %57, %56 : vector<8x32xf32>
    %59 = math.exp %58 : vector<8x32xf32>
    %60 = math.log1p %59 : vector<8x32xf32>
    %61 = arith.addf %55, %60 : vector<8x32xf32>
    %62 = vector.extract_strided_slice %49 {offsets = [0, 32], sizes = [8, 32], strides = [1, 1]} : vector<8x64xf32> to vector<8x32xf32>
    %63 = vector.extract_strided_slice %52 {offsets = [0, 0], sizes = [8, 32], strides = [1, 1]} : vector<8x64xf32> to vector<8x32xf32>
    %cst_27 = arith.constant 0.000000e+00 : f32
    %64 = vector.broadcast %cst_27 : f32 to vector<8x32xf32>
    %65 = arith.maximumf %63, %64 : vector<8x32xf32>
    %66 = math.absf %63 : vector<8x32xf32>
    %cst_28 = arith.constant 0.000000e+00 : f32
    %67 = vector.broadcast %cst_28 : f32 to vector<8x32xf32>
    %68 = arith.subf %67, %66 : vector<8x32xf32>
    %69 = math.exp %68 : vector<8x32xf32>
    %70 = math.log1p %69 : vector<8x32xf32>
    %71 = arith.addf %65, %70 : vector<8x32xf32>
    %72 = vector.extract_strided_slice %52 {offsets = [0, 32], sizes = [8, 32], strides = [1, 1]} : vector<8x64xf32> to vector<8x32xf32>
    %73 = arith.index_cast %c0_i32_8 : i32 to index
    %c0_29 = arith.constant 0 : index
    %c0_30 = arith.constant 0 : index
    %74 = vector.load %arg3[%73, %c0_29, %c0_30] : memref<8x8x32xf32, #tpu.memory_space<vmem>>, vector<1x8x32xf32>
    %75 = vector.shape_cast %74 : vector<1x8x32xf32> to vector<8x32xf32>
    %76 = arith.mulf %61, %75 : vector<8x32xf32>
    %77 = arith.addf %62, %76 : vector<8x32xf32>
    %78 = arith.index_cast %c0_i32_8 : i32 to index
    %c0_31 = arith.constant 0 : index
    %c0_32 = arith.constant 0 : index
    %79 = vector.load %arg4[%78, %c0_31, %c0_32] : memref<8x8x32xf32, #tpu.memory_space<vmem>>, vector<1x8x32xf32>
    %80 = vector.shape_cast %79 : vector<1x8x32xf32> to vector<8x32xf32>
    %81 = arith.mulf %71, %80 : vector<8x32xf32>
    %82 = arith.addf %72, %81 : vector<8x32xf32>
    %83 = arith.index_cast %c0_i32_8 : i32 to index
    %c0_33 = arith.constant 0 : index
    %c0_34 = arith.constant 0 : index
    %84 = vector.load %arg11[%83, %c0_33, %c0_34] : memref<8x8x32xf32, #tpu.memory_space<vmem>>, vector<1x8x32xf32>
    %85 = vector.shape_cast %84 : vector<1x8x32xf32> to vector<8x32xf32>
    %86 = vector.shape_cast %77 : vector<8x32xf32> to vector<1x8x32xf32>
    tpu.vector_store %arg11[%83, %c0_33, %c0_34], %86 {strides = array<i32>} : memref<8x8x32xf32, #tpu.memory_space<vmem>>, vector<1x8x32xf32>,
    %87 = arith.index_cast %c0_i32_8 : i32 to index
    %c0_35 = arith.constant 0 : index
    %c0_36 = arith.constant 0 : index
    %88 = vector.load %arg12[%87, %c0_35, %c0_36] : memref<8x8x32xf32, #tpu.memory_space<vmem>>, vector<1x8x32xf32>
    %89 = vector.shape_cast %88 : vector<1x8x32xf32> to vector<8x32xf32>
    %90 = vector.shape_cast %82 : vector<8x32xf32> to vector<1x8x32xf32>
    tpu.vector_store %arg12[%87, %c0_35, %c0_36], %90 {strides = array<i32>} : memref<8x8x32xf32, #tpu.memory_space<vmem>>, vector<1x8x32xf32>,
    %91 = arith.index_cast %c0_i32_8 : i32 to index
    %c0_37 = arith.constant 0 : index
    %c0_38 = arith.constant 0 : index
    %92 = vector.load %arg13[%91, %c0_37, %c0_38] : memref<8x8x32xf32, #tpu.memory_space<vmem>>, vector<1x8x32xf32>
    %93 = vector.shape_cast %92 : vector<1x8x32xf32> to vector<8x32xf32>
    %94 = vector.shape_cast %62 : vector<8x32xf32> to vector<1x8x32xf32>
    tpu.vector_store %arg13[%91, %c0_37, %c0_38], %94 {strides = array<i32>} : memref<8x8x32xf32, #tpu.memory_space<vmem>>, vector<1x8x32xf32>,
    %95 = arith.index_cast %c0_i32_8 : i32 to index
    %c0_39 = arith.constant 0 : index
    %c0_40 = arith.constant 0 : index
    %96 = vector.load %arg14[%95, %c0_39, %c0_40] : memref<8x8x32xf32, #tpu.memory_space<vmem>>, vector<1x8x32xf32>
    %97 = vector.shape_cast %96 : vector<1x8x32xf32> to vector<8x32xf32>
    %98 = vector.shape_cast %61 : vector<8x32xf32> to vector<1x8x32xf32>
    tpu.vector_store %arg14[%95, %c0_39, %c0_40], %98 {strides = array<i32>} : memref<8x8x32xf32, #tpu.memory_space<vmem>>, vector<1x8x32xf32>,
    %99 = arith.index_cast %c0_i32_8 : i32 to index
    %c0_41 = arith.constant 0 : index
    %c0_42 = arith.constant 0 : index
    %100 = vector.load %arg15[%99, %c0_41, %c0_42] : memref<8x8x32xf32, #tpu.memory_space<vmem>>, vector<1x8x32xf32>
    %101 = vector.shape_cast %100 : vector<1x8x32xf32> to vector<8x32xf32>
    %102 = vector.shape_cast %72 : vector<8x32xf32> to vector<1x8x32xf32>
    tpu.vector_store %arg15[%99, %c0_41, %c0_42], %102 {strides = array<i32>} : memref<8x8x32xf32, #tpu.memory_space<vmem>>, vector<1x8x32xf32>,
    %103 = arith.index_cast %c0_i32_8 : i32 to index
    %c0_43 = arith.constant 0 : index
    %c0_44 = arith.constant 0 : index
    %104 = vector.load %arg16[%103, %c0_43, %c0_44] : memref<8x8x32xf32, #tpu.memory_space<vmem>>, vector<1x8x32xf32>
    %105 = vector.shape_cast %104 : vector<1x8x32xf32> to vector<8x32xf32>
    %106 = vector.shape_cast %71 : vector<8x32xf32> to vector<1x8x32xf32>
    tpu.vector_store %arg16[%103, %c0_43, %c0_44], %106 {strides = array<i32>} : memref<8x8x32xf32, #tpu.memory_space<vmem>>, vector<1x8x32xf32>,
    %c1_i32 = arith.constant 1 : i32
    %107 = arith.index_cast %c1_i32 : i32 to index
    %c0_45 = arith.constant 0 : index
    %c0_46 = arith.constant 0 : index
    %108 = vector.load %arg2[%107, %c0_45, %c0_46] : memref<8x8x128xf32, #tpu.memory_space<vmem>>, vector<1x8x128xf32>
    %109 = vector.shape_cast %108 : vector<1x8x128xf32> to vector<8x128xf32>
    %c0_47 = arith.constant 0 : index
    %c0_48 = arith.constant 0 : index
    %110 = vector.load %arg7[%c0_47, %c0_48] : memref<32x128xf32, #tpu.memory_space<vmem>>, vector<32x128xf32>
    %cst_49 = arith.constant dense<0.000000e+00> : vector<8x128xf32>
    %111 = tpu.matmul %77, %110, %cst_49 {dimension_numbers = #tpu.dot_dimension_numbers<[1], [0], [0], [1], [0, 0, 1, 1], [], []>} : vector<8x32xf32>, vector<32x128xf32>, vector<8x128xf32> -> vector<8x128xf32>
    %112 = arith.addf %109, %111 : vector<8x128xf32>
    %113 = vector.extract_strided_slice %112 {offsets = [0, 0], sizes = [8, 32], strides = [1, 1]} : vector<8x128xf32> to vector<8x32xf32>
    %cst_50 = arith.constant 5.000000e-01 : f32
    %114 = vector.broadcast %cst_50 : f32 to vector<8x32xf32>
    %115 = arith.mulf %114, %113 : vector<8x32xf32>
    %116 = math.tanh %115 : vector<8x32xf32>
    %cst_51 = arith.constant 1.000000e+00 : f32
    %117 = vector.broadcast %cst_51 : f32 to vector<8x32xf32>
    %118 = arith.addf %116, %117 : vector<8x32xf32>
    %cst_52 = arith.constant 5.000000e-01 : f32
    %119 = vector.broadcast %cst_52 : f32 to vector<8x32xf32>
    %120 = arith.mulf %119, %118 : vector<8x32xf32>
    %121 = vector.extract_strided_slice %112 {offsets = [0, 32], sizes = [8, 32], strides = [1, 1]} : vector<8x128xf32> to vector<8x32xf32>
    %cst_53 = arith.constant 5.000000e-01 : f32
    %122 = vector.broadcast %cst_53 : f32 to vector<8x32xf32>
    %123 = arith.mulf %122, %121 : vector<8x32xf32>
    %124 = math.tanh %123 : vector<8x32xf32>
    %cst_54 = arith.constant 1.000000e+00 : f32
    %125 = vector.broadcast %cst_54 : f32 to vector<8x32xf32>
    %126 = arith.addf %124, %125 : vector<8x32xf32>
    %cst_55 = arith.constant 5.000000e-01 : f32
    %127 = vector.broadcast %cst_55 : f32 to vector<8x32xf32>
    %128 = arith.mulf %127, %126 : vector<8x32xf32>
    %129 = vector.extract_strided_slice %112 {offsets = [0, 64], sizes = [8, 32], strides = [1, 1]} : vector<8x128xf32> to vector<8x32xf32>
    %130 = math.tanh %129 : vector<8x32xf32>
    %131 = vector.extract_strided_slice %112 {offsets = [0, 96], sizes = [8, 32], strides = [1, 1]} : vector<8x128xf32> to vector<8x32xf32>
    %cst_56 = arith.constant 5.000000e-01 : f32
    %132 = vector.broadcast %cst_56 : f32 to vector<8x32xf32>
    %133 = arith.mulf %132, %131 : vector<8x32xf32>
    %134 = math.tanh %133 : vector<8x32xf32>
    %cst_57 = arith.constant 1.000000e+00 : f32
    %135 = vector.broadcast %cst_57 : f32 to vector<8x32xf32>
    %136 = arith.addf %134, %135 : vector<8x32xf32>
    %cst_58 = arith.constant 5.000000e-01 : f32
    %137 = vector.broadcast %cst_58 : f32 to vector<8x32xf32>
    %138 = arith.mulf %137, %136 : vector<8x32xf32>
    %139 = arith.mulf %128, %82 : vector<8x32xf32>
    %140 = arith.mulf %120, %130 : vector<8x32xf32>
    %141 = arith.addf %139, %140 : vector<8x32xf32>
    %142 = math.tanh %141 : vector<8x32xf32>
    %143 = arith.mulf %138, %142 : vector<8x32xf32>
    %144 = tpu.concatenate %143, %141 in 0 : vector<8x32xf32>, vector<8x32xf32> -> vector<16x32xf32>
    %c0_59 = arith.constant 0 : index
    %c0_60 = arith.constant 0 : index
    %145 = vector.load %arg8[%c0_59, %c0_60] : memref<32x128xf32, #tpu.memory_space<vmem>>, vector<32x128xf32>
    %cst_61 = arith.constant dense<0.000000e+00> : vector<16x128xf32>
    %146 = tpu.matmul %144, %145, %cst_61 {dimension_numbers = #tpu.dot_dimension_numbers<[1], [0], [0], [1], [0, 0, 1, 1], [], []>} : vector<16x32xf32>, vector<32x128xf32>, vector<16x128xf32> -> vector<16x128xf32>
    %147 = vector.extract_strided_slice %146 {offsets = [0, 0], sizes = [8, 64], strides = [1, 1]} : vector<16x128xf32> to vector<8x64xf32>
    %148 = vector.broadcast %3 : vector<1x64xf32> to vector<8x64xf32>
    %149 = arith.addf %147, %148 : vector<8x64xf32>
    %150 = vector.extract_strided_slice %146 {offsets = [8, 64], sizes = [8, 64], strides = [1, 1]} : vector<16x128xf32> to vector<8x64xf32>
    %151 = vector.broadcast %4 : vector<1x64xf32> to vector<8x64xf32>
    %152 = arith.addf %150, %151 : vector<8x64xf32>
    %153 = vector.extract_strided_slice %149 {offsets = [0, 0], sizes = [8, 32], strides = [1, 1]} : vector<8x64xf32> to vector<8x32xf32>
    %cst_62 = arith.constant 0.000000e+00 : f32
    %154 = vector.broadcast %cst_62 : f32 to vector<8x32xf32>
    %155 = arith.maximumf %153, %154 : vector<8x32xf32>
    %156 = math.absf %153 : vector<8x32xf32>
    %cst_63 = arith.constant 0.000000e+00 : f32
    %157 = vector.broadcast %cst_63 : f32 to vector<8x32xf32>
    %158 = arith.subf %157, %156 : vector<8x32xf32>
    %159 = math.exp %158 : vector<8x32xf32>
    %160 = math.log1p %159 : vector<8x32xf32>
    %161 = arith.addf %155, %160 : vector<8x32xf32>
    %162 = vector.extract_strided_slice %149 {offsets = [0, 32], sizes = [8, 32], strides = [1, 1]} : vector<8x64xf32> to vector<8x32xf32>
    %163 = vector.extract_strided_slice %152 {offsets = [0, 0], sizes = [8, 32], strides = [1, 1]} : vector<8x64xf32> to vector<8x32xf32>
    %cst_64 = arith.constant 0.000000e+00 : f32
    %164 = vector.broadcast %cst_64 : f32 to vector<8x32xf32>
    %165 = arith.maximumf %163, %164 : vector<8x32xf32>
    %166 = math.absf %163 : vector<8x32xf32>
    %cst_65 = arith.constant 0.000000e+00 : f32
    %167 = vector.broadcast %cst_65 : f32 to vector<8x32xf32>
    %168 = arith.subf %167, %166 : vector<8x32xf32>
    %169 = math.exp %168 : vector<8x32xf32>
    %170 = math.log1p %169 : vector<8x32xf32>
    %171 = arith.addf %165, %170 : vector<8x32xf32>
    %172 = vector.extract_strided_slice %152 {offsets = [0, 32], sizes = [8, 32], strides = [1, 1]} : vector<8x64xf32> to vector<8x32xf32>
    %173 = arith.index_cast %c1_i32 : i32 to index
    %c0_66 = arith.constant 0 : index
    %c0_67 = arith.constant 0 : index
    %174 = vector.load %arg3[%173, %c0_66, %c0_67] : memref<8x8x32xf32, #tpu.memory_space<vmem>>, vector<1x8x32xf32>
    %175 = vector.shape_cast %174 : vector<1x8x32xf32> to vector<8x32xf32>
    %176 = arith.mulf %161, %175 : vector<8x32xf32>
    %177 = arith.addf %162, %176 : vector<8x32xf32>
    %178 = arith.index_cast %c1_i32 : i32 to index
    %c0_68 = arith.constant 0 : index
    %c0_69 = arith.constant 0 : index
    %179 = vector.load %arg4[%178, %c0_68, %c0_69] : memref<8x8x32xf32, #tpu.memory_space<vmem>>, vector<1x8x32xf32>
    %180 = vector.shape_cast %179 : vector<1x8x32xf32> to vector<8x32xf32>
    %181 = arith.mulf %171, %180 : vector<8x32xf32>
    %182 = arith.addf %172, %181 : vector<8x32xf32>
    %183 = arith.index_cast %c1_i32 : i32 to index
    %c0_70 = arith.constant 0 : index
    %c0_71 = arith.constant 0 : index
    %184 = vector.load %arg11[%183, %c0_70, %c0_71] : memref<8x8x32xf32, #tpu.memory_space<vmem>>, vector<1x8x32xf32>
    %185 = vector.shape_cast %184 : vector<1x8x32xf32> to vector<8x32xf32>
    %186 = vector.shape_cast %177 : vector<8x32xf32> to vector<1x8x32xf32>
    tpu.vector_store %arg11[%183, %c0_70, %c0_71], %186 {strides = array<i32>} : memref<8x8x32xf32, #tpu.memory_space<vmem>>, vector<1x8x32xf32>,
    %187 = arith.index_cast %c1_i32 : i32 to index
    %c0_72 = arith.constant 0 : index
    %c0_73 = arith.constant 0 : index
    %188 = vector.load %arg12[%187, %c0_72, %c0_73] : memref<8x8x32xf32, #tpu.memory_space<vmem>>, vector<1x8x32xf32>
    %189 = vector.shape_cast %188 : vector<1x8x32xf32> to vector<8x32xf32>
    %190 = vector.shape_cast %182 : vector<8x32xf32> to vector<1x8x32xf32>
    tpu.vector_store %arg12[%187, %c0_72, %c0_73], %190 {strides = array<i32>} : memref<8x8x32xf32, #tpu.memory_space<vmem>>, vector<1x8x32xf32>,
    %191 = arith.index_cast %c1_i32 : i32 to index
    %c0_74 = arith.constant 0 : index
    %c0_75 = arith.constant 0 : index
    %192 = vector.load %arg13[%191, %c0_74, %c0_75] : memref<8x8x32xf32, #tpu.memory_space<vmem>>, vector<1x8x32xf32>
    %193 = vector.shape_cast %192 : vector<1x8x32xf32> to vector<8x32xf32>
    %194 = vector.shape_cast %162 : vector<8x32xf32> to vector<1x8x32xf32>
    tpu.vector_store %arg13[%191, %c0_74, %c0_75], %194 {strides = array<i32>} : memref<8x8x32xf32, #tpu.memory_space<vmem>>, vector<1x8x32xf32>,
    %195 = arith.index_cast %c1_i32 : i32 to index
    %c0_76 = arith.constant 0 : index
    %c0_77 = arith.constant 0 : index
    %196 = vector.load %arg14[%195, %c0_76, %c0_77] : memref<8x8x32xf32, #tpu.memory_space<vmem>>, vector<1x8x32xf32>
    %197 = vector.shape_cast %196 : vector<1x8x32xf32> to vector<8x32xf32>
    %198 = vector.shape_cast %161 : vector<8x32xf32> to vector<1x8x32xf32>
    tpu.vector_store %arg14[%195, %c0_76, %c0_77], %198 {strides = array<i32>} : memref<8x8x32xf32, #tpu.memory_space<vmem>>, vector<1x8x32xf32>,
    %199 = arith.index_cast %c1_i32 : i32 to index
    %c0_78 = arith.constant 0 : index
    %c0_79 = arith.constant 0 : index
    %200 = vector.load %arg15[%199, %c0_78, %c0_79] : memref<8x8x32xf32, #tpu.memory_space<vmem>>, vector<1x8x32xf32>
    %201 = vector.shape_cast %200 : vector<1x8x32xf32> to vector<8x32xf32>
    %202 = vector.shape_cast %172 : vector<8x32xf32> to vector<1x8x32xf32>
    tpu.vector_store %arg15[%199, %c0_78, %c0_79], %202 {strides = array<i32>} : memref<8x8x32xf32, #tpu.memory_space<vmem>>, vector<1x8x32xf32>,
    %203 = arith.index_cast %c1_i32 : i32 to index
    %c0_80 = arith.constant 0 : index
    %c0_81 = arith.constant 0 : index
    %204 = vector.load %arg16[%203, %c0_80, %c0_81] : memref<8x8x32xf32, #tpu.memory_space<vmem>>, vector<1x8x32xf32>
    %205 = vector.shape_cast %204 : vector<1x8x32xf32> to vector<8x32xf32>
    %206 = vector.shape_cast %171 : vector<8x32xf32> to vector<1x8x32xf32>
    tpu.vector_store %arg16[%203, %c0_80, %c0_81], %206 {strides = array<i32>} : memref<8x8x32xf32, #tpu.memory_space<vmem>>, vector<1x8x32xf32>,
    %c2_i32 = arith.constant 2 : i32
    %207 = arith.index_cast %c2_i32 : i32 to index
    %c0_82 = arith.constant 0 : index
    %c0_83 = arith.constant 0 : index
    %208 = vector.load %arg2[%207, %c0_82, %c0_83] : memref<8x8x128xf32, #tpu.memory_space<vmem>>, vector<1x8x128xf32>
    %209 = vector.shape_cast %208 : vector<1x8x128xf32> to vector<8x128xf32>
    %c0_84 = arith.constant 0 : index
    %c0_85 = arith.constant 0 : index
    %210 = vector.load %arg7[%c0_84, %c0_85] : memref<32x128xf32, #tpu.memory_space<vmem>>, vector<32x128xf32>
    %cst_86 = arith.constant dense<0.000000e+00> : vector<8x128xf32>
    %211 = tpu.matmul %177, %210, %cst_86 {dimension_numbers = #tpu.dot_dimension_numbers<[1], [0], [0], [1], [0, 0, 1, 1], [], []>} : vector<8x32xf32>, vector<32x128xf32>, vector<8x128xf32> -> vector<8x128xf32>
    %212 = arith.addf %209, %211 : vector<8x128xf32>
    %213 = vector.extract_strided_slice %212 {offsets = [0, 0], sizes = [8, 32], strides = [1, 1]} : vector<8x128xf32> to vector<8x32xf32>
    %cst_87 = arith.constant 5.000000e-01 : f32
    %214 = vector.broadcast %cst_87 : f32 to vector<8x32xf32>
    %215 = arith.mulf %214, %213 : vector<8x32xf32>
    %216 = math.tanh %215 : vector<8x32xf32>
    %cst_88 = arith.constant 1.000000e+00 : f32
    %217 = vector.broadcast %cst_88 : f32 to vector<8x32xf32>
    %218 = arith.addf %216, %217 : vector<8x32xf32>
    %cst_89 = arith.constant 5.000000e-01 : f32
    %219 = vector.broadcast %cst_89 : f32 to vector<8x32xf32>
    %220 = arith.mulf %219, %218 : vector<8x32xf32>
    %221 = vector.extract_strided_slice %212 {offsets = [0, 32], sizes = [8, 32], strides = [1, 1]} : vector<8x128xf32> to vector<8x32xf32>
    %cst_90 = arith.constant 5.000000e-01 : f32
    %222 = vector.broadcast %cst_90 : f32 to vector<8x32xf32>
    %223 = arith.mulf %222, %221 : vector<8x32xf32>
    %224 = math.tanh %223 : vector<8x32xf32>
    %cst_91 = arith.constant 1.000000e+00 : f32
    %225 = vector.broadcast %cst_91 : f32 to vector<8x32xf32>
    %226 = arith.addf %224, %225 : vector<8x32xf32>
    %cst_92 = arith.constant 5.000000e-01 : f32
    %227 = vector.broadcast %cst_92 : f32 to vector<8x32xf32>
    %228 = arith.mulf %227, %226 : vector<8x32xf32>
    %229 = vector.extract_strided_slice %212 {offsets = [0, 64], sizes = [8, 32], strides = [1, 1]} : vector<8x128xf32> to vector<8x32xf32>
    %230 = math.tanh %229 : vector<8x32xf32>
    %231 = vector.extract_strided_slice %212 {offsets = [0, 96], sizes = [8, 32], strides = [1, 1]} : vector<8x128xf32> to vector<8x32xf32>
    %cst_93 = arith.constant 5.000000e-01 : f32
    %232 = vector.broadcast %cst_93 : f32 to vector<8x32xf32>
    %233 = arith.mulf %232, %231 : vector<8x32xf32>
    %234 = math.tanh %233 : vector<8x32xf32>
    %cst_94 = arith.constant 1.000000e+00 : f32
    %235 = vector.broadcast %cst_94 : f32 to vector<8x32xf32>
    %236 = arith.addf %234, %235 : vector<8x32xf32>
    %cst_95 = arith.constant 5.000000e-01 : f32
    %237 = vector.broadcast %cst_95 : f32 to vector<8x32xf32>
    %238 = arith.mulf %237, %236 : vector<8x32xf32>
    %239 = arith.mulf %228, %182 : vector<8x32xf32>
    %240 = arith.mulf %220, %230 : vector<8x32xf32>
    %241 = arith.addf %239, %240 : vector<8x32xf32>
    %242 = math.tanh %241 : vector<8x32xf32>
    %243 = arith.mulf %238, %242 : vector<8x32xf32>
    %244 = tpu.concatenate %243, %241 in 0 : vector<8x32xf32>, vector<8x32xf32> -> vector<16x32xf32>
    %c0_96 = arith.constant 0 : index
    %c0_97 = arith.constant 0 : index
    %245 = vector.load %arg8[%c0_96, %c0_97] : memref<32x128xf32, #tpu.memory_space<vmem>>, vector<32x128xf32>
    %cst_98 = arith.constant dense<0.000000e+00> : vector<16x128xf32>
    %246 = tpu.matmul %244, %245, %cst_98 {dimension_numbers = #tpu.dot_dimension_numbers<[1], [0], [0], [1], [0, 0, 1, 1], [], []>} : vector<16x32xf32>, vector<32x128xf32>, vector<16x128xf32> -> vector<16x128xf32>
    %247 = vector.extract_strided_slice %246 {offsets = [0, 0], sizes = [8, 64], strides = [1, 1]} : vector<16x128xf32> to vector<8x64xf32>
    %248 = vector.broadcast %3 : vector<1x64xf32> to vector<8x64xf32>
    %249 = arith.addf %247, %248 : vector<8x64xf32>
    %250 = vector.extract_strided_slice %246 {offsets = [8, 64], sizes = [8, 64], strides = [1, 1]} : vector<16x128xf32> to vector<8x64xf32>
    %251 = vector.broadcast %4 : vector<1x64xf32> to vector<8x64xf32>
    %252 = arith.addf %250, %251 : vector<8x64xf32>
    %253 = vector.extract_strided_slice %249 {offsets = [0, 0], sizes = [8, 32], strides = [1, 1]} : vector<8x64xf32> to vector<8x32xf32>
    %cst_99 = arith.constant 0.000000e+00 : f32
    %254 = vector.broadcast %cst_99 : f32 to vector<8x32xf32>
    %255 = arith.maximumf %253, %254 : vector<8x32xf32>
    %256 = math.absf %253 : vector<8x32xf32>
    %cst_100 = arith.constant 0.000000e+00 : f32
    %257 = vector.broadcast %cst_100 : f32 to vector<8x32xf32>
    %258 = arith.subf %257, %256 : vector<8x32xf32>
    %259 = math.exp %258 : vector<8x32xf32>
    %260 = math.log1p %259 : vector<8x32xf32>
    %261 = arith.addf %255, %260 : vector<8x32xf32>
    %262 = vector.extract_strided_slice %249 {offsets = [0, 32], sizes = [8, 32], strides = [1, 1]} : vector<8x64xf32> to vector<8x32xf32>
    %263 = vector.extract_strided_slice %252 {offsets = [0, 0], sizes = [8, 32], strides = [1, 1]} : vector<8x64xf32> to vector<8x32xf32>
    %cst_101 = arith.constant 0.000000e+00 : f32
    %264 = vector.broadcast %cst_101 : f32 to vector<8x32xf32>
    %265 = arith.maximumf %263, %264 : vector<8x32xf32>
    %266 = math.absf %263 : vector<8x32xf32>
    %cst_102 = arith.constant 0.000000e+00 : f32
    %267 = vector.broadcast %cst_102 : f32 to vector<8x32xf32>
    %268 = arith.subf %267, %266 : vector<8x32xf32>
    %269 = math.exp %268 : vector<8x32xf32>
    %270 = math.log1p %269 : vector<8x32xf32>
    %271 = arith.addf %265, %270 : vector<8x32xf32>
    %272 = vector.extract_strided_slice %252 {offsets = [0, 32], sizes = [8, 32], strides = [1, 1]} : vector<8x64xf32> to vector<8x32xf32>
    %273 = arith.index_cast %c2_i32 : i32 to index
    %c0_103 = arith.constant 0 : index
    %c0_104 = arith.constant 0 : index
    %274 = vector.load %arg3[%273, %c0_103, %c0_104] : memref<8x8x32xf32, #tpu.memory_space<vmem>>, vector<1x8x32xf32>
    %275 = vector.shape_cast %274 : vector<1x8x32xf32> to vector<8x32xf32>
    %276 = arith.mulf %261, %275 : vector<8x32xf32>
    %277 = arith.addf %262, %276 : vector<8x32xf32>
    %278 = arith.index_cast %c2_i32 : i32 to index
    %c0_105 = arith.constant 0 : index
    %c0_106 = arith.constant 0 : index
    %279 = vector.load %arg4[%278, %c0_105, %c0_106] : memref<8x8x32xf32, #tpu.memory_space<vmem>>, vector<1x8x32xf32>
    %280 = vector.shape_cast %279 : vector<1x8x32xf32> to vector<8x32xf32>
    %281 = arith.mulf %271, %280 : vector<8x32xf32>
    %282 = arith.addf %272, %281 : vector<8x32xf32>
    %283 = arith.index_cast %c2_i32 : i32 to index
    %c0_107 = arith.constant 0 : index
    %c0_108 = arith.constant 0 : index
    %284 = vector.load %arg11[%283, %c0_107, %c0_108] : memref<8x8x32xf32, #tpu.memory_space<vmem>>, vector<1x8x32xf32>
    %285 = vector.shape_cast %284 : vector<1x8x32xf32> to vector<8x32xf32>
    %286 = vector.shape_cast %277 : vector<8x32xf32> to vector<1x8x32xf32>
    tpu.vector_store %arg11[%283, %c0_107, %c0_108], %286 {strides = array<i32>} : memref<8x8x32xf32, #tpu.memory_space<vmem>>, vector<1x8x32xf32>,
    %287 = arith.index_cast %c2_i32 : i32 to index
    %c0_109 = arith.constant 0 : index
    %c0_110 = arith.constant 0 : index
    %288 = vector.load %arg12[%287, %c0_109, %c0_110] : memref<8x8x32xf32, #tpu.memory_space<vmem>>, vector<1x8x32xf32>
    %289 = vector.shape_cast %288 : vector<1x8x32xf32> to vector<8x32xf32>
    %290 = vector.shape_cast %282 : vector<8x32xf32> to vector<1x8x32xf32>
    tpu.vector_store %arg12[%287, %c0_109, %c0_110], %290 {strides = array<i32>} : memref<8x8x32xf32, #tpu.memory_space<vmem>>, vector<1x8x32xf32>,
    %291 = arith.index_cast %c2_i32 : i32 to index
    %c0_111 = arith.constant 0 : index
    %c0_112 = arith.constant 0 : index
    %292 = vector.load %arg13[%291, %c0_111, %c0_112] : memref<8x8x32xf32, #tpu.memory_space<vmem>>, vector<1x8x32xf32>
    %293 = vector.shape_cast %292 : vector<1x8x32xf32> to vector<8x32xf32>
    %294 = vector.shape_cast %262 : vector<8x32xf32> to vector<1x8x32xf32>
    tpu.vector_store %arg13[%291, %c0_111, %c0_112], %294 {strides = array<i32>} : memref<8x8x32xf32, #tpu.memory_space<vmem>>, vector<1x8x32xf32>,
    %295 = arith.index_cast %c2_i32 : i32 to index
    %c0_113 = arith.constant 0 : index
    %c0_114 = arith.constant 0 : index
    %296 = vector.load %arg14[%295, %c0_113, %c0_114] : memref<8x8x32xf32, #tpu.memory_space<vmem>>, vector<1x8x32xf32>
    %297 = vector.shape_cast %296 : vector<1x8x32xf32> to vector<8x32xf32>
    %298 = vector.shape_cast %261 : vector<8x32xf32> to vector<1x8x32xf32>
    tpu.vector_store %arg14[%295, %c0_113, %c0_114], %298 {strides = array<i32>} : memref<8x8x32xf32, #tpu.memory_space<vmem>>, vector<1x8x32xf32>,
    %299 = arith.index_cast %c2_i32 : i32 to index
    %c0_115 = arith.constant 0 : index
    %c0_116 = arith.constant 0 : index
    %300 = vector.load %arg15[%299, %c0_115, %c0_116] : memref<8x8x32xf32, #tpu.memory_space<vmem>>, vector<1x8x32xf32>
    %301 = vector.shape_cast %300 : vector<1x8x32xf32> to vector<8x32xf32>
    %302 = vector.shape_cast %272 : vector<8x32xf32> to vector<1x8x32xf32>
    tpu.vector_store %arg15[%299, %c0_115, %c0_116], %302 {strides = array<i32>} : memref<8x8x32xf32, #tpu.memory_space<vmem>>, vector<1x8x32xf32>,
    %303 = arith.index_cast %c2_i32 : i32 to index
    %c0_117 = arith.constant 0 : index
    %c0_118 = arith.constant 0 : index
    %304 = vector.load %arg16[%303, %c0_117, %c0_118] : memref<8x8x32xf32, #tpu.memory_space<vmem>>, vector<1x8x32xf32>
    %305 = vector.shape_cast %304 : vector<1x8x32xf32> to vector<8x32xf32>
    %306 = vector.shape_cast %271 : vector<8x32xf32> to vector<1x8x32xf32>
    tpu.vector_store %arg16[%303, %c0_117, %c0_118], %306 {strides = array<i32>} : memref<8x8x32xf32, #tpu.memory_space<vmem>>, vector<1x8x32xf32>,
    %c3_i32 = arith.constant 3 : i32
    %307 = arith.index_cast %c3_i32 : i32 to index
    %c0_119 = arith.constant 0 : index
    %c0_120 = arith.constant 0 : index
    %308 = vector.load %arg2[%307, %c0_119, %c0_120] : memref<8x8x128xf32, #tpu.memory_space<vmem>>, vector<1x8x128xf32>
    %309 = vector.shape_cast %308 : vector<1x8x128xf32> to vector<8x128xf32>
    %c0_121 = arith.constant 0 : index
    %c0_122 = arith.constant 0 : index
    %310 = vector.load %arg7[%c0_121, %c0_122] : memref<32x128xf32, #tpu.memory_space<vmem>>, vector<32x128xf32>
    %cst_123 = arith.constant dense<0.000000e+00> : vector<8x128xf32>
    %311 = tpu.matmul %277, %310, %cst_123 {dimension_numbers = #tpu.dot_dimension_numbers<[1], [0], [0], [1], [0, 0, 1, 1], [], []>} : vector<8x32xf32>, vector<32x128xf32>, vector<8x128xf32> -> vector<8x128xf32>
    %312 = arith.addf %309, %311 : vector<8x128xf32>
    %313 = vector.extract_strided_slice %312 {offsets = [0, 0], sizes = [8, 32], strides = [1, 1]} : vector<8x128xf32> to vector<8x32xf32>
    %cst_124 = arith.constant 5.000000e-01 : f32
    %314 = vector.broadcast %cst_124 : f32 to vector<8x32xf32>
    %315 = arith.mulf %314, %313 : vector<8x32xf32>
    %316 = math.tanh %315 : vector<8x32xf32>
    %cst_125 = arith.constant 1.000000e+00 : f32
    %317 = vector.broadcast %cst_125 : f32 to vector<8x32xf32>
    %318 = arith.addf %316, %317 : vector<8x32xf32>
    %cst_126 = arith.constant 5.000000e-01 : f32
    %319 = vector.broadcast %cst_126 : f32 to vector<8x32xf32>
    %320 = arith.mulf %319, %318 : vector<8x32xf32>
    %321 = vector.extract_strided_slice %312 {offsets = [0, 32], sizes = [8, 32], strides = [1, 1]} : vector<8x128xf32> to vector<8x32xf32>
    %cst_127 = arith.constant 5.000000e-01 : f32
    %322 = vector.broadcast %cst_127 : f32 to vector<8x32xf32>
    %323 = arith.mulf %322, %321 : vector<8x32xf32>
    %324 = math.tanh %323 : vector<8x32xf32>
    %cst_128 = arith.constant 1.000000e+00 : f32
    %325 = vector.broadcast %cst_128 : f32 to vector<8x32xf32>
    %326 = arith.addf %324, %325 : vector<8x32xf32>
    %cst_129 = arith.constant 5.000000e-01 : f32
    %327 = vector.broadcast %cst_129 : f32 to vector<8x32xf32>
    %328 = arith.mulf %327, %326 : vector<8x32xf32>
    %329 = vector.extract_strided_slice %312 {offsets = [0, 64], sizes = [8, 32], strides = [1, 1]} : vector<8x128xf32> to vector<8x32xf32>
    %330 = math.tanh %329 : vector<8x32xf32>
    %331 = vector.extract_strided_slice %312 {offsets = [0, 96], sizes = [8, 32], strides = [1, 1]} : vector<8x128xf32> to vector<8x32xf32>
    %cst_130 = arith.constant 5.000000e-01 : f32
    %332 = vector.broadcast %cst_130 : f32 to vector<8x32xf32>
    %333 = arith.mulf %332, %331 : vector<8x32xf32>
    %334 = math.tanh %333 : vector<8x32xf32>
    %cst_131 = arith.constant 1.000000e+00 : f32
    %335 = vector.broadcast %cst_131 : f32 to vector<8x32xf32>
    %336 = arith.addf %334, %335 : vector<8x32xf32>
    %cst_132 = arith.constant 5.000000e-01 : f32
    %337 = vector.broadcast %cst_132 : f32 to vector<8x32xf32>
    %338 = arith.mulf %337, %336 : vector<8x32xf32>
    %339 = arith.mulf %328, %282 : vector<8x32xf32>
    %340 = arith.mulf %320, %330 : vector<8x32xf32>
    %341 = arith.addf %339, %340 : vector<8x32xf32>
    %342 = math.tanh %341 : vector<8x32xf32>
    %343 = arith.mulf %338, %342 : vector<8x32xf32>
    %344 = tpu.concatenate %343, %341 in 0 : vector<8x32xf32>, vector<8x32xf32> -> vector<16x32xf32>
    %c0_133 = arith.constant 0 : index
    %c0_134 = arith.constant 0 : index
    %345 = vector.load %arg8[%c0_133, %c0_134] : memref<32x128xf32, #tpu.memory_space<vmem>>, vector<32x128xf32>
    %cst_135 = arith.constant dense<0.000000e+00> : vector<16x128xf32>
    %346 = tpu.matmul %344, %345, %cst_135 {dimension_numbers = #tpu.dot_dimension_numbers<[1], [0], [0], [1], [0, 0, 1, 1], [], []>} : vector<16x32xf32>, vector<32x128xf32>, vector<16x128xf32> -> vector<16x128xf32>
    %347 = vector.extract_strided_slice %346 {offsets = [0, 0], sizes = [8, 64], strides = [1, 1]} : vector<16x128xf32> to vector<8x64xf32>
    %348 = vector.broadcast %3 : vector<1x64xf32> to vector<8x64xf32>
    %349 = arith.addf %347, %348 : vector<8x64xf32>
    %350 = vector.extract_strided_slice %346 {offsets = [8, 64], sizes = [8, 64], strides = [1, 1]} : vector<16x128xf32> to vector<8x64xf32>
    %351 = vector.broadcast %4 : vector<1x64xf32> to vector<8x64xf32>
    %352 = arith.addf %350, %351 : vector<8x64xf32>
    %353 = vector.extract_strided_slice %349 {offsets = [0, 0], sizes = [8, 32], strides = [1, 1]} : vector<8x64xf32> to vector<8x32xf32>
    %cst_136 = arith.constant 0.000000e+00 : f32
    %354 = vector.broadcast %cst_136 : f32 to vector<8x32xf32>
    %355 = arith.maximumf %353, %354 : vector<8x32xf32>
    %356 = math.absf %353 : vector<8x32xf32>
    %cst_137 = arith.constant 0.000000e+00 : f32
    %357 = vector.broadcast %cst_137 : f32 to vector<8x32xf32>
    %358 = arith.subf %357, %356 : vector<8x32xf32>
    %359 = math.exp %358 : vector<8x32xf32>
    %360 = math.log1p %359 : vector<8x32xf32>
    %361 = arith.addf %355, %360 : vector<8x32xf32>
    %362 = vector.extract_strided_slice %349 {offsets = [0, 32], sizes = [8, 32], strides = [1, 1]} : vector<8x64xf32> to vector<8x32xf32>
    %363 = vector.extract_strided_slice %352 {offsets = [0, 0], sizes = [8, 32], strides = [1, 1]} : vector<8x64xf32> to vector<8x32xf32>
    %cst_138 = arith.constant 0.000000e+00 : f32
    %364 = vector.broadcast %cst_138 : f32 to vector<8x32xf32>
    %365 = arith.maximumf %363, %364 : vector<8x32xf32>
    %366 = math.absf %363 : vector<8x32xf32>
    %cst_139 = arith.constant 0.000000e+00 : f32
    %367 = vector.broadcast %cst_139 : f32 to vector<8x32xf32>
    %368 = arith.subf %367, %366 : vector<8x32xf32>
    %369 = math.exp %368 : vector<8x32xf32>
    %370 = math.log1p %369 : vector<8x32xf32>
    %371 = arith.addf %365, %370 : vector<8x32xf32>
    %372 = vector.extract_strided_slice %352 {offsets = [0, 32], sizes = [8, 32], strides = [1, 1]} : vector<8x64xf32> to vector<8x32xf32>
    %373 = arith.index_cast %c3_i32 : i32 to index
    %c0_140 = arith.constant 0 : index
    %c0_141 = arith.constant 0 : index
    %374 = vector.load %arg3[%373, %c0_140, %c0_141] : memref<8x8x32xf32, #tpu.memory_space<vmem>>, vector<1x8x32xf32>
    %375 = vector.shape_cast %374 : vector<1x8x32xf32> to vector<8x32xf32>
    %376 = arith.mulf %361, %375 : vector<8x32xf32>
    %377 = arith.addf %362, %376 : vector<8x32xf32>
    %378 = arith.index_cast %c3_i32 : i32 to index
    %c0_142 = arith.constant 0 : index
    %c0_143 = arith.constant 0 : index
    %379 = vector.load %arg4[%378, %c0_142, %c0_143] : memref<8x8x32xf32, #tpu.memory_space<vmem>>, vector<1x8x32xf32>
    %380 = vector.shape_cast %379 : vector<1x8x32xf32> to vector<8x32xf32>
    %381 = arith.mulf %371, %380 : vector<8x32xf32>
    %382 = arith.addf %372, %381 : vector<8x32xf32>
    %383 = arith.index_cast %c3_i32 : i32 to index
    %c0_144 = arith.constant 0 : index
    %c0_145 = arith.constant 0 : index
    %384 = vector.load %arg11[%383, %c0_144, %c0_145] : memref<8x8x32xf32, #tpu.memory_space<vmem>>, vector<1x8x32xf32>
    %385 = vector.shape_cast %384 : vector<1x8x32xf32> to vector<8x32xf32>
    %386 = vector.shape_cast %377 : vector<8x32xf32> to vector<1x8x32xf32>
    tpu.vector_store %arg11[%383, %c0_144, %c0_145], %386 {strides = array<i32>} : memref<8x8x32xf32, #tpu.memory_space<vmem>>, vector<1x8x32xf32>,
    %387 = arith.index_cast %c3_i32 : i32 to index
    %c0_146 = arith.constant 0 : index
    %c0_147 = arith.constant 0 : index
    %388 = vector.load %arg12[%387, %c0_146, %c0_147] : memref<8x8x32xf32, #tpu.memory_space<vmem>>, vector<1x8x32xf32>
    %389 = vector.shape_cast %388 : vector<1x8x32xf32> to vector<8x32xf32>
    %390 = vector.shape_cast %382 : vector<8x32xf32> to vector<1x8x32xf32>
    tpu.vector_store %arg12[%387, %c0_146, %c0_147], %390 {strides = array<i32>} : memref<8x8x32xf32, #tpu.memory_space<vmem>>, vector<1x8x32xf32>,
    %391 = arith.index_cast %c3_i32 : i32 to index
    %c0_148 = arith.constant 0 : index
    %c0_149 = arith.constant 0 : index
    %392 = vector.load %arg13[%391, %c0_148, %c0_149] : memref<8x8x32xf32, #tpu.memory_space<vmem>>, vector<1x8x32xf32>
    %393 = vector.shape_cast %392 : vector<1x8x32xf32> to vector<8x32xf32>
    %394 = vector.shape_cast %362 : vector<8x32xf32> to vector<1x8x32xf32>
    tpu.vector_store %arg13[%391, %c0_148, %c0_149], %394 {strides = array<i32>} : memref<8x8x32xf32, #tpu.memory_space<vmem>>, vector<1x8x32xf32>,
    %395 = arith.index_cast %c3_i32 : i32 to index
    %c0_150 = arith.constant 0 : index
    %c0_151 = arith.constant 0 : index
    %396 = vector.load %arg14[%395, %c0_150, %c0_151] : memref<8x8x32xf32, #tpu.memory_space<vmem>>, vector<1x8x32xf32>
    %397 = vector.shape_cast %396 : vector<1x8x32xf32> to vector<8x32xf32>
    %398 = vector.shape_cast %361 : vector<8x32xf32> to vector<1x8x32xf32>
    tpu.vector_store %arg14[%395, %c0_150, %c0_151], %398 {strides = array<i32>} : memref<8x8x32xf32, #tpu.memory_space<vmem>>, vector<1x8x32xf32>,
    %399 = arith.index_cast %c3_i32 : i32 to index
    %c0_152 = arith.constant 0 : index
    %c0_153 = arith.constant 0 : index
    %400 = vector.load %arg15[%399, %c0_152, %c0_153] : memref<8x8x32xf32, #tpu.memory_space<vmem>>, vector<1x8x32xf32>
    %401 = vector.shape_cast %400 : vector<1x8x32xf32> to vector<8x32xf32>
    %402 = vector.shape_cast %372 : vector<8x32xf32> to vector<1x8x32xf32>
    tpu.vector_store %arg15[%399, %c0_152, %c0_153], %402 {strides = array<i32>} : memref<8x8x32xf32, #tpu.memory_space<vmem>>, vector<1x8x32xf32>,
    %403 = arith.index_cast %c3_i32 : i32 to index
    %c0_154 = arith.constant 0 : index
    %c0_155 = arith.constant 0 : index
    %404 = vector.load %arg16[%403, %c0_154, %c0_155] : memref<8x8x32xf32, #tpu.memory_space<vmem>>, vector<1x8x32xf32>
    %405 = vector.shape_cast %404 : vector<1x8x32xf32> to vector<8x32xf32>
    %406 = vector.shape_cast %371 : vector<8x32xf32> to vector<1x8x32xf32>
    tpu.vector_store %arg16[%403, %c0_154, %c0_155], %406 {strides = array<i32>} : memref<8x8x32xf32, #tpu.memory_space<vmem>>, vector<1x8x32xf32>,
    %c4_i32 = arith.constant 4 : i32
    %407 = arith.index_cast %c4_i32 : i32 to index
    %c0_156 = arith.constant 0 : index
    %c0_157 = arith.constant 0 : index
    %408 = vector.load %arg2[%407, %c0_156, %c0_157] : memref<8x8x128xf32, #tpu.memory_space<vmem>>, vector<1x8x128xf32>
    %409 = vector.shape_cast %408 : vector<1x8x128xf32> to vector<8x128xf32>
    %c0_158 = arith.constant 0 : index
    %c0_159 = arith.constant 0 : index
    %410 = vector.load %arg7[%c0_158, %c0_159] : memref<32x128xf32, #tpu.memory_space<vmem>>, vector<32x128xf32>
    %cst_160 = arith.constant dense<0.000000e+00> : vector<8x128xf32>
    %411 = tpu.matmul %377, %410, %cst_160 {dimension_numbers = #tpu.dot_dimension_numbers<[1], [0], [0], [1], [0, 0, 1, 1], [], []>} : vector<8x32xf32>, vector<32x128xf32>, vector<8x128xf32> -> vector<8x128xf32>
    %412 = arith.addf %409, %411 : vector<8x128xf32>
    %413 = vector.extract_strided_slice %412 {offsets = [0, 0], sizes = [8, 32], strides = [1, 1]} : vector<8x128xf32> to vector<8x32xf32>
    %cst_161 = arith.constant 5.000000e-01 : f32
    %414 = vector.broadcast %cst_161 : f32 to vector<8x32xf32>
    %415 = arith.mulf %414, %413 : vector<8x32xf32>
    %416 = math.tanh %415 : vector<8x32xf32>
    %cst_162 = arith.constant 1.000000e+00 : f32
    %417 = vector.broadcast %cst_162 : f32 to vector<8x32xf32>
    %418 = arith.addf %416, %417 : vector<8x32xf32>
    %cst_163 = arith.constant 5.000000e-01 : f32
    %419 = vector.broadcast %cst_163 : f32 to vector<8x32xf32>
    %420 = arith.mulf %419, %418 : vector<8x32xf32>
    %421 = vector.extract_strided_slice %412 {offsets = [0, 32], sizes = [8, 32], strides = [1, 1]} : vector<8x128xf32> to vector<8x32xf32>
    %cst_164 = arith.constant 5.000000e-01 : f32
    %422 = vector.broadcast %cst_164 : f32 to vector<8x32xf32>
    %423 = arith.mulf %422, %421 : vector<8x32xf32>
    %424 = math.tanh %423 : vector<8x32xf32>
    %cst_165 = arith.constant 1.000000e+00 : f32
    %425 = vector.broadcast %cst_165 : f32 to vector<8x32xf32>
    %426 = arith.addf %424, %425 : vector<8x32xf32>
    %cst_166 = arith.constant 5.000000e-01 : f32
    %427 = vector.broadcast %cst_166 : f32 to vector<8x32xf32>
    %428 = arith.mulf %427, %426 : vector<8x32xf32>
    %429 = vector.extract_strided_slice %412 {offsets = [0, 64], sizes = [8, 32], strides = [1, 1]} : vector<8x128xf32> to vector<8x32xf32>
    %430 = math.tanh %429 : vector<8x32xf32>
    %431 = vector.extract_strided_slice %412 {offsets = [0, 96], sizes = [8, 32], strides = [1, 1]} : vector<8x128xf32> to vector<8x32xf32>
    %cst_167 = arith.constant 5.000000e-01 : f32
    %432 = vector.broadcast %cst_167 : f32 to vector<8x32xf32>
    %433 = arith.mulf %432, %431 : vector<8x32xf32>
    %434 = math.tanh %433 : vector<8x32xf32>
    %cst_168 = arith.constant 1.000000e+00 : f32
    %435 = vector.broadcast %cst_168 : f32 to vector<8x32xf32>
    %436 = arith.addf %434, %435 : vector<8x32xf32>
    %cst_169 = arith.constant 5.000000e-01 : f32
    %437 = vector.broadcast %cst_169 : f32 to vector<8x32xf32>
    %438 = arith.mulf %437, %436 : vector<8x32xf32>
    %439 = arith.mulf %428, %382 : vector<8x32xf32>
    %440 = arith.mulf %420, %430 : vector<8x32xf32>
    %441 = arith.addf %439, %440 : vector<8x32xf32>
    %442 = math.tanh %441 : vector<8x32xf32>
    %443 = arith.mulf %438, %442 : vector<8x32xf32>
    %444 = tpu.concatenate %443, %441 in 0 : vector<8x32xf32>, vector<8x32xf32> -> vector<16x32xf32>
    %c0_170 = arith.constant 0 : index
    %c0_171 = arith.constant 0 : index
    %445 = vector.load %arg8[%c0_170, %c0_171] : memref<32x128xf32, #tpu.memory_space<vmem>>, vector<32x128xf32>
    %cst_172 = arith.constant dense<0.000000e+00> : vector<16x128xf32>
    %446 = tpu.matmul %444, %445, %cst_172 {dimension_numbers = #tpu.dot_dimension_numbers<[1], [0], [0], [1], [0, 0, 1, 1], [], []>} : vector<16x32xf32>, vector<32x128xf32>, vector<16x128xf32> -> vector<16x128xf32>
    %447 = vector.extract_strided_slice %446 {offsets = [0, 0], sizes = [8, 64], strides = [1, 1]} : vector<16x128xf32> to vector<8x64xf32>
    %448 = vector.broadcast %3 : vector<1x64xf32> to vector<8x64xf32>
    %449 = arith.addf %447, %448 : vector<8x64xf32>
    %450 = vector.extract_strided_slice %446 {offsets = [8, 64], sizes = [8, 64], strides = [1, 1]} : vector<16x128xf32> to vector<8x64xf32>
    %451 = vector.broadcast %4 : vector<1x64xf32> to vector<8x64xf32>
    %452 = arith.addf %450, %451 : vector<8x64xf32>
    %453 = vector.extract_strided_slice %449 {offsets = [0, 0], sizes = [8, 32], strides = [1, 1]} : vector<8x64xf32> to vector<8x32xf32>
    %cst_173 = arith.constant 0.000000e+00 : f32
    %454 = vector.broadcast %cst_173 : f32 to vector<8x32xf32>
    %455 = arith.maximumf %453, %454 : vector<8x32xf32>
    %456 = math.absf %453 : vector<8x32xf32>
    %cst_174 = arith.constant 0.000000e+00 : f32
    %457 = vector.broadcast %cst_174 : f32 to vector<8x32xf32>
    %458 = arith.subf %457, %456 : vector<8x32xf32>
    %459 = math.exp %458 : vector<8x32xf32>
    %460 = math.log1p %459 : vector<8x32xf32>
    %461 = arith.addf %455, %460 : vector<8x32xf32>
    %462 = vector.extract_strided_slice %449 {offsets = [0, 32], sizes = [8, 32], strides = [1, 1]} : vector<8x64xf32> to vector<8x32xf32>
    %463 = vector.extract_strided_slice %452 {offsets = [0, 0], sizes = [8, 32], strides = [1, 1]} : vector<8x64xf32> to vector<8x32xf32>
    %cst_175 = arith.constant 0.000000e+00 : f32
    %464 = vector.broadcast %cst_175 : f32 to vector<8x32xf32>
    %465 = arith.maximumf %463, %464 : vector<8x32xf32>
    %466 = math.absf %463 : vector<8x32xf32>
    %cst_176 = arith.constant 0.000000e+00 : f32
    %467 = vector.broadcast %cst_176 : f32 to vector<8x32xf32>
    %468 = arith.subf %467, %466 : vector<8x32xf32>
    %469 = math.exp %468 : vector<8x32xf32>
    %470 = math.log1p %469 : vector<8x32xf32>
    %471 = arith.addf %465, %470 : vector<8x32xf32>
    %472 = vector.extract_strided_slice %452 {offsets = [0, 32], sizes = [8, 32], strides = [1, 1]} : vector<8x64xf32> to vector<8x32xf32>
    %473 = arith.index_cast %c4_i32 : i32 to index
    %c0_177 = arith.constant 0 : index
    %c0_178 = arith.constant 0 : index
    %474 = vector.load %arg3[%473, %c0_177, %c0_178] : memref<8x8x32xf32, #tpu.memory_space<vmem>>, vector<1x8x32xf32>
    %475 = vector.shape_cast %474 : vector<1x8x32xf32> to vector<8x32xf32>
    %476 = arith.mulf %461, %475 : vector<8x32xf32>
    %477 = arith.addf %462, %476 : vector<8x32xf32>
    %478 = arith.index_cast %c4_i32 : i32 to index
    %c0_179 = arith.constant 0 : index
    %c0_180 = arith.constant 0 : index
    %479 = vector.load %arg4[%478, %c0_179, %c0_180] : memref<8x8x32xf32, #tpu.memory_space<vmem>>, vector<1x8x32xf32>
    %480 = vector.shape_cast %479 : vector<1x8x32xf32> to vector<8x32xf32>
    %481 = arith.mulf %471, %480 : vector<8x32xf32>
    %482 = arith.addf %472, %481 : vector<8x32xf32>
    %483 = arith.index_cast %c4_i32 : i32 to index
    %c0_181 = arith.constant 0 : index
    %c0_182 = arith.constant 0 : index
    %484 = vector.load %arg11[%483, %c0_181, %c0_182] : memref<8x8x32xf32, #tpu.memory_space<vmem>>, vector<1x8x32xf32>
    %485 = vector.shape_cast %484 : vector<1x8x32xf32> to vector<8x32xf32>
    %486 = vector.shape_cast %477 : vector<8x32xf32> to vector<1x8x32xf32>
    tpu.vector_store %arg11[%483, %c0_181, %c0_182], %486 {strides = array<i32>} : memref<8x8x32xf32, #tpu.memory_space<vmem>>, vector<1x8x32xf32>,
    %487 = arith.index_cast %c4_i32 : i32 to index
    %c0_183 = arith.constant 0 : index
    %c0_184 = arith.constant 0 : index
    %488 = vector.load %arg12[%487, %c0_183, %c0_184] : memref<8x8x32xf32, #tpu.memory_space<vmem>>, vector<1x8x32xf32>
    %489 = vector.shape_cast %488 : vector<1x8x32xf32> to vector<8x32xf32>
    %490 = vector.shape_cast %482 : vector<8x32xf32> to vector<1x8x32xf32>
    tpu.vector_store %arg12[%487, %c0_183, %c0_184], %490 {strides = array<i32>} : memref<8x8x32xf32, #tpu.memory_space<vmem>>, vector<1x8x32xf32>,
    %491 = arith.index_cast %c4_i32 : i32 to index
    %c0_185 = arith.constant 0 : index
    %c0_186 = arith.constant 0 : index
    %492 = vector.load %arg13[%491, %c0_185, %c0_186] : memref<8x8x32xf32, #tpu.memory_space<vmem>>, vector<1x8x32xf32>
    %493 = vector.shape_cast %492 : vector<1x8x32xf32> to vector<8x32xf32>
    %494 = vector.shape_cast %462 : vector<8x32xf32> to vector<1x8x32xf32>
    tpu.vector_store %arg13[%491, %c0_185, %c0_186], %494 {strides = array<i32>} : memref<8x8x32xf32, #tpu.memory_space<vmem>>, vector<1x8x32xf32>,
    %495 = arith.index_cast %c4_i32 : i32 to index
    %c0_187 = arith.constant 0 : index
    %c0_188 = arith.constant 0 : index
    %496 = vector.load %arg14[%495, %c0_187, %c0_188] : memref<8x8x32xf32, #tpu.memory_space<vmem>>, vector<1x8x32xf32>
    %497 = vector.shape_cast %496 : vector<1x8x32xf32> to vector<8x32xf32>
    %498 = vector.shape_cast %461 : vector<8x32xf32> to vector<1x8x32xf32>
    tpu.vector_store %arg14[%495, %c0_187, %c0_188], %498 {strides = array<i32>} : memref<8x8x32xf32, #tpu.memory_space<vmem>>, vector<1x8x32xf32>,
    %499 = arith.index_cast %c4_i32 : i32 to index
    %c0_189 = arith.constant 0 : index
    %c0_190 = arith.constant 0 : index
    %500 = vector.load %arg15[%499, %c0_189, %c0_190] : memref<8x8x32xf32, #tpu.memory_space<vmem>>, vector<1x8x32xf32>
    %501 = vector.shape_cast %500 : vector<1x8x32xf32> to vector<8x32xf32>
    %502 = vector.shape_cast %472 : vector<8x32xf32> to vector<1x8x32xf32>
    tpu.vector_store %arg15[%499, %c0_189, %c0_190], %502 {strides = array<i32>} : memref<8x8x32xf32, #tpu.memory_space<vmem>>, vector<1x8x32xf32>,
    %503 = arith.index_cast %c4_i32 : i32 to index
    %c0_191 = arith.constant 0 : index
    %c0_192 = arith.constant 0 : index
    %504 = vector.load %arg16[%503, %c0_191, %c0_192] : memref<8x8x32xf32, #tpu.memory_space<vmem>>, vector<1x8x32xf32>
    %505 = vector.shape_cast %504 : vector<1x8x32xf32> to vector<8x32xf32>
    %506 = vector.shape_cast %471 : vector<8x32xf32> to vector<1x8x32xf32>
    tpu.vector_store %arg16[%503, %c0_191, %c0_192], %506 {strides = array<i32>} : memref<8x8x32xf32, #tpu.memory_space<vmem>>, vector<1x8x32xf32>,
    %c5_i32 = arith.constant 5 : i32
    %507 = arith.index_cast %c5_i32 : i32 to index
    %c0_193 = arith.constant 0 : index
    %c0_194 = arith.constant 0 : index
    %508 = vector.load %arg2[%507, %c0_193, %c0_194] : memref<8x8x128xf32, #tpu.memory_space<vmem>>, vector<1x8x128xf32>
    %509 = vector.shape_cast %508 : vector<1x8x128xf32> to vector<8x128xf32>
    %c0_195 = arith.constant 0 : index
    %c0_196 = arith.constant 0 : index
    %510 = vector.load %arg7[%c0_195, %c0_196] : memref<32x128xf32, #tpu.memory_space<vmem>>, vector<32x128xf32>
    %cst_197 = arith.constant dense<0.000000e+00> : vector<8x128xf32>
    %511 = tpu.matmul %477, %510, %cst_197 {dimension_numbers = #tpu.dot_dimension_numbers<[1], [0], [0], [1], [0, 0, 1, 1], [], []>} : vector<8x32xf32>, vector<32x128xf32>, vector<8x128xf32> -> vector<8x128xf32>
    %512 = arith.addf %509, %511 : vector<8x128xf32>
    %513 = vector.extract_strided_slice %512 {offsets = [0, 0], sizes = [8, 32], strides = [1, 1]} : vector<8x128xf32> to vector<8x32xf32>
    %cst_198 = arith.constant 5.000000e-01 : f32
    %514 = vector.broadcast %cst_198 : f32 to vector<8x32xf32>
    %515 = arith.mulf %514, %513 : vector<8x32xf32>
    %516 = math.tanh %515 : vector<8x32xf32>
    %cst_199 = arith.constant 1.000000e+00 : f32
    %517 = vector.broadcast %cst_199 : f32 to vector<8x32xf32>
    %518 = arith.addf %516, %517 : vector<8x32xf32>
    %cst_200 = arith.constant 5.000000e-01 : f32
    %519 = vector.broadcast %cst_200 : f32 to vector<8x32xf32>
    %520 = arith.mulf %519, %518 : vector<8x32xf32>
    %521 = vector.extract_strided_slice %512 {offsets = [0, 32], sizes = [8, 32], strides = [1, 1]} : vector<8x128xf32> to vector<8x32xf32>
    %cst_201 = arith.constant 5.000000e-01 : f32
    %522 = vector.broadcast %cst_201 : f32 to vector<8x32xf32>
    %523 = arith.mulf %522, %521 : vector<8x32xf32>
    %524 = math.tanh %523 : vector<8x32xf32>
    %cst_202 = arith.constant 1.000000e+00 : f32
    %525 = vector.broadcast %cst_202 : f32 to vector<8x32xf32>
    %526 = arith.addf %524, %525 : vector<8x32xf32>
    %cst_203 = arith.constant 5.000000e-01 : f32
    %527 = vector.broadcast %cst_203 : f32 to vector<8x32xf32>
    %528 = arith.mulf %527, %526 : vector<8x32xf32>
    %529 = vector.extract_strided_slice %512 {offsets = [0, 64], sizes = [8, 32], strides = [1, 1]} : vector<8x128xf32> to vector<8x32xf32>
    %530 = math.tanh %529 : vector<8x32xf32>
    %531 = vector.extract_strided_slice %512 {offsets = [0, 96], sizes = [8, 32], strides = [1, 1]} : vector<8x128xf32> to vector<8x32xf32>
    %cst_204 = arith.constant 5.000000e-01 : f32
    %532 = vector.broadcast %cst_204 : f32 to vector<8x32xf32>
    %533 = arith.mulf %532, %531 : vector<8x32xf32>
    %534 = math.tanh %533 : vector<8x32xf32>
    %cst_205 = arith.constant 1.000000e+00 : f32
    %535 = vector.broadcast %cst_205 : f32 to vector<8x32xf32>
    %536 = arith.addf %534, %535 : vector<8x32xf32>
    %cst_206 = arith.constant 5.000000e-01 : f32
    %537 = vector.broadcast %cst_206 : f32 to vector<8x32xf32>
    %538 = arith.mulf %537, %536 : vector<8x32xf32>
    %539 = arith.mulf %528, %482 : vector<8x32xf32>
    %540 = arith.mulf %520, %530 : vector<8x32xf32>
    %541 = arith.addf %539, %540 : vector<8x32xf32>
    %542 = math.tanh %541 : vector<8x32xf32>
    %543 = arith.mulf %538, %542 : vector<8x32xf32>
    %544 = tpu.concatenate %543, %541 in 0 : vector<8x32xf32>, vector<8x32xf32> -> vector<16x32xf32>
    %c0_207 = arith.constant 0 : index
    %c0_208 = arith.constant 0 : index
    %545 = vector.load %arg8[%c0_207, %c0_208] : memref<32x128xf32, #tpu.memory_space<vmem>>, vector<32x128xf32>
    %cst_209 = arith.constant dense<0.000000e+00> : vector<16x128xf32>
    %546 = tpu.matmul %544, %545, %cst_209 {dimension_numbers = #tpu.dot_dimension_numbers<[1], [0], [0], [1], [0, 0, 1, 1], [], []>} : vector<16x32xf32>, vector<32x128xf32>, vector<16x128xf32> -> vector<16x128xf32>
    %547 = vector.extract_strided_slice %546 {offsets = [0, 0], sizes = [8, 64], strides = [1, 1]} : vector<16x128xf32> to vector<8x64xf32>
    %548 = vector.broadcast %3 : vector<1x64xf32> to vector<8x64xf32>
    %549 = arith.addf %547, %548 : vector<8x64xf32>
    %550 = vector.extract_strided_slice %546 {offsets = [8, 64], sizes = [8, 64], strides = [1, 1]} : vector<16x128xf32> to vector<8x64xf32>
    %551 = vector.broadcast %4 : vector<1x64xf32> to vector<8x64xf32>
    %552 = arith.addf %550, %551 : vector<8x64xf32>
    %553 = vector.extract_strided_slice %549 {offsets = [0, 0], sizes = [8, 32], strides = [1, 1]} : vector<8x64xf32> to vector<8x32xf32>
    %cst_210 = arith.constant 0.000000e+00 : f32
    %554 = vector.broadcast %cst_210 : f32 to vector<8x32xf32>
    %555 = arith.maximumf %553, %554 : vector<8x32xf32>
    %556 = math.absf %553 : vector<8x32xf32>
    %cst_211 = arith.constant 0.000000e+00 : f32
    %557 = vector.broadcast %cst_211 : f32 to vector<8x32xf32>
    %558 = arith.subf %557, %556 : vector<8x32xf32>
    %559 = math.exp %558 : vector<8x32xf32>
    %560 = math.log1p %559 : vector<8x32xf32>
    %561 = arith.addf %555, %560 : vector<8x32xf32>
    %562 = vector.extract_strided_slice %549 {offsets = [0, 32], sizes = [8, 32], strides = [1, 1]} : vector<8x64xf32> to vector<8x32xf32>
    %563 = vector.extract_strided_slice %552 {offsets = [0, 0], sizes = [8, 32], strides = [1, 1]} : vector<8x64xf32> to vector<8x32xf32>
    %cst_212 = arith.constant 0.000000e+00 : f32
    %564 = vector.broadcast %cst_212 : f32 to vector<8x32xf32>
    %565 = arith.maximumf %563, %564 : vector<8x32xf32>
    %566 = math.absf %563 : vector<8x32xf32>
    %cst_213 = arith.constant 0.000000e+00 : f32
    %567 = vector.broadcast %cst_213 : f32 to vector<8x32xf32>
    %568 = arith.subf %567, %566 : vector<8x32xf32>
    %569 = math.exp %568 : vector<8x32xf32>
    %570 = math.log1p %569 : vector<8x32xf32>
    %571 = arith.addf %565, %570 : vector<8x32xf32>
    %572 = vector.extract_strided_slice %552 {offsets = [0, 32], sizes = [8, 32], strides = [1, 1]} : vector<8x64xf32> to vector<8x32xf32>
    %573 = arith.index_cast %c5_i32 : i32 to index
    %c0_214 = arith.constant 0 : index
    %c0_215 = arith.constant 0 : index
    %574 = vector.load %arg3[%573, %c0_214, %c0_215] : memref<8x8x32xf32, #tpu.memory_space<vmem>>, vector<1x8x32xf32>
    %575 = vector.shape_cast %574 : vector<1x8x32xf32> to vector<8x32xf32>
    %576 = arith.mulf %561, %575 : vector<8x32xf32>
    %577 = arith.addf %562, %576 : vector<8x32xf32>
    %578 = arith.index_cast %c5_i32 : i32 to index
    %c0_216 = arith.constant 0 : index
    %c0_217 = arith.constant 0 : index
    %579 = vector.load %arg4[%578, %c0_216, %c0_217] : memref<8x8x32xf32, #tpu.memory_space<vmem>>, vector<1x8x32xf32>
    %580 = vector.shape_cast %579 : vector<1x8x32xf32> to vector<8x32xf32>
    %581 = arith.mulf %571, %580 : vector<8x32xf32>
    %582 = arith.addf %572, %581 : vector<8x32xf32>
    %583 = arith.index_cast %c5_i32 : i32 to index
    %c0_218 = arith.constant 0 : index
    %c0_219 = arith.constant 0 : index
    %584 = vector.load %arg11[%583, %c0_218, %c0_219] : memref<8x8x32xf32, #tpu.memory_space<vmem>>, vector<1x8x32xf32>
    %585 = vector.shape_cast %584 : vector<1x8x32xf32> to vector<8x32xf32>
    %586 = vector.shape_cast %577 : vector<8x32xf32> to vector<1x8x32xf32>
    tpu.vector_store %arg11[%583, %c0_218, %c0_219], %586 {strides = array<i32>} : memref<8x8x32xf32, #tpu.memory_space<vmem>>, vector<1x8x32xf32>,
    %587 = arith.index_cast %c5_i32 : i32 to index
    %c0_220 = arith.constant 0 : index
    %c0_221 = arith.constant 0 : index
    %588 = vector.load %arg12[%587, %c0_220, %c0_221] : memref<8x8x32xf32, #tpu.memory_space<vmem>>, vector<1x8x32xf32>
    %589 = vector.shape_cast %588 : vector<1x8x32xf32> to vector<8x32xf32>
    %590 = vector.shape_cast %582 : vector<8x32xf32> to vector<1x8x32xf32>
    tpu.vector_store %arg12[%587, %c0_220, %c0_221], %590 {strides = array<i32>} : memref<8x8x32xf32, #tpu.memory_space<vmem>>, vector<1x8x32xf32>,
    %591 = arith.index_cast %c5_i32 : i32 to index
    %c0_222 = arith.constant 0 : index
    %c0_223 = arith.constant 0 : index
    %592 = vector.load %arg13[%591, %c0_222, %c0_223] : memref<8x8x32xf32, #tpu.memory_space<vmem>>, vector<1x8x32xf32>
    %593 = vector.shape_cast %592 : vector<1x8x32xf32> to vector<8x32xf32>
    %594 = vector.shape_cast %562 : vector<8x32xf32> to vector<1x8x32xf32>
    tpu.vector_store %arg13[%591, %c0_222, %c0_223], %594 {strides = array<i32>} : memref<8x8x32xf32, #tpu.memory_space<vmem>>, vector<1x8x32xf32>,
    %595 = arith.index_cast %c5_i32 : i32 to index
    %c0_224 = arith.constant 0 : index
    %c0_225 = arith.constant 0 : index
    %596 = vector.load %arg14[%595, %c0_224, %c0_225] : memref<8x8x32xf32, #tpu.memory_space<vmem>>, vector<1x8x32xf32>
    %597 = vector.shape_cast %596 : vector<1x8x32xf32> to vector<8x32xf32>
    %598 = vector.shape_cast %561 : vector<8x32xf32> to vector<1x8x32xf32>
    tpu.vector_store %arg14[%595, %c0_224, %c0_225], %598 {strides = array<i32>} : memref<8x8x32xf32, #tpu.memory_space<vmem>>, vector<1x8x32xf32>,
    %599 = arith.index_cast %c5_i32 : i32 to index
    %c0_226 = arith.constant 0 : index
    %c0_227 = arith.constant 0 : index
    %600 = vector.load %arg15[%599, %c0_226, %c0_227] : memref<8x8x32xf32, #tpu.memory_space<vmem>>, vector<1x8x32xf32>
    %601 = vector.shape_cast %600 : vector<1x8x32xf32> to vector<8x32xf32>
    %602 = vector.shape_cast %572 : vector<8x32xf32> to vector<1x8x32xf32>
    tpu.vector_store %arg15[%599, %c0_226, %c0_227], %602 {strides = array<i32>} : memref<8x8x32xf32, #tpu.memory_space<vmem>>, vector<1x8x32xf32>,
    %603 = arith.index_cast %c5_i32 : i32 to index
    %c0_228 = arith.constant 0 : index
    %c0_229 = arith.constant 0 : index
    %604 = vector.load %arg16[%603, %c0_228, %c0_229] : memref<8x8x32xf32, #tpu.memory_space<vmem>>, vector<1x8x32xf32>
    %605 = vector.shape_cast %604 : vector<1x8x32xf32> to vector<8x32xf32>
    %606 = vector.shape_cast %571 : vector<8x32xf32> to vector<1x8x32xf32>
    tpu.vector_store %arg16[%603, %c0_228, %c0_229], %606 {strides = array<i32>} : memref<8x8x32xf32, #tpu.memory_space<vmem>>, vector<1x8x32xf32>,
    %c6_i32 = arith.constant 6 : i32
    %607 = arith.index_cast %c6_i32 : i32 to index
    %c0_230 = arith.constant 0 : index
    %c0_231 = arith.constant 0 : index
    %608 = vector.load %arg2[%607, %c0_230, %c0_231] : memref<8x8x128xf32, #tpu.memory_space<vmem>>, vector<1x8x128xf32>
    %609 = vector.shape_cast %608 : vector<1x8x128xf32> to vector<8x128xf32>
    %c0_232 = arith.constant 0 : index
    %c0_233 = arith.constant 0 : index
    %610 = vector.load %arg7[%c0_232, %c0_233] : memref<32x128xf32, #tpu.memory_space<vmem>>, vector<32x128xf32>
    %cst_234 = arith.constant dense<0.000000e+00> : vector<8x128xf32>
    %611 = tpu.matmul %577, %610, %cst_234 {dimension_numbers = #tpu.dot_dimension_numbers<[1], [0], [0], [1], [0, 0, 1, 1], [], []>} : vector<8x32xf32>, vector<32x128xf32>, vector<8x128xf32> -> vector<8x128xf32>
    %612 = arith.addf %609, %611 : vector<8x128xf32>
    %613 = vector.extract_strided_slice %612 {offsets = [0, 0], sizes = [8, 32], strides = [1, 1]} : vector<8x128xf32> to vector<8x32xf32>
    %cst_235 = arith.constant 5.000000e-01 : f32
    %614 = vector.broadcast %cst_235 : f32 to vector<8x32xf32>
    %615 = arith.mulf %614, %613 : vector<8x32xf32>
    %616 = math.tanh %615 : vector<8x32xf32>
    %cst_236 = arith.constant 1.000000e+00 : f32
    %617 = vector.broadcast %cst_236 : f32 to vector<8x32xf32>
    %618 = arith.addf %616, %617 : vector<8x32xf32>
    %cst_237 = arith.constant 5.000000e-01 : f32
    %619 = vector.broadcast %cst_237 : f32 to vector<8x32xf32>
    %620 = arith.mulf %619, %618 : vector<8x32xf32>
    %621 = vector.extract_strided_slice %612 {offsets = [0, 32], sizes = [8, 32], strides = [1, 1]} : vector<8x128xf32> to vector<8x32xf32>
    %cst_238 = arith.constant 5.000000e-01 : f32
    %622 = vector.broadcast %cst_238 : f32 to vector<8x32xf32>
    %623 = arith.mulf %622, %621 : vector<8x32xf32>
    %624 = math.tanh %623 : vector<8x32xf32>
    %cst_239 = arith.constant 1.000000e+00 : f32
    %625 = vector.broadcast %cst_239 : f32 to vector<8x32xf32>
    %626 = arith.addf %624, %625 : vector<8x32xf32>
    %cst_240 = arith.constant 5.000000e-01 : f32
    %627 = vector.broadcast %cst_240 : f32 to vector<8x32xf32>
    %628 = arith.mulf %627, %626 : vector<8x32xf32>
    %629 = vector.extract_strided_slice %612 {offsets = [0, 64], sizes = [8, 32], strides = [1, 1]} : vector<8x128xf32> to vector<8x32xf32>
    %630 = math.tanh %629 : vector<8x32xf32>
    %631 = vector.extract_strided_slice %612 {offsets = [0, 96], sizes = [8, 32], strides = [1, 1]} : vector<8x128xf32> to vector<8x32xf32>
    %cst_241 = arith.constant 5.000000e-01 : f32
    %632 = vector.broadcast %cst_241 : f32 to vector<8x32xf32>
    %633 = arith.mulf %632, %631 : vector<8x32xf32>
    %634 = math.tanh %633 : vector<8x32xf32>
    %cst_242 = arith.constant 1.000000e+00 : f32
    %635 = vector.broadcast %cst_242 : f32 to vector<8x32xf32>
    %636 = arith.addf %634, %635 : vector<8x32xf32>
    %cst_243 = arith.constant 5.000000e-01 : f32
    %637 = vector.broadcast %cst_243 : f32 to vector<8x32xf32>
    %638 = arith.mulf %637, %636 : vector<8x32xf32>
    %639 = arith.mulf %628, %582 : vector<8x32xf32>
    %640 = arith.mulf %620, %630 : vector<8x32xf32>
    %641 = arith.addf %639, %640 : vector<8x32xf32>
    %642 = math.tanh %641 : vector<8x32xf32>
    %643 = arith.mulf %638, %642 : vector<8x32xf32>
    %644 = tpu.concatenate %643, %641 in 0 : vector<8x32xf32>, vector<8x32xf32> -> vector<16x32xf32>
    %c0_244 = arith.constant 0 : index
    %c0_245 = arith.constant 0 : index
    %645 = vector.load %arg8[%c0_244, %c0_245] : memref<32x128xf32, #tpu.memory_space<vmem>>, vector<32x128xf32>
    %cst_246 = arith.constant dense<0.000000e+00> : vector<16x128xf32>
    %646 = tpu.matmul %644, %645, %cst_246 {dimension_numbers = #tpu.dot_dimension_numbers<[1], [0], [0], [1], [0, 0, 1, 1], [], []>} : vector<16x32xf32>, vector<32x128xf32>, vector<16x128xf32> -> vector<16x128xf32>
    %647 = vector.extract_strided_slice %646 {offsets = [0, 0], sizes = [8, 64], strides = [1, 1]} : vector<16x128xf32> to vector<8x64xf32>
    %648 = vector.broadcast %3 : vector<1x64xf32> to vector<8x64xf32>
    %649 = arith.addf %647, %648 : vector<8x64xf32>
    %650 = vector.extract_strided_slice %646 {offsets = [8, 64], sizes = [8, 64], strides = [1, 1]} : vector<16x128xf32> to vector<8x64xf32>
    %651 = vector.broadcast %4 : vector<1x64xf32> to vector<8x64xf32>
    %652 = arith.addf %650, %651 : vector<8x64xf32>
    %653 = vector.extract_strided_slice %649 {offsets = [0, 0], sizes = [8, 32], strides = [1, 1]} : vector<8x64xf32> to vector<8x32xf32>
    %cst_247 = arith.constant 0.000000e+00 : f32
    %654 = vector.broadcast %cst_247 : f32 to vector<8x32xf32>
    %655 = arith.maximumf %653, %654 : vector<8x32xf32>
    %656 = math.absf %653 : vector<8x32xf32>
    %cst_248 = arith.constant 0.000000e+00 : f32
    %657 = vector.broadcast %cst_248 : f32 to vector<8x32xf32>
    %658 = arith.subf %657, %656 : vector<8x32xf32>
    %659 = math.exp %658 : vector<8x32xf32>
    %660 = math.log1p %659 : vector<8x32xf32>
    %661 = arith.addf %655, %660 : vector<8x32xf32>
    %662 = vector.extract_strided_slice %649 {offsets = [0, 32], sizes = [8, 32], strides = [1, 1]} : vector<8x64xf32> to vector<8x32xf32>
    %663 = vector.extract_strided_slice %652 {offsets = [0, 0], sizes = [8, 32], strides = [1, 1]} : vector<8x64xf32> to vector<8x32xf32>
    %cst_249 = arith.constant 0.000000e+00 : f32
    %664 = vector.broadcast %cst_249 : f32 to vector<8x32xf32>
    %665 = arith.maximumf %663, %664 : vector<8x32xf32>
    %666 = math.absf %663 : vector<8x32xf32>
    %cst_250 = arith.constant 0.000000e+00 : f32
    %667 = vector.broadcast %cst_250 : f32 to vector<8x32xf32>
    %668 = arith.subf %667, %666 : vector<8x32xf32>
    %669 = math.exp %668 : vector<8x32xf32>
    %670 = math.log1p %669 : vector<8x32xf32>
    %671 = arith.addf %665, %670 : vector<8x32xf32>
    %672 = vector.extract_strided_slice %652 {offsets = [0, 32], sizes = [8, 32], strides = [1, 1]} : vector<8x64xf32> to vector<8x32xf32>
    %673 = arith.index_cast %c6_i32 : i32 to index
    %c0_251 = arith.constant 0 : index
    %c0_252 = arith.constant 0 : index
    %674 = vector.load %arg3[%673, %c0_251, %c0_252] : memref<8x8x32xf32, #tpu.memory_space<vmem>>, vector<1x8x32xf32>
    %675 = vector.shape_cast %674 : vector<1x8x32xf32> to vector<8x32xf32>
    %676 = arith.mulf %661, %675 : vector<8x32xf32>
    %677 = arith.addf %662, %676 : vector<8x32xf32>
    %678 = arith.index_cast %c6_i32 : i32 to index
    %c0_253 = arith.constant 0 : index
    %c0_254 = arith.constant 0 : index
    %679 = vector.load %arg4[%678, %c0_253, %c0_254] : memref<8x8x32xf32, #tpu.memory_space<vmem>>, vector<1x8x32xf32>
    %680 = vector.shape_cast %679 : vector<1x8x32xf32> to vector<8x32xf32>
    %681 = arith.mulf %671, %680 : vector<8x32xf32>
    %682 = arith.addf %672, %681 : vector<8x32xf32>
    %683 = arith.index_cast %c6_i32 : i32 to index
    %c0_255 = arith.constant 0 : index
    %c0_256 = arith.constant 0 : index
    %684 = vector.load %arg11[%683, %c0_255, %c0_256] : memref<8x8x32xf32, #tpu.memory_space<vmem>>, vector<1x8x32xf32>
    %685 = vector.shape_cast %684 : vector<1x8x32xf32> to vector<8x32xf32>
    %686 = vector.shape_cast %677 : vector<8x32xf32> to vector<1x8x32xf32>
    tpu.vector_store %arg11[%683, %c0_255, %c0_256], %686 {strides = array<i32>} : memref<8x8x32xf32, #tpu.memory_space<vmem>>, vector<1x8x32xf32>,
    %687 = arith.index_cast %c6_i32 : i32 to index
    %c0_257 = arith.constant 0 : index
    %c0_258 = arith.constant 0 : index
    %688 = vector.load %arg12[%687, %c0_257, %c0_258] : memref<8x8x32xf32, #tpu.memory_space<vmem>>, vector<1x8x32xf32>
    %689 = vector.shape_cast %688 : vector<1x8x32xf32> to vector<8x32xf32>
    %690 = vector.shape_cast %682 : vector<8x32xf32> to vector<1x8x32xf32>
    tpu.vector_store %arg12[%687, %c0_257, %c0_258], %690 {strides = array<i32>} : memref<8x8x32xf32, #tpu.memory_space<vmem>>, vector<1x8x32xf32>,
    %691 = arith.index_cast %c6_i32 : i32 to index
    %c0_259 = arith.constant 0 : index
    %c0_260 = arith.constant 0 : index
    %692 = vector.load %arg13[%691, %c0_259, %c0_260] : memref<8x8x32xf32, #tpu.memory_space<vmem>>, vector<1x8x32xf32>
    %693 = vector.shape_cast %692 : vector<1x8x32xf32> to vector<8x32xf32>
    %694 = vector.shape_cast %662 : vector<8x32xf32> to vector<1x8x32xf32>
    tpu.vector_store %arg13[%691, %c0_259, %c0_260], %694 {strides = array<i32>} : memref<8x8x32xf32, #tpu.memory_space<vmem>>, vector<1x8x32xf32>,
    %695 = arith.index_cast %c6_i32 : i32 to index
    %c0_261 = arith.constant 0 : index
    %c0_262 = arith.constant 0 : index
    %696 = vector.load %arg14[%695, %c0_261, %c0_262] : memref<8x8x32xf32, #tpu.memory_space<vmem>>, vector<1x8x32xf32>
    %697 = vector.shape_cast %696 : vector<1x8x32xf32> to vector<8x32xf32>
    %698 = vector.shape_cast %661 : vector<8x32xf32> to vector<1x8x32xf32>
    tpu.vector_store %arg14[%695, %c0_261, %c0_262], %698 {strides = array<i32>} : memref<8x8x32xf32, #tpu.memory_space<vmem>>, vector<1x8x32xf32>,
    %699 = arith.index_cast %c6_i32 : i32 to index
    %c0_263 = arith.constant 0 : index
    %c0_264 = arith.constant 0 : index
    %700 = vector.load %arg15[%699, %c0_263, %c0_264] : memref<8x8x32xf32, #tpu.memory_space<vmem>>, vector<1x8x32xf32>
    %701 = vector.shape_cast %700 : vector<1x8x32xf32> to vector<8x32xf32>
    %702 = vector.shape_cast %672 : vector<8x32xf32> to vector<1x8x32xf32>
    tpu.vector_store %arg15[%699, %c0_263, %c0_264], %702 {strides = array<i32>} : memref<8x8x32xf32, #tpu.memory_space<vmem>>, vector<1x8x32xf32>,
    %703 = arith.index_cast %c6_i32 : i32 to index
    %c0_265 = arith.constant 0 : index
    %c0_266 = arith.constant 0 : index
    %704 = vector.load %arg16[%703, %c0_265, %c0_266] : memref<8x8x32xf32, #tpu.memory_space<vmem>>, vector<1x8x32xf32>
    %705 = vector.shape_cast %704 : vector<1x8x32xf32> to vector<8x32xf32>
    %706 = vector.shape_cast %671 : vector<8x32xf32> to vector<1x8x32xf32>
    tpu.vector_store %arg16[%703, %c0_265, %c0_266], %706 {strides = array<i32>} : memref<8x8x32xf32, #tpu.memory_space<vmem>>, vector<1x8x32xf32>,
    %c7_i32 = arith.constant 7 : i32
    %707 = arith.index_cast %c7_i32 : i32 to index
    %c0_267 = arith.constant 0 : index
    %c0_268 = arith.constant 0 : index
    %708 = vector.load %arg2[%707, %c0_267, %c0_268] : memref<8x8x128xf32, #tpu.memory_space<vmem>>, vector<1x8x128xf32>
    %709 = vector.shape_cast %708 : vector<1x8x128xf32> to vector<8x128xf32>
    %c0_269 = arith.constant 0 : index
    %c0_270 = arith.constant 0 : index
    %710 = vector.load %arg7[%c0_269, %c0_270] : memref<32x128xf32, #tpu.memory_space<vmem>>, vector<32x128xf32>
    %cst_271 = arith.constant dense<0.000000e+00> : vector<8x128xf32>
    %711 = tpu.matmul %677, %710, %cst_271 {dimension_numbers = #tpu.dot_dimension_numbers<[1], [0], [0], [1], [0, 0, 1, 1], [], []>} : vector<8x32xf32>, vector<32x128xf32>, vector<8x128xf32> -> vector<8x128xf32>
    %712 = arith.addf %709, %711 : vector<8x128xf32>
    %713 = vector.extract_strided_slice %712 {offsets = [0, 0], sizes = [8, 32], strides = [1, 1]} : vector<8x128xf32> to vector<8x32xf32>
    %cst_272 = arith.constant 5.000000e-01 : f32
    %714 = vector.broadcast %cst_272 : f32 to vector<8x32xf32>
    %715 = arith.mulf %714, %713 : vector<8x32xf32>
    %716 = math.tanh %715 : vector<8x32xf32>
    %cst_273 = arith.constant 1.000000e+00 : f32
    %717 = vector.broadcast %cst_273 : f32 to vector<8x32xf32>
    %718 = arith.addf %716, %717 : vector<8x32xf32>
    %cst_274 = arith.constant 5.000000e-01 : f32
    %719 = vector.broadcast %cst_274 : f32 to vector<8x32xf32>
    %720 = arith.mulf %719, %718 : vector<8x32xf32>
    %721 = vector.extract_strided_slice %712 {offsets = [0, 32], sizes = [8, 32], strides = [1, 1]} : vector<8x128xf32> to vector<8x32xf32>
    %cst_275 = arith.constant 5.000000e-01 : f32
    %722 = vector.broadcast %cst_275 : f32 to vector<8x32xf32>
    %723 = arith.mulf %722, %721 : vector<8x32xf32>
    %724 = math.tanh %723 : vector<8x32xf32>
    %cst_276 = arith.constant 1.000000e+00 : f32
    %725 = vector.broadcast %cst_276 : f32 to vector<8x32xf32>
    %726 = arith.addf %724, %725 : vector<8x32xf32>
    %cst_277 = arith.constant 5.000000e-01 : f32
    %727 = vector.broadcast %cst_277 : f32 to vector<8x32xf32>
    %728 = arith.mulf %727, %726 : vector<8x32xf32>
    %729 = vector.extract_strided_slice %712 {offsets = [0, 64], sizes = [8, 32], strides = [1, 1]} : vector<8x128xf32> to vector<8x32xf32>
    %730 = math.tanh %729 : vector<8x32xf32>
    %731 = vector.extract_strided_slice %712 {offsets = [0, 96], sizes = [8, 32], strides = [1, 1]} : vector<8x128xf32> to vector<8x32xf32>
    %cst_278 = arith.constant 5.000000e-01 : f32
    %732 = vector.broadcast %cst_278 : f32 to vector<8x32xf32>
    %733 = arith.mulf %732, %731 : vector<8x32xf32>
    %734 = math.tanh %733 : vector<8x32xf32>
    %cst_279 = arith.constant 1.000000e+00 : f32
    %735 = vector.broadcast %cst_279 : f32 to vector<8x32xf32>
    %736 = arith.addf %734, %735 : vector<8x32xf32>
    %cst_280 = arith.constant 5.000000e-01 : f32
    %737 = vector.broadcast %cst_280 : f32 to vector<8x32xf32>
    %738 = arith.mulf %737, %736 : vector<8x32xf32>
    %739 = arith.mulf %728, %682 : vector<8x32xf32>
    %740 = arith.mulf %720, %730 : vector<8x32xf32>
    %741 = arith.addf %739, %740 : vector<8x32xf32>
    %742 = math.tanh %741 : vector<8x32xf32>
    %743 = arith.mulf %738, %742 : vector<8x32xf32>
    %744 = tpu.concatenate %743, %741 in 0 : vector<8x32xf32>, vector<8x32xf32> -> vector<16x32xf32>
    %c0_281 = arith.constant 0 : index
    %c0_282 = arith.constant 0 : index
    %745 = vector.load %arg8[%c0_281, %c0_282] : memref<32x128xf32, #tpu.memory_space<vmem>>, vector<32x128xf32>
    %cst_283 = arith.constant dense<0.000000e+00> : vector<16x128xf32>
    %746 = tpu.matmul %744, %745, %cst_283 {dimension_numbers = #tpu.dot_dimension_numbers<[1], [0], [0], [1], [0, 0, 1, 1], [], []>} : vector<16x32xf32>, vector<32x128xf32>, vector<16x128xf32> -> vector<16x128xf32>
    %747 = vector.extract_strided_slice %746 {offsets = [0, 0], sizes = [8, 64], strides = [1, 1]} : vector<16x128xf32> to vector<8x64xf32>
    %748 = vector.broadcast %3 : vector<1x64xf32> to vector<8x64xf32>
    %749 = arith.addf %747, %748 : vector<8x64xf32>
    %750 = vector.extract_strided_slice %746 {offsets = [8, 64], sizes = [8, 64], strides = [1, 1]} : vector<16x128xf32> to vector<8x64xf32>
    %751 = vector.broadcast %4 : vector<1x64xf32> to vector<8x64xf32>
    %752 = arith.addf %750, %751 : vector<8x64xf32>
    %753 = vector.extract_strided_slice %749 {offsets = [0, 0], sizes = [8, 32], strides = [1, 1]} : vector<8x64xf32> to vector<8x32xf32>
    %cst_284 = arith.constant 0.000000e+00 : f32
    %754 = vector.broadcast %cst_284 : f32 to vector<8x32xf32>
    %755 = arith.maximumf %753, %754 : vector<8x32xf32>
    %756 = math.absf %753 : vector<8x32xf32>
    %cst_285 = arith.constant 0.000000e+00 : f32
    %757 = vector.broadcast %cst_285 : f32 to vector<8x32xf32>
    %758 = arith.subf %757, %756 : vector<8x32xf32>
    %759 = math.exp %758 : vector<8x32xf32>
    %760 = math.log1p %759 : vector<8x32xf32>
    %761 = arith.addf %755, %760 : vector<8x32xf32>
    %762 = vector.extract_strided_slice %749 {offsets = [0, 32], sizes = [8, 32], strides = [1, 1]} : vector<8x64xf32> to vector<8x32xf32>
    %763 = vector.extract_strided_slice %752 {offsets = [0, 0], sizes = [8, 32], strides = [1, 1]} : vector<8x64xf32> to vector<8x32xf32>
    %cst_286 = arith.constant 0.000000e+00 : f32
    %764 = vector.broadcast %cst_286 : f32 to vector<8x32xf32>
    %765 = arith.maximumf %763, %764 : vector<8x32xf32>
    %766 = math.absf %763 : vector<8x32xf32>
    %cst_287 = arith.constant 0.000000e+00 : f32
    %767 = vector.broadcast %cst_287 : f32 to vector<8x32xf32>
    %768 = arith.subf %767, %766 : vector<8x32xf32>
    %769 = math.exp %768 : vector<8x32xf32>
    %770 = math.log1p %769 : vector<8x32xf32>
    %771 = arith.addf %765, %770 : vector<8x32xf32>
    %772 = vector.extract_strided_slice %752 {offsets = [0, 32], sizes = [8, 32], strides = [1, 1]} : vector<8x64xf32> to vector<8x32xf32>
    %773 = arith.index_cast %c7_i32 : i32 to index
    %c0_288 = arith.constant 0 : index
    %c0_289 = arith.constant 0 : index
    %774 = vector.load %arg3[%773, %c0_288, %c0_289] : memref<8x8x32xf32, #tpu.memory_space<vmem>>, vector<1x8x32xf32>
    %775 = vector.shape_cast %774 : vector<1x8x32xf32> to vector<8x32xf32>
    %776 = arith.mulf %761, %775 : vector<8x32xf32>
    %777 = arith.addf %762, %776 : vector<8x32xf32>
    %778 = arith.index_cast %c7_i32 : i32 to index
    %c0_290 = arith.constant 0 : index
    %c0_291 = arith.constant 0 : index
    %779 = vector.load %arg4[%778, %c0_290, %c0_291] : memref<8x8x32xf32, #tpu.memory_space<vmem>>, vector<1x8x32xf32>
    %780 = vector.shape_cast %779 : vector<1x8x32xf32> to vector<8x32xf32>
    %781 = arith.mulf %771, %780 : vector<8x32xf32>
    %782 = arith.addf %772, %781 : vector<8x32xf32>
    %783 = arith.index_cast %c7_i32 : i32 to index
    %c0_292 = arith.constant 0 : index
    %c0_293 = arith.constant 0 : index
    %784 = vector.load %arg11[%783, %c0_292, %c0_293] : memref<8x8x32xf32, #tpu.memory_space<vmem>>, vector<1x8x32xf32>
    %785 = vector.shape_cast %784 : vector<1x8x32xf32> to vector<8x32xf32>
    %786 = vector.shape_cast %777 : vector<8x32xf32> to vector<1x8x32xf32>
    tpu.vector_store %arg11[%783, %c0_292, %c0_293], %786 {strides = array<i32>} : memref<8x8x32xf32, #tpu.memory_space<vmem>>, vector<1x8x32xf32>,
    %787 = arith.index_cast %c7_i32 : i32 to index
    %c0_294 = arith.constant 0 : index
    %c0_295 = arith.constant 0 : index
    %788 = vector.load %arg12[%787, %c0_294, %c0_295] : memref<8x8x32xf32, #tpu.memory_space<vmem>>, vector<1x8x32xf32>
    %789 = vector.shape_cast %788 : vector<1x8x32xf32> to vector<8x32xf32>
    %790 = vector.shape_cast %782 : vector<8x32xf32> to vector<1x8x32xf32>
    tpu.vector_store %arg12[%787, %c0_294, %c0_295], %790 {strides = array<i32>} : memref<8x8x32xf32, #tpu.memory_space<vmem>>, vector<1x8x32xf32>,
    %791 = arith.index_cast %c7_i32 : i32 to index
    %c0_296 = arith.constant 0 : index
    %c0_297 = arith.constant 0 : index
    %792 = vector.load %arg13[%791, %c0_296, %c0_297] : memref<8x8x32xf32, #tpu.memory_space<vmem>>, vector<1x8x32xf32>
    %793 = vector.shape_cast %792 : vector<1x8x32xf32> to vector<8x32xf32>
    %794 = vector.shape_cast %762 : vector<8x32xf32> to vector<1x8x32xf32>
    tpu.vector_store %arg13[%791, %c0_296, %c0_297], %794 {strides = array<i32>} : memref<8x8x32xf32, #tpu.memory_space<vmem>>, vector<1x8x32xf32>,
    %795 = arith.index_cast %c7_i32 : i32 to index
    %c0_298 = arith.constant 0 : index
    %c0_299 = arith.constant 0 : index
    %796 = vector.load %arg14[%795, %c0_298, %c0_299] : memref<8x8x32xf32, #tpu.memory_space<vmem>>, vector<1x8x32xf32>
    %797 = vector.shape_cast %796 : vector<1x8x32xf32> to vector<8x32xf32>
    %798 = vector.shape_cast %761 : vector<8x32xf32> to vector<1x8x32xf32>
    tpu.vector_store %arg14[%795, %c0_298, %c0_299], %798 {strides = array<i32>} : memref<8x8x32xf32, #tpu.memory_space<vmem>>, vector<1x8x32xf32>,
    %799 = arith.index_cast %c7_i32 : i32 to index
    %c0_300 = arith.constant 0 : index
    %c0_301 = arith.constant 0 : index
    %800 = vector.load %arg15[%799, %c0_300, %c0_301] : memref<8x8x32xf32, #tpu.memory_space<vmem>>, vector<1x8x32xf32>
    %801 = vector.shape_cast %800 : vector<1x8x32xf32> to vector<8x32xf32>
    %802 = vector.shape_cast %772 : vector<8x32xf32> to vector<1x8x32xf32>
    tpu.vector_store %arg15[%799, %c0_300, %c0_301], %802 {strides = array<i32>} : memref<8x8x32xf32, #tpu.memory_space<vmem>>, vector<1x8x32xf32>,
    %803 = arith.index_cast %c7_i32 : i32 to index
    %c0_302 = arith.constant 0 : index
    %c0_303 = arith.constant 0 : index
    %804 = vector.load %arg16[%803, %c0_302, %c0_303] : memref<8x8x32xf32, #tpu.memory_space<vmem>>, vector<1x8x32xf32>
    %805 = vector.shape_cast %804 : vector<1x8x32xf32> to vector<8x32xf32>
    %806 = vector.shape_cast %771 : vector<8x32xf32> to vector<1x8x32xf32>
    tpu.vector_store %arg16[%803, %c0_302, %c0_303], %806 {strides = array<i32>} : memref<8x8x32xf32, #tpu.memory_space<vmem>>, vector<1x8x32xf32>,
    %c8_i32 = arith.constant 8 : i32
    %c0_304 = arith.constant 0 : index
    %c0_305 = arith.constant 0 : index
    %807 = vector.load %arg17[%c0_304, %c0_305] : memref<8x32xf32, #tpu.memory_space<vmem>>, vector<8x32xf32>
    tpu.vector_store %arg17[%c0_304, %c0_305], %777 {strides = array<i32>} : memref<8x32xf32, #tpu.memory_space<vmem>>, vector<8x32xf32>,
    %c0_306 = arith.constant 0 : index
    %c0_307 = arith.constant 0 : index
    %808 = vector.load %arg18[%c0_306, %c0_307] : memref<8x32xf32, #tpu.memory_space<vmem>>, vector<8x32xf32>
    tpu.vector_store %arg18[%c0_306, %c0_307], %782 {strides = array<i32>} : memref<8x32xf32, #tpu.memory_space<vmem>>, vector<8x32xf32>,
    return
  }
  func.func @transform_0(%arg0: i32, %arg1: i32) -> (i32, i32, i32) {
    %c0_i32 = arith.constant 0 : i32
    %c0_i32_0 = arith.constant 0 : i32
    return %arg1, %arg0, %c0_i32 : i32, i32, i32
  }
  func.func @transform_1(%arg0: i32, %arg1: i32) -> (i32, i32, i32) {
    %c0_i32 = arith.constant 0 : i32
    %c0_i32_0 = arith.constant 0 : i32
    return %arg1, %arg0, %c0_i32 : i32, i32, i32
  }
  func.func @transform_2(%arg0: i32, %arg1: i32) -> (i32, i32, i32) {
    %c0_i32 = arith.constant 0 : i32
    %c0_i32_0 = arith.constant 0 : i32
    return %arg1, %arg0, %c0_i32 : i32, i32, i32
  }
  func.func @transform_3(%arg0: i32, %arg1: i32) -> (i32, i32) {
    %c0_i32 = arith.constant 0 : i32
    %c0_i32_0 = arith.constant 0 : i32
    return %arg0, %c0_i32 : i32, i32
  }
  func.func @transform_4(%arg0: i32, %arg1: i32) -> (i32, i32) {
    %c0_i32 = arith.constant 0 : i32
    %c0_i32_0 = arith.constant 0 : i32
    return %arg0, %c0_i32 : i32, i32
  }
  func.func @transform_5(%arg0: i32, %arg1: i32) -> (i32, i32) {
    %c0_i32 = arith.constant 0 : i32
    %c0_i32_0 = arith.constant 0 : i32
    %c0_i32_1 = arith.constant 0 : i32
    return %c0_i32, %c0_i32_0 : i32, i32
  }
  func.func @transform_6(%arg0: i32, %arg1: i32) -> (i32, i32) {
    %c0_i32 = arith.constant 0 : i32
    %c0_i32_0 = arith.constant 0 : i32
    %c0_i32_1 = arith.constant 0 : i32
    return %c0_i32, %c0_i32_0 : i32, i32
  }
  func.func @transform_7(%arg0: i32, %arg1: i32) -> (i32, i32) {
    %c0_i32 = arith.constant 0 : i32
    %c0_i32_0 = arith.constant 0 : i32
    %c0_i32_1 = arith.constant 0 : i32
    return %c0_i32, %c0_i32_0 : i32, i32
  }
  func.func @transform_8(%arg0: i32, %arg1: i32) -> (i32, i32) {
    %c0_i32 = arith.constant 0 : i32
    %c0_i32_0 = arith.constant 0 : i32
    %c0_i32_1 = arith.constant 0 : i32
    return %c0_i32, %c0_i32_0 : i32, i32
  }
  func.func @transform_9(%arg0: i32, %arg1: i32) -> (i32, i32, i32) {
    %c0_i32 = arith.constant 0 : i32
    %c0_i32_0 = arith.constant 0 : i32
    return %arg1, %arg0, %c0_i32 : i32, i32, i32
  }
  func.func @transform_10(%arg0: i32, %arg1: i32) -> (i32, i32, i32) {
    %c0_i32 = arith.constant 0 : i32
    %c0_i32_0 = arith.constant 0 : i32
    return %arg1, %arg0, %c0_i32 : i32, i32, i32
  }
  func.func @transform_11(%arg0: i32, %arg1: i32) -> (i32, i32, i32) {
    %c0_i32 = arith.constant 0 : i32
    %c0_i32_0 = arith.constant 0 : i32
    return %arg1, %arg0, %c0_i32 : i32, i32, i32
  }
  func.func @transform_12(%arg0: i32, %arg1: i32) -> (i32, i32, i32) {
    %c0_i32 = arith.constant 0 : i32
    %c0_i32_0 = arith.constant 0 : i32
    return %arg1, %arg0, %c0_i32 : i32, i32, i32
  }
  func.func @transform_13(%arg0: i32, %arg1: i32) -> (i32, i32, i32) {
    %c0_i32 = arith.constant 0 : i32
    %c0_i32_0 = arith.constant 0 : i32
    return %arg1, %arg0, %c0_i32 : i32, i32, i32
  }
  func.func @transform_14(%arg0: i32, %arg1: i32) -> (i32, i32, i32) {
    %c0_i32 = arith.constant 0 : i32
    %c0_i32_0 = arith.constant 0 : i32
    return %arg1, %arg0, %c0_i32 : i32, i32, i32
  }
}

</mosaic_0001>

<llo_original>
// kernel: tpu_custom_call.1
$region0: #{tpu_custom_call.1}
  #allocation0 [shape = 'u32[]', space=smem, size = 0x4, offset = 0x4, fixed_abs, tag = 'smem constant byte address 0x4 - core index']
  #allocation1 [shape = 'u32[144,128]{1,0:T(1,128)}', space=vmem, size = 0x12000, scoped, tag = 'internal scratch']
  #allocation2 [shape = 'f32[8,32]{1,0:T(8,128)}', space=vmem, size = 0x1000, scoped, tag = 'scratch operand']
  #allocation3 [shape = 'f32[8,32]{1,0:T(8,128)}', space=vmem, size = 0x1000, scoped, tag = 'scratch operand']
  %s0 = inlined_call_operand.hbm [shape: f32[8,8,128], index: 0, kind: input, shape index: {}]
  %s1 = inlined_call_operand.hbm [shape: f32[8,8,32], index: 1, kind: input, shape index: {}]
  %s2 = inlined_call_operand.hbm [shape: f32[8,8,32], index: 2, kind: input, shape index: {}]
  %s3 = inlined_call_operand.vmem [shape: f32[8,32], index: 3, kind: input, shape index: {}]
  %s4 = inlined_call_operand.hbm [shape: f32[8,32], index: 4, kind: input, shape index: {}]
  %s5 = inlined_call_operand.hbm [shape: f32[32,128], index: 5, kind: input, shape index: {}]
  %s6 = inlined_call_operand.hbm [shape: f32[32,128], index: 6, kind: input, shape index: {}]
  %s7 = inlined_call_operand.vmem [shape: f32[1,64], index: 7, kind: input, shape index: {}]
  %s8 = inlined_call_operand.vmem [shape: f32[1,64], index: 8, kind: input, shape index: {}]
  %s9 = inlined_call_operand.hbm [shape: f32[8,8,32], index: 9, kind: output, shape index: {0}]
  %s10 = inlined_call_operand.hbm [shape: f32[8,8,32], index: 10, kind: output, shape index: {1}]
  %s11 = inlined_call_operand.hbm [shape: f32[8,8,32], index: 11, kind: output, shape index: {2}]
  %s12 = inlined_call_operand.hbm [shape: f32[8,8,32], index: 12, kind: output, shape index: {3}]
  %s13 = inlined_call_operand.hbm [shape: f32[8,8,32], index: 13, kind: output, shape index: {4}]
  %s14 = inlined_call_operand.hbm [shape: f32[8,8,32], index: 14, kind: output, shape index: {5}]
  %15 = xla_tuple %s9, %s10, %s11, %s12, %s13, %s14
  %s16 = sld [smem:[#allocation0]]
  $region114: #{tpu_custom_call.1} parent=0
    _
  %s18 = ssub.s32 1, %s16
  %s19 = scalar_select 0, %s18, %s16
  $region1: #{tpu_custom_call.1} parent=0
    #allocation4 [shape = 'u8[32768]{0}', space=vmem, size = 0x8000, scoped, tag = 'input window, operand 0, single buffered']
    #allocation5 [shape = 's32[1]{0}', space=sflag, size = 0x4, scoped, tag = 'scoped memory for tpu_custom_call.1']
    #allocation6 [shape = 's32[1]{0}', space=sflag, size = 0x4, scoped, tag = 'scoped memory for tpu_custom_call.1']
    #allocation7 [shape = 'u8[32768]{0}', space=vmem, size = 0x8000, scoped, tag = 'input window, operand 1, single buffered']
    #allocation8 [shape = 's32[1]{0}', space=sflag, size = 0x4, scoped, tag = 'scoped memory for tpu_custom_call.1']
    #allocation9 [shape = 'u8[32768]{0}', space=vmem, size = 0x8000, scoped, tag = 'input window, operand 2, single buffered']
    #allocation10 [shape = 'u8[4096]{0}', space=vmem, size = 0x1000, scoped, tag = 'input window, operand 4, single buffered']
    #allocation11 [shape = 's32[1]{0}', space=sflag, size = 0x4, scoped, tag = 'scoped memory for tpu_custom_call.1']
    #allocation12 [shape = 'u8[16384]{0}', space=vmem, size = 0x4000, scoped, tag = 'input window, operand 5, single buffered']
    #allocation13 [shape = 'u8[16384]{0}', space=vmem, size = 0x4000, scoped, tag = 'input window, operand 6, single buffered']
    #allocation14 [shape = 's32[1]{0}', space=sflag, size = 0x4, scoped, tag = 'scoped memory for tpu_custom_call.1']
    #allocation15 [shape = 'u8[32768]{0}', space=vmem, size = 0x8000, scoped, tag = 'output window, operand 0, single buffered']
    #allocation16 [shape = 'u8[32768]{0}', space=vmem, size = 0x8000, scoped, tag = 'output window, operand 1, single buffered']
    #allocation17 [shape = 's32[1]{0}', space=sflag, size = 0x4, scoped, tag = 'scoped memory for tpu_custom_call.1']
    #allocation18 [shape = 'u8[32768]{0}', space=vmem, size = 0x8000, scoped, tag = 'output window, operand 2, single buffered']
    #allocation19 [shape = 'u8[32768]{0}', space=vmem, size = 0x8000, scoped, tag = 'output window, operand 3, single buffered']
    #allocation20 [shape = 's32[1]{0}', space=sflag, size = 0x4, scoped, tag = 'scoped memory for tpu_custom_call.1']
    #allocation21 [shape = 'u8[32768]{0}', space=vmem, size = 0x8000, scoped, tag = 'output window, operand 4, single buffered']
    #allocation22 [shape = 'u8[32768]{0}', space=vmem, size = 0x8000, scoped, tag = 'output window, operand 5, single buffered']
    #allocation23 [shape = 's32[1]{0}', space=sflag, size = 0x4, scoped, tag = 'scoped memory for tpu_custom_call.1']
    %20 = vsyncpa [#allocation5], 0
    %21 = vsyncpa [#allocation8], 0
    %22 = vsyncpa [#allocation11], 0
    %23 = vsyncpa [#allocation14], 0
    %24 = vsyncpa [#allocation6], 0
    %25 = vsyncpa [#allocation17], 0
    %26 = vsyncpa [#allocation20], 0
    %27 = vsyncpa [#allocation23], 0
    // Predicated region
    $region2: #{tpu_custom_call.1} parent=1 // pred_check
      _
    $region3: #{tpu_custom_call.1} parent=1 // pred_check_branch
      %29 = sbr.rel (0) target = $region5
    $region4: #{tpu_custom_call.1} parent=1 // pred_region
      %s31 = ssub.s32 1024, 1024
      %32 = vsyncadd [#allocation5], %s31
      %s33 = sshll.u32 [#allocation4], 4
      %s34 = int_to_ptr.vmem [resolvable:$true] %s33
      %39 = dma.hbm_to_vmem [thread:$0]  %s0, 1024, %s34, [#allocation5], 128, 128, 8
    $region5: #{tpu_custom_call.1} parent=1 // pred_fallthru
      _
    // Predicated region
    $region6: #{tpu_custom_call.1} parent=1 // pred_check
      _
    $region7: #{tpu_custom_call.1} parent=1 // pred_check_branch
      %41 = sbr.rel (0) target = $region9
    $region8: #{tpu_custom_call.1} parent=1 // pred_region
      %s43 = ssub.s32 1024, 1024
      %44 = vsyncadd [#allocation8], %s43
      %s45 = sshll.u32 [#allocation7], 4
      %s46 = int_to_ptr.vmem [resolvable:$true] %s45
      %51 = dma.hbm_to_vmem [thread:$0]  %s1, 1024, %s46, [#allocation8], 128, 128, 8
    $region9: #{tpu_custom_call.1} parent=1 // pred_fallthru
      _
    // Predicated region
    $region10: #{tpu_custom_call.1} parent=1 // pred_check
      _
    $region11: #{tpu_custom_call.1} parent=1 // pred_check_branch
      %53 = sbr.rel (0) target = $region13
    $region12: #{tpu_custom_call.1} parent=1 // pred_region
      %s55 = ssub.s32 1024, 1024
      %56 = vsyncadd [#allocation8], %s55
      %s57 = sshll.u32 [#allocation9], 4
      %s58 = int_to_ptr.vmem [resolvable:$true] %s57
      %63 = dma.hbm_to_vmem [thread:$0]  %s2, 1024, %s58, [#allocation8], 128, 128, 8
    $region13: #{tpu_custom_call.1} parent=1 // pred_fallthru
      _
    // Predicated region
    $region14: #{tpu_custom_call.1} parent=1 // pred_check
      _
    $region15: #{tpu_custom_call.1} parent=1 // pred_check_branch
      %65 = sbr.rel (0) target = $region17
    $region16: #{tpu_custom_call.1} parent=1 // pred_region
      _
    $region17: #{tpu_custom_call.1} parent=1 // pred_fallthru
      _
    // Predicated region
    $region18: #{tpu_custom_call.1} parent=1 // pred_check
      _
    $region19: #{tpu_custom_call.1} parent=1 // pred_check_branch
      %67 = sbr.rel (0) target = $region21
    $region20: #{tpu_custom_call.1} parent=1 // pred_region
      %s69 = ssub.s32 128, 128
      %70 = vsyncadd [#allocation11], %s69
      %s72 = sshll.u32 [#allocation10], 4
      %s73 = int_to_ptr.vmem [resolvable:$true] %s72
      %75 = dma.hbm_to_vmem [thread:$0]  %s4, 128, %s73, [#allocation11]
    $region21: #{tpu_custom_call.1} parent=1 // pred_fallthru
      _
    // Predicated region
    $region22: #{tpu_custom_call.1} parent=1 // pred_check
      _
    $region23: #{tpu_custom_call.1} parent=1 // pred_check_branch
      %77 = sbr.rel (0) target = $region25
    $region24: #{tpu_custom_call.1} parent=1 // pred_region
      %s79 = ssub.s32 512, 512
      %80 = vsyncadd [#allocation11], %s79
      %s81 = sshll.u32 [#allocation12], 4
      %s82 = int_to_ptr.vmem [resolvable:$true] %s81
      %87 = dma.hbm_to_vmem [thread:$0]  %s5, 512, %s82, [#allocation11], 128, 128, 8
    $region25: #{tpu_custom_call.1} parent=1 // pred_fallthru
      _
    // Predicated region
    $region26: #{tpu_custom_call.1} parent=1 // pred_check
      _
    $region27: #{tpu_custom_call.1} parent=1 // pred_check_branch
      %89 = sbr.rel (0) target = $region29
    $region28: #{tpu_custom_call.1} parent=1 // pred_region
      %s91 = ssub.s32 512, 512
      %92 = vsyncadd [#allocation14], %s91
      %s93 = sshll.u32 [#allocation13], 4
      %s94 = int_to_ptr.vmem [resolvable:$true] %s93
      %99 = dma.hbm_to_vmem [thread:$0]  %s6, 512, %s94, [#allocation14], 128, 128, 8
    $region29: #{tpu_custom_call.1} parent=1 // pred_fallthru
      _
    // Predicated region
    $region30: #{tpu_custom_call.1} parent=1 // pred_check
      _
    $region31: #{tpu_custom_call.1} parent=1 // pred_check_branch
      %101 = sbr.rel (0) target = $region33
    $region32: #{tpu_custom_call.1} parent=1 // pred_region
      _
    $region33: #{tpu_custom_call.1} parent=1 // pred_fallthru
      _
    // Predicated region
    $region34: #{tpu_custom_call.1} parent=1 // pred_check
      _
    $region35: #{tpu_custom_call.1} parent=1 // pred_check_branch
      %103 = sbr.rel (0) target = $region37
    $region36: #{tpu_custom_call.1} parent=1 // pred_region
      _
    $region37: #{tpu_custom_call.1} parent=1 // pred_fallthru
      _
    // Predicated region
    $region38: #{tpu_custom_call.1} parent=1 // pred_check
      _
    $region39: #{tpu_custom_call.1} parent=1 // pred_check_branch
      %105 = sbr.rel (0) target = $region41
    $region40: #{tpu_custom_call.1} parent=1 // pred_region
      %106 = dma.done [#allocation5], 1024
    $region41: #{tpu_custom_call.1} parent=1 // pred_fallthru
      _
    // Predicated region
    $region42: #{tpu_custom_call.1} parent=1 // pred_check
      _
    $region43: #{tpu_custom_call.1} parent=1 // pred_check_branch
      %108 = sbr.rel (0) target = $region45
    $region44: #{tpu_custom_call.1} parent=1 // pred_region
      %109 = dma.done [#allocation8], 1024
    $region45: #{tpu_custom_call.1} parent=1 // pred_fallthru
      _
    // Predicated region
    $region46: #{tpu_custom_call.1} parent=1 // pred_check
      _
    $region47: #{tpu_custom_call.1} parent=1 // pred_check_branch
      %111 = sbr.rel (0) target = $region49
    $region48: #{tpu_custom_call.1} parent=1 // pred_region
      %112 = dma.done [#allocation8], 1024
    $region49: #{tpu_custom_call.1} parent=1 // pred_fallthru
      _
    // Predicated region
    $region50: #{tpu_custom_call.1} parent=1 // pred_check
      _
    $region51: #{tpu_custom_call.1} parent=1 // pred_check_branch
      %114 = sbr.rel (0) target = $region53
    $region52: #{tpu_custom_call.1} parent=1 // pred_region
      %115 = dma.done [#allocation11], 128
    $region53: #{tpu_custom_call.1} parent=1 // pred_fallthru
      _
    // Predicated region
    $region54: #{tpu_custom_call.1} parent=1 // pred_check
      _
    $region55: #{tpu_custom_call.1} parent=1 // pred_check_branch
      %117 = sbr.rel (0) target = $region57
    $region56: #{tpu_custom_call.1} parent=1 // pred_region
      %118 = dma.done [#allocation11], 512
    $region57: #{tpu_custom_call.1} parent=1 // pred_fallthru
      _
    // Predicated region
    $region58: #{tpu_custom_call.1} parent=1 // pred_check
      _
    $region59: #{tpu_custom_call.1} parent=1 // pred_check_branch
      %120 = sbr.rel (0) target = $region61
    $region60: #{tpu_custom_call.1} parent=1 // pred_region
      %121 = dma.done [#allocation14], 512
    $region61: #{tpu_custom_call.1} parent=1 // pred_fallthru
      _
    %p122 = scmp.eq.s32.totalorder 0, 0
    // Predicated region
    $region62: #{tpu_custom_call.1} parent=1 // pred_check
      %p123 = pneg %p122
    $region63: #{tpu_custom_call.1} parent=1 // pred_check_branch
      %125 = sbr.rel (%p123) target = $region65
    $region64: #{tpu_custom_call.1} parent=1 // pred_region
      %v126 = vld [vmem:[%s3] sm:$0xff]
      %vm127 = vcmask 261120
      %128 = vst.msk [vmem:[#allocation2] sm:$0xff] %vm127, %v126
      %v129 = vld [vmem:[#allocation10] sm:$0xff]
      %130 = vst.msk [vmem:[#allocation3] sm:$0xff] %vm127, %v129
    $region65: #{tpu_custom_call.1} parent=1 // pred_fallthru
      _
    %v131 = vld [vmem:[%s7] sm:$0x1]
    %v132 = vld [vmem:[%s8] sm:$0x1]
    %v133 = vld [vmem:[#allocation2] sm:$0xff]
    %v134 = vld [vmem:[#allocation3] sm:$0xff]
    %v135 = vld [vmem:[#allocation4] sm:$0xff]
    %v136 = vld [vmem:[#allocation12] sm:$0xff]
    %v137 = vld [vmem:[#allocation12 + $0x8] sm:$0xff]
    %v138 = vld [vmem:[#allocation12 + $0x10] sm:$0xff]
    %v139 = vld [vmem:[#allocation12 + $0x18] sm:$0xff]
    %vm140 = vcmask 261120
    %v142 = vsel %vm140, %v133, 0
    %144 = vmatprep.subr.mxu0 0.0
    %145 = vmatpush1.msra.mxu0 %v136
    %146 = vmatprep.subr.mxu0 0.0
    %147 = vmatpush1.msra.mxu0 %v137
    %148 = vmatprep.subr.mxu0 0.0
    %149 = vmatpush1.msra.mxu0 %v138
    %150 = vmatprep.subr.mxu0 0.0
    %151 = vmatpush1.msra.mxu0 %v139
    %152 = vmatprep.subr.mxu0 0.0
    %153 = vmatpush1.msra.mxu0 0.0
    %154 = vmatprep.subr.mxu0 0.0
    %155 = vmatpush1.msra.mxu0 0.0
    %156 = vmatprep.subr.mxu0 0.0
    %157 = vmatpush1.msra.mxu0 0.0
    %158 = vmatprep.subr.mxu0 0.0
    %159 = vmatpush1.msra.mxu0 0.0
    %160 = vmatprep.subr.mxu0 0.0
    %161 = vmatpush1.msra.mxu0 0.0
    %162 = vmatprep.subr.mxu0 0.0
    %163 = vmatpush1.msra.mxu0 0.0
    %164 = vmatprep.subr.mxu0 0.0
    %165 = vmatpush1.msra.mxu0 0.0
    %166 = vmatprep.subr.mxu0 0.0
    %167 = vmatpush1.msra.mxu0 0.0
    %168 = vmatprep.subr.mxu0 0.0
    %169 = vmatpush1.msra.mxu0 0.0
    %170 = vmatprep.subr.mxu0 0.0
    %171 = vmatpush1.msra.mxu0 0.0
    %172 = vmatprep.subr.mxu0 0.0
    %173 = vmatpush1.msra.mxu0 0.0
    %174 = vmatprep.subr.mxu0 0.0
    %175 = vmatpush1.msra.mxu0 0.0
    %176 = vmatprep.subr.mxu0 0.0
    %177 = vmatpush1.msra.mxu0 0.0
    %178 = vmatprep.subr.mxu0 0.0
    %179 = vmatpush1.msra.mxu0 0.0
    %180 = vmatprep.subr.mxu0 0.0
    %181 = vmatpush1.msra.mxu0 0.0
    %182 = vmatprep.subr.mxu0 0.0
    %183 = vmatpush1.msra.mxu0 0.0
    %184 = vmatprep.subr.mxu0 0.0
    %185 = vmatpush1.msra.mxu0 0.0
    %186 = vmatprep.subr.mxu0 0.0
    %187 = vmatpush1.msra.mxu0 0.0
    %188 = vmatprep.subr.mxu0 0.0
    %189 = vmatpush1.msra.mxu0 0.0
    %190 = vmatprep.subr.mxu0 0.0
    %191 = vmatpush1.msra.mxu0 0.0
    %192 = vmatprep.subr.mxu0 0.0
    %193 = vmatpush1.msra.mxu0 0.0
    %194 = vmatprep.subr.mxu0 0.0
    %195 = vmatpush1.msra.mxu0 0.0
    %196 = vmatprep.subr.mxu0 0.0
    %197 = vmatpush1.msra.mxu0 0.0
    %198 = vmatprep.subr.mxu0 0.0
    %199 = vmatpush1.msra.mxu0 0.0
    %200 = vmatprep.subr.mxu0 0.0
    %201 = vmatpush1.msra.mxu0 0.0
    %202 = vmatprep.subr.mxu0 0.0
    %203 = vmatpush1.msra.mxu0 0.0
    %204 = vmatprep.subr.mxu0 0.0
    %205 = vmatpush1.msra.mxu0 0.0
    %206 = vmatprep.subr.mxu0 0.0
    %207 = vmatpush1.msra.mxu0 0.0
    %208 = vmatprep.mubr.f32.mxu0 0.0
    %209 = vmatmul.mubr.f32.gmra.mrb[0].mxu0 %v142
    %v210 = vpop.f32.mrb[0].mxu0
    %v211 = vadd.f32 0.0, %v210
    %v212 = vpop.f32.mrb[0].mxu0
    %213 = vdwg.mxu0
    %v214 = vadd.f32 %v135, %v211
    %v215 = vmul.f32 %v214, 0.5
    %v216 = vtanh.pop %v215
    %v217 = vadd.f32 %v216, 1.0
    %v218 = vmul.f32 %v217, 0.5
    %v219 = vtanh.pop %v214
    %221 = vrot.lane.b32.xlu0 %v134, 32
    %v222 = vpop.permute.xlu0 %221
    %v224 = vmul.f32 %v218, %v222
    %226 = vrot.lane.b32.xlu0 %v219, 64
    %v227 = vpop.permute.xlu0 %226
    %v229 = vmul.f32 %v218, %v227
    %231 = vrot.lane.b32.xlu0 %v229, 32
    %v232 = vpop.permute.xlu0 %231
    %v234 = vadd.f32 %v224, %v232
    %v235 = vtanh.pop %v234
    %237 = vrot.lane.b32.xlu0 %v235, 64
    %v238 = vpop.permute.xlu0 %237
    %v240 = vmul.f32 %v218, %v238
    %242 = vrot.lane.b32.xlu0 %v234, 64
    %v243 = vpop.permute.xlu0 %242
    %v244 = vld [vmem:[#allocation13] sm:$0xff]
    %v245 = vld [vmem:[#allocation13 + $0x8] sm:$0xff]
    %v246 = vld [vmem:[#allocation13 + $0x10] sm:$0xff]
    %v247 = vld [vmem:[#allocation13 + $0x18] sm:$0xff]
    %249 = vrot.lane.b32.xlu0 %v240, 32
    %v250 = vpop.permute.xlu0 %249
    %251 = vrot.lane.b32.xlu0 %v243, 32
    %v252 = vpop.permute.xlu0 %251
    %v253 = vsel %vm140, %v250, 0
    %v255 = vsel %vm140, %v252, 0
    %257 = vmatprep.subr.mxu0 0.0
    %258 = vmatpush1.msra.mxu0 %v244
    %259 = vmatprep.subr.mxu0 0.0
    %260 = vmatpush1.msra.mxu0 %v245
    %261 = vmatprep.subr.mxu0 0.0
    %262 = vmatpush1.msra.mxu0 %v246
    %263 = vmatprep.subr.mxu0 0.0
    %264 = vmatpush1.msra.mxu0 %v247
    %265 = vmatprep.subr.mxu0 0.0
    %266 = vmatpush1.msra.mxu0 0.0
    %267 = vmatprep.subr.mxu0 0.0
    %268 = vmatpush1.msra.mxu0 0.0
    %269 = vmatprep.subr.mxu0 0.0
    %270 = vmatpush1.msra.mxu0 0.0
    %271 = vmatprep.subr.mxu0 0.0
    %272 = vmatpush1.msra.mxu0 0.0
    %273 = vmatprep.subr.mxu0 0.0
    %274 = vmatpush1.msra.mxu0 0.0
    %275 = vmatprep.subr.mxu0 0.0
    %276 = vmatpush1.msra.mxu0 0.0
    %277 = vmatprep.subr.mxu0 0.0
    %278 = vmatpush1.msra.mxu0 0.0
    %279 = vmatprep.subr.mxu0 0.0
    %280 = vmatpush1.msra.mxu0 0.0
    %281 = vmatprep.subr.mxu0 0.0
    %282 = vmatpush1.msra.mxu0 0.0
    %283 = vmatprep.subr.mxu0 0.0
    %284 = vmatpush1.msra.mxu0 0.0
    %285 = vmatprep.subr.mxu0 0.0
    %286 = vmatpush1.msra.mxu0 0.0
    %287 = vmatprep.subr.mxu0 0.0
    %288 = vmatpush1.msra.mxu0 0.0
    %289 = vmatprep.subr.mxu0 0.0
    %290 = vmatpush1.msra.mxu0 0.0
    %291 = vmatprep.subr.mxu0 0.0
    %292 = vmatpush1.msra.mxu0 0.0
    %293 = vmatprep.subr.mxu0 0.0
    %294 = vmatpush1.msra.mxu0 0.0
    %295 = vmatprep.subr.mxu0 0.0
    %296 = vmatpush1.msra.mxu0 0.0
    %297 = vmatprep.subr.mxu0 0.0
    %298 = vmatpush1.msra.mxu0 0.0
    %299 = vmatprep.subr.mxu0 0.0
    %300 = vmatpush1.msra.mxu0 0.0
    %301 = vmatprep.subr.mxu0 0.0
    %302 = vmatpush1.msra.mxu0 0.0
    %303 = vmatprep.subr.mxu0 0.0
    %304 = vmatpush1.msra.mxu0 0.0
    %305 = vmatprep.subr.mxu0 0.0
    %306 = vmatpush1.msra.mxu0 0.0
    %307 = vmatprep.subr.mxu0 0.0
    %308 = vmatpush1.msra.mxu0 0.0
    %309 = vmatprep.subr.mxu0 0.0
    %310 = vmatpush1.msra.mxu0 0.0
    %311 = vmatprep.subr.mxu0 0.0
    %312 = vmatpush1.msra.mxu0 0.0
    %313 = vmatprep.subr.mxu0 0.0
    %314 = vmatpush1.msra.mxu0 0.0
    %315 = vmatprep.subr.mxu0 0.0
    %316 = vmatpush1.msra.mxu0 0.0
    %317 = vmatprep.subr.mxu0 0.0
    %318 = vmatpush1.msra.mxu0 0.0
    %319 = vmatprep.subr.mxu0 0.0
    %320 = vmatpush1.msra.mxu0 0.0
    %321 = vmatprep.mubr.f32.mxu0 0.0
    %322 = vmatmul.mubr.f32.gmra.mrb[0].mxu0 %v253
    %v323 = vpop.f32.mrb[0].mxu0
    %v324 = vadd.f32 0.0, %v323
    %v325 = vpop.f32.mrb[0].mxu0
    %326 = vmatprep.mubr.f32.mxu0 0.0
    %327 = vmatmul.mubr.f32.gmra.mrb[0].mxu0 %v255
    %v328 = vpop.f32.mrb[0].mxu0
    %v329 = vadd.f32 0.0, %v328
    %v330 = vpop.f32.mrb[0].mxu0
    %331 = vdwg.mxu0
    %v333 = vlaneseq
    %v334 = vshrl.u32 %v333, 7
    %v335 = vsub.s32 0, %v334
    %v336 = vrot.slane %v131, %v335
    %v338 = vadd.f32 %v324, %v336
    %v340 = vlaneseq
    %v341 = vshrl.u32 %v340, 7
    %v342 = vsub.s32 0, %v341
    %v343 = vrot.slane %v132, %v342
    %344 = vrot.lane.b32.xlu0 %v343, 64
    %v345 = vpop.permute.xlu0 %344
    %v347 = vadd.f32 %v329, %v345
    %v348 = vmax.f32 %v338, 0.0
    %v349 = vand.u32 2147483647, %v338
    %v350 = vsub.f32 0.0, %v349
    %v351 = vmul.f32 %v350, 1.442695
    %v352 = vpow.pop %v351
    %v353 = vadd.f32 %v352, 1.0
    %v354 = vlog2.pop %v353
    %v355 = vmul.f32 %v354, 0.6931472
    %v356 = vmul.f32 -0.5, %v352
    %v357 = vadd.f32 %v356, 1.0
    %v358 = vmul.f32 %v357, %v352
    %v359 = vand.u32 2147483647, %v352
    %vm360 = vcmp.lt.f32.partialorder %v359, 0.0004427343
    %v361 = vsel %vm360, %v358, %v355
    %v362 = vadd.f32 %v348, %v361
    %v363 = vmax.f32 %v347, 0.0
    %v364 = vand.u32 2147483647, %v347
    %v365 = vsub.f32 0.0, %v364
    %v366 = vmul.f32 %v365, 1.442695
    %v367 = vpow.pop %v366
    %v368 = vadd.f32 %v367, 1.0
    %v369 = vlog2.pop %v368
    %v370 = vmul.f32 %v369, 0.6931472
    %v371 = vmul.f32 -0.5, %v367
    %v372 = vadd.f32 %v371, 1.0
    %v373 = vmul.f32 %v372, %v367
    %v374 = vand.u32 2147483647, %v367
    %vm375 = vcmp.lt.f32.partialorder %v374, 0.0004427343
    %v376 = vsel %vm375, %v373, %v370
    %v377 = vadd.f32 %v363, %v376
    %v378 = vld [vmem:[#allocation7] sm:$0xff]
    %v379 = vmul.f32 %v362, %v378
    %381 = vrot.lane.b32.xlu0 %v379, 32
    %v382 = vpop.permute.xlu0 %381
    %v384 = vadd.f32 %v338, %v382
    %v385 = vld [vmem:[#allocation9] sm:$0xff]
    %387 = vrot.lane.b32.xlu0 %v385, 64
    %v388 = vpop.permute.xlu0 %387
    %v390 = vmul.f32 %v377, %v388
    %392 = vrot.lane.b32.xlu0 %v390, 32
    %v393 = vpop.permute.xlu0 %392
    %v395 = vadd.f32 %v347, %v393
    %397 = vrot.lane.b32.xlu0 %v384, 96
    %v398 = vpop.permute.xlu0 %397
    %400 = vst.msk [vmem:[#allocation15] sm:$0xff] %vm140, %v398
    %402 = vrot.lane.b32.xlu0 %v395, 32
    %v403 = vpop.permute.xlu0 %402
    %405 = vst.msk [vmem:[#allocation16] sm:$0xff] %vm140, %v403
    %407 = vrot.lane.b32.xlu0 %v338, 96
    %v408 = vpop.permute.xlu0 %407
    %410 = vst.msk [vmem:[#allocation18] sm:$0xff] %vm140, %v408
    %411 = vst.msk [vmem:[#allocation19] sm:$0xff] %vm140, %v362
    %413 = vrot.lane.b32.xlu0 %v347, 32
    %v414 = vpop.permute.xlu0 %413
    %416 = vst.msk [vmem:[#allocation21] sm:$0xff] %vm140, %v414
    %418 = vrot.lane.b32.xlu0 %v377, 64
    %v419 = vpop.permute.xlu0 %418
    %421 = vst.msk [vmem:[#allocation22] sm:$0xff] %vm140, %v419
    %s422 = scalar_lea.vmem [#allocation4], 8
    %v423 = vld [vmem:[%s422] sm:$0xff]
    %v424 = vld [vmem:[#allocation12] sm:$0xff]
    %v425 = vld [vmem:[#allocation12 + $0x8] sm:$0xff]
    %v426 = vld [vmem:[#allocation12 + $0x10] sm:$0xff]
    %v427 = vld [vmem:[#allocation12 + $0x18] sm:$0xff]
    %v428 = vsel %vm140, %v398, 0
    %430 = vmatprep.subr.mxu0 0.0
    %431 = vmatpush1.msra.mxu0 %v424
    %432 = vmatprep.subr.mxu0 0.0
    %433 = vmatpush1.msra.mxu0 %v425
    %434 = vmatprep.subr.mxu0 0.0
    %435 = vmatpush1.msra.mxu0 %v426
    %436 = vmatprep.subr.mxu0 0.0
    %437 = vmatpush1.msra.mxu0 %v427
    %438 = vmatprep.subr.mxu0 0.0
    %439 = vmatpush1.msra.mxu0 0.0
    %440 = vmatprep.subr.mxu0 0.0
    %441 = vmatpush1.msra.mxu0 0.0
    %442 = vmatprep.subr.mxu0 0.0
    %443 = vmatpush1.msra.mxu0 0.0
    %444 = vmatprep.subr.mxu0 0.0
    %445 = vmatpush1.msra.mxu0 0.0
    %446 = vmatprep.subr.mxu0 0.0
    %447 = vmatpush1.msra.mxu0 0.0
    %448 = vmatprep.subr.mxu0 0.0
    %449 = vmatpush1.msra.mxu0 0.0
    %450 = vmatprep.subr.mxu0 0.0
    %451 = vmatpush1.msra.mxu0 0.0
    %452 = vmatprep.subr.mxu0 0.0
    %453 = vmatpush1.msra.mxu0 0.0
    %454 = vmatprep.subr.mxu0 0.0
    %455 = vmatpush1.msra.mxu0 0.0
    %456 = vmatprep.subr.mxu0 0.0
    %457 = vmatpush1.msra.mxu0 0.0
    %458 = vmatprep.subr.mxu0 0.0
    %459 = vmatpush1.msra.mxu0 0.0
    %460 = vmatprep.subr.mxu0 0.0
    %461 = vmatpush1.msra.mxu0 0.0
    %462 = vmatprep.subr.mxu0 0.0
    %463 = vmatpush1.msra.mxu0 0.0
    %464 = vmatprep.subr.mxu0 0.0
    %465 = vmatpush1.msra.mxu0 0.0
    %466 = vmatprep.subr.mxu0 0.0
    %467 = vmatpush1.msra.mxu0 0.0
    %468 = vmatprep.subr.mxu0 0.0
    %469 = vmatpush1.msra.mxu0 0.0
    %470 = vmatprep.subr.mxu0 0.0
    %471 = vmatpush1.msra.mxu0 0.0
    %472 = vmatprep.subr.mxu0 0.0
    %473 = vmatpush1.msra.mxu0 0.0
    %474 = vmatprep.subr.mxu0 0.0
    %475 = vmatpush1.msra.mxu0 0.0
    %476 = vmatprep.subr.mxu0 0.0
    %477 = vmatpush1.msra.mxu0 0.0
    %478 = vmatprep.subr.mxu0 0.0
    %479 = vmatpush1.msra.mxu0 0.0
    %480 = vmatprep.subr.mxu0 0.0
    %481 = vmatpush1.msra.mxu0 0.0
    %482 = vmatprep.subr.mxu0 0.0
    %483 = vmatpush1.msra.mxu0 0.0
    %484 = vmatprep.subr.mxu0 0.0
    %485 = vmatpush1.msra.mxu0 0.0
    %486 = vmatprep.subr.mxu0 0.0
    %487 = vmatpush1.msra.mxu0 0.0
    %488 = vmatprep.subr.mxu0 0.0
    %489 = vmatpush1.msra.mxu0 0.0
    %490 = vmatprep.subr.mxu0 0.0
    %491 = vmatpush1.msra.mxu0 0.0
    %492 = vmatprep.subr.mxu0 0.0
    %493 = vmatpush1.msra.mxu0 0.0
    %494 = vmatprep.mubr.f32.mxu0 0.0
    %495 = vmatmul.mubr.f32.gmra.mrb[0].mxu0 %v428
    %v496 = vpop.f32.mrb[0].mxu0
    %v497 = vadd.f32 0.0, %v496
    %v498 = vpop.f32.mrb[0].mxu0
    %499 = vdwg.mxu0
    %v500 = vadd.f32 %v423, %v497
    %v501 = vmul.f32 %v500, 0.5
    %v502 = vtanh.pop %v501
    %v503 = vadd.f32 %v502, 1.0
    %v504 = vmul.f32 %v503, 0.5
    %v505 = vtanh.pop %v500
    %506 = vrot.lane.b32.xlu0 %v395, 64
    %v507 = vpop.permute.xlu0 %506
    %v509 = vmul.f32 %v504, %v507
    %511 = vrot.lane.b32.xlu0 %v505, 64
    %v512 = vpop.permute.xlu0 %511
    %v514 = vmul.f32 %v504, %v512
    %516 = vrot.lane.b32.xlu0 %v514, 32
    %v517 = vpop.permute.xlu0 %516
    %v519 = vadd.f32 %v509, %v517
    %v520 = vtanh.pop %v519
    %522 = vrot.lane.b32.xlu0 %v520, 64
    %v523 = vpop.permute.xlu0 %522
    %v525 = vmul.f32 %v504, %v523
    %527 = vrot.lane.b32.xlu0 %v519, 64
    %v528 = vpop.permute.xlu0 %527
    %v529 = vld [vmem:[#allocation13] sm:$0xff]
    %v530 = vld [vmem:[#allocation13 + $0x8] sm:$0xff]
    %v531 = vld [vmem:[#allocation13 + $0x10] sm:$0xff]
    %v532 = vld [vmem:[#allocation13 + $0x18] sm:$0xff]
    %534 = vrot.lane.b32.xlu0 %v525, 32
    %v535 = vpop.permute.xlu0 %534
    %536 = vrot.lane.b32.xlu0 %v528, 32
    %v537 = vpop.permute.xlu0 %536
    %v538 = vsel %vm140, %v535, 0
    %v540 = vsel %vm140, %v537, 0
    %542 = vmatprep.subr.mxu0 0.0
    %543 = vmatpush1.msra.mxu0 %v529
    %544 = vmatprep.subr.mxu0 0.0
    %545 = vmatpush1.msra.mxu0 %v530
    %546 = vmatprep.subr.mxu0 0.0
    %547 = vmatpush1.msra.mxu0 %v531
    %548 = vmatprep.subr.mxu0 0.0
    %549 = vmatpush1.msra.mxu0 %v532
    %550 = vmatprep.subr.mxu0 0.0
    %551 = vmatpush1.msra.mxu0 0.0
    %552 = vmatprep.subr.mxu0 0.0
    %553 = vmatpush1.msra.mxu0 0.0
    %554 = vmatprep.subr.mxu0 0.0
    %555 = vmatpush1.msra.mxu0 0.0
    %556 = vmatprep.subr.mxu0 0.0
    %557 = vmatpush1.msra.mxu0 0.0
    %558 = vmatprep.subr.mxu0 0.0
    %559 = vmatpush1.msra.mxu0 0.0
    %560 = vmatprep.subr.mxu0 0.0
    %561 = vmatpush1.msra.mxu0 0.0
    %562 = vmatprep.subr.mxu0 0.0
    %563 = vmatpush1.msra.mxu0 0.0
    %564 = vmatprep.subr.mxu0 0.0
    %565 = vmatpush1.msra.mxu0 0.0
    %566 = vmatprep.subr.mxu0 0.0
    %567 = vmatpush1.msra.mxu0 0.0
    %568 = vmatprep.subr.mxu0 0.0
    %569 = vmatpush1.msra.mxu0 0.0
    %570 = vmatprep.subr.mxu0 0.0
    %571 = vmatpush1.msra.mxu0 0.0
    %572 = vmatprep.subr.mxu0 0.0
    %573 = vmatpush1.msra.mxu0 0.0
    %574 = vmatprep.subr.mxu0 0.0
    %575 = vmatpush1.msra.mxu0 0.0
    %576 = vmatprep.subr.mxu0 0.0
    %577 = vmatpush1.msra.mxu0 0.0
    %578 = vmatprep.subr.mxu0 0.0
    %579 = vmatpush1.msra.mxu0 0.0
    %580 = vmatprep.subr.mxu0 0.0
    %581 = vmatpush1.msra.mxu0 0.0
    %582 = vmatprep.subr.mxu0 0.0
    %583 = vmatpush1.msra.mxu0 0.0
    %584 = vmatprep.subr.mxu0 0.0
    %585 = vmatpush1.msra.mxu0 0.0
    %586 = vmatprep.subr.mxu0 0.0
    %587 = vmatpush1.msra.mxu0 0.0
    %588 = vmatprep.subr.mxu0 0.0
    %589 = vmatpush1.msra.mxu0 0.0
    %590 = vmatprep.subr.mxu0 0.0
    %591 = vmatpush1.msra.mxu0 0.0
    %592 = vmatprep.subr.mxu0 0.0
    %593 = vmatpush1.msra.mxu0 0.0
    %594 = vmatprep.subr.mxu0 0.0
    %595 = vmatpush1.msra.mxu0 0.0
    %596 = vmatprep.subr.mxu0 0.0
    %597 = vmatpush1.msra.mxu0 0.0
    %598 = vmatprep.subr.mxu0 0.0
    %599 = vmatpush1.msra.mxu0 0.0
    %600 = vmatprep.subr.mxu0 0.0
    %601 = vmatpush1.msra.mxu0 0.0
    %602 = vmatprep.subr.mxu0 0.0
    %603 = vmatpush1.msra.mxu0 0.0
    %604 = vmatprep.subr.mxu0 0.0
    %605 = vmatpush1.msra.mxu0 0.0
    %606 = vmatprep.mubr.f32.mxu0 0.0
    %607 = vmatmul.mubr.f32.gmra.mrb[0].mxu0 %v538
    %v608 = vpop.f32.mrb[0].mxu0
    %v609 = vadd.f32 0.0, %v608
    %v610 = vpop.f32.mrb[0].mxu0
    %611 = vmatprep.mubr.f32.mxu0 0.0
    %612 = vmatmul.mubr.f32.gmra.mrb[0].mxu0 %v540
    %v613 = vpop.f32.mrb[0].mxu0
    %v614 = vadd.f32 0.0, %v613
    %v615 = vpop.f32.mrb[0].mxu0
    %616 = vdwg.mxu0
    %v617 = vadd.f32 %v609, %v336
    %v618 = vadd.f32 %v614, %v345
    %v619 = vmax.f32 %v617, 0.0
    %v620 = vand.u32 2147483647, %v617
    %v621 = vsub.f32 0.0, %v620
    %v622 = vmul.f32 %v621, 1.442695
    %v623 = vpow.pop %v622
    %v624 = vadd.f32 %v623, 1.0
    %v625 = vlog2.pop %v624
    %v626 = vmul.f32 %v625, 0.6931472
    %v627 = vmul.f32 -0.5, %v623
    %v628 = vadd.f32 %v627, 1.0
    %v629 = vmul.f32 %v628, %v623
    %v630 = vand.u32 2147483647, %v623
    %vm631 = vcmp.lt.f32.partialorder %v630, 0.0004427343
    %v632 = vsel %vm631, %v629, %v626
    %v633 = vadd.f32 %v619, %v632
    %v634 = vmax.f32 %v618, 0.0
    %v635 = vand.u32 2147483647, %v618
    %v636 = vsub.f32 0.0, %v635
    %v637 = vmul.f32 %v636, 1.442695
    %v638 = vpow.pop %v637
    %v639 = vadd.f32 %v638, 1.0
    %v640 = vlog2.pop %v639
    %v641 = vmul.f32 %v640, 0.6931472
    %v642 = vmul.f32 -0.5, %v638
    %v643 = vadd.f32 %v642, 1.0
    %v644 = vmul.f32 %v643, %v638
    %v645 = vand.u32 2147483647, %v638
    %vm646 = vcmp.lt.f32.partialorder %v645, 0.0004427343
    %v647 = vsel %vm646, %v644, %v641
    %v648 = vadd.f32 %v634, %v647
    %s649 = scalar_lea.vmem [#allocation7], 8
    %v650 = vld [vmem:[%s649] sm:$0xff]
    %v651 = vmul.f32 %v633, %v650
    %653 = vrot.lane.b32.xlu0 %v651, 32
    %v654 = vpop.permute.xlu0 %653
    %v656 = vadd.f32 %v617, %v654
    %s657 = scalar_lea.vmem [#allocation9], 8
    %v658 = vld [vmem:[%s657] sm:$0xff]
    %660 = vrot.lane.b32.xlu0 %v658, 64
    %v661 = vpop.permute.xlu0 %660
    %v663 = vmul.f32 %v648, %v661
    %665 = vrot.lane.b32.xlu0 %v663, 32
    %v666 = vpop.permute.xlu0 %665
    %v668 = vadd.f32 %v618, %v666
    %670 = vrot.lane.b32.xlu0 %v656, 96
    %v671 = vpop.permute.xlu0 %670
    %s673 = scalar_lea.vmem [#allocation15], 8
    %674 = vst.msk [vmem:[%s673] sm:$0xff] %vm140, %v671
    %676 = vrot.lane.b32.xlu0 %v668, 32
    %v677 = vpop.permute.xlu0 %676
    %s679 = scalar_lea.vmem [#allocation16], 8
    %680 = vst.msk [vmem:[%s679] sm:$0xff] %vm140, %v677
    %682 = vrot.lane.b32.xlu0 %v617, 96
    %v683 = vpop.permute.xlu0 %682
    %s685 = scalar_lea.vmem [#allocation18], 8
    %686 = vst.msk [vmem:[%s685] sm:$0xff] %vm140, %v683
    %s687 = scalar_lea.vmem [#allocation19], 8
    %688 = vst.msk [vmem:[%s687] sm:$0xff] %vm140, %v633
    %690 = vrot.lane.b32.xlu0 %v618, 32
    %v691 = vpop.permute.xlu0 %690
    %s693 = scalar_lea.vmem [#allocation21], 8
    %694 = vst.msk [vmem:[%s693] sm:$0xff] %vm140, %v691
    %696 = vrot.lane.b32.xlu0 %v648, 64
    %v697 = vpop.permute.xlu0 %696
    %s699 = scalar_lea.vmem [#allocation22], 8
    %700 = vst.msk [vmem:[%s699] sm:$0xff] %vm140, %v697
    %s701 = scalar_lea.vmem [#allocation4], 16
    %v702 = vld [vmem:[%s701] sm:$0xff]
    %v703 = vld [vmem:[#allocation12] sm:$0xff]
    %v704 = vld [vmem:[#allocation12 + $0x8] sm:$0xff]
    %v705 = vld [vmem:[#allocation12 + $0x10] sm:$0xff]
    %v706 = vld [vmem:[#allocation12 + $0x18] sm:$0xff]
    %v707 = vsel %vm140, %v671, 0
    %709 = vmatprep.subr.mxu0 0.0
    %710 = vmatpush1.msra.mxu0 %v703
    %711 = vmatprep.subr.mxu0 0.0
    %712 = vmatpush1.msra.mxu0 %v704
    %713 = vmatprep.subr.mxu0 0.0
    %714 = vmatpush1.msra.mxu0 %v705
    %715 = vmatprep.subr.mxu0 0.0
    %716 = vmatpush1.msra.mxu0 %v706
    %717 = vmatprep.subr.mxu0 0.0
    %718 = vmatpush1.msra.mxu0 0.0
    %719 = vmatprep.subr.mxu0 0.0
    %720 = vmatpush1.msra.mxu0 0.0
    %721 = vmatprep.subr.mxu0 0.0
    %722 = vmatpush1.msra.mxu0 0.0
    %723 = vmatprep.subr.mxu0 0.0
    %724 = vmatpush1.msra.mxu0 0.0
    %725 = vmatprep.subr.mxu0 0.0
    %726 = vmatpush1.msra.mxu0 0.0
    %727 = vmatprep.subr.mxu0 0.0
    %728 = vmatpush1.msra.mxu0 0.0
    %729 = vmatprep.subr.mxu0 0.0
    %730 = vmatpush1.msra.mxu0 0.0
    %731 = vmatprep.subr.mxu0 0.0
    %732 = vmatpush1.msra.mxu0 0.0
    %733 = vmatprep.subr.mxu0 0.0
    %734 = vmatpush1.msra.mxu0 0.0
    %735 = vmatprep.subr.mxu0 0.0
    %736 = vmatpush1.msra.mxu0 0.0
    %737 = vmatprep.subr.mxu0 0.0
    %738 = vmatpush1.msra.mxu0 0.0
    %739 = vmatprep.subr.mxu0 0.0
    %740 = vmatpush1.msra.mxu0 0.0
    %741 = vmatprep.subr.mxu0 0.0
    %742 = vmatpush1.msra.mxu0 0.0
    %743 = vmatprep.subr.mxu0 0.0
    %744 = vmatpush1.msra.mxu0 0.0
    %745 = vmatprep.subr.mxu0 0.0
    %746 = vmatpush1.msra.mxu0 0.0
    %747 = vmatprep.subr.mxu0 0.0
    %748 = vmatpush1.msra.mxu0 0.0
    %749 = vmatprep.subr.mxu0 0.0
    %750 = vmatpush1.msra.mxu0 0.0
    %751 = vmatprep.subr.mxu0 0.0
    %752 = vmatpush1.msra.mxu0 0.0
    %753 = vmatprep.subr.mxu0 0.0
    %754 = vmatpush1.msra.mxu0 0.0
    %755 = vmatprep.subr.mxu0 0.0
    %756 = vmatpush1.msra.mxu0 0.0
    %757 = vmatprep.subr.mxu0 0.0
    %758 = vmatpush1.msra.mxu0 0.0
    %759 = vmatprep.subr.mxu0 0.0
    %760 = vmatpush1.msra.mxu0 0.0
    %761 = vmatprep.subr.mxu0 0.0
    %762 = vmatpush1.msra.mxu0 0.0
    %763 = vmatprep.subr.mxu0 0.0
    %764 = vmatpush1.msra.mxu0 0.0
    %765 = vmatprep.subr.mxu0 0.0
    %766 = vmatpush1.msra.mxu0 0.0
    %767 = vmatprep.subr.mxu0 0.0
    %768 = vmatpush1.msra.mxu0 0.0
    %769 = vmatprep.subr.mxu0 0.0
    %770 = vmatpush1.msra.mxu0 0.0
    %771 = vmatprep.subr.mxu0 0.0
    %772 = vmatpush1.msra.mxu0 0.0
    %773 = vmatprep.mubr.f32.mxu0 0.0
    %774 = vmatmul.mubr.f32.gmra.mrb[0].mxu0 %v707
    %v775 = vpop.f32.mrb[0].mxu0
    %v776 = vadd.f32 0.0, %v775
    %v777 = vpop.f32.mrb[0].mxu0
    %778 = vdwg.mxu0
    %v779 = vadd.f32 %v702, %v776
    %v780 = vmul.f32 %v779, 0.5
    %v781 = vtanh.pop %v780
    %v782 = vadd.f32 %v781, 1.0
    %v783 = vmul.f32 %v782, 0.5
    %v784 = vtanh.pop %v779
    %785 = vrot.lane.b32.xlu0 %v668, 64
    %v786 = vpop.permute.xlu0 %785
    %v788 = vmul.f32 %v783, %v786
    %790 = vrot.lane.b32.xlu0 %v784, 64
    %v791 = vpop.permute.xlu0 %790
    %v793 = vmul.f32 %v783, %v791
    %795 = vrot.lane.b32.xlu0 %v793, 32
    %v796 = vpop.permute.xlu0 %795
    %v798 = vadd.f32 %v788, %v796
    %v799 = vtanh.pop %v798
    %801 = vrot.lane.b32.xlu0 %v799, 64
    %v802 = vpop.permute.xlu0 %801
    %v804 = vmul.f32 %v783, %v802
    %806 = vrot.lane.b32.xlu0 %v798, 64
    %v807 = vpop.permute.xlu0 %806
    %v808 = vld [vmem:[#allocation13] sm:$0xff]
    %v809 = vld [vmem:[#allocation13 + $0x8] sm:$0xff]
    %v810 = vld [vmem:[#allocation13 + $0x10] sm:$0xff]
    %v811 = vld [vmem:[#allocation13 + $0x18] sm:$0xff]
    %813 = vrot.lane.b32.xlu0 %v804, 32
    %v814 = vpop.permute.xlu0 %813
    %815 = vrot.lane.b32.xlu0 %v807, 32
    %v816 = vpop.permute.xlu0 %815
    %v817 = vsel %vm140, %v814, 0
    %v819 = vsel %vm140, %v816, 0
    %821 = vmatprep.subr.mxu0 0.0
    %822 = vmatpush1.msra.mxu0 %v808
    %823 = vmatprep.subr.mxu0 0.0
    %824 = vmatpush1.msra.mxu0 %v809
    %825 = vmatprep.subr.mxu0 0.0
    %826 = vmatpush1.msra.mxu0 %v810
    %827 = vmatprep.subr.mxu0 0.0
    %828 = vmatpush1.msra.mxu0 %v811
    %829 = vmatprep.subr.mxu0 0.0
    %830 = vmatpush1.msra.mxu0 0.0
    %831 = vmatprep.subr.mxu0 0.0
    %832 = vmatpush1.msra.mxu0 0.0
    %833 = vmatprep.subr.mxu0 0.0
    %834 = vmatpush1.msra.mxu0 0.0
    %835 = vmatprep.subr.mxu0 0.0
    %836 = vmatpush1.msra.mxu0 0.0
    %837 = vmatprep.subr.mxu0 0.0
    %838 = vmatpush1.msra.mxu0 0.0
    %839 = vmatprep.subr.mxu0 0.0
    %840 = vmatpush1.msra.mxu0 0.0
    %841 = vmatprep.subr.mxu0 0.0
    %842 = vmatpush1.msra.mxu0 0.0
    %843 = vmatprep.subr.mxu0 0.0
    %844 = vmatpush1.msra.mxu0 0.0
    %845 = vmatprep.subr.mxu0 0.0
    %846 = vmatpush1.msra.mxu0 0.0
    %847 = vmatprep.subr.mxu0 0.0
    %848 = vmatpush1.msra.mxu0 0.0
    %849 = vmatprep.subr.mxu0 0.0
    %850 = vmatpush1.msra.mxu0 0.0
    %851 = vmatprep.subr.mxu0 0.0
    %852 = vmatpush1.msra.mxu0 0.0
    %853 = vmatprep.subr.mxu0 0.0
    %854 = vmatpush1.msra.mxu0 0.0
    %855 = vmatprep.subr.mxu0 0.0
    %856 = vmatpush1.msra.mxu0 0.0
    %857 = vmatprep.subr.mxu0 0.0
    %858 = vmatpush1.msra.mxu0 0.0
    %859 = vmatprep.subr.mxu0 0.0
    %860 = vmatpush1.msra.mxu0 0.0
    %861 = vmatprep.subr.mxu0 0.0
    %862 = vmatpush1.msra.mxu0 0.0
    %863 = vmatprep.subr.mxu0 0.0
    %864 = vmatpush1.msra.mxu0 0.0
    %865 = vmatprep.subr.mxu0 0.0
    %866 = vmatpush1.msra.mxu0 0.0
    %867 = vmatprep.subr.mxu0 0.0
    %868 = vmatpush1.msra.mxu0 0.0
    %869 = vmatprep.subr.mxu0 0.0
    %870 = vmatpush1.msra.mxu0 0.0
    %871 = vmatprep.subr.mxu0 0.0
    %872 = vmatpush1.msra.mxu0 0.0
    %873 = vmatprep.subr.mxu0 0.0
    %874 = vmatpush1.msra.mxu0 0.0
    %875 = vmatprep.subr.mxu0 0.0
    %876 = vmatpush1.msra.mxu0 0.0
    %877 = vmatprep.subr.mxu0 0.0
    %878 = vmatpush1.msra.mxu0 0.0
    %879 = vmatprep.subr.mxu0 0.0
    %880 = vmatpush1.msra.mxu0 0.0
    %881 = vmatprep.subr.mxu0 0.0
    %882 = vmatpush1.msra.mxu0 0.0
    %883 = vmatprep.subr.mxu0 0.0
    %884 = vmatpush1.msra.mxu0 0.0
    %885 = vmatprep.mubr.f32.mxu0 0.0
    %886 = vmatmul.mubr.f32.gmra.mrb[0].mxu0 %v817
    %v887 = vpop.f32.mrb[0].mxu0
    %v888 = vadd.f32 0.0, %v887
    %v889 = vpop.f32.mrb[0].mxu0
    %890 = vmatprep.mubr.f32.mxu0 0.0
    %891 = vmatmul.mubr.f32.gmra.mrb[0].mxu0 %v819
    %v892 = vpop.f32.mrb[0].mxu0
    %v893 = vadd.f32 0.0, %v892
    %v894 = vpop.f32.mrb[0].mxu0
    %895 = vdwg.mxu0
    %v896 = vadd.f32 %v888, %v336
    %v897 = vadd.f32 %v893, %v345
    %v898 = vmax.f32 %v896, 0.0
    %v899 = vand.u32 2147483647, %v896
    %v900 = vsub.f32 0.0, %v899
    %v901 = vmul.f32 %v900, 1.442695
    %v902 = vpow.pop %v901
    %v903 = vadd.f32 %v902, 1.0
    %v904 = vlog2.pop %v903
    %v905 = vmul.f32 %v904, 0.6931472
    %v906 = vmul.f32 -0.5, %v902
    %v907 = vadd.f32 %v906, 1.0
    %v908 = vmul.f32 %v907, %v902
    %v909 = vand.u32 2147483647, %v902
    %vm910 = vcmp.lt.f32.partialorder %v909, 0.0004427343
    %v911 = vsel %vm910, %v908, %v905
    %v912 = vadd.f32 %v898, %v911
    %v913 = vmax.f32 %v897, 0.0
    %v914 = vand.u32 2147483647, %v897
    %v915 = vsub.f32 0.0, %v914
    %v916 = vmul.f32 %v915, 1.442695
    %v917 = vpow.pop %v916
    %v918 = vadd.f32 %v917, 1.0
    %v919 = vlog2.pop %v918
    %v920 = vmul.f32 %v919, 0.6931472
    %v921 = vmul.f32 -0.5, %v917
    %v922 = vadd.f32 %v921, 1.0
    %v923 = vmul.f32 %v922, %v917
    %v924 = vand.u32 2147483647, %v917
    %vm925 = vcmp.lt.f32.partialorder %v924, 0.0004427343
    %v926 = vsel %vm925, %v923, %v920
    %v927 = vadd.f32 %v913, %v926
    %s928 = scalar_lea.vmem [#allocation7], 16
    %v929 = vld [vmem:[%s928] sm:$0xff]
    %v930 = vmul.f32 %v912, %v929
    %932 = vrot.lane.b32.xlu0 %v930, 32
    %v933 = vpop.permute.xlu0 %932
    %v935 = vadd.f32 %v896, %v933
    %s936 = scalar_lea.vmem [#allocation9], 16
    %v937 = vld [vmem:[%s936] sm:$0xff]
    %939 = vrot.lane.b32.xlu0 %v937, 64
    %v940 = vpop.permute.xlu0 %939
    %v942 = vmul.f32 %v927, %v940
    %944 = vrot.lane.b32.xlu0 %v942, 32
    %v945 = vpop.permute.xlu0 %944
    %v947 = vadd.f32 %v897, %v945
    %949 = vrot.lane.b32.xlu0 %v935, 96
    %v950 = vpop.permute.xlu0 %949
    %s952 = scalar_lea.vmem [#allocation15], 16
    %953 = vst.msk [vmem:[%s952] sm:$0xff] %vm140, %v950
    %955 = vrot.lane.b32.xlu0 %v947, 32
    %v956 = vpop.permute.xlu0 %955
    %s958 = scalar_lea.vmem [#allocation16], 16
    %959 = vst.msk [vmem:[%s958] sm:$0xff] %vm140, %v956
    %961 = vrot.lane.b32.xlu0 %v896, 96
    %v962 = vpop.permute.xlu0 %961
    %s964 = scalar_lea.vmem [#allocation18], 16
    %965 = vst.msk [vmem:[%s964] sm:$0xff] %vm140, %v962
    %s966 = scalar_lea.vmem [#allocation19], 16
    %967 = vst.msk [vmem:[%s966] sm:$0xff] %vm140, %v912
    %969 = vrot.lane.b32.xlu0 %v897, 32
    %v970 = vpop.permute.xlu0 %969
    %s972 = scalar_lea.vmem [#allocation21], 16
    %973 = vst.msk [vmem:[%s972] sm:$0xff] %vm140, %v970
    %975 = vrot.lane.b32.xlu0 %v927, 64
    %v976 = vpop.permute.xlu0 %975
    %s978 = scalar_lea.vmem [#allocation22], 16
    %979 = vst.msk [vmem:[%s978] sm:$0xff] %vm140, %v976
    %s980 = scalar_lea.vmem [#allocation4], 24
    %v981 = vld [vmem:[%s980] sm:$0xff]
    %v982 = vld [vmem:[#allocation12] sm:$0xff]
    %v983 = vld [vmem:[#allocation12 + $0x8] sm:$0xff]
    %v984 = vld [vmem:[#allocation12 + $0x10] sm:$0xff]
    %v985 = vld [vmem:[#allocation12 + $0x18] sm:$0xff]
    %v986 = vsel %vm140, %v950, 0
    %988 = vmatprep.subr.mxu0 0.0
    %989 = vmatpush1.msra.mxu0 %v982
    %990 = vmatprep.subr.mxu0 0.0
    %991 = vmatpush1.msra.mxu0 %v983
    %992 = vmatprep.subr.mxu0 0.0
    %993 = vmatpush1.msra.mxu0 %v984
    %994 = vmatprep.subr.mxu0 0.0
    %995 = vmatpush1.msra.mxu0 %v985
    %996 = vmatprep.subr.mxu0 0.0
    %997 = vmatpush1.msra.mxu0 0.0
    %998 = vmatprep.subr.mxu0 0.0
    %999 = vmatpush1.msra.mxu0 0.0
    %1000 = vmatprep.subr.mxu0 0.0
    %1001 = vmatpush1.msra.mxu0 0.0
    %1002 = vmatprep.subr.mxu0 0.0
    %1003 = vmatpush1.msra.mxu0 0.0
    %1004 = vmatprep.subr.mxu0 0.0
    %1005 = vmatpush1.msra.mxu0 0.0
    %1006 = vmatprep.subr.mxu0 0.0
    %1007 = vmatpush1.msra.mxu0 0.0
    %1008 = vmatprep.subr.mxu0 0.0
    %1009 = vmatpush1.msra.mxu0 0.0
    %1010 = vmatprep.subr.mxu0 0.0
    %1011 = vmatpush1.msra.mxu0 0.0
    %1012 = vmatprep.subr.mxu0 0.0
    %1013 = vmatpush1.msra.mxu0 0.0
    %1014 = vmatprep.subr.mxu0 0.0
    %1015 = vmatpush1.msra.mxu0 0.0
    %1016 = vmatprep.subr.mxu0 0.0
    %1017 = vmatpush1.msra.mxu0 0.0
    %1018 = vmatprep.subr.mxu0 0.0
    %1019 = vmatpush1.msra.mxu0 0.0
    %1020 = vmatprep.subr.mxu0 0.0
    %1021 = vmatpush1.msra.mxu0 0.0
    %1022 = vmatprep.subr.mxu0 0.0
    %1023 = vmatpush1.msra.mxu0 0.0
    %1024 = vmatprep.subr.mxu0 0.0
    %1025 = vmatpush1.msra.mxu0 0.0
    %1026 = vmatprep.subr.mxu0 0.0
    %1027 = vmatpush1.msra.mxu0 0.0
    %1028 = vmatprep.subr.mxu0 0.0
    %1029 = vmatpush1.msra.mxu0 0.0
    %1030 = vmatprep.subr.mxu0 0.0
    %1031 = vmatpush1.msra.mxu0 0.0
    %1032 = vmatprep.subr.mxu0 0.0
    %1033 = vmatpush1.msra.mxu0 0.0
    %1034 = vmatprep.subr.mxu0 0.0
    %1035 = vmatpush1.msra.mxu0 0.0
    %1036 = vmatprep.subr.mxu0 0.0
    %1037 = vmatpush1.msra.mxu0 0.0
    %1038 = vmatprep.subr.mxu0 0.0
    %1039 = vmatpush1.msra.mxu0 0.0
    %1040 = vmatprep.subr.mxu0 0.0
    %1041 = vmatpush1.msra.mxu0 0.0
    %1042 = vmatprep.subr.mxu0 0.0
    %1043 = vmatpush1.msra.mxu0 0.0
    %1044 = vmatprep.subr.mxu0 0.0
    %1045 = vmatpush1.msra.mxu0 0.0
    %1046 = vmatprep.subr.mxu0 0.0
    %1047 = vmatpush1.msra.mxu0 0.0
    %1048 = vmatprep.subr.mxu0 0.0
    %1049 = vmatpush1.msra.mxu0 0.0
    %1050 = vmatprep.subr.mxu0 0.0
    %1051 = vmatpush1.msra.mxu0 0.0
    %1052 = vmatprep.mubr.f32.mxu0 0.0
    %1053 = vmatmul.mubr.f32.gmra.mrb[0].mxu0 %v986
    %v1054 = vpop.f32.mrb[0].mxu0
    %v1055 = vadd.f32 0.0, %v1054
    %v1056 = vpop.f32.mrb[0].mxu0
    %1057 = vdwg.mxu0
    %v1058 = vadd.f32 %v981, %v1055
    %v1059 = vmul.f32 %v1058, 0.5
    %v1060 = vtanh.pop %v1059
    %v1061 = vadd.f32 %v1060, 1.0
    %v1062 = vmul.f32 %v1061, 0.5
    %v1063 = vtanh.pop %v1058
    %1064 = vrot.lane.b32.xlu0 %v947, 64
    %v1065 = vpop.permute.xlu0 %1064
    %v1067 = vmul.f32 %v1062, %v1065
    %1069 = vrot.lane.b32.xlu0 %v1063, 64
    %v1070 = vpop.permute.xlu0 %1069
    %v1072 = vmul.f32 %v1062, %v1070
    %1074 = vrot.lane.b32.xlu0 %v1072, 32
    %v1075 = vpop.permute.xlu0 %1074
    %v1077 = vadd.f32 %v1067, %v1075
    %v1078 = vtanh.pop %v1077
    %1080 = vrot.lane.b32.xlu0 %v1078, 64
    %v1081 = vpop.permute.xlu0 %1080
    %v1083 = vmul.f32 %v1062, %v1081
    %1085 = vrot.lane.b32.xlu0 %v1077, 64
    %v1086 = vpop.permute.xlu0 %1085
    %v1087 = vld [vmem:[#allocation13] sm:$0xff]
    %v1088 = vld [vmem:[#allocation13 + $0x8] sm:$0xff]
    %v1089 = vld [vmem:[#allocation13 + $0x10] sm:$0xff]
    %v1090 = vld [vmem:[#allocation13 + $0x18] sm:$0xff]
    %1092 = vrot.lane.b32.xlu0 %v1083, 32
    %v1093 = vpop.permute.xlu0 %1092
    %1094 = vrot.lane.b32.xlu0 %v1086, 32
    %v1095 = vpop.permute.xlu0 %1094
    %v1096 = vsel %vm140, %v1093, 0
    %v1098 = vsel %vm140, %v1095, 0
    %1100 = vmatprep.subr.mxu0 0.0
    %1101 = vmatpush1.msra.mxu0 %v1087
    %1102 = vmatprep.subr.mxu0 0.0
    %1103 = vmatpush1.msra.mxu0 %v1088
    %1104 = vmatprep.subr.mxu0 0.0
    %1105 = vmatpush1.msra.mxu0 %v1089
    %1106 = vmatprep.subr.mxu0 0.0
    %1107 = vmatpush1.msra.mxu0 %v1090
    %1108 = vmatprep.subr.mxu0 0.0
    %1109 = vmatpush1.msra.mxu0 0.0
    %1110 = vmatprep.subr.mxu0 0.0
    %1111 = vmatpush1.msra.mxu0 0.0
    %1112 = vmatprep.subr.mxu0 0.0
    %1113 = vmatpush1.msra.mxu0 0.0
    %1114 = vmatprep.subr.mxu0 0.0
    %1115 = vmatpush1.msra.mxu0 0.0
    %1116 = vmatprep.subr.mxu0 0.0
    %1117 = vmatpush1.msra.mxu0 0.0
    %1118 = vmatprep.subr.mxu0 0.0
    %1119 = vmatpush1.msra.mxu0 0.0
    %1120 = vmatprep.subr.mxu0 0.0
    %1121 = vmatpush1.msra.mxu0 0.0
    %1122 = vmatprep.subr.mxu0 0.0
    %1123 = vmatpush1.msra.mxu0 0.0
    %1124 = vmatprep.subr.mxu0 0.0
    %1125 = vmatpush1.msra.mxu0 0.0
    %1126 = vmatprep.subr.mxu0 0.0
    %1127 = vmatpush1.msra.mxu0 0.0
    %1128 = vmatprep.subr.mxu0 0.0
    %1129 = vmatpush1.msra.mxu0 0.0
    %1130 = vmatprep.subr.mxu0 0.0
    %1131 = vmatpush1.msra.mxu0 0.0
    %1132 = vmatprep.subr.mxu0 0.0
    %1133 = vmatpush1.msra.mxu0 0.0
    %1134 = vmatprep.subr.mxu0 0.0
    %1135 = vmatpush1.msra.mxu0 0.0
    %1136 = vmatprep.subr.mxu0 0.0
    %1137 = vmatpush1.msra.mxu0 0.0
    %1138 = vmatprep.subr.mxu0 0.0
    %1139 = vmatpush1.msra.mxu0 0.0
    %1140 = vmatprep.subr.mxu0 0.0
    %1141 = vmatpush1.msra.mxu0 0.0
    %1142 = vmatprep.subr.mxu0 0.0
    %1143 = vmatpush1.msra.mxu0 0.0
    %1144 = vmatprep.subr.mxu0 0.0
    %1145 = vmatpush1.msra.mxu0 0.0
    %1146 = vmatprep.subr.mxu0 0.0
    %1147 = vmatpush1.msra.mxu0 0.0
    %1148 = vmatprep.subr.mxu0 0.0
    %1149 = vmatpush1.msra.mxu0 0.0
    %1150 = vmatprep.subr.mxu0 0.0
    %1151 = vmatpush1.msra.mxu0 0.0
    %1152 = vmatprep.subr.mxu0 0.0
    %1153 = vmatpush1.msra.mxu0 0.0
    %1154 = vmatprep.subr.mxu0 0.0
    %1155 = vmatpush1.msra.mxu0 0.0
    %1156 = vmatprep.subr.mxu0 0.0
    %1157 = vmatpush1.msra.mxu0 0.0
    %1158 = vmatprep.subr.mxu0 0.0
    %1159 = vmatpush1.msra.mxu0 0.0
    %1160 = vmatprep.subr.mxu0 0.0
    %1161 = vmatpush1.msra.mxu0 0.0
    %1162 = vmatprep.subr.mxu0 0.0
    %1163 = vmatpush1.msra.mxu0 0.0
    %1164 = vmatprep.mubr.f32.mxu0 0.0
    %1165 = vmatmul.mubr.f32.gmra.mrb[0].mxu0 %v1096
    %v1166 = vpop.f32.mrb[0].mxu0
    %v1167 = vadd.f32 0.0, %v1166
    %v1168 = vpop.f32.mrb[0].mxu0
    %1169 = vmatprep.mubr.f32.mxu0 0.0
    %1170 = vmatmul.mubr.f32.gmra.mrb[0].mxu0 %v1098
    %v1171 = vpop.f32.mrb[0].mxu0
    %v1172 = vadd.f32 0.0, %v1171
    %v1173 = vpop.f32.mrb[0].mxu0
    %1174 = vdwg.mxu0
    %v1175 = vadd.f32 %v1167, %v336
    %v1176 = vadd.f32 %v1172, %v345
    %v1177 = vmax.f32 %v1175, 0.0
    %v1178 = vand.u32 2147483647, %v1175
    %v1179 = vsub.f32 0.0, %v1178
    %v1180 = vmul.f32 %v1179, 1.442695
    %v1181 = vpow.pop %v1180
    %v1182 = vadd.f32 %v1181, 1.0
    %v1183 = vlog2.pop %v1182
    %v1184 = vmul.f32 %v1183, 0.6931472
    %v1185 = vmul.f32 -0.5, %v1181
    %v1186 = vadd.f32 %v1185, 1.0
    %v1187 = vmul.f32 %v1186, %v1181
    %v1188 = vand.u32 2147483647, %v1181
    %vm1189 = vcmp.lt.f32.partialorder %v1188, 0.0004427343
    %v1190 = vsel %vm1189, %v1187, %v1184
    %v1191 = vadd.f32 %v1177, %v1190
    %v1192 = vmax.f32 %v1176, 0.0
    %v1193 = vand.u32 2147483647, %v1176
    %v1194 = vsub.f32 0.0, %v1193
    %v1195 = vmul.f32 %v1194, 1.442695
    %v1196 = vpow.pop %v1195
    %v1197 = vadd.f32 %v1196, 1.0
    %v1198 = vlog2.pop %v1197
    %v1199 = vmul.f32 %v1198, 0.6931472
    %v1200 = vmul.f32 -0.5, %v1196
    %v1201 = vadd.f32 %v1200, 1.0
    %v1202 = vmul.f32 %v1201, %v1196
    %v1203 = vand.u32 2147483647, %v1196
    %vm1204 = vcmp.lt.f32.partialorder %v1203, 0.0004427343
    %v1205 = vsel %vm1204, %v1202, %v1199
    %v1206 = vadd.f32 %v1192, %v1205
    %s1207 = scalar_lea.vmem [#allocation7], 24
    %v1208 = vld [vmem:[%s1207] sm:$0xff]
    %v1209 = vmul.f32 %v1191, %v1208
    %1211 = vrot.lane.b32.xlu0 %v1209, 32
    %v1212 = vpop.permute.xlu0 %1211
    %v1214 = vadd.f32 %v1175, %v1212
    %s1215 = scalar_lea.vmem [#allocation9], 24
    %v1216 = vld [vmem:[%s1215] sm:$0xff]
    %1218 = vrot.lane.b32.xlu0 %v1216, 64
    %v1219 = vpop.permute.xlu0 %1218
    %v1221 = vmul.f32 %v1206, %v1219
    %1223 = vrot.lane.b32.xlu0 %v1221, 32
    %v1224 = vpop.permute.xlu0 %1223
    %v1226 = vadd.f32 %v1176, %v1224
    %1228 = vrot.lane.b32.xlu0 %v1214, 96
    %v1229 = vpop.permute.xlu0 %1228
    %s1231 = scalar_lea.vmem [#allocation15], 24
    %1232 = vst.msk [vmem:[%s1231] sm:$0xff] %vm140, %v1229
    %1234 = vrot.lane.b32.xlu0 %v1226, 32
    %v1235 = vpop.permute.xlu0 %1234
    %s1237 = scalar_lea.vmem [#allocation16], 24
    %1238 = vst.msk [vmem:[%s1237] sm:$0xff] %vm140, %v1235
    %1240 = vrot.lane.b32.xlu0 %v1175, 96
    %v1241 = vpop.permute.xlu0 %1240
    %s1243 = scalar_lea.vmem [#allocation18], 24
    %1244 = vst.msk [vmem:[%s1243] sm:$0xff] %vm140, %v1241
    %s1245 = scalar_lea.vmem [#allocation19], 24
    %1246 = vst.msk [vmem:[%s1245] sm:$0xff] %vm140, %v1191
    %1248 = vrot.lane.b32.xlu0 %v1176, 32
    %v1249 = vpop.permute.xlu0 %1248
    %s1251 = scalar_lea.vmem [#allocation21], 24
    %1252 = vst.msk [vmem:[%s1251] sm:$0xff] %vm140, %v1249
    %1254 = vrot.lane.b32.xlu0 %v1206, 64
    %v1255 = vpop.permute.xlu0 %1254
    %s1257 = scalar_lea.vmem [#allocation22], 24
    %1258 = vst.msk [vmem:[%s1257] sm:$0xff] %vm140, %v1255
    %s1259 = scalar_lea.vmem [#allocation4], 32
    %v1260 = vld [vmem:[%s1259] sm:$0xff]
    %v1261 = vld [vmem:[#allocation12] sm:$0xff]
    %v1262 = vld [vmem:[#allocation12 + $0x8] sm:$0xff]
    %v1263 = vld [vmem:[#allocation12 + $0x10] sm:$0xff]
    %v1264 = vld [vmem:[#allocation12 + $0x18] sm:$0xff]
    %v1265 = vsel %vm140, %v1229, 0
    %1267 = vmatprep.subr.mxu0 0.0
    %1268 = vmatpush1.msra.mxu0 %v1261
    %1269 = vmatprep.subr.mxu0 0.0
    %1270 = vmatpush1.msra.mxu0 %v1262
    %1271 = vmatprep.subr.mxu0 0.0
    %1272 = vmatpush1.msra.mxu0 %v1263
    %1273 = vmatprep.subr.mxu0 0.0
    %1274 = vmatpush1.msra.mxu0 %v1264
    %1275 = vmatprep.subr.mxu0 0.0
    %1276 = vmatpush1.msra.mxu0 0.0
    %1277 = vmatprep.subr.mxu0 0.0
    %1278 = vmatpush1.msra.mxu0 0.0
    %1279 = vmatprep.subr.mxu0 0.0
    %1280 = vmatpush1.msra.mxu0 0.0
    %1281 = vmatprep.subr.mxu0 0.0
    %1282 = vmatpush1.msra.mxu0 0.0
    %1283 = vmatprep.subr.mxu0 0.0
    %1284 = vmatpush1.msra.mxu0 0.0
    %1285 = vmatprep.subr.mxu0 0.0
    %1286 = vmatpush1.msra.mxu0 0.0
    %1287 = vmatprep.subr.mxu0 0.0
    %1288 = vmatpush1.msra.mxu0 0.0
    %1289 = vmatprep.subr.mxu0 0.0
    %1290 = vmatpush1.msra.mxu0 0.0
    %1291 = vmatprep.subr.mxu0 0.0
    %1292 = vmatpush1.msra.mxu0 0.0
    %1293 = vmatprep.subr.mxu0 0.0
    %1294 = vmatpush1.msra.mxu0 0.0
    %1295 = vmatprep.subr.mxu0 0.0
    %1296 = vmatpush1.msra.mxu0 0.0
    %1297 = vmatprep.subr.mxu0 0.0
    %1298 = vmatpush1.msra.mxu0 0.0
    %1299 = vmatprep.subr.mxu0 0.0
    %1300 = vmatpush1.msra.mxu0 0.0
    %1301 = vmatprep.subr.mxu0 0.0
    %1302 = vmatpush1.msra.mxu0 0.0
    %1303 = vmatprep.subr.mxu0 0.0
    %1304 = vmatpush1.msra.mxu0 0.0
    %1305 = vmatprep.subr.mxu0 0.0
    %1306 = vmatpush1.msra.mxu0 0.0
    %1307 = vmatprep.subr.mxu0 0.0
    %1308 = vmatpush1.msra.mxu0 0.0
    %1309 = vmatprep.subr.mxu0 0.0
    %1310 = vmatpush1.msra.mxu0 0.0
    %1311 = vmatprep.subr.mxu0 0.0
    %1312 = vmatpush1.msra.mxu0 0.0
    %1313 = vmatprep.subr.mxu0 0.0
    %1314 = vmatpush1.msra.mxu0 0.0
    %1315 = vmatprep.subr.mxu0 0.0
    %1316 = vmatpush1.msra.mxu0 0.0
    %1317 = vmatprep.subr.mxu0 0.0
    %1318 = vmatpush1.msra.mxu0 0.0
    %1319 = vmatprep.subr.mxu0 0.0
    %1320 = vmatpush1.msra.mxu0 0.0
    %1321 = vmatprep.subr.mxu0 0.0
    %1322 = vmatpush1.msra.mxu0 0.0
    %1323 = vmatprep.subr.mxu0 0.0
    %1324 = vmatpush1.msra.mxu0 0.0
    %1325 = vmatprep.subr.mxu0 0.0
    %1326 = vmatpush1.msra.mxu0 0.0
    %1327 = vmatprep.subr.mxu0 0.0
    %1328 = vmatpush1.msra.mxu0 0.0
    %1329 = vmatprep.subr.mxu0 0.0
    %1330 = vmatpush1.msra.mxu0 0.0
    %1331 = vmatprep.mubr.f32.mxu0 0.0
    %1332 = vmatmul.mubr.f32.gmra.mrb[0].mxu0 %v1265
    %v1333 = vpop.f32.mrb[0].mxu0
    %v1334 = vadd.f32 0.0, %v1333
    %v1335 = vpop.f32.mrb[0].mxu0
    %1336 = vdwg.mxu0
    %v1337 = vadd.f32 %v1260, %v1334
    %v1338 = vmul.f32 %v1337, 0.5
    %v1339 = vtanh.pop %v1338
    %v1340 = vadd.f32 %v1339, 1.0
    %v1341 = vmul.f32 %v1340, 0.5
    %v1342 = vtanh.pop %v1337
    %1343 = vrot.lane.b32.xlu0 %v1226, 64
    %v1344 = vpop.permute.xlu0 %1343
    %v1346 = vmul.f32 %v1341, %v1344
    %1348 = vrot.lane.b32.xlu0 %v1342, 64
    %v1349 = vpop.permute.xlu0 %1348
    %v1351 = vmul.f32 %v1341, %v1349
    %1353 = vrot.lane.b32.xlu0 %v1351, 32
    %v1354 = vpop.permute.xlu0 %1353
    %v1356 = vadd.f32 %v1346, %v1354
    %v1357 = vtanh.pop %v1356
    %1359 = vrot.lane.b32.xlu0 %v1357, 64
    %v1360 = vpop.permute.xlu0 %1359
    %v1362 = vmul.f32 %v1341, %v1360
    %1364 = vrot.lane.b32.xlu0 %v1356, 64
    %v1365 = vpop.permute.xlu0 %1364
    %v1366 = vld [vmem:[#allocation13] sm:$0xff]
    %v1367 = vld [vmem:[#allocation13 + $0x8] sm:$0xff]
    %v1368 = vld [vmem:[#allocation13 + $0x10] sm:$0xff]
    %v1369 = vld [vmem:[#allocation13 + $0x18] sm:$0xff]
    %1371 = vrot.lane.b32.xlu0 %v1362, 32
    %v1372 = vpop.permute.xlu0 %1371
    %1373 = vrot.lane.b32.xlu0 %v1365, 32
    %v1374 = vpop.permute.xlu0 %1373
    %v1375 = vsel %vm140, %v1372, 0
    %v1377 = vsel %vm140, %v1374, 0
    %1379 = vmatprep.subr.mxu0 0.0
    %1380 = vmatpush1.msra.mxu0 %v1366
    %1381 = vmatprep.subr.mxu0 0.0
    %1382 = vmatpush1.msra.mxu0 %v1367
    %1383 = vmatprep.subr.mxu0 0.0
    %1384 = vmatpush1.msra.mxu0 %v1368
    %1385 = vmatprep.subr.mxu0 0.0
    %1386 = vmatpush1.msra.mxu0 %v1369
    %1387 = vmatprep.subr.mxu0 0.0
    %1388 = vmatpush1.msra.mxu0 0.0
    %1389 = vmatprep.subr.mxu0 0.0
    %1390 = vmatpush1.msra.mxu0 0.0
    %1391 = vmatprep.subr.mxu0 0.0
    %1392 = vmatpush1.msra.mxu0 0.0
    %1393 = vmatprep.subr.mxu0 0.0
    %1394 = vmatpush1.msra.mxu0 0.0
    %1395 = vmatprep.subr.mxu0 0.0
    %1396 = vmatpush1.msra.mxu0 0.0
    %1397 = vmatprep.subr.mxu0 0.0
    %1398 = vmatpush1.msra.mxu0 0.0
    %1399 = vmatprep.subr.mxu0 0.0
    %1400 = vmatpush1.msra.mxu0 0.0
    %1401 = vmatprep.subr.mxu0 0.0
    %1402 = vmatpush1.msra.mxu0 0.0
    %1403 = vmatprep.subr.mxu0 0.0
    %1404 = vmatpush1.msra.mxu0 0.0
    %1405 = vmatprep.subr.mxu0 0.0
    %1406 = vmatpush1.msra.mxu0 0.0
    %1407 = vmatprep.subr.mxu0 0.0
    %1408 = vmatpush1.msra.mxu0 0.0
    %1409 = vmatprep.subr.mxu0 0.0
    %1410 = vmatpush1.msra.mxu0 0.0
    %1411 = vmatprep.subr.mxu0 0.0
    %1412 = vmatpush1.msra.mxu0 0.0
    %1413 = vmatprep.subr.mxu0 0.0
    %1414 = vmatpush1.msra.mxu0 0.0
    %1415 = vmatprep.subr.mxu0 0.0
    %1416 = vmatpush1.msra.mxu0 0.0
    %1417 = vmatprep.subr.mxu0 0.0
    %1418 = vmatpush1.msra.mxu0 0.0
    %1419 = vmatprep.subr.mxu0 0.0
    %1420 = vmatpush1.msra.mxu0 0.0
    %1421 = vmatprep.subr.mxu0 0.0
    %1422 = vmatpush1.msra.mxu0 0.0
    %1423 = vmatprep.subr.mxu0 0.0
    %1424 = vmatpush1.msra.mxu0 0.0
    %1425 = vmatprep.subr.mxu0 0.0
    %1426 = vmatpush1.msra.mxu0 0.0
    %1427 = vmatprep.subr.mxu0 0.0
    %1428 = vmatpush1.msra.mxu0 0.0
    %1429 = vmatprep.subr.mxu0 0.0
    %1430 = vmatpush1.msra.mxu0 0.0
    %1431 = vmatprep.subr.mxu0 0.0
    %1432 = vmatpush1.msra.mxu0 0.0
    %1433 = vmatprep.subr.mxu0 0.0
    %1434 = vmatpush1.msra.mxu0 0.0
    %1435 = vmatprep.subr.mxu0 0.0
    %1436 = vmatpush1.msra.mxu0 0.0
    %1437 = vmatprep.subr.mxu0 0.0
    %1438 = vmatpush1.msra.mxu0 0.0
    %1439 = vmatprep.subr.mxu0 0.0
    %1440 = vmatpush1.msra.mxu0 0.0
    %1441 = vmatprep.subr.mxu0 0.0
    %1442 = vmatpush1.msra.mxu0 0.0
    %1443 = vmatprep.mubr.f32.mxu0 0.0
    %1444 = vmatmul.mubr.f32.gmra.mrb[0].mxu0 %v1375
    %v1445 = vpop.f32.mrb[0].mxu0
    %v1446 = vadd.f32 0.0, %v1445
    %v1447 = vpop.f32.mrb[0].mxu0
    %1448 = vmatprep.mubr.f32.mxu0 0.0
    %1449 = vmatmul.mubr.f32.gmra.mrb[0].mxu0 %v1377
    %v1450 = vpop.f32.mrb[0].mxu0
    %v1451 = vadd.f32 0.0, %v1450
    %v1452 = vpop.f32.mrb[0].mxu0
    %1453 = vdwg.mxu0
    %v1454 = vadd.f32 %v1446, %v336
    %v1455 = vadd.f32 %v1451, %v345
    %v1456 = vmax.f32 %v1454, 0.0
    %v1457 = vand.u32 2147483647, %v1454
    %v1458 = vsub.f32 0.0, %v1457
    %v1459 = vmul.f32 %v1458, 1.442695
    %v1460 = vpow.pop %v1459
    %v1461 = vadd.f32 %v1460, 1.0
    %v1462 = vlog2.pop %v1461
    %v1463 = vmul.f32 %v1462, 0.6931472
    %v1464 = vmul.f32 -0.5, %v1460
    %v1465 = vadd.f32 %v1464, 1.0
    %v1466 = vmul.f32 %v1465, %v1460
    %v1467 = vand.u32 2147483647, %v1460
    %vm1468 = vcmp.lt.f32.partialorder %v1467, 0.0004427343
    %v1469 = vsel %vm1468, %v1466, %v1463
    %v1470 = vadd.f32 %v1456, %v1469
    %v1471 = vmax.f32 %v1455, 0.0
    %v1472 = vand.u32 2147483647, %v1455
    %v1473 = vsub.f32 0.0, %v1472
    %v1474 = vmul.f32 %v1473, 1.442695
    %v1475 = vpow.pop %v1474
    %v1476 = vadd.f32 %v1475, 1.0
    %v1477 = vlog2.pop %v1476
    %v1478 = vmul.f32 %v1477, 0.6931472
    %v1479 = vmul.f32 -0.5, %v1475
    %v1480 = vadd.f32 %v1479, 1.0
    %v1481 = vmul.f32 %v1480, %v1475
    %v1482 = vand.u32 2147483647, %v1475
    %vm1483 = vcmp.lt.f32.partialorder %v1482, 0.0004427343
    %v1484 = vsel %vm1483, %v1481, %v1478
    %v1485 = vadd.f32 %v1471, %v1484
    %s1486 = scalar_lea.vmem [#allocation7], 32
    %v1487 = vld [vmem:[%s1486] sm:$0xff]
    %v1488 = vmul.f32 %v1470, %v1487
    %1490 = vrot.lane.b32.xlu0 %v1488, 32
    %v1491 = vpop.permute.xlu0 %1490
    %v1493 = vadd.f32 %v1454, %v1491
    %s1494 = scalar_lea.vmem [#allocation9], 32
    %v1495 = vld [vmem:[%s1494] sm:$0xff]
    %1497 = vrot.lane.b32.xlu0 %v1495, 64
    %v1498 = vpop.permute.xlu0 %1497
    %v1500 = vmul.f32 %v1485, %v1498
    %1502 = vrot.lane.b32.xlu0 %v1500, 32
    %v1503 = vpop.permute.xlu0 %1502
    %v1505 = vadd.f32 %v1455, %v1503
    %1507 = vrot.lane.b32.xlu0 %v1493, 96
    %v1508 = vpop.permute.xlu0 %1507
    %s1510 = scalar_lea.vmem [#allocation15], 32
    %1511 = vst.msk [vmem:[%s1510] sm:$0xff] %vm140, %v1508
    %1513 = vrot.lane.b32.xlu0 %v1505, 32
    %v1514 = vpop.permute.xlu0 %1513
    %s1516 = scalar_lea.vmem [#allocation16], 32
    %1517 = vst.msk [vmem:[%s1516] sm:$0xff] %vm140, %v1514
    %1519 = vrot.lane.b32.xlu0 %v1454, 96
    %v1520 = vpop.permute.xlu0 %1519
    %s1522 = scalar_lea.vmem [#allocation18], 32
    %1523 = vst.msk [vmem:[%s1522] sm:$0xff] %vm140, %v1520
    %s1524 = scalar_lea.vmem [#allocation19], 32
    %1525 = vst.msk [vmem:[%s1524] sm:$0xff] %vm140, %v1470
    %1527 = vrot.lane.b32.xlu0 %v1455, 32
    %v1528 = vpop.permute.xlu0 %1527
    %s1530 = scalar_lea.vmem [#allocation21], 32
    %1531 = vst.msk [vmem:[%s1530] sm:$0xff] %vm140, %v1528
    %1533 = vrot.lane.b32.xlu0 %v1485, 64
    %v1534 = vpop.permute.xlu0 %1533
    %s1536 = scalar_lea.vmem [#allocation22], 32
    %1537 = vst.msk [vmem:[%s1536] sm:$0xff] %vm140, %v1534
    %s1538 = scalar_lea.vmem [#allocation4], 40
    %v1539 = vld [vmem:[%s1538] sm:$0xff]
    %v1540 = vld [vmem:[#allocation12] sm:$0xff]
    %v1541 = vld [vmem:[#allocation12 + $0x8] sm:$0xff]
    %v1542 = vld [vmem:[#allocation12 + $0x10] sm:$0xff]
    %v1543 = vld [vmem:[#allocation12 + $0x18] sm:$0xff]
    %v1544 = vsel %vm140, %v1508, 0
    %1546 = vmatprep.subr.mxu0 0.0
    %1547 = vmatpush1.msra.mxu0 %v1540
    %1548 = vmatprep.subr.mxu0 0.0
    %1549 = vmatpush1.msra.mxu0 %v1541
    %1550 = vmatprep.subr.mxu0 0.0
    %1551 = vmatpush1.msra.mxu0 %v1542
    %1552 = vmatprep.subr.mxu0 0.0
    %1553 = vmatpush1.msra.mxu0 %v1543
    %1554 = vmatprep.subr.mxu0 0.0
    %1555 = vmatpush1.msra.mxu0 0.0
    %1556 = vmatprep.subr.mxu0 0.0
    %1557 = vmatpush1.msra.mxu0 0.0
    %1558 = vmatprep.subr.mxu0 0.0
    %1559 = vmatpush1.msra.mxu0 0.0
    %1560 = vmatprep.subr.mxu0 0.0
    %1561 = vmatpush1.msra.mxu0 0.0
    %1562 = vmatprep.subr.mxu0 0.0
    %1563 = vmatpush1.msra.mxu0 0.0
    %1564 = vmatprep.subr.mxu0 0.0
    %1565 = vmatpush1.msra.mxu0 0.0
    %1566 = vmatprep.subr.mxu0 0.0
    %1567 = vmatpush1.msra.mxu0 0.0
    %1568 = vmatprep.subr.mxu0 0.0
    %1569 = vmatpush1.msra.mxu0 0.0
    %1570 = vmatprep.subr.mxu0 0.0
    %1571 = vmatpush1.msra.mxu0 0.0
    %1572 = vmatprep.subr.mxu0 0.0
    %1573 = vmatpush1.msra.mxu0 0.0
    %1574 = vmatprep.subr.mxu0 0.0
    %1575 = vmatpush1.msra.mxu0 0.0
    %1576 = vmatprep.subr.mxu0 0.0
    %1577 = vmatpush1.msra.mxu0 0.0
    %1578 = vmatprep.subr.mxu0 0.0
    %1579 = vmatpush1.msra.mxu0 0.0
    %1580 = vmatprep.subr.mxu0 0.0
    %1581 = vmatpush1.msra.mxu0 0.0
    %1582 = vmatprep.subr.mxu0 0.0
    %1583 = vmatpush1.msra.mxu0 0.0
    %1584 = vmatprep.subr.mxu0 0.0
    %1585 = vmatpush1.msra.mxu0 0.0
    %1586 = vmatprep.subr.mxu0 0.0
    %1587 = vmatpush1.msra.mxu0 0.0
    %1588 = vmatprep.subr.mxu0 0.0
    %1589 = vmatpush1.msra.mxu0 0.0
    %1590 = vmatprep.subr.mxu0 0.0
    %1591 = vmatpush1.msra.mxu0 0.0
    %1592 = vmatprep.subr.mxu0 0.0
    %1593 = vmatpush1.msra.mxu0 0.0
    %1594 = vmatprep.subr.mxu0 0.0
    %1595 = vmatpush1.msra.mxu0 0.0
    %1596 = vmatprep.subr.mxu0 0.0
    %1597 = vmatpush1.msra.mxu0 0.0
    %1598 = vmatprep.subr.mxu0 0.0
    %1599 = vmatpush1.msra.mxu0 0.0
    %1600 = vmatprep.subr.mxu0 0.0
    %1601 = vmatpush1.msra.mxu0 0.0
    %1602 = vmatprep.subr.mxu0 0.0
    %1603 = vmatpush1.msra.mxu0 0.0
    %1604 = vmatprep.subr.mxu0 0.0
    %1605 = vmatpush1.msra.mxu0 0.0
    %1606 = vmatprep.subr.mxu0 0.0
    %1607 = vmatpush1.msra.mxu0 0.0
    %1608 = vmatprep.subr.mxu0 0.0
    %1609 = vmatpush1.msra.mxu0 0.0
    %1610 = vmatprep.mubr.f32.mxu0 0.0
    %1611 = vmatmul.mubr.f32.gmra.mrb[0].mxu0 %v1544
    %v1612 = vpop.f32.mrb[0].mxu0
    %v1613 = vadd.f32 0.0, %v1612
    %v1614 = vpop.f32.mrb[0].mxu0
    %1615 = vdwg.mxu0
    %v1616 = vadd.f32 %v1539, %v1613
    %v1617 = vmul.f32 %v1616, 0.5
    %v1618 = vtanh.pop %v1617
    %v1619 = vadd.f32 %v1618, 1.0
    %v1620 = vmul.f32 %v1619, 0.5
    %v1621 = vtanh.pop %v1616
    %1622 = vrot.lane.b32.xlu0 %v1505, 64
    %v1623 = vpop.permute.xlu0 %1622
    %v1625 = vmul.f32 %v1620, %v1623
    %1627 = vrot.lane.b32.xlu0 %v1621, 64
    %v1628 = vpop.permute.xlu0 %1627
    %v1630 = vmul.f32 %v1620, %v1628
    %1632 = vrot.lane.b32.xlu0 %v1630, 32
    %v1633 = vpop.permute.xlu0 %1632
    %v1635 = vadd.f32 %v1625, %v1633
    %v1636 = vtanh.pop %v1635
    %1638 = vrot.lane.b32.xlu0 %v1636, 64
    %v1639 = vpop.permute.xlu0 %1638
    %v1641 = vmul.f32 %v1620, %v1639
    %1643 = vrot.lane.b32.xlu0 %v1635, 64
    %v1644 = vpop.permute.xlu0 %1643
    %v1645 = vld [vmem:[#allocation13] sm:$0xff]
    %v1646 = vld [vmem:[#allocation13 + $0x8] sm:$0xff]
    %v1647 = vld [vmem:[#allocation13 + $0x10] sm:$0xff]
    %v1648 = vld [vmem:[#allocation13 + $0x18] sm:$0xff]
    %1650 = vrot.lane.b32.xlu0 %v1641, 32
    %v1651 = vpop.permute.xlu0 %1650
    %1652 = vrot.lane.b32.xlu0 %v1644, 32
    %v1653 = vpop.permute.xlu0 %1652
    %v1654 = vsel %vm140, %v1651, 0
    %v1656 = vsel %vm140, %v1653, 0
    %1658 = vmatprep.subr.mxu0 0.0
    %1659 = vmatpush1.msra.mxu0 %v1645
    %1660 = vmatprep.subr.mxu0 0.0
    %1661 = vmatpush1.msra.mxu0 %v1646
    %1662 = vmatprep.subr.mxu0 0.0
    %1663 = vmatpush1.msra.mxu0 %v1647
    %1664 = vmatprep.subr.mxu0 0.0
    %1665 = vmatpush1.msra.mxu0 %v1648
    %1666 = vmatprep.subr.mxu0 0.0
    %1667 = vmatpush1.msra.mxu0 0.0
    %1668 = vmatprep.subr.mxu0 0.0
    %1669 = vmatpush1.msra.mxu0 0.0
    %1670 = vmatprep.subr.mxu0 0.0
    %1671 = vmatpush1.msra.mxu0 0.0
    %1672 = vmatprep.subr.mxu0 0.0
    %1673 = vmatpush1.msra.mxu0 0.0
    %1674 = vmatprep.subr.mxu0 0.0
    %1675 = vmatpush1.msra.mxu0 0.0
    %1676 = vmatprep.subr.mxu0 0.0
    %1677 = vmatpush1.msra.mxu0 0.0
    %1678 = vmatprep.subr.mxu0 0.0
    %1679 = vmatpush1.msra.mxu0 0.0
    %1680 = vmatprep.subr.mxu0 0.0
    %1681 = vmatpush1.msra.mxu0 0.0
    %1682 = vmatprep.subr.mxu0 0.0
    %1683 = vmatpush1.msra.mxu0 0.0
    %1684 = vmatprep.subr.mxu0 0.0
    %1685 = vmatpush1.msra.mxu0 0.0
    %1686 = vmatprep.subr.mxu0 0.0
    %1687 = vmatpush1.msra.mxu0 0.0
    %1688 = vmatprep.subr.mxu0 0.0
    %1689 = vmatpush1.msra.mxu0 0.0
    %1690 = vmatprep.subr.mxu0 0.0
    %1691 = vmatpush1.msra.mxu0 0.0
    %1692 = vmatprep.subr.mxu0 0.0
    %1693 = vmatpush1.msra.mxu0 0.0
    %1694 = vmatprep.subr.mxu0 0.0
    %1695 = vmatpush1.msra.mxu0 0.0
    %1696 = vmatprep.subr.mxu0 0.0
    %1697 = vmatpush1.msra.mxu0 0.0
    %1698 = vmatprep.subr.mxu0 0.0
    %1699 = vmatpush1.msra.mxu0 0.0
    %1700 = vmatprep.subr.mxu0 0.0
    %1701 = vmatpush1.msra.mxu0 0.0
    %1702 = vmatprep.subr.mxu0 0.0
    %1703 = vmatpush1.msra.mxu0 0.0
    %1704 = vmatprep.subr.mxu0 0.0
    %1705 = vmatpush1.msra.mxu0 0.0
    %1706 = vmatprep.subr.mxu0 0.0
    %1707 = vmatpush1.msra.mxu0 0.0
    %1708 = vmatprep.subr.mxu0 0.0
    %1709 = vmatpush1.msra.mxu0 0.0
    %1710 = vmatprep.subr.mxu0 0.0
    %1711 = vmatpush1.msra.mxu0 0.0
    %1712 = vmatprep.subr.mxu0 0.0
    %1713 = vmatpush1.msra.mxu0 0.0
    %1714 = vmatprep.subr.mxu0 0.0
    %1715 = vmatpush1.msra.mxu0 0.0
    %1716 = vmatprep.subr.mxu0 0.0
    %1717 = vmatpush1.msra.mxu0 0.0
    %1718 = vmatprep.subr.mxu0 0.0
    %1719 = vmatpush1.msra.mxu0 0.0
    %1720 = vmatprep.subr.mxu0 0.0
    %1721 = vmatpush1.msra.mxu0 0.0
    %1722 = vmatprep.mubr.f32.mxu0 0.0
    %1723 = vmatmul.mubr.f32.gmra.mrb[0].mxu0 %v1654
    %v1724 = vpop.f32.mrb[0].mxu0
    %v1725 = vadd.f32 0.0, %v1724
    %v1726 = vpop.f32.mrb[0].mxu0
    %1727 = vmatprep.mubr.f32.mxu0 0.0
    %1728 = vmatmul.mubr.f32.gmra.mrb[0].mxu0 %v1656
    %v1729 = vpop.f32.mrb[0].mxu0
    %v1730 = vadd.f32 0.0, %v1729
    %v1731 = vpop.f32.mrb[0].mxu0
    %1732 = vdwg.mxu0
    %v1733 = vadd.f32 %v1725, %v336
    %v1734 = vadd.f32 %v1730, %v345
    %v1735 = vmax.f32 %v1733, 0.0
    %v1736 = vand.u32 2147483647, %v1733
    %v1737 = vsub.f32 0.0, %v1736
    %v1738 = vmul.f32 %v1737, 1.442695
    %v1739 = vpow.pop %v1738
    %v1740 = vadd.f32 %v1739, 1.0
    %v1741 = vlog2.pop %v1740
    %v1742 = vmul.f32 %v1741, 0.6931472
    %v1743 = vmul.f32 -0.5, %v1739
    %v1744 = vadd.f32 %v1743, 1.0
    %v1745 = vmul.f32 %v1744, %v1739
    %v1746 = vand.u32 2147483647, %v1739
    %vm1747 = vcmp.lt.f32.partialorder %v1746, 0.0004427343
    %v1748 = vsel %vm1747, %v1745, %v1742
    %v1749 = vadd.f32 %v1735, %v1748
    %v1750 = vmax.f32 %v1734, 0.0
    %v1751 = vand.u32 2147483647, %v1734
    %v1752 = vsub.f32 0.0, %v1751
    %v1753 = vmul.f32 %v1752, 1.442695
    %v1754 = vpow.pop %v1753
    %v1755 = vadd.f32 %v1754, 1.0
    %v1756 = vlog2.pop %v1755
    %v1757 = vmul.f32 %v1756, 0.6931472
    %v1758 = vmul.f32 -0.5, %v1754
    %v1759 = vadd.f32 %v1758, 1.0
    %v1760 = vmul.f32 %v1759, %v1754
    %v1761 = vand.u32 2147483647, %v1754
    %vm1762 = vcmp.lt.f32.partialorder %v1761, 0.0004427343
    %v1763 = vsel %vm1762, %v1760, %v1757
    %v1764 = vadd.f32 %v1750, %v1763
    %s1765 = scalar_lea.vmem [#allocation7], 40
    %v1766 = vld [vmem:[%s1765] sm:$0xff]
    %v1767 = vmul.f32 %v1749, %v1766
    %1769 = vrot.lane.b32.xlu0 %v1767, 32
    %v1770 = vpop.permute.xlu0 %1769
    %v1772 = vadd.f32 %v1733, %v1770
    %s1773 = scalar_lea.vmem [#allocation9], 40
    %v1774 = vld [vmem:[%s1773] sm:$0xff]
    %1776 = vrot.lane.b32.xlu0 %v1774, 64
    %v1777 = vpop.permute.xlu0 %1776
    %v1779 = vmul.f32 %v1764, %v1777
    %1781 = vrot.lane.b32.xlu0 %v1779, 32
    %v1782 = vpop.permute.xlu0 %1781
    %v1784 = vadd.f32 %v1734, %v1782
    %1786 = vrot.lane.b32.xlu0 %v1772, 96
    %v1787 = vpop.permute.xlu0 %1786
    %s1789 = scalar_lea.vmem [#allocation15], 40
    %1790 = vst.msk [vmem:[%s1789] sm:$0xff] %vm140, %v1787
    %1792 = vrot.lane.b32.xlu0 %v1784, 32
    %v1793 = vpop.permute.xlu0 %1792
    %s1795 = scalar_lea.vmem [#allocation16], 40
    %1796 = vst.msk [vmem:[%s1795] sm:$0xff] %vm140, %v1793
    %1798 = vrot.lane.b32.xlu0 %v1733, 96
    %v1799 = vpop.permute.xlu0 %1798
    %s1801 = scalar_lea.vmem [#allocation18], 40
    %1802 = vst.msk [vmem:[%s1801] sm:$0xff] %vm140, %v1799
    %s1803 = scalar_lea.vmem [#allocation19], 40
    %1804 = vst.msk [vmem:[%s1803] sm:$0xff] %vm140, %v1749
    %1806 = vrot.lane.b32.xlu0 %v1734, 32
    %v1807 = vpop.permute.xlu0 %1806
    %s1809 = scalar_lea.vmem [#allocation21], 40
    %1810 = vst.msk [vmem:[%s1809] sm:$0xff] %vm140, %v1807
    %1812 = vrot.lane.b32.xlu0 %v1764, 64
    %v1813 = vpop.permute.xlu0 %1812
    %s1815 = scalar_lea.vmem [#allocation22], 40
    %1816 = vst.msk [vmem:[%s1815] sm:$0xff] %vm140, %v1813
    %s1817 = scalar_lea.vmem [#allocation4], 48
    %v1818 = vld [vmem:[%s1817] sm:$0xff]
    %v1819 = vld [vmem:[#allocation12] sm:$0xff]
    %v1820 = vld [vmem:[#allocation12 + $0x8] sm:$0xff]
    %v1821 = vld [vmem:[#allocation12 + $0x10] sm:$0xff]
    %v1822 = vld [vmem:[#allocation12 + $0x18] sm:$0xff]
    %v1823 = vsel %vm140, %v1787, 0
    %1825 = vmatprep.subr.mxu0 0.0
    %1826 = vmatpush1.msra.mxu0 %v1819
    %1827 = vmatprep.subr.mxu0 0.0
    %1828 = vmatpush1.msra.mxu0 %v1820
    %1829 = vmatprep.subr.mxu0 0.0
    %1830 = vmatpush1.msra.mxu0 %v1821
    %1831 = vmatprep.subr.mxu0 0.0
    %1832 = vmatpush1.msra.mxu0 %v1822
    %1833 = vmatprep.subr.mxu0 0.0
    %1834 = vmatpush1.msra.mxu0 0.0
    %1835 = vmatprep.subr.mxu0 0.0
    %1836 = vmatpush1.msra.mxu0 0.0
    %1837 = vmatprep.subr.mxu0 0.0
    %1838 = vmatpush1.msra.mxu0 0.0
    %1839 = vmatprep.subr.mxu0 0.0
    %1840 = vmatpush1.msra.mxu0 0.0
    %1841 = vmatprep.subr.mxu0 0.0
    %1842 = vmatpush1.msra.mxu0 0.0
    %1843 = vmatprep.subr.mxu0 0.0
    %1844 = vmatpush1.msra.mxu0 0.0
    %1845 = vmatprep.subr.mxu0 0.0
    %1846 = vmatpush1.msra.mxu0 0.0
    %1847 = vmatprep.subr.mxu0 0.0
    %1848 = vmatpush1.msra.mxu0 0.0
    %1849 = vmatprep.subr.mxu0 0.0
    %1850 = vmatpush1.msra.mxu0 0.0
    %1851 = vmatprep.subr.mxu0 0.0
    %1852 = vmatpush1.msra.mxu0 0.0
    %1853 = vmatprep.subr.mxu0 0.0
    %1854 = vmatpush1.msra.mxu0 0.0
    %1855 = vmatprep.subr.mxu0 0.0
    %1856 = vmatpush1.msra.mxu0 0.0
    %1857 = vmatprep.subr.mxu0 0.0
    %1858 = vmatpush1.msra.mxu0 0.0
    %1859 = vmatprep.subr.mxu0 0.0
    %1860 = vmatpush1.msra.mxu0 0.0
    %1861 = vmatprep.subr.mxu0 0.0
    %1862 = vmatpush1.msra.mxu0 0.0
    %1863 = vmatprep.subr.mxu0 0.0
    %1864 = vmatpush1.msra.mxu0 0.0
    %1865 = vmatprep.subr.mxu0 0.0
    %1866 = vmatpush1.msra.mxu0 0.0
    %1867 = vmatprep.subr.mxu0 0.0
    %1868 = vmatpush1.msra.mxu0 0.0
    %1869 = vmatprep.subr.mxu0 0.0
    %1870 = vmatpush1.msra.mxu0 0.0
    %1871 = vmatprep.subr.mxu0 0.0
    %1872 = vmatpush1.msra.mxu0 0.0
    %1873 = vmatprep.subr.mxu0 0.0
    %1874 = vmatpush1.msra.mxu0 0.0
    %1875 = vmatprep.subr.mxu0 0.0
    %1876 = vmatpush1.msra.mxu0 0.0
    %1877 = vmatprep.subr.mxu0 0.0
    %1878 = vmatpush1.msra.mxu0 0.0
    %1879 = vmatprep.subr.mxu0 0.0
    %1880 = vmatpush1.msra.mxu0 0.0
    %1881 = vmatprep.subr.mxu0 0.0
    %1882 = vmatpush1.msra.mxu0 0.0
    %1883 = vmatprep.subr.mxu0 0.0
    %1884 = vmatpush1.msra.mxu0 0.0
    %1885 = vmatprep.subr.mxu0 0.0
    %1886 = vmatpush1.msra.mxu0 0.0
    %1887 = vmatprep.subr.mxu0 0.0
    %1888 = vmatpush1.msra.mxu0 0.0
    %1889 = vmatprep.mubr.f32.mxu0 0.0
    %1890 = vmatmul.mubr.f32.gmra.mrb[0].mxu0 %v1823
    %v1891 = vpop.f32.mrb[0].mxu0
    %v1892 = vadd.f32 0.0, %v1891
    %v1893 = vpop.f32.mrb[0].mxu0
    %1894 = vdwg.mxu0
    %v1895 = vadd.f32 %v1818, %v1892
    %v1896 = vmul.f32 %v1895, 0.5
    %v1897 = vtanh.pop %v1896
    %v1898 = vadd.f32 %v1897, 1.0
    %v1899 = vmul.f32 %v1898, 0.5
    %v1900 = vtanh.pop %v1895
    %1901 = vrot.lane.b32.xlu0 %v1784, 64
    %v1902 = vpop.permute.xlu0 %1901
    %v1904 = vmul.f32 %v1899, %v1902
    %1906 = vrot.lane.b32.xlu0 %v1900, 64
    %v1907 = vpop.permute.xlu0 %1906
    %v1909 = vmul.f32 %v1899, %v1907
    %1911 = vrot.lane.b32.xlu0 %v1909, 32
    %v1912 = vpop.permute.xlu0 %1911
    %v1914 = vadd.f32 %v1904, %v1912
    %v1915 = vtanh.pop %v1914
    %1917 = vrot.lane.b32.xlu0 %v1915, 64
    %v1918 = vpop.permute.xlu0 %1917
    %v1920 = vmul.f32 %v1899, %v1918
    %1922 = vrot.lane.b32.xlu0 %v1914, 64
    %v1923 = vpop.permute.xlu0 %1922
    %v1924 = vld [vmem:[#allocation13] sm:$0xff]
    %v1925 = vld [vmem:[#allocation13 + $0x8] sm:$0xff]
    %v1926 = vld [vmem:[#allocation13 + $0x10] sm:$0xff]
    %v1927 = vld [vmem:[#allocation13 + $0x18] sm:$0xff]
    %1929 = vrot.lane.b32.xlu0 %v1920, 32
    %v1930 = vpop.permute.xlu0 %1929
    %1931 = vrot.lane.b32.xlu0 %v1923, 32
    %v1932 = vpop.permute.xlu0 %1931
    %v1933 = vsel %vm140, %v1930, 0
    %v1935 = vsel %vm140, %v1932, 0
    %1937 = vmatprep.subr.mxu0 0.0
    %1938 = vmatpush1.msra.mxu0 %v1924
    %1939 = vmatprep.subr.mxu0 0.0
    %1940 = vmatpush1.msra.mxu0 %v1925
    %1941 = vmatprep.subr.mxu0 0.0
    %1942 = vmatpush1.msra.mxu0 %v1926
    %1943 = vmatprep.subr.mxu0 0.0
    %1944 = vmatpush1.msra.mxu0 %v1927
    %1945 = vmatprep.subr.mxu0 0.0
    %1946 = vmatpush1.msra.mxu0 0.0
    %1947 = vmatprep.subr.mxu0 0.0
    %1948 = vmatpush1.msra.mxu0 0.0
    %1949 = vmatprep.subr.mxu0 0.0
    %1950 = vmatpush1.msra.mxu0 0.0
    %1951 = vmatprep.subr.mxu0 0.0
    %1952 = vmatpush1.msra.mxu0 0.0
    %1953 = vmatprep.subr.mxu0 0.0
    %1954 = vmatpush1.msra.mxu0 0.0
    %1955 = vmatprep.subr.mxu0 0.0
    %1956 = vmatpush1.msra.mxu0 0.0
    %1957 = vmatprep.subr.mxu0 0.0
    %1958 = vmatpush1.msra.mxu0 0.0
    %1959 = vmatprep.subr.mxu0 0.0
    %1960 = vmatpush1.msra.mxu0 0.0
    %1961 = vmatprep.subr.mxu0 0.0
    %1962 = vmatpush1.msra.mxu0 0.0
    %1963 = vmatprep.subr.mxu0 0.0
    %1964 = vmatpush1.msra.mxu0 0.0
    %1965 = vmatprep.subr.mxu0 0.0
    %1966 = vmatpush1.msra.mxu0 0.0
    %1967 = vmatprep.subr.mxu0 0.0
    %1968 = vmatpush1.msra.mxu0 0.0
    %1969 = vmatprep.subr.mxu0 0.0
    %1970 = vmatpush1.msra.mxu0 0.0
    %1971 = vmatprep.subr.mxu0 0.0
    %1972 = vmatpush1.msra.mxu0 0.0
    %1973 = vmatprep.subr.mxu0 0.0
    %1974 = vmatpush1.msra.mxu0 0.0
    %1975 = vmatprep.subr.mxu0 0.0
    %1976 = vmatpush1.msra.mxu0 0.0
    %1977 = vmatprep.subr.mxu0 0.0
    %1978 = vmatpush1.msra.mxu0 0.0
    %1979 = vmatprep.subr.mxu0 0.0
    %1980 = vmatpush1.msra.mxu0 0.0
    %1981 = vmatprep.subr.mxu0 0.0
    %1982 = vmatpush1.msra.mxu0 0.0
    %1983 = vmatprep.subr.mxu0 0.0
    %1984 = vmatpush1.msra.mxu0 0.0
    %1985 = vmatprep.subr.mxu0 0.0
    %1986 = vmatpush1.msra.mxu0 0.0
    %1987 = vmatprep.subr.mxu0 0.0
    %1988 = vmatpush1.msra.mxu0 0.0
    %1989 = vmatprep.subr.mxu0 0.0
    %1990 = vmatpush1.msra.mxu0 0.0
    %1991 = vmatprep.subr.mxu0 0.0
    %1992 = vmatpush1.msra.mxu0 0.0
    %1993 = vmatprep.subr.mxu0 0.0
    %1994 = vmatpush1.msra.mxu0 0.0
    %1995 = vmatprep.subr.mxu0 0.0
    %1996 = vmatpush1.msra.mxu0 0.0
    %1997 = vmatprep.subr.mxu0 0.0
    %1998 = vmatpush1.msra.mxu0 0.0
    %1999 = vmatprep.subr.mxu0 0.0
    %2000 = vmatpush1.msra.mxu0 0.0
    %2001 = vmatprep.mubr.f32.mxu0 0.0
    %2002 = vmatmul.mubr.f32.gmra.mrb[0].mxu0 %v1933
    %v2003 = vpop.f32.mrb[0].mxu0
    %v2004 = vadd.f32 0.0, %v2003
    %v2005 = vpop.f32.mrb[0].mxu0
    %2006 = vmatprep.mubr.f32.mxu0 0.0
    %2007 = vmatmul.mubr.f32.gmra.mrb[0].mxu0 %v1935
    %v2008 = vpop.f32.mrb[0].mxu0
    %v2009 = vadd.f32 0.0, %v2008
    %v2010 = vpop.f32.mrb[0].mxu0
    %2011 = vdwg.mxu0
    %v2012 = vadd.f32 %v2004, %v336
    %v2013 = vadd.f32 %v2009, %v345
    %v2014 = vmax.f32 %v2012, 0.0
    %v2015 = vand.u32 2147483647, %v2012
    %v2016 = vsub.f32 0.0, %v2015
    %v2017 = vmul.f32 %v2016, 1.442695
    %v2018 = vpow.pop %v2017
    %v2019 = vadd.f32 %v2018, 1.0
    %v2020 = vlog2.pop %v2019
    %v2021 = vmul.f32 %v2020, 0.6931472
    %v2022 = vmul.f32 -0.5, %v2018
    %v2023 = vadd.f32 %v2022, 1.0
    %v2024 = vmul.f32 %v2023, %v2018
    %v2025 = vand.u32 2147483647, %v2018
    %vm2026 = vcmp.lt.f32.partialorder %v2025, 0.0004427343
    %v2027 = vsel %vm2026, %v2024, %v2021
    %v2028 = vadd.f32 %v2014, %v2027
    %v2029 = vmax.f32 %v2013, 0.0
    %v2030 = vand.u32 2147483647, %v2013
    %v2031 = vsub.f32 0.0, %v2030
    %v2032 = vmul.f32 %v2031, 1.442695
    %v2033 = vpow.pop %v2032
    %v2034 = vadd.f32 %v2033, 1.0
    %v2035 = vlog2.pop %v2034
    %v2036 = vmul.f32 %v2035, 0.6931472
    %v2037 = vmul.f32 -0.5, %v2033
    %v2038 = vadd.f32 %v2037, 1.0
    %v2039 = vmul.f32 %v2038, %v2033
    %v2040 = vand.u32 2147483647, %v2033
    %vm2041 = vcmp.lt.f32.partialorder %v2040, 0.0004427343
    %v2042 = vsel %vm2041, %v2039, %v2036
    %v2043 = vadd.f32 %v2029, %v2042
    %s2044 = scalar_lea.vmem [#allocation7], 48
    %v2045 = vld [vmem:[%s2044] sm:$0xff]
    %v2046 = vmul.f32 %v2028, %v2045
    %2048 = vrot.lane.b32.xlu0 %v2046, 32
    %v2049 = vpop.permute.xlu0 %2048
    %v2051 = vadd.f32 %v2012, %v2049
    %s2052 = scalar_lea.vmem [#allocation9], 48
    %v2053 = vld [vmem:[%s2052] sm:$0xff]
    %2055 = vrot.lane.b32.xlu0 %v2053, 64
    %v2056 = vpop.permute.xlu0 %2055
    %v2058 = vmul.f32 %v2043, %v2056
    %2060 = vrot.lane.b32.xlu0 %v2058, 32
    %v2061 = vpop.permute.xlu0 %2060
    %v2063 = vadd.f32 %v2013, %v2061
    %2065 = vrot.lane.b32.xlu0 %v2051, 96
    %v2066 = vpop.permute.xlu0 %2065
    %s2068 = scalar_lea.vmem [#allocation15], 48
    %2069 = vst.msk [vmem:[%s2068] sm:$0xff] %vm140, %v2066
    %2071 = vrot.lane.b32.xlu0 %v2063, 32
    %v2072 = vpop.permute.xlu0 %2071
    %s2074 = scalar_lea.vmem [#allocation16], 48
    %2075 = vst.msk [vmem:[%s2074] sm:$0xff] %vm140, %v2072
    %2077 = vrot.lane.b32.xlu0 %v2012, 96
    %v2078 = vpop.permute.xlu0 %2077
    %s2080 = scalar_lea.vmem [#allocation18], 48
    %2081 = vst.msk [vmem:[%s2080] sm:$0xff] %vm140, %v2078
    %s2082 = scalar_lea.vmem [#allocation19], 48
    %2083 = vst.msk [vmem:[%s2082] sm:$0xff] %vm140, %v2028
    %2085 = vrot.lane.b32.xlu0 %v2013, 32
    %v2086 = vpop.permute.xlu0 %2085
    %s2088 = scalar_lea.vmem [#allocation21], 48
    %2089 = vst.msk [vmem:[%s2088] sm:$0xff] %vm140, %v2086
    %2091 = vrot.lane.b32.xlu0 %v2043, 64
    %v2092 = vpop.permute.xlu0 %2091
    %s2094 = scalar_lea.vmem [#allocation22], 48
    %2095 = vst.msk [vmem:[%s2094] sm:$0xff] %vm140, %v2092
    %s2096 = scalar_lea.vmem [#allocation4], 56
    %v2097 = vld [vmem:[%s2096] sm:$0xff]
    %v2098 = vld [vmem:[#allocation12] sm:$0xff]
    %v2099 = vld [vmem:[#allocation12 + $0x8] sm:$0xff]
    %v2100 = vld [vmem:[#allocation12 + $0x10] sm:$0xff]
    %v2101 = vld [vmem:[#allocation12 + $0x18] sm:$0xff]
    %v2102 = vsel %vm140, %v2066, 0
    %2104 = vmatprep.subr.mxu0 0.0
    %2105 = vmatpush1.msra.mxu0 %v2098
    %2106 = vmatprep.subr.mxu0 0.0
    %2107 = vmatpush1.msra.mxu0 %v2099
    %2108 = vmatprep.subr.mxu0 0.0
    %2109 = vmatpush1.msra.mxu0 %v2100
    %2110 = vmatprep.subr.mxu0 0.0
    %2111 = vmatpush1.msra.mxu0 %v2101
    %2112 = vmatprep.subr.mxu0 0.0
    %2113 = vmatpush1.msra.mxu0 0.0
    %2114 = vmatprep.subr.mxu0 0.0
    %2115 = vmatpush1.msra.mxu0 0.0
    %2116 = vmatprep.subr.mxu0 0.0
    %2117 = vmatpush1.msra.mxu0 0.0
    %2118 = vmatprep.subr.mxu0 0.0
    %2119 = vmatpush1.msra.mxu0 0.0
    %2120 = vmatprep.subr.mxu0 0.0
    %2121 = vmatpush1.msra.mxu0 0.0
    %2122 = vmatprep.subr.mxu0 0.0
    %2123 = vmatpush1.msra.mxu0 0.0
    %2124 = vmatprep.subr.mxu0 0.0
    %2125 = vmatpush1.msra.mxu0 0.0
    %2126 = vmatprep.subr.mxu0 0.0
    %2127 = vmatpush1.msra.mxu0 0.0
    %2128 = vmatprep.subr.mxu0 0.0
    %2129 = vmatpush1.msra.mxu0 0.0
    %2130 = vmatprep.subr.mxu0 0.0
    %2131 = vmatpush1.msra.mxu0 0.0
    %2132 = vmatprep.subr.mxu0 0.0
    %2133 = vmatpush1.msra.mxu0 0.0
    %2134 = vmatprep.subr.mxu0 0.0
    %2135 = vmatpush1.msra.mxu0 0.0
    %2136 = vmatprep.subr.mxu0 0.0
    %2137 = vmatpush1.msra.mxu0 0.0
    %2138 = vmatprep.subr.mxu0 0.0
    %2139 = vmatpush1.msra.mxu0 0.0
    %2140 = vmatprep.subr.mxu0 0.0
    %2141 = vmatpush1.msra.mxu0 0.0
    %2142 = vmatprep.subr.mxu0 0.0
    %2143 = vmatpush1.msra.mxu0 0.0
    %2144 = vmatprep.subr.mxu0 0.0
    %2145 = vmatpush1.msra.mxu0 0.0
    %2146 = vmatprep.subr.mxu0 0.0
    %2147 = vmatpush1.msra.mxu0 0.0
    %2148 = vmatprep.subr.mxu0 0.0
    %2149 = vmatpush1.msra.mxu0 0.0
    %2150 = vmatprep.subr.mxu0 0.0
    %2151 = vmatpush1.msra.mxu0 0.0
    %2152 = vmatprep.subr.mxu0 0.0
    %2153 = vmatpush1.msra.mxu0 0.0
    %2154 = vmatprep.subr.mxu0 0.0
    %2155 = vmatpush1.msra.mxu0 0.0
    %2156 = vmatprep.subr.mxu0 0.0
    %2157 = vmatpush1.msra.mxu0 0.0
    %2158 = vmatprep.subr.mxu0 0.0
    %2159 = vmatpush1.msra.mxu0 0.0
    %2160 = vmatprep.subr.mxu0 0.0
    %2161 = vmatpush1.msra.mxu0 0.0
    %2162 = vmatprep.subr.mxu0 0.0
    %2163 = vmatpush1.msra.mxu0 0.0
    %2164 = vmatprep.subr.mxu0 0.0
    %2165 = vmatpush1.msra.mxu0 0.0
    %2166 = vmatprep.subr.mxu0 0.0
    %2167 = vmatpush1.msra.mxu0 0.0
    %2168 = vmatprep.mubr.f32.mxu0 0.0
    %2169 = vmatmul.mubr.f32.gmra.mrb[0].mxu0 %v2102
    %v2170 = vpop.f32.mrb[0].mxu0
    %v2171 = vadd.f32 0.0, %v2170
    %v2172 = vpop.f32.mrb[0].mxu0
    %2173 = vdwg.mxu0
    %v2174 = vadd.f32 %v2097, %v2171
    %v2175 = vmul.f32 %v2174, 0.5
    %v2176 = vtanh.pop %v2175
    %v2177 = vadd.f32 %v2176, 1.0
    %v2178 = vmul.f32 %v2177, 0.5
    %v2179 = vtanh.pop %v2174
    %2180 = vrot.lane.b32.xlu0 %v2063, 64
    %v2181 = vpop.permute.xlu0 %2180
    %v2183 = vmul.f32 %v2178, %v2181
    %2185 = vrot.lane.b32.xlu0 %v2179, 64
    %v2186 = vpop.permute.xlu0 %2185
    %v2188 = vmul.f32 %v2178, %v2186
    %2190 = vrot.lane.b32.xlu0 %v2188, 32
    %v2191 = vpop.permute.xlu0 %2190
    %v2193 = vadd.f32 %v2183, %v2191
    %v2194 = vtanh.pop %v2193
    %2196 = vrot.lane.b32.xlu0 %v2194, 64
    %v2197 = vpop.permute.xlu0 %2196
    %v2199 = vmul.f32 %v2178, %v2197
    %2201 = vrot.lane.b32.xlu0 %v2193, 64
    %v2202 = vpop.permute.xlu0 %2201
    %v2203 = vld [vmem:[#allocation13] sm:$0xff]
    %v2204 = vld [vmem:[#allocation13 + $0x8] sm:$0xff]
    %v2205 = vld [vmem:[#allocation13 + $0x10] sm:$0xff]
    %v2206 = vld [vmem:[#allocation13 + $0x18] sm:$0xff]
    %2208 = vrot.lane.b32.xlu0 %v2199, 32
    %v2209 = vpop.permute.xlu0 %2208
    %2210 = vrot.lane.b32.xlu0 %v2202, 32
    %v2211 = vpop.permute.xlu0 %2210
    %v2212 = vsel %vm140, %v2209, 0
    %v2214 = vsel %vm140, %v2211, 0
    %2216 = vmatprep.subr.mxu0 0.0
    %2217 = vmatpush1.msra.mxu0 %v2203
    %2218 = vmatprep.subr.mxu0 0.0
    %2219 = vmatpush1.msra.mxu0 %v2204
    %2220 = vmatprep.subr.mxu0 0.0
    %2221 = vmatpush1.msra.mxu0 %v2205
    %2222 = vmatprep.subr.mxu0 0.0
    %2223 = vmatpush1.msra.mxu0 %v2206
    %2224 = vmatprep.subr.mxu0 0.0
    %2225 = vmatpush1.msra.mxu0 0.0
    %2226 = vmatprep.subr.mxu0 0.0
    %2227 = vmatpush1.msra.mxu0 0.0
    %2228 = vmatprep.subr.mxu0 0.0
    %2229 = vmatpush1.msra.mxu0 0.0
    %2230 = vmatprep.subr.mxu0 0.0
    %2231 = vmatpush1.msra.mxu0 0.0
    %2232 = vmatprep.subr.mxu0 0.0
    %2233 = vmatpush1.msra.mxu0 0.0
    %2234 = vmatprep.subr.mxu0 0.0
    %2235 = vmatpush1.msra.mxu0 0.0
    %2236 = vmatprep.subr.mxu0 0.0
    %2237 = vmatpush1.msra.mxu0 0.0
    %2238 = vmatprep.subr.mxu0 0.0
    %2239 = vmatpush1.msra.mxu0 0.0
    %2240 = vmatprep.subr.mxu0 0.0
    %2241 = vmatpush1.msra.mxu0 0.0
    %2242 = vmatprep.subr.mxu0 0.0
    %2243 = vmatpush1.msra.mxu0 0.0
    %2244 = vmatprep.subr.mxu0 0.0
    %2245 = vmatpush1.msra.mxu0 0.0
    %2246 = vmatprep.subr.mxu0 0.0
    %2247 = vmatpush1.msra.mxu0 0.0
    %2248 = vmatprep.subr.mxu0 0.0
    %2249 = vmatpush1.msra.mxu0 0.0
    %2250 = vmatprep.subr.mxu0 0.0
    %2251 = vmatpush1.msra.mxu0 0.0
    %2252 = vmatprep.subr.mxu0 0.0
    %2253 = vmatpush1.msra.mxu0 0.0
    %2254 = vmatprep.subr.mxu0 0.0
    %2255 = vmatpush1.msra.mxu0 0.0
    %2256 = vmatprep.subr.mxu0 0.0
    %2257 = vmatpush1.msra.mxu0 0.0
    %2258 = vmatprep.subr.mxu0 0.0
    %2259 = vmatpush1.msra.mxu0 0.0
    %2260 = vmatprep.subr.mxu0 0.0
    %2261 = vmatpush1.msra.mxu0 0.0
    %2262 = vmatprep.subr.mxu0 0.0
    %2263 = vmatpush1.msra.mxu0 0.0
    %2264 = vmatprep.subr.mxu0 0.0
    %2265 = vmatpush1.msra.mxu0 0.0
    %2266 = vmatprep.subr.mxu0 0.0
    %2267 = vmatpush1.msra.mxu0 0.0
    %2268 = vmatprep.subr.mxu0 0.0
    %2269 = vmatpush1.msra.mxu0 0.0
    %2270 = vmatprep.subr.mxu0 0.0
    %2271 = vmatpush1.msra.mxu0 0.0
    %2272 = vmatprep.subr.mxu0 0.0
    %2273 = vmatpush1.msra.mxu0 0.0
    %2274 = vmatprep.subr.mxu0 0.0
    %2275 = vmatpush1.msra.mxu0 0.0
    %2276 = vmatprep.subr.mxu0 0.0
    %2277 = vmatpush1.msra.mxu0 0.0
    %2278 = vmatprep.subr.mxu0 0.0
    %2279 = vmatpush1.msra.mxu0 0.0
    %2280 = vmatprep.mubr.f32.mxu0 0.0
    %2281 = vmatmul.mubr.f32.gmra.mrb[0].mxu0 %v2212
    %v2282 = vpop.f32.mrb[0].mxu0
    %v2283 = vadd.f32 0.0, %v2282
    %v2284 = vpop.f32.mrb[0].mxu0
    %2285 = vmatprep.mubr.f32.mxu0 0.0
    %2286 = vmatmul.mubr.f32.gmra.mrb[0].mxu0 %v2214
    %v2287 = vpop.f32.mrb[0].mxu0
    %v2288 = vadd.f32 0.0, %v2287
    %v2289 = vpop.f32.mrb[0].mxu0
    %2290 = vdwg.mxu0
    %v2291 = vadd.f32 %v2283, %v336
    %v2292 = vadd.f32 %v2288, %v345
    %v2293 = vmax.f32 %v2291, 0.0
    %v2294 = vand.u32 2147483647, %v2291
    %v2295 = vsub.f32 0.0, %v2294
    %v2296 = vmul.f32 %v2295, 1.442695
    %v2297 = vpow.pop %v2296
    %v2298 = vadd.f32 %v2297, 1.0
    %v2299 = vlog2.pop %v2298
    %v2300 = vmul.f32 %v2299, 0.6931472
    %v2301 = vmul.f32 -0.5, %v2297
    %v2302 = vadd.f32 %v2301, 1.0
    %v2303 = vmul.f32 %v2302, %v2297
    %v2304 = vand.u32 2147483647, %v2297
    %vm2305 = vcmp.lt.f32.partialorder %v2304, 0.0004427343
    %v2306 = vsel %vm2305, %v2303, %v2300
    %v2307 = vadd.f32 %v2293, %v2306
    %v2308 = vmax.f32 %v2292, 0.0
    %v2309 = vand.u32 2147483647, %v2292
    %v2310 = vsub.f32 0.0, %v2309
    %v2311 = vmul.f32 %v2310, 1.442695
    %v2312 = vpow.pop %v2311
    %v2313 = vadd.f32 %v2312, 1.0
    %v2314 = vlog2.pop %v2313
    %v2315 = vmul.f32 %v2314, 0.6931472
    %v2316 = vmul.f32 -0.5, %v2312
    %v2317 = vadd.f32 %v2316, 1.0
    %v2318 = vmul.f32 %v2317, %v2312
    %v2319 = vand.u32 2147483647, %v2312
    %vm2320 = vcmp.lt.f32.partialorder %v2319, 0.0004427343
    %v2321 = vsel %vm2320, %v2318, %v2315
    %v2322 = vadd.f32 %v2308, %v2321
    %s2323 = scalar_lea.vmem [#allocation7], 56
    %v2324 = vld [vmem:[%s2323] sm:$0xff]
    %v2325 = vmul.f32 %v2307, %v2324
    %2327 = vrot.lane.b32.xlu0 %v2325, 32
    %v2328 = vpop.permute.xlu0 %2327
    %v2330 = vadd.f32 %v2291, %v2328
    %s2331 = scalar_lea.vmem [#allocation9], 56
    %v2332 = vld [vmem:[%s2331] sm:$0xff]
    %2334 = vrot.lane.b32.xlu0 %v2332, 64
    %v2335 = vpop.permute.xlu0 %2334
    %v2337 = vmul.f32 %v2322, %v2335
    %2339 = vrot.lane.b32.xlu0 %v2337, 32
    %v2340 = vpop.permute.xlu0 %2339
    %v2342 = vadd.f32 %v2292, %v2340
    %2344 = vrot.lane.b32.xlu0 %v2330, 96
    %v2345 = vpop.permute.xlu0 %2344
    %s2347 = scalar_lea.vmem [#allocation15], 56
    %2348 = vst.msk [vmem:[%s2347] sm:$0xff] %vm140, %v2345
    %2350 = vrot.lane.b32.xlu0 %v2342, 32
    %v2351 = vpop.permute.xlu0 %2350
    %s2353 = scalar_lea.vmem [#allocation16], 56
    %2354 = vst.msk [vmem:[%s2353] sm:$0xff] %vm140, %v2351
    %2356 = vrot.lane.b32.xlu0 %v2291, 96
    %v2357 = vpop.permute.xlu0 %2356
    %s2359 = scalar_lea.vmem [#allocation18], 56
    %2360 = vst.msk [vmem:[%s2359] sm:$0xff] %vm140, %v2357
    %s2361 = scalar_lea.vmem [#allocation19], 56
    %2362 = vst.msk [vmem:[%s2361] sm:$0xff] %vm140, %v2307
    %2364 = vrot.lane.b32.xlu0 %v2292, 32
    %v2365 = vpop.permute.xlu0 %2364
    %s2367 = scalar_lea.vmem [#allocation21], 56
    %2368 = vst.msk [vmem:[%s2367] sm:$0xff] %vm140, %v2365
    %2370 = vrot.lane.b32.xlu0 %v2322, 64
    %v2371 = vpop.permute.xlu0 %2370
    %s2373 = scalar_lea.vmem [#allocation22], 56
    %2374 = vst.msk [vmem:[%s2373] sm:$0xff] %vm140, %v2371
    %2375 = vst.msk [vmem:[#allocation2] sm:$0xff] %vm140, %v2345
    %2376 = vst.msk [vmem:[#allocation3] sm:$0xff] %vm140, %v2351
    // Predicated region
    $region66: #{tpu_custom_call.1} parent=1 // pred_check
      _
    $region67: #{tpu_custom_call.1} parent=1 // pred_check_branch
      %2378 = sbr.rel (0) target = $region69
    $region68: #{tpu_custom_call.1} parent=1 // pred_region
      %s2380 = ssub.s32 1024, 1024
      %2381 = vsyncadd [#allocation6], %s2380
      %s2382 = sshll.u32 [#allocation15], 4
      %s2383 = int_to_ptr.vmem [resolvable:$true] %s2382
      %2388 = dma.vmem_to_hbm [thread:$0]  %s2383, 1024, %s9, [#allocation6], 128, 128, 8
    $region69: #{tpu_custom_call.1} parent=1 // pred_fallthru
      _
    // Predicated region
    $region70: #{tpu_custom_call.1} parent=1 // pred_check
      _
    $region71: #{tpu_custom_call.1} parent=1 // pred_check_branch
      %2390 = sbr.rel (0) target = $region73
    $region72: #{tpu_custom_call.1} parent=1 // pred_region
      %s2392 = ssub.s32 1024, 1024
      %2393 = vsyncadd [#allocation17], %s2392
      %s2394 = sshll.u32 [#allocation16], 4
      %s2395 = int_to_ptr.vmem [resolvable:$true] %s2394
      %2400 = dma.vmem_to_hbm [thread:$0]  %s2395, 1024, %s10, [#allocation17], 128, 128, 8
    $region73: #{tpu_custom_call.1} parent=1 // pred_fallthru
      _
    // Predicated region
    $region74: #{tpu_custom_call.1} parent=1 // pred_check
      _
    $region75: #{tpu_custom_call.1} parent=1 // pred_check_branch
      %2402 = sbr.rel (0) target = $region77
    $region76: #{tpu_custom_call.1} parent=1 // pred_region
      %s2404 = ssub.s32 1024, 1024
      %2405 = vsyncadd [#allocation17], %s2404
      %s2406 = sshll.u32 [#allocation18], 4
      %s2407 = int_to_ptr.vmem [resolvable:$true] %s2406
      %2412 = dma.vmem_to_hbm [thread:$0]  %s2407, 1024, %s11, [#allocation17], 128, 128, 8
    $region77: #{tpu_custom_call.1} parent=1 // pred_fallthru
      _
    // Predicated region
    $region78: #{tpu_custom_call.1} parent=1 // pred_check
      _
    $region79: #{tpu_custom_call.1} parent=1 // pred_check_branch
      %2414 = sbr.rel (0) target = $region81
    $region80: #{tpu_custom_call.1} parent=1 // pred_region
      %s2416 = ssub.s32 1024, 1024
      %2417 = vsyncadd [#allocation20], %s2416
      %s2418 = sshll.u32 [#allocation19], 4
      %s2419 = int_to_ptr.vmem [resolvable:$true] %s2418
      %2424 = dma.vmem_to_hbm [thread:$0]  %s2419, 1024, %s12, [#allocation20], 128, 128, 8
    $region81: #{tpu_custom_call.1} parent=1 // pred_fallthru
      _
    // Predicated region
    $region82: #{tpu_custom_call.1} parent=1 // pred_check
      _
    $region83: #{tpu_custom_call.1} parent=1 // pred_check_branch
      %2426 = sbr.rel (0) target = $region85
    $region84: #{tpu_custom_call.1} parent=1 // pred_region
      %s2428 = ssub.s32 1024, 1024
      %2429 = vsyncadd [#allocation20], %s2428
      %s2430 = sshll.u32 [#allocation21], 4
      %s2431 = int_to_ptr.vmem [resolvable:$true] %s2430
      %2436 = dma.vmem_to_hbm [thread:$0]  %s2431, 1024, %s13, [#allocation20], 128, 128, 8
    $region85: #{tpu_custom_call.1} parent=1 // pred_fallthru
      _
    // Predicated region
    $region86: #{tpu_custom_call.1} parent=1 // pred_check
      _
    $region87: #{tpu_custom_call.1} parent=1 // pred_check_branch
      %2438 = sbr.rel (0) target = $region89
    $region88: #{tpu_custom_call.1} parent=1 // pred_region
      %s2440 = ssub.s32 1024, 1024
      %2441 = vsyncadd [#allocation23], %s2440
      %s2442 = sshll.u32 [#allocation22], 4
      %s2443 = int_to_ptr.vmem [resolvable:$true] %s2442
      %2448 = dma.vmem_to_hbm [thread:$0]  %s2443, 1024, %s14, [#allocation23], 128, 128, 8
    $region89: #{tpu_custom_call.1} parent=1 // pred_fallthru
      _
    // Predicated region
    $region90: #{tpu_custom_call.1} parent=1 // pred_check
      _
    $region91: #{tpu_custom_call.1} parent=1 // pred_check_branch
      %2450 = sbr.rel (0) target = $region93
    $region92: #{tpu_custom_call.1} parent=1 // pred_region
      %2451 = dma.done [#allocation6], 1024
    $region93: #{tpu_custom_call.1} parent=1 // pred_fallthru
      _
    // Predicated region
    $region94: #{tpu_custom_call.1} parent=1 // pred_check
      _
    $region95: #{tpu_custom_call.1} parent=1 // pred_check_branch
      %2453 = sbr.rel (0) target = $region97
    $region96: #{tpu_custom_call.1} parent=1 // pred_region
      %2454 = dma.done [#allocation17], 1024
    $region97: #{tpu_custom_call.1} parent=1 // pred_fallthru
      _
    // Predicated region
    $region98: #{tpu_custom_call.1} parent=1 // pred_check
      _
    $region99: #{tpu_custom_call.1} parent=1 // pred_check_branch
      %2456 = sbr.rel (0) target = $region101
    $region100: #{tpu_custom_call.1} parent=1 // pred_region
      %2457 = dma.done [#allocation17], 1024
    $region101: #{tpu_custom_call.1} parent=1 // pred_fallthru
      _
    // Predicated region
    $region102: #{tpu_custom_call.1} parent=1 // pred_check
      _
    $region103: #{tpu_custom_call.1} parent=1 // pred_check_branch
      %2459 = sbr.rel (0) target = $region105
    $region104: #{tpu_custom_call.1} parent=1 // pred_region
      %2460 = dma.done [#allocation20], 1024
    $region105: #{tpu_custom_call.1} parent=1 // pred_fallthru
      _
    // Predicated region
    $region106: #{tpu_custom_call.1} parent=1 // pred_check
      _
    $region107: #{tpu_custom_call.1} parent=1 // pred_check_branch
      %2462 = sbr.rel (0) target = $region109
    $region108: #{tpu_custom_call.1} parent=1 // pred_region
      %2463 = dma.done [#allocation20], 1024
    $region109: #{tpu_custom_call.1} parent=1 // pred_fallthru
      _
    // Predicated region
    $region110: #{tpu_custom_call.1} parent=1 // pred_check
      _
    $region111: #{tpu_custom_call.1} parent=1 // pred_check_branch
      %2465 = sbr.rel (0) target = $region113
    $region112: #{tpu_custom_call.1} parent=1 // pred_region
      %2466 = dma.done [#allocation23], 1024
    $region113: #{tpu_custom_call.1} parent=1 // pred_fallthru
      _
    %2467 = vsyncpa [#allocation5], 1
    %2468 = vsyncpa [#allocation8], 1
    %2469 = vsyncpa [#allocation11], 1
    %2470 = vsyncpa [#allocation14], 1
    %2471 = vsyncpa [#allocation6], 1
    %2472 = vsyncpa [#allocation17], 1
    %2473 = vsyncpa [#allocation20], 1
    %2474 = vsyncpa [#allocation23], 1

// kernel: tpu_custom_call.1
$region0: #{tpu_custom_call.1}
  #allocation0 [shape = 'u32[]', space=smem, size = 0x4, offset = 0x4, fixed_abs, tag = 'smem constant byte address 0x4 - core index']
  #allocation1 [shape = 'u32[144,128]{1,0:T(1,128)}', space=vmem, size = 0x12000, scoped, tag = 'internal scratch']
  #allocation2 [shape = 'f32[8,32]{1,0:T(8,128)}', space=vmem, size = 0x1000, scoped, tag = 'scratch operand']
  #allocation3 [shape = 'f32[8,32]{1,0:T(8,128)}', space=vmem, size = 0x1000, scoped, tag = 'scratch operand']
  %s0 = inlined_call_operand.hbm [shape: f32[8,8,128], index: 0, kind: input, shape index: {}]
  %s1 = inlined_call_operand.hbm [shape: f32[8,8,32], index: 1, kind: input, shape index: {}]
  %s2 = inlined_call_operand.hbm [shape: f32[8,8,32], index: 2, kind: input, shape index: {}]
  %s3 = inlined_call_operand.vmem [shape: f32[8,32], index: 3, kind: input, shape index: {}]
  %s4 = inlined_call_operand.hbm [shape: f32[8,32], index: 4, kind: input, shape index: {}]
  %s5 = inlined_call_operand.hbm [shape: f32[32,128], index: 5, kind: input, shape index: {}]
  %s6 = inlined_call_operand.hbm [shape: f32[32,128], index: 6, kind: input, shape index: {}]
  %s7 = inlined_call_operand.vmem [shape: f32[1,64], index: 7, kind: input, shape index: {}]
  %s8 = inlined_call_operand.vmem [shape: f32[1,64], index: 8, kind: input, shape index: {}]
  %s9 = inlined_call_operand.hbm [shape: f32[8,8,32], index: 9, kind: output, shape index: {0}]
  %s10 = inlined_call_operand.hbm [shape: f32[8,8,32], index: 10, kind: output, shape index: {1}]
  %s11 = inlined_call_operand.hbm [shape: f32[8,8,32], index: 11, kind: output, shape index: {2}]
  %s12 = inlined_call_operand.hbm [shape: f32[8,8,32], index: 12, kind: output, shape index: {3}]
  %s13 = inlined_call_operand.hbm [shape: f32[8,8,32], index: 13, kind: output, shape index: {4}]
  %s14 = inlined_call_operand.hbm [shape: f32[8,8,32], index: 14, kind: output, shape index: {5}]
  %15 = xla_tuple %s9, %s10, %s11, %s12, %s13, %s14
  %s16 = sld [smem:[#allocation0]]
  $region114: #{tpu_custom_call.1} parent=0
    _
  %s18 = ssub.s32 1, %s16
  %s19 = scalar_select 0, %s18, %s16
  $region1: #{tpu_custom_call.1} parent=0
    #allocation4 [shape = 'u8[32768]{0}', space=vmem, size = 0x8000, scoped, tag = 'input window, operand 0, single buffered']
    #allocation5 [shape = 's32[1]{0}', space=sflag, size = 0x4, scoped, tag = 'scoped memory for tpu_custom_call.1']
    #allocation6 [shape = 's32[1]{0}', space=sflag, size = 0x4, scoped, tag = 'scoped memory for tpu_custom_call.1']
    #allocation7 [shape = 'u8[32768]{0}', space=vmem, size = 0x8000, scoped, tag = 'input window, operand 1, single buffered']
    #allocation8 [shape = 's32[1]{0}', space=sflag, size = 0x4, scoped, tag = 'scoped memory for tpu_custom_call.1']
    #allocation9 [shape = 'u8[32768]{0}', space=vmem, size = 0x8000, scoped, tag = 'input window, operand 2, single buffered']
    #allocation10 [shape = 'u8[4096]{0}', space=vmem, size = 0x1000, scoped, tag = 'input window, operand 4, single buffered']
    #allocation11 [shape = 's32[1]{0}', space=sflag, size = 0x4, scoped, tag = 'scoped memory for tpu_custom_call.1']
    #allocation12 [shape = 'u8[16384]{0}', space=vmem, size = 0x4000, scoped, tag = 'input window, operand 5, single buffered']
    #allocation13 [shape = 'u8[16384]{0}', space=vmem, size = 0x4000, scoped, tag = 'input window, operand 6, single buffered']
    #allocation14 [shape = 's32[1]{0}', space=sflag, size = 0x4, scoped, tag = 'scoped memory for tpu_custom_call.1']
    #allocation15 [shape = 'u8[32768]{0}', space=vmem, size = 0x8000, scoped, tag = 'output window, operand 0, single buffered']
    #allocation16 [shape = 'u8[32768]{0}', space=vmem, size = 0x8000, scoped, tag = 'output window, operand 1, single buffered']
    #allocation17 [shape = 's32[1]{0}', space=sflag, size = 0x4, scoped, tag = 'scoped memory for tpu_custom_call.1']
    #allocation18 [shape = 'u8[32768]{0}', space=vmem, size = 0x8000, scoped, tag = 'output window, operand 2, single buffered']
    #allocation19 [shape = 'u8[32768]{0}', space=vmem, size = 0x8000, scoped, tag = 'output window, operand 3, single buffered']
    #allocation20 [shape = 's32[1]{0}', space=sflag, size = 0x4, scoped, tag = 'scoped memory for tpu_custom_call.1']
    #allocation21 [shape = 'u8[32768]{0}', space=vmem, size = 0x8000, scoped, tag = 'output window, operand 4, single buffered']
    #allocation22 [shape = 'u8[32768]{0}', space=vmem, size = 0x8000, scoped, tag = 'output window, operand 5, single buffered']
    #allocation23 [shape = 's32[1]{0}', space=sflag, size = 0x4, scoped, tag = 'scoped memory for tpu_custom_call.1']
    %20 = vsyncpa [#allocation5], 0
    %21 = vsyncpa [#allocation8], 0
    %22 = vsyncpa [#allocation11], 0
    %23 = vsyncpa [#allocation14], 0
    %24 = vsyncpa [#allocation6], 0
    %25 = vsyncpa [#allocation17], 0
    %26 = vsyncpa [#allocation20], 0
    %27 = vsyncpa [#allocation23], 0
    // Predicated region
    $region2: #{tpu_custom_call.1} parent=1 // pred_check
      _
    $region3: #{tpu_custom_call.1} parent=1 // pred_check_branch
      %29 = sbr.rel (0) target = $region5
    $region4: #{tpu_custom_call.1} parent=1 // pred_region
      %s31 = ssub.s32 1024, 1024
      %32 = vsyncadd [#allocation5], %s31
      %s33 = sshll.u32 [#allocation4], 4
      %s34 = int_to_ptr.vmem [resolvable:$true] %s33
      %39 = dma.hbm_to_vmem [thread:$0]  %s0, 1024, %s34, [#allocation5], 128, 128, 8
    $region5: #{tpu_custom_call.1} parent=1 // pred_fallthru
      _
    // Predicated region
    $region6: #{tpu_custom_call.1} parent=1 // pred_check
      _
    $region7: #{tpu_custom_call.1} parent=1 // pred_check_branch
      %41 = sbr.rel (0) target = $region9
    $region8: #{tpu_custom_call.1} parent=1 // pred_region
      %s43 = ssub.s32 1024, 1024
      %44 = vsyncadd [#allocation8], %s43
      %s45 = sshll.u32 [#allocation7], 4
      %s46 = int_to_ptr.vmem [resolvable:$true] %s45
      %51 = dma.hbm_to_vmem [thread:$0]  %s1, 1024, %s46, [#allocation8], 128, 128, 8
    $region9: #{tpu_custom_call.1} parent=1 // pred_fallthru
      _
    // Predicated region
    $region10: #{tpu_custom_call.1} parent=1 // pred_check
      _
    $region11: #{tpu_custom_call.1} parent=1 // pred_check_branch
      %53 = sbr.rel (0) target = $region13
    $region12: #{tpu_custom_call.1} parent=1 // pred_region
      %s55 = ssub.s32 1024, 1024
      %56 = vsyncadd [#allocation8], %s55
      %s57 = sshll.u32 [#allocation9], 4
      %s58 = int_to_ptr.vmem [resolvable:$true] %s57
      %63 = dma.hbm_to_vmem [thread:$0]  %s2, 1024, %s58, [#allocation8], 128, 128, 8
    $region13: #{tpu_custom_call.1} parent=1 // pred_fallthru
      _
    // Predicated region
    $region14: #{tpu_custom_call.1} parent=1 // pred_check
      _
    $region15: #{tpu_custom_call.1} parent=1 // pred_check_branch
      %65 = sbr.rel (0) target = $region17
    $region16: #{tpu_custom_call.1} parent=1 // pred_region
      _
    $region17: #{tpu_custom_call.1} parent=1 // pred_fallthru
      _
    // Predicated region
    $region18: #{tpu_custom_call.1} parent=1 // pred_check
      _
    $region19: #{tpu_custom_call.1} parent=1 // pred_check_branch
      %67 = sbr.rel (0) target = $region21
    $region20: #{tpu_custom_call.1} parent=1 // pred_region
      %s69 = ssub.s32 128, 128
      %70 = vsyncadd [#allocation11], %s69
      %s72 = sshll.u32 [#allocation10], 4
      %s73 = int_to_ptr.vmem [resolvable:$true] %s72
      %75 = dma.hbm_to_vmem [thread:$0]  %s4, 128, %s73, [#allocation11]
    $region21: #{tpu_custom_call.1} parent=1 // pred_fallthru
      _
    // Predicated region
    $region22: #{tpu_custom_call.1} parent=1 // pred_check
      _
    $region23: #{tpu_custom_call.1} parent=1 // pred_check_branch
      %77 = sbr.rel (0) target = $region25
    $region24: #{tpu_custom_call.1} parent=1 // pred_region
      %s79 = ssub.s32 512, 512
      %80 = vsyncadd [#allocation11], %s79
      %s81 = sshll.u32 [#allocation12], 4
      %s82 = int_to_ptr.vmem [resolvable:$true] %s81
      %87 = dma.hbm_to_vmem [thread:$0]  %s5, 512, %s82, [#allocation11], 128, 128, 8
    $region25: #{tpu_custom_call.1} parent=1 // pred_fallthru
      _
    // Predicated region
    $region26: #{tpu_custom_call.1} parent=1 // pred_check
      _
    $region27: #{tpu_custom_call.1} parent=1 // pred_check_branch
      %89 = sbr.rel (0) target = $region29
    $region28: #{tpu_custom_call.1} parent=1 // pred_region
      %s91 = ssub.s32 512, 512
      %92 = vsyncadd [#allocation14], %s91
      %s93 = sshll.u32 [#allocation13], 4
      %s94 = int_to_ptr.vmem [resolvable:$true] %s93
      %99 = dma.hbm_to_vmem [thread:$0]  %s6, 512, %s94, [#allocation14], 128, 128, 8
    $region29: #{tpu_custom_call.1} parent=1 // pred_fallthru
      _
    // Predicated region
    $region30: #{tpu_custom_call.1} parent=1 // pred_check
      _
    $region31: #{tpu_custom_call.1} parent=1 // pred_check_branch
      %101 = sbr.rel (0) target = $region33
    $region32: #{tpu_custom_call.1} parent=1 // pred_region
      _
    $region33: #{tpu_custom_call.1} parent=1 // pred_fallthru
      _
    // Predicated region
    $region34: #{tpu_custom_call.1} parent=1 // pred_check
      _
    $region35: #{tpu_custom_call.1} parent=1 // pred_check_branch
      %103 = sbr.rel (0) target = $region37
    $region36: #{tpu_custom_call.1} parent=1 // pred_region
      _
    $region37: #{tpu_custom_call.1} parent=1 // pred_fallthru
      _
    // Predicated region
    $region38: #{tpu_custom_call.1} parent=1 // pred_check
      _
    $region39: #{tpu_custom_call.1} parent=1 // pred_check_branch
      %105 = sbr.rel (0) target = $region41
    $region40: #{tpu_custom_call.1} parent=1 // pred_region
      %106 = dma.done [#allocation5], 1024
    $region41: #{tpu_custom_call.1} parent=1 // pred_fallthru
      _
    // Predicated region
    $region42: #{tpu_custom_call.1} parent=1 // pred_check
      _
    $region43: #{tpu_custom_call.1} parent=1 // pred_check_branch
      %108 = sbr.rel (0) target = $region45
    $region44: #{tpu_custom_call.1} parent=1 // pred_region
      %109 = dma.done [#allocation8], 1024
    $region45: #{tpu_custom_call.1} parent=1 // pred_fallthru
      _
    // Predicated region
    $region46: #{tpu_custom_call.1} parent=1 // pred_check
      _
    $region47: #{tpu_custom_call.1} parent=1 // pred_check_branch
      %111 = sbr.rel (0) target = $region49
    $region48: #{tpu_custom_call.1} parent=1 // pred_region
      %112 = dma.done [#allocation8], 1024
    $region49: #{tpu_custom_call.1} parent=1 // pred_fallthru
      _
    // Predicated region
    $region50: #{tpu_custom_call.1} parent=1 // pred_check
      _
    $region51: #{tpu_custom_call.1} parent=1 // pred_check_branch
      %114 = sbr.rel (0) target = $region53
    $region52: #{tpu_custom_call.1} parent=1 // pred_region
      %115 = dma.done [#allocation11], 128
    $region53: #{tpu_custom_call.1} parent=1 // pred_fallthru
      _
    // Predicated region
    $region54: #{tpu_custom_call.1} parent=1 // pred_check
      _
    $region55: #{tpu_custom_call.1} parent=1 // pred_check_branch
      %117 = sbr.rel (0) target = $region57
    $region56: #{tpu_custom_call.1} parent=1 // pred_region
      %118 = dma.done [#allocation11], 512
    $region57: #{tpu_custom_call.1} parent=1 // pred_fallthru
      _
    // Predicated region
    $region58: #{tpu_custom_call.1} parent=1 // pred_check
      _
    $region59: #{tpu_custom_call.1} parent=1 // pred_check_branch
      %120 = sbr.rel (0) target = $region61
    $region60: #{tpu_custom_call.1} parent=1 // pred_region
      %121 = dma.done [#allocation14], 512
    $region61: #{tpu_custom_call.1} parent=1 // pred_fallthru
      _
    %p122 = scmp.eq.s32.totalorder 0, 0
    // Predicated region
    $region62: #{tpu_custom_call.1} parent=1 // pred_check
      %p123 = pneg %p122
    $region63: #{tpu_custom_call.1} parent=1 // pred_check_branch
      %125 = sbr.rel (%p123) target = $region65
    $region64: #{tpu_custom_call.1} parent=1 // pred_region
      %v126 = vld [vmem:[%s3] sm:$0xff]
      %vm127 = vcmask 261120
      %128 = vst.msk [vmem:[#allocation2] sm:$0xff] %vm127, %v126
      %v129 = vld [vmem:[#allocation10] sm:$0xff]
      %130 = vst.msk [vmem:[#allocation3] sm:$0xff] %vm127, %v129
    $region65: #{tpu_custom_call.1} parent=1 // pred_fallthru
      _
    %v131 = vld [vmem:[%s7] sm:$0x1]
    %v132 = vld [vmem:[%s8] sm:$0x1]
    %v133 = vld [vmem:[#allocation2] sm:$0xff]
    %v134 = vld [vmem:[#allocation3] sm:$0xff]
    %v135 = vld [vmem:[#allocation4] sm:$0xff]
    %v136 = vld [vmem:[#allocation12] sm:$0xff]
    %v137 = vld [vmem:[#allocation12 + $0x8] sm:$0xff]
    %v138 = vld [vmem:[#allocation12 + $0x10] sm:$0xff]
    %v139 = vld [vmem:[#allocation12 + $0x18] sm:$0xff]
    %vm140 = vcmask 261120
    %v142 = vsel %vm140, %v133, 0
    %144 = vmatprep.subr.mxu0 0.0
    %145 = vmatpush1.msra.mxu0 %v136
    %146 = vmatprep.subr.mxu0 0.0
    %147 = vmatpush1.msra.mxu0 %v137
    %148 = vmatprep.subr.mxu0 0.0
    %149 = vmatpush1.msra.mxu0 %v138
    %150 = vmatprep.subr.mxu0 0.0
    %151 = vmatpush1.msra.mxu0 %v139
    %152 = vmatprep.subr.mxu0 0.0
    %153 = vmatpush1.msra.mxu0 0.0
    %154 = vmatprep.subr.mxu0 0.0
    %155 = vmatpush1.msra.mxu0 0.0
    %156 = vmatprep.subr.mxu0 0.0
    %157 = vmatpush1.msra.mxu0 0.0
    %158 = vmatprep.subr.mxu0 0.0
    %159 = vmatpush1.msra.mxu0 0.0
    %160 = vmatprep.subr.mxu0 0.0
    %161 = vmatpush1.msra.mxu0 0.0
    %162 = vmatprep.subr.mxu0 0.0
    %163 = vmatpush1.msra.mxu0 0.0
    %164 = vmatprep.subr.mxu0 0.0
    %165 = vmatpush1.msra.mxu0 0.0
    %166 = vmatprep.subr.mxu0 0.0
    %167 = vmatpush1.msra.mxu0 0.0
    %168 = vmatprep.subr.mxu0 0.0
    %169 = vmatpush1.msra.mxu0 0.0
    %170 = vmatprep.subr.mxu0 0.0
    %171 = vmatpush1.msra.mxu0 0.0
    %172 = vmatprep.subr.mxu0 0.0
    %173 = vmatpush1.msra.mxu0 0.0
    %174 = vmatprep.subr.mxu0 0.0
    %175 = vmatpush1.msra.mxu0 0.0
    %176 = vmatprep.subr.mxu0 0.0
    %177 = vmatpush1.msra.mxu0 0.0
    %178 = vmatprep.subr.mxu0 0.0
    %179 = vmatpush1.msra.mxu0 0.0
    %180 = vmatprep.subr.mxu0 0.0
    %181 = vmatpush1.msra.mxu0 0.0
    %182 = vmatprep.subr.mxu0 0.0
    %183 = vmatpush1.msra.mxu0 0.0
    %184 = vmatprep.subr.mxu0 0.0
    %185 = vmatpush1.msra.mxu0 0.0
    %186 = vmatprep.subr.mxu0 0.0
    %187 = vmatpush1.msra.mxu0 0.0
    %188 = vmatprep.subr.mxu0 0.0
    %189 = vmatpush1.msra.mxu0 0.0
    %190 = vmatprep.subr.mxu0 0.0
    %191 = vmatpush1.msra.mxu0 0.0
    %192 = vmatprep.subr.mxu0 0.0
    %193 = vmatpush1.msra.mxu0 0.0
    %194 = vmatprep.subr.mxu0 0.0
    %195 = vmatpush1.msra.mxu0 0.0
    %196 = vmatprep.subr.mxu0 0.0
    %197 = vmatpush1.msra.mxu0 0.0
    %198 = vmatprep.subr.mxu0 0.0
    %199 = vmatpush1.msra.mxu0 0.0
    %200 = vmatprep.subr.mxu0 0.0
    %201 = vmatpush1.msra.mxu0 0.0
    %202 = vmatprep.subr.mxu0 0.0
    %203 = vmatpush1.msra.mxu0 0.0
    %204 = vmatprep.subr.mxu0 0.0
    %205 = vmatpush1.msra.mxu0 0.0
    %206 = vmatprep.subr.mxu0 0.0
    %207 = vmatpush1.msra.mxu0 0.0
    %208 = vmatprep.mubr.f32.mxu0 0.0
    %209 = vmatmul.mubr.f32.gmra.mrb[0].mxu0 %v142
    %v210 = vpop.f32.mrb[0].mxu0
    %v211 = vadd.f32 0.0, %v210
    %v212 = vpop.f32.mrb[0].mxu0
    %213 = vdwg.mxu0
    %v214 = vadd.f32 %v135, %v211
    %v215 = vmul.f32 %v214, 0.5
    %v216 = vtanh.pop %v215
    %v217 = vadd.f32 %v216, 1.0
    %v218 = vmul.f32 %v217, 0.5
    %v219 = vtanh.pop %v214
    %221 = vrot.lane.b32.xlu0 %v134, 32
    %v222 = vpop.permute.xlu0 %221
    %v224 = vmul.f32 %v218, %v222
    %226 = vrot.lane.b32.xlu0 %v219, 64
    %v227 = vpop.permute.xlu0 %226
    %v229 = vmul.f32 %v218, %v227
    %231 = vrot.lane.b32.xlu0 %v229, 32
    %v232 = vpop.permute.xlu0 %231
    %v234 = vadd.f32 %v224, %v232
    %v235 = vtanh.pop %v234
    %237 = vrot.lane.b32.xlu0 %v235, 64
    %v238 = vpop.permute.xlu0 %237
    %v240 = vmul.f32 %v218, %v238
    %242 = vrot.lane.b32.xlu0 %v234, 64
    %v243 = vpop.permute.xlu0 %242
    %v244 = vld [vmem:[#allocation13] sm:$0xff]
    %v245 = vld [vmem:[#allocation13 + $0x8] sm:$0xff]
    %v246 = vld [vmem:[#allocation13 + $0x10] sm:$0xff]
    %v247 = vld [vmem:[#allocation13 + $0x18] sm:$0xff]
    %249 = vrot.lane.b32.xlu0 %v240, 32
    %v250 = vpop.permute.xlu0 %249
    %251 = vrot.lane.b32.xlu0 %v243, 32
    %v252 = vpop.permute.xlu0 %251
    %v253 = vsel %vm140, %v250, 0
    %v255 = vsel %vm140, %v252, 0
    %257 = vmatprep.subr.mxu0 0.0
    %258 = vmatpush1.msra.mxu0 %v244
    %259 = vmatprep.subr.mxu0 0.0
    %260 = vmatpush1.msra.mxu0 %v245
    %261 = vmatprep.subr.mxu0 0.0
    %262 = vmatpush1.msra.mxu0 %v246
    %263 = vmatprep.subr.mxu0 0.0
    %264 = vmatpush1.msra.mxu0 %v247
    %265 = vmatprep.subr.mxu0 0.0
    %266 = vmatpush1.msra.mxu0 0.0
    %267 = vmatprep.subr.mxu0 0.0
    %268 = vmatpush1.msra.mxu0 0.0
    %269 = vmatprep.subr.mxu0 0.0
    %270 = vmatpush1.msra.mxu0 0.0
    %271 = vmatprep.subr.mxu0 0.0
    %272 = vmatpush1.msra.mxu0 0.0
    %273 = vmatprep.subr.mxu0 0.0
    %274 = vmatpush1.msra.mxu0 0.0
    %275 = vmatprep.subr.mxu0 0.0
    %276 = vmatpush1.msra.mxu0 0.0
    %277 = vmatprep.subr.mxu0 0.0
    %278 = vmatpush1.msra.mxu0 0.0
    %279 = vmatprep.subr.mxu0 0.0
    %280 = vmatpush1.msra.mxu0 0.0
    %281 = vmatprep.subr.mxu0 0.0
    %282 = vmatpush1.msra.mxu0 0.0
    %283 = vmatprep.subr.mxu0 0.0
    %284 = vmatpush1.msra.mxu0 0.0
    %285 = vmatprep.subr.mxu0 0.0
    %286 = vmatpush1.msra.mxu0 0.0
    %287 = vmatprep.subr.mxu0 0.0
    %288 = vmatpush1.msra.mxu0 0.0
    %289 = vmatprep.subr.mxu0 0.0
    %290 = vmatpush1.msra.mxu0 0.0
    %291 = vmatprep.subr.mxu0 0.0
    %292 = vmatpush1.msra.mxu0 0.0
    %293 = vmatprep.subr.mxu0 0.0
    %294 = vmatpush1.msra.mxu0 0.0
    %295 = vmatprep.subr.mxu0 0.0
    %296 = vmatpush1.msra.mxu0 0.0
    %297 = vmatprep.subr.mxu0 0.0
    %298 = vmatpush1.msra.mxu0 0.0
    %299 = vmatprep.subr.mxu0 0.0
    %300 = vmatpush1.msra.mxu0 0.0
    %301 = vmatprep.subr.mxu0 0.0
    %302 = vmatpush1.msra.mxu0 0.0
    %303 = vmatprep.subr.mxu0 0.0
    %304 = vmatpush1.msra.mxu0 0.0
    %305 = vmatprep.subr.mxu0 0.0
    %306 = vmatpush1.msra.mxu0 0.0
    %307 = vmatprep.subr.mxu0 0.0
    %308 = vmatpush1.msra.mxu0 0.0
    %309 = vmatprep.subr.mxu0 0.0
    %310 = vmatpush1.msra.mxu0 0.0
    %311 = vmatprep.subr.mxu0 0.0
    %312 = vmatpush1.msra.mxu0 0.0
    %313 = vmatprep.subr.mxu0 0.0
    %314 = vmatpush1.msra.mxu0 0.0
    %315 = vmatprep.subr.mxu0 0.0
    %316 = vmatpush1.msra.mxu0 0.0
    %317 = vmatprep.subr.mxu0 0.0
    %318 = vmatpush1.msra.mxu0 0.0
    %319 = vmatprep.subr.mxu0 0.0
    %320 = vmatpush1.msra.mxu0 0.0
    %321 = vmatprep.mubr.f32.mxu0 0.0
    %322 = vmatmul.mubr.f32.gmra.mrb[0].mxu0 %v253
    %v323 = vpop.f32.mrb[0].mxu0
    %v324 = vadd.f32 0.0, %v323
    %v325 = vpop.f32.mrb[0].mxu0
    %326 = vmatprep.mubr.f32.mxu0 0.0
    %327 = vmatmul.mubr.f32.gmra.mrb[0].mxu0 %v255
    %v328 = vpop.f32.mrb[0].mxu0
    %v329 = vadd.f32 0.0, %v328
    %v330 = vpop.f32.mrb[0].mxu0
    %331 = vdwg.mxu0
    %v333 = vlaneseq
    %v334 = vshrl.u32 %v333, 7
    %v335 = vsub.s32 0, %v334
    %v336 = vrot.slane %v131, %v335
    %v338 = vadd.f32 %v324, %v336
    %v340 = vlaneseq
    %v341 = vshrl.u32 %v340, 7
    %v342 = vsub.s32 0, %v341
    %v343 = vrot.slane %v132, %v342
    %344 = vrot.lane.b32.xlu0 %v343, 64
    %v345 = vpop.permute.xlu0 %344
    %v347 = vadd.f32 %v329, %v345
    %v348 = vmax.f32 %v338, 0.0
    %v349 = vand.u32 2147483647, %v338
    %v350 = vsub.f32 0.0, %v349
    %v351 = vmul.f32 %v350, 1.442695
    %v352 = vpow.pop %v351
    %v353 = vadd.f32 %v352, 1.0
    %v354 = vlog2.pop %v353
    %v355 = vmul.f32 %v354, 0.6931472
    %v356 = vmul.f32 -0.5, %v352
    %v357 = vadd.f32 %v356, 1.0
    %v358 = vmul.f32 %v357, %v352
    %v359 = vand.u32 2147483647, %v352
    %vm360 = vcmp.lt.f32.partialorder %v359, 0.0004427343
    %v361 = vsel %vm360, %v358, %v355
    %v362 = vadd.f32 %v348, %v361
    %v363 = vmax.f32 %v347, 0.0
    %v364 = vand.u32 2147483647, %v347
    %v365 = vsub.f32 0.0, %v364
    %v366 = vmul.f32 %v365, 1.442695
    %v367 = vpow.pop %v366
    %v368 = vadd.f32 %v367, 1.0
    %v369 = vlog2.pop %v368
    %v370 = vmul.f32 %v369, 0.6931472
    %v371 = vmul.f32 -0.5, %v367
    %v372 = vadd.f32 %v371, 1.0
    %v373 = vmul.f32 %v372, %v367
    %v374 = vand.u32 2147483647, %v367
    %vm375 = vcmp.lt.f32.partialorder %v374, 0.0004427343
    %v376 = vsel %vm375, %v373, %v370
    %v377 = vadd.f32 %v363, %v376
    %v378 = vld [vmem:[#allocation7] sm:$0xff]
    %v379 = vmul.f32 %v362, %v378
    %381 = vrot.lane.b32.xlu0 %v379, 32
    %v382 = vpop.permute.xlu0 %381
    %v384 = vadd.f32 %v338, %v382
    %v385 = vld [vmem:[#allocation9] sm:$0xff]
    %387 = vrot.lane.b32.xlu0 %v385, 64
    %v388 = vpop.permute.xlu0 %387
    %v390 = vmul.f32 %v377, %v388
    %392 = vrot.lane.b32.xlu0 %v390, 32
    %v393 = vpop.permute.xlu0 %392
    %v395 = vadd.f32 %v347, %v393
    %397 = vrot.lane.b32.xlu0 %v384, 96
    %v398 = vpop.permute.xlu0 %397
    %400 = vst.msk [vmem:[#allocation15] sm:$0xff] %vm140, %v398
    %402 = vrot.lane.b32.xlu0 %v395, 32
    %v403 = vpop.permute.xlu0 %402
    %405 = vst.msk [vmem:[#allocation16] sm:$0xff] %vm140, %v403
    %407 = vrot.lane.b32.xlu0 %v338, 96
    %v408 = vpop.permute.xlu0 %407
    %410 = vst.msk [vmem:[#allocation18] sm:$0xff] %vm140, %v408
    %411 = vst.msk [vmem:[#allocation19] sm:$0xff] %vm140, %v362
    %413 = vrot.lane.b32.xlu0 %v347, 32
    %v414 = vpop.permute.xlu0 %413
    %416 = vst.msk [vmem:[#allocation21] sm:$0xff] %vm140, %v414
    %418 = vrot.lane.b32.xlu0 %v377, 64
    %v419 = vpop.permute.xlu0 %418
    %421 = vst.msk [vmem:[#allocation22] sm:$0xff] %vm140, %v419
    %s422 = scalar_lea.vmem [#allocation4], 8
    %v423 = vld [vmem:[%s422] sm:$0xff]
    %v424 = vld [vmem:[#allocation12] sm:$0xff]
    %v425 = vld [vmem:[#allocation12 + $0x8] sm:$0xff]
    %v426 = vld [vmem:[#allocation12 + $0x10] sm:$0xff]
    %v427 = vld [vmem:[#allocation12 + $0x18] sm:$0xff]
    %v428 = vsel %vm140, %v398, 0
    %430 = vmatprep.subr.mxu0 0.0
    %431 = vmatpush1.msra.mxu0 %v424
    %432 = vmatprep.subr.mxu0 0.0
    %433 = vmatpush1.msra.mxu0 %v425
    %434 = vmatprep.subr.mxu0 0.0
    %435 = vmatpush1.msra.mxu0 %v426
    %436 = vmatprep.subr.mxu0 0.0
    %437 = vmatpush1.msra.mxu0 %v427
    %438 = vmatprep.subr.mxu0 0.0
    %439 = vmatpush1.msra.mxu0 0.0
    %440 = vmatprep.subr.mxu0 0.0
    %441 = vmatpush1.msra.mxu0 0.0
    %442 = vmatprep.subr.mxu0 0.0
    %443 = vmatpush1.msra.mxu0 0.0
    %444 = vmatprep.subr.mxu0 0.0
    %445 = vmatpush1.msra.mxu0 0.0
    %446 = vmatprep.subr.mxu0 0.0
    %447 = vmatpush1.msra.mxu0 0.0
    %448 = vmatprep.subr.mxu0 0.0
    %449 = vmatpush1.msra.mxu0 0.0
    %450 = vmatprep.subr.mxu0 0.0
    %451 = vmatpush1.msra.mxu0 0.0
    %452 = vmatprep.subr.mxu0 0.0
    %453 = vmatpush1.msra.mxu0 0.0
    %454 = vmatprep.subr.mxu0 0.0
    %455 = vmatpush1.msra.mxu0 0.0
    %456 = vmatprep.subr.mxu0 0.0
    %457 = vmatpush1.msra.mxu0 0.0
    %458 = vmatprep.subr.mxu0 0.0
    %459 = vmatpush1.msra.mxu0 0.0
    %460 = vmatprep.subr.mxu0 0.0
    %461 = vmatpush1.msra.mxu0 0.0
    %462 = vmatprep.subr.mxu0 0.0
    %463 = vmatpush1.msra.mxu0 0.0
    %464 = vmatprep.subr.mxu0 0.0
    %465 = vmatpush1.msra.mxu0 0.0
    %466 = vmatprep.subr.mxu0 0.0
    %467 = vmatpush1.msra.mxu0 0.0
    %468 = vmatprep.subr.mxu0 0.0
    %469 = vmatpush1.msra.mxu0 0.0
    %470 = vmatprep.subr.mxu0 0.0
    %471 = vmatpush1.msra.mxu0 0.0
    %472 = vmatprep.subr.mxu0 0.0
    %473 = vmatpush1.msra.mxu0 0.0
    %474 = vmatprep.subr.mxu0 0.0
    %475 = vmatpush1.msra.mxu0 0.0
    %476 = vmatprep.subr.mxu0 0.0
    %477 = vmatpush1.msra.mxu0 0.0
    %478 = vmatprep.subr.mxu0 0.0
    %479 = vmatpush1.msra.mxu0 0.0
    %480 = vmatprep.subr.mxu0 0.0
    %481 = vmatpush1.msra.mxu0 0.0
    %482 = vmatprep.subr.mxu0 0.0
    %483 = vmatpush1.msra.mxu0 0.0
    %484 = vmatprep.subr.mxu0 0.0
    %485 = vmatpush1.msra.mxu0 0.0
    %486 = vmatprep.subr.mxu0 0.0
    %487 = vmatpush1.msra.mxu0 0.0
    %488 = vmatprep.subr.mxu0 0.0
    %489 = vmatpush1.msra.mxu0 0.0
    %490 = vmatprep.subr.mxu0 0.0
    %491 = vmatpush1.msra.mxu0 0.0
    %492 = vmatprep.subr.mxu0 0.0
    %493 = vmatpush1.msra.mxu0 0.0
    %494 = vmatprep.mubr.f32.mxu0 0.0
    %495 = vmatmul.mubr.f32.gmra.mrb[0].mxu0 %v428
    %v496 = vpop.f32.mrb[0].mxu0
    %v497 = vadd.f32 0.0, %v496
    %v498 = vpop.f32.mrb[0].mxu0
    %499 = vdwg.mxu0
    %v500 = vadd.f32 %v423, %v497
    %v501 = vmul.f32 %v500, 0.5
    %v502 = vtanh.pop %v501
    %v503 = vadd.f32 %v502, 1.0
    %v504 = vmul.f32 %v503, 0.5
    %v505 = vtanh.pop %v500
    %506 = vrot.lane.b32.xlu0 %v395, 64
    %v507 = vpop.permute.xlu0 %506
    %v509 = vmul.f32 %v504, %v507
    %511 = vrot.lane.b32.xlu0 %v505, 64
    %v512 = vpop.permute.xlu0 %511
    %v514 = vmul.f32 %v504, %v512
    %516 = vrot.lane.b32.xlu0 %v514, 32
    %v517 = vpop.permute.xlu0 %516
    %v519 = vadd.f32 %v509, %v517
    %v520 = vtanh.pop %v519
    %522 = vrot.lane.b32.xlu0 %v520, 64
    %v523 = vpop.permute.xlu0 %522
    %v525 = vmul.f32 %v504, %v523
    %527 = vrot.lane.b32.xlu0 %v519, 64
    %v528 = vpop.permute.xlu0 %527
    %v529 = vld [vmem:[#allocation13] sm:$0xff]
    %v530 = vld [vmem:[#allocation13 + $0x8] sm:$0xff]
    %v531 = vld [vmem:[#allocation13 + $0x10] sm:$0xff]
    %v532 = vld [vmem:[#allocation13 + $0x18] sm:$0xff]
    %534 = vrot.lane.b32.xlu0 %v525, 32
    %v535 = vpop.permute.xlu0 %534
    %536 = vrot.lane.b32.xlu0 %v528, 32
    %v537 = vpop.permute.xlu0 %536
    %v538 = vsel %vm140, %v535, 0
    %v540 = vsel %vm140, %v537, 0
    %542 = vmatprep.subr.mxu0 0.0
    %543 = vmatpush1.msra.mxu0 %v529
    %544 = vmatprep.subr.mxu0 0.0
    %545 = vmatpush1.msra.mxu0 %v530
    %546 = vmatprep.subr.mxu0 0.0
    %547 = vmatpush1.msra.mxu0 %v531
    %548 = vmatprep.subr.mxu0 0.0
    %549 = vmatpush1.msra.mxu0 %v532
    %550 = vmatprep.subr.mxu0 0.0
    %551 = vmatpush1.msra.mxu0 0.0
    %552 = vmatprep.subr.mxu0 0.0
    %553 = vmatpush1.msra.mxu0 0.0
    %554 = vmatprep.subr.mxu0 0.0
    %555 = vmatpush1.msra.mxu0 0.0
    %556 = vmatprep.subr.mxu0 0.0
    %557 = vmatpush1.msra.mxu0 0.0
    %558 = vmatprep.subr.mxu0 0.0
    %559 = vmatpush1.msra.mxu0 0.0
    %560 = vmatprep.subr.mxu0 0.0
    %561 = vmatpush1.msra.mxu0 0.0
    %562 = vmatprep.subr.mxu0 0.0
    %563 = vmatpush1.msra.mxu0 0.0
    %564 = vmatprep.subr.mxu0 0.0
    %565 = vmatpush1.msra.mxu0 0.0
    %566 = vmatprep.subr.mxu0 0.0
    %567 = vmatpush1.msra.mxu0 0.0
    %568 = vmatprep.subr.mxu0 0.0
    %569 = vmatpush1.msra.mxu0 0.0
    %570 = vmatprep.subr.mxu0 0.0
    %571 = vmatpush1.msra.mxu0 0.0
    %572 = vmatprep.subr.mxu0 0.0
    %573 = vmatpush1.msra.mxu0 0.0
    %574 = vmatprep.subr.mxu0 0.0
    %575 = vmatpush1.msra.mxu0 0.0
    %576 = vmatprep.subr.mxu0 0.0
    %577 = vmatpush1.msra.mxu0 0.0
    %578 = vmatprep.subr.mxu0 0.0
    %579 = vmatpush1.msra.mxu0 0.0
    %580 = vmatprep.subr.mxu0 0.0
    %581 = vmatpush1.msra.mxu0 0.0
    %582 = vmatprep.subr.mxu0 0.0
    %583 = vmatpush1.msra.mxu0 0.0
    %584 = vmatprep.subr.mxu0 0.0
    %585 = vmatpush1.msra.mxu0 0.0
    %586 = vmatprep.subr.mxu0 0.0
    %587 = vmatpush1.msra.mxu0 0.0
    %588 = vmatprep.subr.mxu0 0.0
    %589 = vmatpush1.msra.mxu0 0.0
    %590 = vmatprep.subr.mxu0 0.0
    %591 = vmatpush1.msra.mxu0 0.0
    %592 = vmatprep.subr.mxu0 0.0
    %593 = vmatpush1.msra.mxu0 0.0
    %594 = vmatprep.subr.mxu0 0.0
    %595 = vmatpush1.msra.mxu0 0.0
    %596 = vmatprep.subr.mxu0 0.0
    %597 = vmatpush1.msra.mxu0 0.0
    %598 = vmatprep.subr.mxu0 0.0
    %599 = vmatpush1.msra.mxu0 0.0
    %600 = vmatprep.subr.mxu0 0.0
    %601 = vmatpush1.msra.mxu0 0.0
    %602 = vmatprep.subr.mxu0 0.0
    %603 = vmatpush1.msra.mxu0 0.0
    %604 = vmatprep.subr.mxu0 0.0
    %605 = vmatpush1.msra.mxu0 0.0
    %606 = vmatprep.mubr.f32.mxu0 0.0
    %607 = vmatmul.mubr.f32.gmra.mrb[0].mxu0 %v538
    %v608 = vpop.f32.mrb[0].mxu0
    %v609 = vadd.f32 0.0, %v608
    %v610 = vpop.f32.mrb[0].mxu0
    %611 = vmatprep.mubr.f32.mxu0 0.0
    %612 = vmatmul.mubr.f32.gmra.mrb[0].mxu0 %v540
    %v613 = vpop.f32.mrb[0].mxu0
    %v614 = vadd.f32 0.0, %v613
    %v615 = vpop.f32.mrb[0].mxu0
    %616 = vdwg.mxu0
    %v617 = vadd.f32 %v609, %v336
    %v618 = vadd.f32 %v614, %v345
    %v619 = vmax.f32 %v617, 0.0
    %v620 = vand.u32 2147483647, %v617
    %v621 = vsub.f32 0.0, %v620
    %v622 = vmul.f32 %v621, 1.442695
    %v623 = vpow.pop %v622
    %v624 = vadd.f32 %v623, 1.0
    %v625 = vlog2.pop %v624
    %v626 = vmul.f32 %v625, 0.6931472
    %v627 = vmul.f32 -0.5, %v623
    %v628 = vadd.f32 %v627, 1.0
    %v629 = vmul.f32 %v628, %v623
    %v630 = vand.u32 2147483647, %v623
    %vm631 = vcmp.lt.f32.partialorder %v630, 0.0004427343
    %v632 = vsel %vm631, %v629, %v626
    %v633 = vadd.f32 %v619, %v632
    %v634 = vmax.f32 %v618, 0.0
    %v635 = vand.u32 2147483647, %v618
    %v636 = vsub.f32 0.0, %v635
    %v637 = vmul.f32 %v636, 1.442695
    %v638 = vpow.pop %v637
    %v639 = vadd.f32 %v638, 1.0
    %v640 = vlog2.pop %v639
    %v641 = vmul.f32 %v640, 0.6931472
    %v642 = vmul.f32 -0.5, %v638
    %v643 = vadd.f32 %v642, 1.0
    %v644 = vmul.f32 %v643, %v638
    %v645 = vand.u32 2147483647, %v638
    %vm646 = vcmp.lt.f32.partialorder %v645, 0.0004427343
    %v647 = vsel %vm646, %v644, %v641
    %v648 = vadd.f32 %v634, %v647
    %s649 = scalar_lea.vmem [#allocation7], 8
    %v650 = vld [vmem:[%s649] sm:$0xff]
    %v651 = vmul.f32 %v633, %v650
    %653 = vrot.lane.b32.xlu0 %v651, 32
    %v654 = vpop.permute.xlu0 %653
    %v656 = vadd.f32 %v617, %v654
    %s657 = scalar_lea.vmem [#allocation9], 8
    %v658 = vld [vmem:[%s657] sm:$0xff]
    %660 = vrot.lane.b32.xlu0 %v658, 64
    %v661 = vpop.permute.xlu0 %660
    %v663 = vmul.f32 %v648, %v661
    %665 = vrot.lane.b32.xlu0 %v663, 32
    %v666 = vpop.permute.xlu0 %665
    %v668 = vadd.f32 %v618, %v666
    %670 = vrot.lane.b32.xlu0 %v656, 96
    %v671 = vpop.permute.xlu0 %670
    %s673 = scalar_lea.vmem [#allocation15], 8
    %674 = vst.msk [vmem:[%s673] sm:$0xff] %vm140, %v671
    %676 = vrot.lane.b32.xlu0 %v668, 32
    %v677 = vpop.permute.xlu0 %676
    %s679 = scalar_lea.vmem [#allocation16], 8
    %680 = vst.msk [vmem:[%s679] sm:$0xff] %vm140, %v677
    %682 = vrot.lane.b32.xlu0 %v617, 96
    %v683 = vpop.permute.xlu0 %682
    %s685 = scalar_lea.vmem [#allocation18], 8
    %686 = vst.msk [vmem:[%s685] sm:$0xff] %vm140, %v683
    %s687 = scalar_lea.vmem [#allocation19], 8
    %688 = vst.msk [vmem:[%s687] sm:$0xff] %vm140, %v633
    %690 = vrot.lane.b32.xlu0 %v618, 32
    %v691 = vpop.permute.xlu0 %690
    %s693 = scalar_lea.vmem [#allocation21], 8
    %694 = vst.msk [vmem:[%s693] sm:$0xff] %vm140, %v691
    %696 = vrot.lane.b32.xlu0 %v648, 64
    %v697 = vpop.permute.xlu0 %696
    %s699 = scalar_lea.vmem [#allocation22], 8
    %700 = vst.msk [vmem:[%s699] sm:$0xff] %vm140, %v697
    %s701 = scalar_lea.vmem [#allocation4], 16
    %v702 = vld [vmem:[%s701] sm:$0xff]
    %v703 = vld [vmem:[#allocation12] sm:$0xff]
    %v704 = vld [vmem:[#allocation12 + $0x8] sm:$0xff]
    %v705 = vld [vmem:[#allocation12 + $0x10] sm:$0xff]
    %v706 = vld [vmem:[#allocation12 + $0x18] sm:$0xff]
    %v707 = vsel %vm140, %v671, 0
    %709 = vmatprep.subr.mxu0 0.0
    %710 = vmatpush1.msra.mxu0 %v703
    %711 = vmatprep.subr.mxu0 0.0
    %712 = vmatpush1.msra.mxu0 %v704
    %713 = vmatprep.subr.mxu0 0.0
    %714 = vmatpush1.msra.mxu0 %v705
    %715 = vmatprep.subr.mxu0 0.0
    %716 = vmatpush1.msra.mxu0 %v706
    %717 = vmatprep.subr.mxu0 0.0
    %718 = vmatpush1.msra.mxu0 0.0
    %719 = vmatprep.subr.mxu0 0.0
    %720 = vmatpush1.msra.mxu0 0.0
    %721 = vmatprep.subr.mxu0 0.0
    %722 = vmatpush1.msra.mxu0 0.0
    %723 = vmatprep.subr.mxu0 0.0
    %724 = vmatpush1.msra.mxu0 0.0
    %725 = vmatprep.subr.mxu0 0.0
    %726 = vmatpush1.msra.mxu0 0.0
    %727 = vmatprep.subr.mxu0 0.0
    %728 = vmatpush1.msra.mxu0 0.0
    %729 = vmatprep.subr.mxu0 0.0
    %730 = vmatpush1.msra.mxu0 0.0
    %731 = vmatprep.subr.mxu0 0.0
    %732 = vmatpush1.msra.mxu0 0.0
    %733 = vmatprep.subr.mxu0 0.0
    %734 = vmatpush1.msra.mxu0 0.0
    %735 = vmatprep.subr.mxu0 0.0
    %736 = vmatpush1.msra.mxu0 0.0
    %737 = vmatprep.subr.mxu0 0.0
    %738 = vmatpush1.msra.mxu0 0.0
    %739 = vmatprep.subr.mxu0 0.0
    %740 = vmatpush1.msra.mxu0 0.0
    %741 = vmatprep.subr.mxu0 0.0
    %742 = vmatpush1.msra.mxu0 0.0
    %743 = vmatprep.subr.mxu0 0.0
    %744 = vmatpush1.msra.mxu0 0.0
    %745 = vmatprep.subr.mxu0 0.0
    %746 = vmatpush1.msra.mxu0 0.0
    %747 = vmatprep.subr.mxu0 0.0
    %748 = vmatpush1.msra.mxu0 0.0
    %749 = vmatprep.subr.mxu0 0.0
    %750 = vmatpush1.msra.mxu0 0.0
    %751 = vmatprep.subr.mxu0 0.0
    %752 = vmatpush1.msra.mxu0 0.0
    %753 = vmatprep.subr.mxu0 0.0
    %754 = vmatpush1.msra.mxu0 0.0
    %755 = vmatprep.subr.mxu0 0.0
    %756 = vmatpush1.msra.mxu0 0.0
    %757 = vmatprep.subr.mxu0 0.0
    %758 = vmatpush1.msra.mxu0 0.0
    %759 = vmatprep.subr.mxu0 0.0
    %760 = vmatpush1.msra.mxu0 0.0
    %761 = vmatprep.subr.mxu0 0.0
    %762 = vmatpush1.msra.mxu0 0.0
    %763 = vmatprep.subr.mxu0 0.0
    %764 = vmatpush1.msra.mxu0 0.0
    %765 = vmatprep.subr.mxu0 0.0
    %766 = vmatpush1.msra.mxu0 0.0
    %767 = vmatprep.subr.mxu0 0.0
    %768 = vmatpush1.msra.mxu0 0.0
    %769 = vmatprep.subr.mxu0 0.0
    %770 = vmatpush1.msra.mxu0 0.0
    %771 = vmatprep.subr.mxu0 0.0
    %772 = vmatpush1.msra.mxu0 0.0
    %773 = vmatprep.mubr.f32.mxu0 0.0
    %774 = vmatmul.mubr.f32.gmra.mrb[0].mxu0 %v707
    %v775 = vpop.f32.mrb[0].mxu0
    %v776 = vadd.f32 0.0, %v775
    %v777 = vpop.f32.mrb[0].mxu0
    %778 = vdwg.mxu0
    %v779 = vadd.f32 %v702, %v776
    %v780 = vmul.f32 %v779, 0.5
    %v781 = vtanh.pop %v780
    %v782 = vadd.f32 %v781, 1.0
    %v783 = vmul.f32 %v782, 0.5
    %v784 = vtanh.pop %v779
    %785 = vrot.lane.b32.xlu0 %v668, 64
    %v786 = vpop.permute.xlu0 %785
    %v788 = vmul.f32 %v783, %v786
    %790 = vrot.lane.b32.xlu0 %v784, 64
    %v791 = vpop.permute.xlu0 %790
    %v793 = vmul.f32 %v783, %v791
    %795 = vrot.lane.b32.xlu0 %v793, 32
    %v796 = vpop.permute.xlu0 %795
    %v798 = vadd.f32 %v788, %v796
    %v799 = vtanh.pop %v798
    %801 = vrot.lane.b32.xlu0 %v799, 64
    %v802 = vpop.permute.xlu0 %801
    %v804 = vmul.f32 %v783, %v802
    %806 = vrot.lane.b32.xlu0 %v798, 64
    %v807 = vpop.permute.xlu0 %806
    %v808 = vld [vmem:[#allocation13] sm:$0xff]
    %v809 = vld [vmem:[#allocation13 + $0x8] sm:$0xff]
    %v810 = vld [vmem:[#allocation13 + $0x10] sm:$0xff]
    %v811 = vld [vmem:[#allocation13 + $0x18] sm:$0xff]
    %813 = vrot.lane.b32.xlu0 %v804, 32
    %v814 = vpop.permute.xlu0 %813
    %815 = vrot.lane.b32.xlu0 %v807, 32
    %v816 = vpop.permute.xlu0 %815
    %v817 = vsel %vm140, %v814, 0
    %v819 = vsel %vm140, %v816, 0
    %821 = vmatprep.subr.mxu0 0.0
    %822 = vmatpush1.msra.mxu0 %v808
    %823 = vmatprep.subr.mxu0 0.0
    %824 = vmatpush1.msra.mxu0 %v809
    %825 = vmatprep.subr.mxu0 0.0
    %826 = vmatpush1.msra.mxu0 %v810
    %827 = vmatprep.subr.mxu0 0.0
    %828 = vmatpush1.msra.mxu0 %v811
    %829 = vmatprep.subr.mxu0 0.0
    %830 = vmatpush1.msra.mxu0 0.0
    %831 = vmatprep.subr.mxu0 0.0
    %832 = vmatpush1.msra.mxu0 0.0
    %833 = vmatprep.subr.mxu0 0.0
    %834 = vmatpush1.msra.mxu0 0.0
    %835 = vmatprep.subr.mxu0 0.0
    %836 = vmatpush1.msra.mxu0 0.0
    %837 = vmatprep.subr.mxu0 0.0
    %838 = vmatpush1.msra.mxu0 0.0
    %839 = vmatprep.subr.mxu0 0.0
    %840 = vmatpush1.msra.mxu0 0.0
    %841 = vmatprep.subr.mxu0 0.0
    %842 = vmatpush1.msra.mxu0 0.0
    %843 = vmatprep.subr.mxu0 0.0
    %844 = vmatpush1.msra.mxu0 0.0
    %845 = vmatprep.subr.mxu0 0.0
    %846 = vmatpush1.msra.mxu0 0.0
    %847 = vmatprep.subr.mxu0 0.0
    %848 = vmatpush1.msra.mxu0 0.0
    %849 = vmatprep.subr.mxu0 0.0
    %850 = vmatpush1.msra.mxu0 0.0
    %851 = vmatprep.subr.mxu0 0.0
    %852 = vmatpush1.msra.mxu0 0.0
    %853 = vmatprep.subr.mxu0 0.0
    %854 = vmatpush1.msra.mxu0 0.0
    %855 = vmatprep.subr.mxu0 0.0
    %856 = vmatpush1.msra.mxu0 0.0
    %857 = vmatprep.subr.mxu0 0.0
    %858 = vmatpush1.msra.mxu0 0.0
    %859 = vmatprep.subr.mxu0 0.0
    %860 = vmatpush1.msra.mxu0 0.0
    %861 = vmatprep.subr.mxu0 0.0
    %862 = vmatpush1.msra.mxu0 0.0
    %863 = vmatprep.subr.mxu0 0.0
    %864 = vmatpush1.msra.mxu0 0.0
    %865 = vmatprep.subr.mxu0 0.0
    %866 = vmatpush1.msra.mxu0 0.0
    %867 = vmatprep.subr.mxu0 0.0
    %868 = vmatpush1.msra.mxu0 0.0
    %869 = vmatprep.subr.mxu0 0.0
    %870 = vmatpush1.msra.mxu0 0.0
    %871 = vmatprep.subr.mxu0 0.0
    %872 = vmatpush1.msra.mxu0 0.0
    %873 = vmatprep.subr.mxu0 0.0
    %874 = vmatpush1.msra.mxu0 0.0
    %875 = vmatprep.subr.mxu0 0.0
    %876 = vmatpush1.msra.mxu0 0.0
    %877 = vmatprep.subr.mxu0 0.0
    %878 = vmatpush1.msra.mxu0 0.0
    %879 = vmatprep.subr.mxu0 0.0
    %880 = vmatpush1.msra.mxu0 0.0
    %881 = vmatprep.subr.mxu0 0.0
    %882 = vmatpush1.msra.mxu0 0.0
    %883 = vmatprep.subr.mxu0 0.0
    %884 = vmatpush1.msra.mxu0 0.0
    %885 = vmatprep.mubr.f32.mxu0 0.0
    %886 = vmatmul.mubr.f32.gmra.mrb[0].mxu0 %v817
    %v887 = vpop.f32.mrb[0].mxu0
    %v888 = vadd.f32 0.0, %v887
    %v889 = vpop.f32.mrb[0].mxu0
    %890 = vmatprep.mubr.f32.mxu0 0.0
    %891 = vmatmul.mubr.f32.gmra.mrb[0].mxu0 %v819
    %v892 = vpop.f32.mrb[0].mxu0
    %v893 = vadd.f32 0.0, %v892
    %v894 = vpop.f32.mrb[0].mxu0
    %895 = vdwg.mxu0
    %v896 = vadd.f32 %v888, %v336
    %v897 = vadd.f32 %v893, %v345
    %v898 = vmax.f32 %v896, 0.0
    %v899 = vand.u32 2147483647, %v896
    %v900 = vsub.f32 0.0, %v899
    %v901 = vmul.f32 %v900, 1.442695
    %v902 = vpow.pop %v901
    %v903 = vadd.f32 %v902, 1.0
    %v904 = vlog2.pop %v903
    %v905 = vmul.f32 %v904, 0.6931472
    %v906 = vmul.f32 -0.5, %v902
    %v907 = vadd.f32 %v906, 1.0
    %v908 = vmul.f32 %v907, %v902
    %v909 = vand.u32 2147483647, %v902
    %vm910 = vcmp.lt.f32.partialorder %v909, 0.0004427343
    %v911 = vsel %vm910, %v908, %v905
    %v912 = vadd.f32 %v898, %v911
    %v913 = vmax.f32 %v897, 0.0
    %v914 = vand.u32 2147483647, %v897
    %v915 = vsub.f32 0.0, %v914
    %v916 = vmul.f32 %v915, 1.442695
    %v917 = vpow.pop %v916
    %v918 = vadd.f32 %v917, 1.0
    %v919 = vlog2.pop %v918
    %v920 = vmul.f32 %v919, 0.6931472
    %v921 = vmul.f32 -0.5, %v917
    %v922 = vadd.f32 %v921, 1.0
    %v923 = vmul.f32 %v922, %v917
    %v924 = vand.u32 2147483647, %v917
    %vm925 = vcmp.lt.f32.partialorder %v924, 0.0004427343
    %v926 = vsel %vm925, %v923, %v920
    %v927 = vadd.f32 %v913, %v926
    %s928 = scalar_lea.vmem [#allocation7], 16
    %v929 = vld [vmem:[%s928] sm:$0xff]
    %v930 = vmul.f32 %v912, %v929
    %932 = vrot.lane.b32.xlu0 %v930, 32
    %v933 = vpop.permute.xlu0 %932
    %v935 = vadd.f32 %v896, %v933
    %s936 = scalar_lea.vmem [#allocation9], 16
    %v937 = vld [vmem:[%s936] sm:$0xff]
    %939 = vrot.lane.b32.xlu0 %v937, 64
    %v940 = vpop.permute.xlu0 %939
    %v942 = vmul.f32 %v927, %v940
    %944 = vrot.lane.b32.xlu0 %v942, 32
    %v945 = vpop.permute.xlu0 %944
    %v947 = vadd.f32 %v897, %v945
    %949 = vrot.lane.b32.xlu0 %v935, 96
    %v950 = vpop.permute.xlu0 %949
    %s952 = scalar_lea.vmem [#allocation15], 16
    %953 = vst.msk [vmem:[%s952] sm:$0xff] %vm140, %v950
    %955 = vrot.lane.b32.xlu0 %v947, 32
    %v956 = vpop.permute.xlu0 %955
    %s958 = scalar_lea.vmem [#allocation16], 16
    %959 = vst.msk [vmem:[%s958] sm:$0xff] %vm140, %v956
    %961 = vrot.lane.b32.xlu0 %v896, 96
    %v962 = vpop.permute.xlu0 %961
    %s964 = scalar_lea.vmem [#allocation18], 16
    %965 = vst.msk [vmem:[%s964] sm:$0xff] %vm140, %v962
    %s966 = scalar_lea.vmem [#allocation19], 16
    %967 = vst.msk [vmem:[%s966] sm:$0xff] %vm140, %v912
    %969 = vrot.lane.b32.xlu0 %v897, 32
    %v970 = vpop.permute.xlu0 %969
    %s972 = scalar_lea.vmem [#allocation21], 16
    %973 = vst.msk [vmem:[%s972] sm:$0xff] %vm140, %v970
    %975 = vrot.lane.b32.xlu0 %v927, 64
    %v976 = vpop.permute.xlu0 %975
    %s978 = scalar_lea.vmem [#allocation22], 16
    %979 = vst.msk [vmem:[%s978] sm:$0xff] %vm140, %v976
    %s980 = scalar_lea.vmem [#allocation4], 24
    %v981 = vld [vmem:[%s980] sm:$0xff]
    %v982 = vld [vmem:[#allocation12] sm:$0xff]
    %v983 = vld [vmem:[#allocation12 + $0x8] sm:$0xff]
    %v984 = vld [vmem:[#allocation12 + $0x10] sm:$0xff]
    %v985 = vld [vmem:[#allocation12 + $0x18] sm:$0xff]
    %v986 = vsel %vm140, %v950, 0
    %988 = vmatprep.subr.mxu0 0.0
    %989 = vmatpush1.msra.mxu0 %v982
    %990 = vmatprep.subr.mxu0 0.0
    %991 = vmatpush1.msra.mxu0 %v983
    %992 = vmatprep.subr.mxu0 0.0
    %993 = vmatpush1.msra.mxu0 %v984
    %994 = vmatprep.subr.mxu0 0.0
    %995 = vmatpush1.msra.mxu0 %v985
    %996 = vmatprep.subr.mxu0 0.0
    %997 = vmatpush1.msra.mxu0 0.0
    %998 = vmatprep.subr.mxu0 0.0
    %999 = vmatpush1.msra.mxu0 0.0
    %1000 = vmatprep.subr.mxu0 0.0
    %1001 = vmatpush1.msra.mxu0 0.0
    %1002 = vmatprep.subr.mxu0 0.0
    %1003 = vmatpush1.msra.mxu0 0.0
    %1004 = vmatprep.subr.mxu0 0.0
    %1005 = vmatpush1.msra.mxu0 0.0
    %1006 = vmatprep.subr.mxu0 0.0
    %1007 = vmatpush1.msra.mxu0 0.0
    %1008 = vmatprep.subr.mxu0 0.0
    %1009 = vmatpush1.msra.mxu0 0.0
    %1010 = vmatprep.subr.mxu0 0.0
    %1011 = vmatpush1.msra.mxu0 0.0
    %1012 = vmatprep.subr.mxu0 0.0
    %1013 = vmatpush1.msra.mxu0 0.0
    %1014 = vmatprep.subr.mxu0 0.0
    %1015 = vmatpush1.msra.mxu0 0.0
    %1016 = vmatprep.subr.mxu0 0.0
    %1017 = vmatpush1.msra.mxu0 0.0
    %1018 = vmatprep.subr.mxu0 0.0
    %1019 = vmatpush1.msra.mxu0 0.0
    %1020 = vmatprep.subr.mxu0 0.0
    %1021 = vmatpush1.msra.mxu0 0.0
    %1022 = vmatprep.subr.mxu0 0.0
    %1023 = vmatpush1.msra.mxu0 0.0
    %1024 = vmatprep.subr.mxu0 0.0
    %1025 = vmatpush1.msra.mxu0 0.0
    %1026 = vmatprep.subr.mxu0 0.0
    %1027 = vmatpush1.msra.mxu0 0.0
    %1028 = vmatprep.subr.mxu0 0.0
    %1029 = vmatpush1.msra.mxu0 0.0
    %1030 = vmatprep.subr.mxu0 0.0
    %1031 = vmatpush1.msra.mxu0 0.0
    %1032 = vmatprep.subr.mxu0 0.0
    %1033 = vmatpush1.msra.mxu0 0.0
    %1034 = vmatprep.subr.mxu0 0.0
    %1035 = vmatpush1.msra.mxu0 0.0
    %1036 = vmatprep.subr.mxu0 0.0
    %1037 = vmatpush1.msra.mxu0 0.0
    %1038 = vmatprep.subr.mxu0 0.0
    %1039 = vmatpush1.msra.mxu0 0.0
    %1040 = vmatprep.subr.mxu0 0.0
    %1041 = vmatpush1.msra.mxu0 0.0
    %1042 = vmatprep.subr.mxu0 0.0
    %1043 = vmatpush1.msra.mxu0 0.0
    %1044 = vmatprep.subr.mxu0 0.0
    %1045 = vmatpush1.msra.mxu0 0.0
    %1046 = vmatprep.subr.mxu0 0.0
    %1047 = vmatpush1.msra.mxu0 0.0
    %1048 = vmatprep.subr.mxu0 0.0
    %1049 = vmatpush1.msra.mxu0 0.0
    %1050 = vmatprep.subr.mxu0 0.0
    %1051 = vmatpush1.msra.mxu0 0.0
    %1052 = vmatprep.mubr.f32.mxu0 0.0
    %1053 = vmatmul.mubr.f32.gmra.mrb[0].mxu0 %v986
    %v1054 = vpop.f32.mrb[0].mxu0
    %v1055 = vadd.f32 0.0, %v1054
    %v1056 = vpop.f32.mrb[0].mxu0
    %1057 = vdwg.mxu0
    %v1058 = vadd.f32 %v981, %v1055
    %v1059 = vmul.f32 %v1058, 0.5
    %v1060 = vtanh.pop %v1059
    %v1061 = vadd.f32 %v1060, 1.0
    %v1062 = vmul.f32 %v1061, 0.5
    %v1063 = vtanh.pop %v1058
    %1064 = vrot.lane.b32.xlu0 %v947, 64
    %v1065 = vpop.permute.xlu0 %1064
    %v1067 = vmul.f32 %v1062, %v1065
    %1069 = vrot.lane.b32.xlu0 %v1063, 64
    %v1070 = vpop.permute.xlu0 %1069
    %v1072 = vmul.f32 %v1062, %v1070
    %1074 = vrot.lane.b32.xlu0 %v1072, 32
    %v1075 = vpop.permute.xlu0 %1074
    %v1077 = vadd.f32 %v1067, %v1075
    %v1078 = vtanh.pop %v1077
    %1080 = vrot.lane.b32.xlu0 %v1078, 64
    %v1081 = vpop.permute.xlu0 %1080
    %v1083 = vmul.f32 %v1062, %v1081
    %1085 = vrot.lane.b32.xlu0 %v1077, 64
    %v1086 = vpop.permute.xlu0 %1085
    %v1087 = vld [vmem:[#allocation13] sm:$0xff]
    %v1088 = vld [vmem:[#allocation13 + $0x8] sm:$0xff]
    %v1089 = vld [vmem:[#allocation13 + $0x10] sm:$0xff]
    %v1090 = vld [vmem:[#allocation13 + $0x18] sm:$0xff]
    %1092 = vrot.lane.b32.xlu0 %v1083, 32
    %v1093 = vpop.permute.xlu0 %1092
    %1094 = vrot.lane.b32.xlu0 %v1086, 32
    %v1095 = vpop.permute.xlu0 %1094
    %v1096 = vsel %vm140, %v1093, 0
    %v1098 = vsel %vm140, %v1095, 0
    %1100 = vmatprep.subr.mxu0 0.0
    %1101 = vmatpush1.msra.mxu0 %v1087
    %1102 = vmatprep.subr.mxu0 0.0
    %1103 = vmatpush1.msra.mxu0 %v1088
    %1104 = vmatprep.subr.mxu0 0.0
    %1105 = vmatpush1.msra.mxu0 %v1089
    %1106 = vmatprep.subr.mxu0 0.0
    %1107 = vmatpush1.msra.mxu0 %v1090
    %1108 = vmatprep.subr.mxu0 0.0
    %1109 = vmatpush1.msra.mxu0 0.0
    %1110 = vmatprep.subr.mxu0 0.0
    %1111 = vmatpush1.msra.mxu0 0.0
    %1112 = vmatprep.subr.mxu0 0.0
    %1113 = vmatpush1.msra.mxu0 0.0
    %1114 = vmatprep.subr.mxu0 0.0
    %1115 = vmatpush1.msra.mxu0 0.0
    %1116 = vmatprep.subr.mxu0 0.0
    %1117 = vmatpush1.msra.mxu0 0.0
    %1118 = vmatprep.subr.mxu0 0.0
    %1119 = vmatpush1.msra.mxu0 0.0
    %1120 = vmatprep.subr.mxu0 0.0
    %1121 = vmatpush1.msra.mxu0 0.0
    %1122 = vmatprep.subr.mxu0 0.0
    %1123 = vmatpush1.msra.mxu0 0.0
    %1124 = vmatprep.subr.mxu0 0.0
    %1125 = vmatpush1.msra.mxu0 0.0
    %1126 = vmatprep.subr.mxu0 0.0
    %1127 = vmatpush1.msra.mxu0 0.0
    %1128 = vmatprep.subr.mxu0 0.0
    %1129 = vmatpush1.msra.mxu0 0.0
    %1130 = vmatprep.subr.mxu0 0.0
    %1131 = vmatpush1.msra.mxu0 0.0
    %1132 = vmatprep.subr.mxu0 0.0
    %1133 = vmatpush1.msra.mxu0 0.0
    %1134 = vmatprep.subr.mxu0 0.0
    %1135 = vmatpush1.msra.mxu0 0.0
    %1136 = vmatprep.subr.mxu0 0.0
    %1137 = vmatpush1.msra.mxu0 0.0
    %1138 = vmatprep.subr.mxu0 0.0
    %1139 = vmatpush1.msra.mxu0 0.0
    %1140 = vmatprep.subr.mxu0 0.0
    %1141 = vmatpush1.msra.mxu0 0.0
    %1142 = vmatprep.subr.mxu0 0.0
    %1143 = vmatpush1.msra.mxu0 0.0
    %1144 = vmatprep.subr.mxu0 0.0
    %1145 = vmatpush1.msra.mxu0 0.0
    %1146 = vmatprep.subr.mxu0 0.0
    %1147 = vmatpush1.msra.mxu0 0.0
    %1148 = vmatprep.subr.mxu0 0.0
    %1149 = vmatpush1.msra.mxu0 0.0
    %1150 = vmatprep.subr.mxu0 0.0
    %1151 = vmatpush1.msra.mxu0 0.0
    %1152 = vmatprep.subr.mxu0 0.0
    %1153 = vmatpush1.msra.mxu0 0.0
    %1154 = vmatprep.subr.mxu0 0.0
    %1155 = vmatpush1.msra.mxu0 0.0
    %1156 = vmatprep.subr.mxu0 0.0
    %1157 = vmatpush1.msra.mxu0 0.0
    %1158 = vmatprep.subr.mxu0 0.0
    %1159 = vmatpush1.msra.mxu0 0.0
    %1160 = vmatprep.subr.mxu0 0.0
    %1161 = vmatpush1.msra.mxu0 0.0
    %1162 = vmatprep.subr.mxu0 0.0
    %1163 = vmatpush1.msra.mxu0 0.0
    %1164 = vmatprep.mubr.f32.mxu0 0.0
    %1165 = vmatmul.mubr.f32.gmra.mrb[0].mxu0 %v1096
    %v1166 = vpop.f32.mrb[0].mxu0
    %v1167 = vadd.f32 0.0, %v1166
    %v1168 = vpop.f32.mrb[0].mxu0
    %1169 = vmatprep.mubr.f32.mxu0 0.0
    %1170 = vmatmul.mubr.f32.gmra.mrb[0].mxu0 %v1098
    %v1171 = vpop.f32.mrb[0].mxu0
    %v1172 = vadd.f32 0.0, %v1171
    %v1173 = vpop.f32.mrb[0].mxu0
    %1174 = vdwg.mxu0
    %v1175 = vadd.f32 %v1167, %v336
    %v1176 = vadd.f32 %v1172, %v345
    %v1177 = vmax.f32 %v1175, 0.0
    %v1178 = vand.u32 2147483647, %v1175
    %v1179 = vsub.f32 0.0, %v1178
    %v1180 = vmul.f32 %v1179, 1.442695
    %v1181 = vpow.pop %v1180
    %v1182 = vadd.f32 %v1181, 1.0
    %v1183 = vlog2.pop %v1182
    %v1184 = vmul.f32 %v1183, 0.6931472
    %v1185 = vmul.f32 -0.5, %v1181
    %v1186 = vadd.f32 %v1185, 1.0
    %v1187 = vmul.f32 %v1186, %v1181
    %v1188 = vand.u32 2147483647, %v1181
    %vm1189 = vcmp.lt.f32.partialorder %v1188, 0.0004427343
    %v1190 = vsel %vm1189, %v1187, %v1184
    %v1191 = vadd.f32 %v1177, %v1190
    %v1192 = vmax.f32 %v1176, 0.0
    %v1193 = vand.u32 2147483647, %v1176
    %v1194 = vsub.f32 0.0, %v1193
    %v1195 = vmul.f32 %v1194, 1.442695
    %v1196 = vpow.pop %v1195
    %v1197 = vadd.f32 %v1196, 1.0
    %v1198 = vlog2.pop %v1197
    %v1199 = vmul.f32 %v1198, 0.6931472
    %v1200 = vmul.f32 -0.5, %v1196
    %v1201 = vadd.f32 %v1200, 1.0
    %v1202 = vmul.f32 %v1201, %v1196
    %v1203 = vand.u32 2147483647, %v1196
    %vm1204 = vcmp.lt.f32.partialorder %v1203, 0.0004427343
    %v1205 = vsel %vm1204, %v1202, %v1199
    %v1206 = vadd.f32 %v1192, %v1205
    %s1207 = scalar_lea.vmem [#allocation7], 24
    %v1208 = vld [vmem:[%s1207] sm:$0xff]
    %v1209 = vmul.f32 %v1191, %v1208
    %1211 = vrot.lane.b32.xlu0 %v1209, 32
    %v1212 = vpop.permute.xlu0 %1211
    %v1214 = vadd.f32 %v1175, %v1212
    %s1215 = scalar_lea.vmem [#allocation9], 24
    %v1216 = vld [vmem:[%s1215] sm:$0xff]
    %1218 = vrot.lane.b32.xlu0 %v1216, 64
    %v1219 = vpop.permute.xlu0 %1218
    %v1221 = vmul.f32 %v1206, %v1219
    %1223 = vrot.lane.b32.xlu0 %v1221, 32
    %v1224 = vpop.permute.xlu0 %1223
    %v1226 = vadd.f32 %v1176, %v1224
    %1228 = vrot.lane.b32.xlu0 %v1214, 96
    %v1229 = vpop.permute.xlu0 %1228
    %s1231 = scalar_lea.vmem [#allocation15], 24
    %1232 = vst.msk [vmem:[%s1231] sm:$0xff] %vm140, %v1229
    %1234 = vrot.lane.b32.xlu0 %v1226, 32
    %v1235 = vpop.permute.xlu0 %1234
    %s1237 = scalar_lea.vmem [#allocation16], 24
    %1238 = vst.msk [vmem:[%s1237] sm:$0xff] %vm140, %v1235
    %1240 = vrot.lane.b32.xlu0 %v1175, 96
    %v1241 = vpop.permute.xlu0 %1240
    %s1243 = scalar_lea.vmem [#allocation18], 24
    %1244 = vst.msk [vmem:[%s1243] sm:$0xff] %vm140, %v1241
    %s1245 = scalar_lea.vmem [#allocation19], 24
    %1246 = vst.msk [vmem:[%s1245] sm:$0xff] %vm140, %v1191
    %1248 = vrot.lane.b32.xlu0 %v1176, 32
    %v1249 = vpop.permute.xlu0 %1248
    %s1251 = scalar_lea.vmem [#allocation21], 24
    %1252 = vst.msk [vmem:[%s1251] sm:$0xff] %vm140, %v1249
    %1254 = vrot.lane.b32.xlu0 %v1206, 64
    %v1255 = vpop.permute.xlu0 %1254
    %s1257 = scalar_lea.vmem [#allocation22], 24
    %1258 = vst.msk [vmem:[%s1257] sm:$0xff] %vm140, %v1255
    %s1259 = scalar_lea.vmem [#allocation4], 32
    %v1260 = vld [vmem:[%s1259] sm:$0xff]
    %v1261 = vld [vmem:[#allocation12] sm:$0xff]
    %v1262 = vld [vmem:[#allocation12 + $0x8] sm:$0xff]
    %v1263 = vld [vmem:[#allocation12 + $0x10] sm:$0xff]
    %v1264 = vld [vmem:[#allocation12 + $0x18] sm:$0xff]
    %v1265 = vsel %vm140, %v1229, 0
    %1267 = vmatprep.subr.mxu0 0.0
    %1268 = vmatpush1.msra.mxu0 %v1261
    %1269 = vmatprep.subr.mxu0 0.0
    %1270 = vmatpush1.msra.mxu0 %v1262
    %1271 = vmatprep.subr.mxu0 0.0
    %1272 = vmatpush1.msra.mxu0 %v1263
    %1273 = vmatprep.subr.mxu0 0.0
    %1274 = vmatpush1.msra.mxu0 %v1264
    %1275 = vmatprep.subr.mxu0 0.0
    %1276 = vmatpush1.msra.mxu0 0.0
    %1277 = vmatprep.subr.mxu0 0.0
    %1278 = vmatpush1.msra.mxu0 0.0
    %1279 = vmatprep.subr.mxu0 0.0
    %1280 = vmatpush1.msra.mxu0 0.0
    %1281 = vmatprep.subr.mxu0 0.0
    %1282 = vmatpush1.msra.mxu0 0.0
    %1283 = vmatprep.subr.mxu0 0.0
    %1284 = vmatpush1.msra.mxu0 0.0
    %1285 = vmatprep.subr.mxu0 0.0
    %1286 = vmatpush1.msra.mxu0 0.0
    %1287 = vmatprep.subr.mxu0 0.0
    %1288 = vmatpush1.msra.mxu0 0.0
    %1289 = vmatprep.subr.mxu0 0.0
    %1290 = vmatpush1.msra.mxu0 0.0
    %1291 = vmatprep.subr.mxu0 0.0
    %1292 = vmatpush1.msra.mxu0 0.0
    %1293 = vmatprep.subr.mxu0 0.0
    %1294 = vmatpush1.msra.mxu0 0.0
    %1295 = vmatprep.subr.mxu0 0.0
    %1296 = vmatpush1.msra.mxu0 0.0
    %1297 = vmatprep.subr.mxu0 0.0
    %1298 = vmatpush1.msra.mxu0 0.0
    %1299 = vmatprep.subr.mxu0 0.0
    %1300 = vmatpush1.msra.mxu0 0.0
    %1301 = vmatprep.subr.mxu0 0.0
    %1302 = vmatpush1.msra.mxu0 0.0
    %1303 = vmatprep.subr.mxu0 0.0
    %1304 = vmatpush1.msra.mxu0 0.0
    %1305 = vmatprep.subr.mxu0 0.0
    %1306 = vmatpush1.msra.mxu0 0.0
    %1307 = vmatprep.subr.mxu0 0.0
    %1308 = vmatpush1.msra.mxu0 0.0
    %1309 = vmatprep.subr.mxu0 0.0
    %1310 = vmatpush1.msra.mxu0 0.0
    %1311 = vmatprep.subr.mxu0 0.0
    %1312 = vmatpush1.msra.mxu0 0.0
    %1313 = vmatprep.subr.mxu0 0.0
    %1314 = vmatpush1.msra.mxu0 0.0
    %1315 = vmatprep.subr.mxu0 0.0
    %1316 = vmatpush1.msra.mxu0 0.0
    %1317 = vmatprep.subr.mxu0 0.0
    %1318 = vmatpush1.msra.mxu0 0.0
    %1319 = vmatprep.subr.mxu0 0.0
    %1320 = vmatpush1.msra.mxu0 0.0
    %1321 = vmatprep.subr.mxu0 0.0
    %1322 = vmatpush1.msra.mxu0 0.0
    %1323 = vmatprep.subr.mxu0 0.0
    %1324 = vmatpush1.msra.mxu0 0.0
    %1325 = vmatprep.subr.mxu0 0.0
    %1326 = vmatpush1.msra.mxu0 0.0
    %1327 = vmatprep.subr.mxu0 0.0
    %1328 = vmatpush1.msra.mxu0 0.0
    %1329 = vmatprep.subr.mxu0 0.0
    %1330 = vmatpush1.msra.mxu0 0.0
    %1331 = vmatprep.mubr.f32.mxu0 0.0
    %1332 = vmatmul.mubr.f32.gmra.mrb[0].mxu0 %v1265
    %v1333 = vpop.f32.mrb[0].mxu0
    %v1334 = vadd.f32 0.0, %v1333
    %v1335 = vpop.f32.mrb[0].mxu0
    %1336 = vdwg.mxu0
    %v1337 = vadd.f32 %v1260, %v1334
    %v1338 = vmul.f32 %v1337, 0.5
    %v1339 = vtanh.pop %v1338
    %v1340 = vadd.f32 %v1339, 1.0
    %v1341 = vmul.f32 %v1340, 0.5
    %v1342 = vtanh.pop %v1337
    %1343 = vrot.lane.b32.xlu0 %v1226, 64
    %v1344 = vpop.permute.xlu0 %1343
    %v1346 = vmul.f32 %v1341, %v1344
    %1348 = vrot.lane.b32.xlu0 %v1342, 64
    %v1349 = vpop.permute.xlu0 %1348
    %v1351 = vmul.f32 %v1341, %v1349
    %1353 = vrot.lane.b32.xlu0 %v1351, 32
    %v1354 = vpop.permute.xlu0 %1353
    %v1356 = vadd.f32 %v1346, %v1354
    %v1357 = vtanh.pop %v1356
    %1359 = vrot.lane.b32.xlu0 %v1357, 64
    %v1360 = vpop.permute.xlu0 %1359
    %v1362 = vmul.f32 %v1341, %v1360
    %1364 = vrot.lane.b32.xlu0 %v1356, 64
    %v1365 = vpop.permute.xlu0 %1364
    %v1366 = vld [vmem:[#allocation13] sm:$0xff]
    %v1367 = vld [vmem:[#allocation13 + $0x8] sm:$0xff]
    %v1368 = vld [vmem:[#allocation13 + $0x10] sm:$0xff]
    %v1369 = vld [vmem:[#allocation13 + $0x18] sm:$0xff]
    %1371 = vrot.lane.b32.xlu0 %v1362, 32
    %v1372 = vpop.permute.xlu0 %1371
    %1373 = vrot.lane.b32.xlu0 %v1365, 32
    %v1374 = vpop.permute.xlu0 %1373
    %v1375 = vsel %vm140, %v1372, 0
    %v1377 = vsel %vm140, %v1374, 0
    %1379 = vmatprep.subr.mxu0 0.0
    %1380 = vmatpush1.msra.mxu0 %v1366
    %1381 = vmatprep.subr.mxu0 0.0
    %1382 = vmatpush1.msra.mxu0 %v1367
    %1383 = vmatprep.subr.mxu0 0.0
    %1384 = vmatpush1.msra.mxu0 %v1368
    %1385 = vmatprep.subr.mxu0 0.0
    %1386 = vmatpush1.msra.mxu0 %v1369
    %1387 = vmatprep.subr.mxu0 0.0
    %1388 = vmatpush1.msra.mxu0 0.0
    %1389 = vmatprep.subr.mxu0 0.0
    %1390 = vmatpush1.msra.mxu0 0.0
    %1391 = vmatprep.subr.mxu0 0.0
    %1392 = vmatpush1.msra.mxu0 0.0
    %1393 = vmatprep.subr.mxu0 0.0
    %1394 = vmatpush1.msra.mxu0 0.0
    %1395 = vmatprep.subr.mxu0 0.0
    %1396 = vmatpush1.msra.mxu0 0.0
    %1397 = vmatprep.subr.mxu0 0.0
    %1398 = vmatpush1.msra.mxu0 0.0
    %1399 = vmatprep.subr.mxu0 0.0
    %1400 = vmatpush1.msra.mxu0 0.0
    %1401 = vmatprep.subr.mxu0 0.0
    %1402 = vmatpush1.msra.mxu0 0.0
    %1403 = vmatprep.subr.mxu0 0.0
    %1404 = vmatpush1.msra.mxu0 0.0
    %1405 = vmatprep.subr.mxu0 0.0
    %1406 = vmatpush1.msra.mxu0 0.0
    %1407 = vmatprep.subr.mxu0 0.0
    %1408 = vmatpush1.msra.mxu0 0.0
    %1409 = vmatprep.subr.mxu0 0.0
    %1410 = vmatpush1.msra.mxu0 0.0
    %1411 = vmatprep.subr.mxu0 0.0
    %1412 = vmatpush1.msra.mxu0 0.0
    %1413 = vmatprep.subr.mxu0 0.0
    %1414 = vmatpush1.msra.mxu0 0.0
    %1415 = vmatprep.subr.mxu0 0.0
    %1416 = vmatpush1.msra.mxu0 0.0
    %1417 = vmatprep.subr.mxu0 0.0
    %1418 = vmatpush1.msra.mxu0 0.0
    %1419 = vmatprep.subr.mxu0 0.0
    %1420 = vmatpush1.msra.mxu0 0.0
    %1421 = vmatprep.subr.mxu0 0.0
    %1422 = vmatpush1.msra.mxu0 0.0
    %1423 = vmatprep.subr.mxu0 0.0
    %1424 = vmatpush1.msra.mxu0 0.0
    %1425 = vmatprep.subr.mxu0 0.0
    %1426 = vmatpush1.msra.mxu0 0.0
    %1427 = vmatprep.subr.mxu0 0.0
    %1428 = vmatpush1.msra.mxu0 0.0
    %1429 = vmatprep.subr.mxu0 0.0
    %1430 = vmatpush1.msra.mxu0 0.0
    %1431 = vmatprep.subr.mxu0 0.0
    %1432 = vmatpush1.msra.mxu0 0.0
    %1433 = vmatprep.subr.mxu0 0.0
    %1434 = vmatpush1.msra.mxu0 0.0
    %1435 = vmatprep.subr.mxu0 0.0
    %1436 = vmatpush1.msra.mxu0 0.0
    %1437 = vmatprep.subr.mxu0 0.0
    %1438 = vmatpush1.msra.mxu0 0.0
    %1439 = vmatprep.subr.mxu0 0.0
    %1440 = vmatpush1.msra.mxu0 0.0
    %1441 = vmatprep.subr.mxu0 0.0
    %1442 = vmatpush1.msra.mxu0 0.0
    %1443 = vmatprep.mubr.f32.mxu0 0.0
    %1444 = vmatmul.mubr.f32.gmra.mrb[0].mxu0 %v1375
    %v1445 = vpop.f32.mrb[0].mxu0
    %v1446 = vadd.f32 0.0, %v1445
    %v1447 = vpop.f32.mrb[0].mxu0
    %1448 = vmatprep.mubr.f32.mxu0 0.0
    %1449 = vmatmul.mubr.f32.gmra.mrb[0].mxu0 %v1377
    %v1450 = vpop.f32.mrb[0].mxu0
    %v1451 = vadd.f32 0.0, %v1450
    %v1452 = vpop.f32.mrb[0].mxu0
    %1453 = vdwg.mxu0
    %v1454 = vadd.f32 %v1446, %v336
    %v1455 = vadd.f32 %v1451, %v345
    %v1456 = vmax.f32 %v1454, 0.0
    %v1457 = vand.u32 2147483647, %v1454
    %v1458 = vsub.f32 0.0, %v1457
    %v1459 = vmul.f32 %v1458, 1.442695
    %v1460 = vpow.pop %v1459
    %v1461 = vadd.f32 %v1460, 1.0
    %v1462 = vlog2.pop %v1461
    %v1463 = vmul.f32 %v1462, 0.6931472
    %v1464 = vmul.f32 -0.5, %v1460
    %v1465 = vadd.f32 %v1464, 1.0
    %v1466 = vmul.f32 %v1465, %v1460
    %v1467 = vand.u32 2147483647, %v1460
    %vm1468 = vcmp.lt.f32.partialorder %v1467, 0.0004427343
    %v1469 = vsel %vm1468, %v1466, %v1463
    %v1470 = vadd.f32 %v1456, %v1469
    %v1471 = vmax.f32 %v1455, 0.0
    %v1472 = vand.u32 2147483647, %v1455
    %v1473 = vsub.f32 0.0, %v1472
    %v1474 = vmul.f32 %v1473, 1.442695
    %v1475 = vpow.pop %v1474
    %v1476 = vadd.f32 %v1475, 1.0
    %v1477 = vlog2.pop %v1476
    %v1478 = vmul.f32 %v1477, 0.6931472
    %v1479 = vmul.f32 -0.5, %v1475
    %v1480 = vadd.f32 %v1479, 1.0
    %v1481 = vmul.f32 %v1480, %v1475
    %v1482 = vand.u32 2147483647, %v1475
    %vm1483 = vcmp.lt.f32.partialorder %v1482, 0.0004427343
    %v1484 = vsel %vm1483, %v1481, %v1478
    %v1485 = vadd.f32 %v1471, %v1484
    %s1486 = scalar_lea.vmem [#allocation7], 32
    %v1487 = vld [vmem:[%s1486] sm:$0xff]
    %v1488 = vmul.f32 %v1470, %v1487
    %1490 = vrot.lane.b32.xlu0 %v1488, 32
    %v1491 = vpop.permute.xlu0 %1490
    %v1493 = vadd.f32 %v1454, %v1491
    %s1494 = scalar_lea.vmem [#allocation9], 32
    %v1495 = vld [vmem:[%s1494] sm:$0xff]
    %1497 = vrot.lane.b32.xlu0 %v1495, 64
    %v1498 = vpop.permute.xlu0 %1497
    %v1500 = vmul.f32 %v1485, %v1498
    %1502 = vrot.lane.b32.xlu0 %v1500, 32
    %v1503 = vpop.permute.xlu0 %1502
    %v1505 = vadd.f32 %v1455, %v1503
    %1507 = vrot.lane.b32.xlu0 %v1493, 96
    %v1508 = vpop.permute.xlu0 %1507
    %s1510 = scalar_lea.vmem [#allocation15], 32
    %1511 = vst.msk [vmem:[%s1510] sm:$0xff] %vm140, %v1508
    %1513 = vrot.lane.b32.xlu0 %v1505, 32
    %v1514 = vpop.permute.xlu0 %1513
    %s1516 = scalar_lea.vmem [#allocation16], 32
    %1517 = vst.msk [vmem:[%s1516] sm:$0xff] %vm140, %v1514
    %1519 = vrot.lane.b32.xlu0 %v1454, 96
    %v1520 = vpop.permute.xlu0 %1519
    %s1522 = scalar_lea.vmem [#allocation18], 32
    %1523 = vst.msk [vmem:[%s1522] sm:$0xff] %vm140, %v1520
    %s1524 = scalar_lea.vmem [#allocation19], 32
    %1525 = vst.msk [vmem:[%s1524] sm:$0xff] %vm140, %v1470
    %1527 = vrot.lane.b32.xlu0 %v1455, 32
    %v1528 = vpop.permute.xlu0 %1527
    %s1530 = scalar_lea.vmem [#allocation21], 32
    %1531 = vst.msk [vmem:[%s1530] sm:$0xff] %vm140, %v1528
    %1533 = vrot.lane.b32.xlu0 %v1485, 64
    %v1534 = vpop.permute.xlu0 %1533
    %s1536 = scalar_lea.vmem [#allocation22], 32
    %1537 = vst.msk [vmem:[%s1536] sm:$0xff] %vm140, %v1534
    %s1538 = scalar_lea.vmem [#allocation4], 40
    %v1539 = vld [vmem:[%s1538] sm:$0xff]
    %v1540 = vld [vmem:[#allocation12] sm:$0xff]
    %v1541 = vld [vmem:[#allocation12 + $0x8] sm:$0xff]
    %v1542 = vld [vmem:[#allocation12 + $0x10] sm:$0xff]
    %v1543 = vld [vmem:[#allocation12 + $0x18] sm:$0xff]
    %v1544 = vsel %vm140, %v1508, 0
    %1546 = vmatprep.subr.mxu0 0.0
    %1547 = vmatpush1.msra.mxu0 %v1540
    %1548 = vmatprep.subr.mxu0 0.0
    %1549 = vmatpush1.msra.mxu0 %v1541
    %1550 = vmatprep.subr.mxu0 0.0
    %1551 = vmatpush1.msra.mxu0 %v1542
    %1552 = vmatprep.subr.mxu0 0.0
    %1553 = vmatpush1.msra.mxu0 %v1543
    %1554 = vmatprep.subr.mxu0 0.0
    %1555 = vmatpush1.msra.mxu0 0.0
    %1556 = vmatprep.subr.mxu0 0.0
    %1557 = vmatpush1.msra.mxu0 0.0
    %1558 = vmatprep.subr.mxu0 0.0
    %1559 = vmatpush1.msra.mxu0 0.0
    %1560 = vmatprep.subr.mxu0 0.0
    %1561 = vmatpush1.msra.mxu0 0.0
    %1562 = vmatprep.subr.mxu0 0.0
    %1563 = vmatpush1.msra.mxu0 0.0
    %1564 = vmatprep.subr.mxu0 0.0
    %1565 = vmatpush1.msra.mxu0 0.0
    %1566 = vmatprep.subr.mxu0 0.0
    %1567 = vmatpush1.msra.mxu0 0.0
    %1568 = vmatprep.subr.mxu0 0.0
    %1569 = vmatpush1.msra.mxu0 0.0
    %1570 = vmatprep.subr.mxu0 0.0
    %1571 = vmatpush1.msra.mxu0 0.0
    %1572 = vmatprep.subr.mxu0 0.0
    %1573 = vmatpush1.msra.mxu0 0.0
    %1574 = vmatprep.subr.mxu0 0.0
    %1575 = vmatpush1.msra.mxu0 0.0
    %1576 = vmatprep.subr.mxu0 0.0
    %1577 = vmatpush1.msra.mxu0 0.0
    %1578 = vmatprep.subr.mxu0 0.0
    %1579 = vmatpush1.msra.mxu0 0.0
    %1580 = vmatprep.subr.mxu0 0.0
    %1581 = vmatpush1.msra.mxu0 0.0
    %1582 = vmatprep.subr.mxu0 0.0
    %1583 = vmatpush1.msra.mxu0 0.0
    %1584 = vmatprep.subr.mxu0 0.0
    %1585 = vmatpush1.msra.mxu0 0.0
    %1586 = vmatprep.subr.mxu0 0.0
    %1587 = vmatpush1.msra.mxu0 0.0
    %1588 = vmatprep.subr.mxu0 0.0
    %1589 = vmatpush1.msra.mxu0 0.0
    %1590 = vmatprep.subr.mxu0 0.0
    %1591 = vmatpush1.msra.mxu0 0.0
    %1592 = vmatprep.subr.mxu0 0.0
    %1593 = vmatpush1.msra.mxu0 0.0
    %1594 = vmatprep.subr.mxu0 0.0
    %1595 = vmatpush1.msra.mxu0 0.0
    %1596 = vmatprep.subr.mxu0 0.0
    %1597 = vmatpush1.msra.mxu0 0.0
    %1598 = vmatprep.subr.mxu0 0.0
    %1599 = vmatpush1.msra.mxu0 0.0
    %1600 = vmatprep.subr.mxu0 0.0
    %1601 = vmatpush1.msra.mxu0 0.0
    %1602 = vmatprep.subr.mxu0 0.0
    %1603 = vmatpush1.msra.mxu0 0.0
    %1604 = vmatprep.subr.mxu0 0.0
    %1605 = vmatpush1.msra.mxu0 0.0
    %1606 = vmatprep.subr.mxu0 0.0
    %1607 = vmatpush1.msra.mxu0 0.0
    %1608 = vmatprep.subr.mxu0 0.0
    %1609 = vmatpush1.msra.mxu0 0.0
    %1610 = vmatprep.mubr.f32.mxu0 0.0
    %1611 = vmatmul.mubr.f32.gmra.mrb[0].mxu0 %v1544
    %v1612 = vpop.f32.mrb[0].mxu0
    %v1613 = vadd.f32 0.0, %v1612
    %v1614 = vpop.f32.mrb[0].mxu0
    %1615 = vdwg.mxu0
    %v1616 = vadd.f32 %v1539, %v1613
    %v1617 = vmul.f32 %v1616, 0.5
    %v1618 = vtanh.pop %v1617
    %v1619 = vadd.f32 %v1618, 1.0
    %v1620 = vmul.f32 %v1619, 0.5
    %v1621 = vtanh.pop %v1616
    %1622 = vrot.lane.b32.xlu0 %v1505, 64
    %v1623 = vpop.permute.xlu0 %1622
    %v1625 = vmul.f32 %v1620, %v1623
    %1627 = vrot.lane.b32.xlu0 %v1621, 64
    %v1628 = vpop.permute.xlu0 %1627
    %v1630 = vmul.f32 %v1620, %v1628
    %1632 = vrot.lane.b32.xlu0 %v1630, 32
    %v1633 = vpop.permute.xlu0 %1632
    %v1635 = vadd.f32 %v1625, %v1633
    %v1636 = vtanh.pop %v1635
    %1638 = vrot.lane.b32.xlu0 %v1636, 64
    %v1639 = vpop.permute.xlu0 %1638
    %v1641 = vmul.f32 %v1620, %v1639
    %1643 = vrot.lane.b32.xlu0 %v1635, 64
    %v1644 = vpop.permute.xlu0 %1643
    %v1645 = vld [vmem:[#allocation13] sm:$0xff]
    %v1646 = vld [vmem:[#allocation13 + $0x8] sm:$0xff]
    %v1647 = vld [vmem:[#allocation13 + $0x10] sm:$0xff]
    %v1648 = vld [vmem:[#allocation13 + $0x18] sm:$0xff]
    %1650 = vrot.lane.b32.xlu0 %v1641, 32
    %v1651 = vpop.permute.xlu0 %1650
    %1652 = vrot.lane.b32.xlu0 %v1644, 32
    %v1653 = vpop.permute.xlu0 %1652
    %v1654 = vsel %vm140, %v1651, 0
    %v1656 = vsel %vm140, %v1653, 0
    %1658 = vmatprep.subr.mxu0 0.0
    %1659 = vmatpush1.msra.mxu0 %v1645
    %1660 = vmatprep.subr.mxu0 0.0
    %1661 = vmatpush1.msra.mxu0 %v1646
    %1662 = vmatprep.subr.mxu0 0.0
    %1663 = vmatpush1.msra.mxu0 %v1647
    %1664 = vmatprep.subr.mxu0 0.0
    %1665 = vmatpush1.msra.mxu0 %v1648
    %1666 = vmatprep.subr.mxu0 0.0
    %1667 = vmatpush1.msra.mxu0 0.0
    %1668 = vmatprep.subr.mxu0 0.0
    %1669 = vmatpush1.msra.mxu0 0.0
    %1670 = vmatprep.subr.mxu0 0.0
    %1671 = vmatpush1.msra.mxu0 0.0
    %1672 = vmatprep.subr.mxu0 0.0
    %1673 = vmatpush1.msra.mxu0 0.0
    %1674 = vmatprep.subr.mxu0 0.0
    %1675 = vmatpush1.msra.mxu0 0.0
    %1676 = vmatprep.subr.mxu0 0.0
    %1677 = vmatpush1.msra.mxu0 0.0
    %1678 = vmatprep.subr.mxu0 0.0
    %1679 = vmatpush1.msra.mxu0 0.0
    %1680 = vmatprep.subr.mxu0 0.0
    %1681 = vmatpush1.msra.mxu0 0.0
    %1682 = vmatprep.subr.mxu0 0.0
    %1683 = vmatpush1.msra.mxu0 0.0
    %1684 = vmatprep.subr.mxu0 0.0
    %1685 = vmatpush1.msra.mxu0 0.0
    %1686 = vmatprep.subr.mxu0 0.0
    %1687 = vmatpush1.msra.mxu0 0.0
    %1688 = vmatprep.subr.mxu0 0.0
    %1689 = vmatpush1.msra.mxu0 0.0
    %1690 = vmatprep.subr.mxu0 0.0
    %1691 = vmatpush1.msra.mxu0 0.0
    %1692 = vmatprep.subr.mxu0 0.0
    %1693 = vmatpush1.msra.mxu0 0.0
    %1694 = vmatprep.subr.mxu0 0.0
    %1695 = vmatpush1.msra.mxu0 0.0
    %1696 = vmatprep.subr.mxu0 0.0
    %1697 = vmatpush1.msra.mxu0 0.0
    %1698 = vmatprep.subr.mxu0 0.0
    %1699 = vmatpush1.msra.mxu0 0.0
    %1700 = vmatprep.subr.mxu0 0.0
    %1701 = vmatpush1.msra.mxu0 0.0
    %1702 = vmatprep.subr.mxu0 0.0
    %1703 = vmatpush1.msra.mxu0 0.0
    %1704 = vmatprep.subr.mxu0 0.0
    %1705 = vmatpush1.msra.mxu0 0.0
    %1706 = vmatprep.subr.mxu0 0.0
    %1707 = vmatpush1.msra.mxu0 0.0
    %1708 = vmatprep.subr.mxu0 0.0
    %1709 = vmatpush1.msra.mxu0 0.0
    %1710 = vmatprep.subr.mxu0 0.0
    %1711 = vmatpush1.msra.mxu0 0.0
    %1712 = vmatprep.subr.mxu0 0.0
    %1713 = vmatpush1.msra.mxu0 0.0
    %1714 = vmatprep.subr.mxu0 0.0
    %1715 = vmatpush1.msra.mxu0 0.0
    %1716 = vmatprep.subr.mxu0 0.0
    %1717 = vmatpush1.msra.mxu0 0.0
    %1718 = vmatprep.subr.mxu0 0.0
    %1719 = vmatpush1.msra.mxu0 0.0
    %1720 = vmatprep.subr.mxu0 0.0
    %1721 = vmatpush1.msra.mxu0 0.0
    %1722 = vmatprep.mubr.f32.mxu0 0.0
    %1723 = vmatmul.mubr.f32.gmra.mrb[0].mxu0 %v1654
    %v1724 = vpop.f32.mrb[0].mxu0
    %v1725 = vadd.f32 0.0, %v1724
    %v1726 = vpop.f32.mrb[0].mxu0
    %1727 = vmatprep.mubr.f32.mxu0 0.0
    %1728 = vmatmul.mubr.f32.gmra.mrb[0].mxu0 %v1656
    %v1729 = vpop.f32.mrb[0].mxu0
    %v1730 = vadd.f32 0.0, %v1729
    %v1731 = vpop.f32.mrb[0].mxu0
    %1732 = vdwg.mxu0
    %v1733 = vadd.f32 %v1725, %v336
    %v1734 = vadd.f32 %v1730, %v345
    %v1735 = vmax.f32 %v1733, 0.0
    %v1736 = vand.u32 2147483647, %v1733
    %v1737 = vsub.f32 0.0, %v1736
    %v1738 = vmul.f32 %v1737, 1.442695
    %v1739 = vpow.pop %v1738
    %v1740 = vadd.f32 %v1739, 1.0
    %v1741 = vlog2.pop %v1740
    %v1742 = vmul.f32 %v1741, 0.6931472
    %v1743 = vmul.f32 -0.5, %v1739
    %v1744 = vadd.f32 %v1743, 1.0
    %v1745 = vmul.f32 %v1744, %v1739
    %v1746 = vand.u32 2147483647, %v1739
    %vm1747 = vcmp.lt.f32.partialorder %v1746, 0.0004427343
    %v1748 = vsel %vm1747, %v1745, %v1742
    %v1749 = vadd.f32 %v1735, %v1748
    %v1750 = vmax.f32 %v1734, 0.0
    %v1751 = vand.u32 2147483647, %v1734
    %v1752 = vsub.f32 0.0, %v1751
    %v1753 = vmul.f32 %v1752, 1.442695
    %v1754 = vpow.pop %v1753
    %v1755 = vadd.f32 %v1754, 1.0
    %v1756 = vlog2.pop %v1755
    %v1757 = vmul.f32 %v1756, 0.6931472
    %v1758 = vmul.f32 -0.5, %v1754
    %v1759 = vadd.f32 %v1758, 1.0
    %v1760 = vmul.f32 %v1759, %v1754
    %v1761 = vand.u32 2147483647, %v1754
    %vm1762 = vcmp.lt.f32.partialorder %v1761, 0.0004427343
    %v1763 = vsel %vm1762, %v1760, %v1757
    %v1764 = vadd.f32 %v1750, %v1763
    %s1765 = scalar_lea.vmem [#allocation7], 40
    %v1766 = vld [vmem:[%s1765] sm:$0xff]
    %v1767 = vmul.f32 %v1749, %v1766
    %1769 = vrot.lane.b32.xlu0 %v1767, 32
    %v1770 = vpop.permute.xlu0 %1769
    %v1772 = vadd.f32 %v1733, %v1770
    %s1773 = scalar_lea.vmem [#allocation9], 40
    %v1774 = vld [vmem:[%s1773] sm:$0xff]
    %1776 = vrot.lane.b32.xlu0 %v1774, 64
    %v1777 = vpop.permute.xlu0 %1776
    %v1779 = vmul.f32 %v1764, %v1777
    %1781 = vrot.lane.b32.xlu0 %v1779, 32
    %v1782 = vpop.permute.xlu0 %1781
    %v1784 = vadd.f32 %v1734, %v1782
    %1786 = vrot.lane.b32.xlu0 %v1772, 96
    %v1787 = vpop.permute.xlu0 %1786
    %s1789 = scalar_lea.vmem [#allocation15], 40
    %1790 = vst.msk [vmem:[%s1789] sm:$0xff] %vm140, %v1787
    %1792 = vrot.lane.b32.xlu0 %v1784, 32
    %v1793 = vpop.permute.xlu0 %1792
    %s1795 = scalar_lea.vmem [#allocation16], 40
    %1796 = vst.msk [vmem:[%s1795] sm:$0xff] %vm140, %v1793
    %1798 = vrot.lane.b32.xlu0 %v1733, 96
    %v1799 = vpop.permute.xlu0 %1798
    %s1801 = scalar_lea.vmem [#allocation18], 40
    %1802 = vst.msk [vmem:[%s1801] sm:$0xff] %vm140, %v1799
    %s1803 = scalar_lea.vmem [#allocation19], 40
    %1804 = vst.msk [vmem:[%s1803] sm:$0xff] %vm140, %v1749
    %1806 = vrot.lane.b32.xlu0 %v1734, 32
    %v1807 = vpop.permute.xlu0 %1806
    %s1809 = scalar_lea.vmem [#allocation21], 40
    %1810 = vst.msk [vmem:[%s1809] sm:$0xff] %vm140, %v1807
    %1812 = vrot.lane.b32.xlu0 %v1764, 64
    %v1813 = vpop.permute.xlu0 %1812
    %s1815 = scalar_lea.vmem [#allocation22], 40
    %1816 = vst.msk [vmem:[%s1815] sm:$0xff] %vm140, %v1813
    %s1817 = scalar_lea.vmem [#allocation4], 48
    %v1818 = vld [vmem:[%s1817] sm:$0xff]
    %v1819 = vld [vmem:[#allocation12] sm:$0xff]
    %v1820 = vld [vmem:[#allocation12 + $0x8] sm:$0xff]
    %v1821 = vld [vmem:[#allocation12 + $0x10] sm:$0xff]
    %v1822 = vld [vmem:[#allocation12 + $0x18] sm:$0xff]
    %v1823 = vsel %vm140, %v1787, 0
    %1825 = vmatprep.subr.mxu0 0.0
    %1826 = vmatpush1.msra.mxu0 %v1819
    %1827 = vmatprep.subr.mxu0 0.0
    %1828 = vmatpush1.msra.mxu0 %v1820
    %1829 = vmatprep.subr.mxu0 0.0
    %1830 = vmatpush1.msra.mxu0 %v1821
    %1831 = vmatprep.subr.mxu0 0.0
    %1832 = vmatpush1.msra.mxu0 %v1822
    %1833 = vmatprep.subr.mxu0 0.0
    %1834 = vmatpush1.msra.mxu0 0.0
    %1835 = vmatprep.subr.mxu0 0.0
    %1836 = vmatpush1.msra.mxu0 0.0
    %1837 = vmatprep.subr.mxu0 0.0
    %1838 = vmatpush1.msra.mxu0 0.0
    %1839 = vmatprep.subr.mxu0 0.0
    %1840 = vmatpush1.msra.mxu0 0.0
    %1841 = vmatprep.subr.mxu0 0.0
    %1842 = vmatpush1.msra.mxu0 0.0
    %1843 = vmatprep.subr.mxu0 0.0
    %1844 = vmatpush1.msra.mxu0 0.0
    %1845 = vmatprep.subr.mxu0 0.0
    %1846 = vmatpush1.msra.mxu0 0.0
    %1847 = vmatprep.subr.mxu0 0.0
    %1848 = vmatpush1.msra.mxu0 0.0
    %1849 = vmatprep.subr.mxu0 0.0
    %1850 = vmatpush1.msra.mxu0 0.0
    %1851 = vmatprep.subr.mxu0 0.0
    %1852 = vmatpush1.msra.mxu0 0.0
    %1853 = vmatprep.subr.mxu0 0.0
    %1854 = vmatpush1.msra.mxu0 0.0
    %1855 = vmatprep.subr.mxu0 0.0
    %1856 = vmatpush1.msra.mxu0 0.0
    %1857 = vmatprep.subr.mxu0 0.0
    %1858 = vmatpush1.msra.mxu0 0.0
    %1859 = vmatprep.subr.mxu0 0.0
    %1860 = vmatpush1.msra.mxu0 0.0
    %1861 = vmatprep.subr.mxu0 0.0
    %1862 = vmatpush1.msra.mxu0 0.0
    %1863 = vmatprep.subr.mxu0 0.0
    %1864 = vmatpush1.msra.mxu0 0.0
    %1865 = vmatprep.subr.mxu0 0.0
    %1866 = vmatpush1.msra.mxu0 0.0
    %1867 = vmatprep.subr.mxu0 0.0
    %1868 = vmatpush1.msra.mxu0 0.0
    %1869 = vmatprep.subr.mxu0 0.0
    %1870 = vmatpush1.msra.mxu0 0.0
    %1871 = vmatprep.subr.mxu0 0.0
    %1872 = vmatpush1.msra.mxu0 0.0
    %1873 = vmatprep.subr.mxu0 0.0
    %1874 = vmatpush1.msra.mxu0 0.0
    %1875 = vmatprep.subr.mxu0 0.0
    %1876 = vmatpush1.msra.mxu0 0.0
    %1877 = vmatprep.subr.mxu0 0.0
    %1878 = vmatpush1.msra.mxu0 0.0
    %1879 = vmatprep.subr.mxu0 0.0
    %1880 = vmatpush1.msra.mxu0 0.0
    %1881 = vmatprep.subr.mxu0 0.0
    %1882 = vmatpush1.msra.mxu0 0.0
    %1883 = vmatprep.subr.mxu0 0.0
    %1884 = vmatpush1.msra.mxu0 0.0
    %1885 = vmatprep.subr.mxu0 0.0
    %1886 = vmatpush1.msra.mxu0 0.0
    %1887 = vmatprep.subr.mxu0 0.0
    %1888 = vmatpush1.msra.mxu0 0.0
    %1889 = vmatprep.mubr.f32.mxu0 0.0
    %1890 = vmatmul.mubr.f32.gmra.mrb[0].mxu0 %v1823
    %v1891 = vpop.f32.mrb[0].mxu0
    %v1892 = vadd.f32 0.0, %v1891
    %v1893 = vpop.f32.mrb[0].mxu0
    %1894 = vdwg.mxu0
    %v1895 = vadd.f32 %v1818, %v1892
    %v1896 = vmul.f32 %v1895, 0.5
    %v1897 = vtanh.pop %v1896
    %v1898 = vadd.f32 %v1897, 1.0
    %v1899 = vmul.f32 %v1898, 0.5
    %v1900 = vtanh.pop %v1895
    %1901 = vrot.lane.b32.xlu0 %v1784, 64
    %v1902 = vpop.permute.xlu0 %1901
    %v1904 = vmul.f32 %v1899, %v1902
    %1906 = vrot.lane.b32.xlu0 %v1900, 64
    %v1907 = vpop.permute.xlu0 %1906
    %v1909 = vmul.f32 %v1899, %v1907
    %1911 = vrot.lane.b32.xlu0 %v1909, 32
    %v1912 = vpop.permute.xlu0 %1911
    %v1914 = vadd.f32 %v1904, %v1912
    %v1915 = vtanh.pop %v1914
    %1917 = vrot.lane.b32.xlu0 %v1915, 64
    %v1918 = vpop.permute.xlu0 %1917
    %v1920 = vmul.f32 %v1899, %v1918
    %1922 = vrot.lane.b32.xlu0 %v1914, 64
    %v1923 = vpop.permute.xlu0 %1922
    %v1924 = vld [vmem:[#allocation13] sm:$0xff]
    %v1925 = vld [vmem:[#allocation13 + $0x8] sm:$0xff]
    %v1926 = vld [vmem:[#allocation13 + $0x10] sm:$0xff]
    %v1927 = vld [vmem:[#allocation13 + $0x18] sm:$0xff]
    %1929 = vrot.lane.b32.xlu0 %v1920, 32
    %v1930 = vpop.permute.xlu0 %1929
    %1931 = vrot.lane.b32.xlu0 %v1923, 32
    %v1932 = vpop.permute.xlu0 %1931
    %v1933 = vsel %vm140, %v1930, 0
    %v1935 = vsel %vm140, %v1932, 0
    %1937 = vmatprep.subr.mxu0 0.0
    %1938 = vmatpush1.msra.mxu0 %v1924
    %1939 = vmatprep.subr.mxu0 0.0
    %1940 = vmatpush1.msra.mxu0 %v1925
    %1941 = vmatprep.subr.mxu0 0.0
    %1942 = vmatpush1.msra.mxu0 %v1926
    %1943 = vmatprep.subr.mxu0 0.0
    %1944 = vmatpush1.msra.mxu0 %v1927
    %1945 = vmatprep.subr.mxu0 0.0
    %1946 = vmatpush1.msra.mxu0 0.0
    %1947 = vmatprep.subr.mxu0 0.0
    %1948 = vmatpush1.msra.mxu0 0.0
    %1949 = vmatprep.subr.mxu0 0.0
    %1950 = vmatpush1.msra.mxu0 0.0
    %1951 = vmatprep.subr.mxu0 0.0
    %1952 = vmatpush1.msra.mxu0 0.0
    %1953 = vmatprep.subr.mxu0 0.0
    %1954 = vmatpush1.msra.mxu0 0.0
    %1955 = vmatprep.subr.mxu0 0.0
    %1956 = vmatpush1.msra.mxu0 0.0
    %1957 = vmatprep.subr.mxu0 0.0
    %1958 = vmatpush1.msra.mxu0 0.0
    %1959 = vmatprep.subr.mxu0 0.0
    %1960 = vmatpush1.msra.mxu0 0.0
    %1961 = vmatprep.subr.mxu0 0.0
    %1962 = vmatpush1.msra.mxu0 0.0
    %1963 = vmatprep.subr.mxu0 0.0
    %1964 = vmatpush1.msra.mxu0 0.0
    %1965 = vmatprep.subr.mxu0 0.0
    %1966 = vmatpush1.msra.mxu0 0.0
    %1967 = vmatprep.subr.mxu0 0.0
    %1968 = vmatpush1.msra.mxu0 0.0
    %1969 = vmatprep.subr.mxu0 0.0
    %1970 = vmatpush1.msra.mxu0 0.0
    %1971 = vmatprep.subr.mxu0 0.0
    %1972 = vmatpush1.msra.mxu0 0.0
    %1973 = vmatprep.subr.mxu0 0.0
    %1974 = vmatpush1.msra.mxu0 0.0
    %1975 = vmatprep.subr.mxu0 0.0
    %1976 = vmatpush1.msra.mxu0 0.0
    %1977 = vmatprep.subr.mxu0 0.0
    %1978 = vmatpush1.msra.mxu0 0.0
    %1979 = vmatprep.subr.mxu0 0.0
    %1980 = vmatpush1.msra.mxu0 0.0
    %1981 = vmatprep.subr.mxu0 0.0
    %1982 = vmatpush1.msra.mxu0 0.0
    %1983 = vmatprep.subr.mxu0 0.0
    %1984 = vmatpush1.msra.mxu0 0.0
    %1985 = vmatprep.subr.mxu0 0.0
    %1986 = vmatpush1.msra.mxu0 0.0
    %1987 = vmatprep.subr.mxu0 0.0
    %1988 = vmatpush1.msra.mxu0 0.0
    %1989 = vmatprep.subr.mxu0 0.0
    %1990 = vmatpush1.msra.mxu0 0.0
    %1991 = vmatprep.subr.mxu0 0.0
    %1992 = vmatpush1.msra.mxu0 0.0
    %1993 = vmatprep.subr.mxu0 0.0
    %1994 = vmatpush1.msra.mxu0 0.0
    %1995 = vmatprep.subr.mxu0 0.0
    %1996 = vmatpush1.msra.mxu0 0.0
    %1997 = vmatprep.subr.mxu0 0.0
    %1998 = vmatpush1.msra.mxu0 0.0
    %1999 = vmatprep.subr.mxu0 0.0
    %2000 = vmatpush1.msra.mxu0 0.0
    %2001 = vmatprep.mubr.f32.mxu0 0.0
    %2002 = vmatmul.mubr.f32.gmra.mrb[0].mxu0 %v1933
    %v2003 = vpop.f32.mrb[0].mxu0
    %v2004 = vadd.f32 0.0, %v2003
    %v2005 = vpop.f32.mrb[0].mxu0
    %2006 = vmatprep.mubr.f32.mxu0 0.0
    %2007 = vmatmul.mubr.f32.gmra.mrb[0].mxu0 %v1935
    %v2008 = vpop.f32.mrb[0].mxu0
    %v2009 = vadd.f32 0.0, %v2008
    %v2010 = vpop.f32.mrb[0].mxu0
    %2011 = vdwg.mxu0
    %v2012 = vadd.f32 %v2004, %v336
    %v2013 = vadd.f32 %v2009, %v345
    %v2014 = vmax.f32 %v2012, 0.0
    %v2015 = vand.u32 2147483647, %v2012
    %v2016 = vsub.f32 0.0, %v2015
    %v2017 = vmul.f32 %v2016, 1.442695
    %v2018 = vpow.pop %v2017
    %v2019 = vadd.f32 %v2018, 1.0
    %v2020 = vlog2.pop %v2019
    %v2021 = vmul.f32 %v2020, 0.6931472
    %v2022 = vmul.f32 -0.5, %v2018
    %v2023 = vadd.f32 %v2022, 1.0
    %v2024 = vmul.f32 %v2023, %v2018
    %v2025 = vand.u32 2147483647, %v2018
    %vm2026 = vcmp.lt.f32.partialorder %v2025, 0.0004427343
    %v2027 = vsel %vm2026, %v2024, %v2021
    %v2028 = vadd.f32 %v2014, %v2027
    %v2029 = vmax.f32 %v2013, 0.0
    %v2030 = vand.u32 2147483647, %v2013
    %v2031 = vsub.f32 0.0, %v2030
    %v2032 = vmul.f32 %v2031, 1.442695
    %v2033 = vpow.pop %v2032
    %v2034 = vadd.f32 %v2033, 1.0
    %v2035 = vlog2.pop %v2034
    %v2036 = vmul.f32 %v2035, 0.6931472
    %v2037 = vmul.f32 -0.5, %v2033
    %v2038 = vadd.f32 %v2037, 1.0
    %v2039 = vmul.f32 %v2038, %v2033
    %v2040 = vand.u32 2147483647, %v2033
    %vm2041 = vcmp.lt.f32.partialorder %v2040, 0.0004427343
    %v2042 = vsel %vm2041, %v2039, %v2036
    %v2043 = vadd.f32 %v2029, %v2042
    %s2044 = scalar_lea.vmem [#allocation7], 48
    %v2045 = vld [vmem:[%s2044] sm:$0xff]
    %v2046 = vmul.f32 %v2028, %v2045
    %2048 = vrot.lane.b32.xlu0 %v2046, 32
    %v2049 = vpop.permute.xlu0 %2048
    %v2051 = vadd.f32 %v2012, %v2049
    %s2052 = scalar_lea.vmem [#allocation9], 48
    %v2053 = vld [vmem:[%s2052] sm:$0xff]
    %2055 = vrot.lane.b32.xlu0 %v2053, 64
    %v2056 = vpop.permute.xlu0 %2055
    %v2058 = vmul.f32 %v2043, %v2056
    %2060 = vrot.lane.b32.xlu0 %v2058, 32
    %v2061 = vpop.permute.xlu0 %2060
    %v2063 = vadd.f32 %v2013, %v2061
    %2065 = vrot.lane.b32.xlu0 %v2051, 96
    %v2066 = vpop.permute.xlu0 %2065
    %s2068 = scalar_lea.vmem [#allocation15], 48
    %2069 = vst.msk [vmem:[%s2068] sm:$0xff] %vm140, %v2066
    %2071 = vrot.lane.b32.xlu0 %v2063, 32
    %v2072 = vpop.permute.xlu0 %2071
    %s2074 = scalar_lea.vmem [#allocation16], 48
    %2075 = vst.msk [vmem:[%s2074] sm:$0xff] %vm140, %v2072
    %2077 = vrot.lane.b32.xlu0 %v2012, 96
    %v2078 = vpop.permute.xlu0 %2077
    %s2080 = scalar_lea.vmem [#allocation18], 48
    %2081 = vst.msk [vmem:[%s2080] sm:$0xff] %vm140, %v2078
    %s2082 = scalar_lea.vmem [#allocation19], 48
    %2083 = vst.msk [vmem:[%s2082] sm:$0xff] %vm140, %v2028
    %2085 = vrot.lane.b32.xlu0 %v2013, 32
    %v2086 = vpop.permute.xlu0 %2085
    %s2088 = scalar_lea.vmem [#allocation21], 48
    %2089 = vst.msk [vmem:[%s2088] sm:$0xff] %vm140, %v2086
    %2091 = vrot.lane.b32.xlu0 %v2043, 64
    %v2092 = vpop.permute.xlu0 %2091
    %s2094 = scalar_lea.vmem [#allocation22], 48
    %2095 = vst.msk [vmem:[%s2094] sm:$0xff] %vm140, %v2092
    %s2096 = scalar_lea.vmem [#allocation4], 56
    %v2097 = vld [vmem:[%s2096] sm:$0xff]
    %v2098 = vld [vmem:[#allocation12] sm:$0xff]
    %v2099 = vld [vmem:[#allocation12 + $0x8] sm:$0xff]
    %v2100 = vld [vmem:[#allocation12 + $0x10] sm:$0xff]
    %v2101 = vld [vmem:[#allocation12 + $0x18] sm:$0xff]
    %v2102 = vsel %vm140, %v2066, 0
    %2104 = vmatprep.subr.mxu0 0.0
    %2105 = vmatpush1.msra.mxu0 %v2098
    %2106 = vmatprep.subr.mxu0 0.0
    %2107 = vmatpush1.msra.mxu0 %v2099
    %2108 = vmatprep.subr.mxu0 0.0
    %2109 = vmatpush1.msra.mxu0 %v2100
    %2110 = vmatprep.subr.mxu0 0.0
    %2111 = vmatpush1.msra.mxu0 %v2101
    %2112 = vmatprep.subr.mxu0 0.0
    %2113 = vmatpush1.msra.mxu0 0.0
    %2114 = vmatprep.subr.mxu0 0.0
    %2115 = vmatpush1.msra.mxu0 0.0
    %2116 = vmatprep.subr.mxu0 0.0
    %2117 = vmatpush1.msra.mxu0 0.0
    %2118 = vmatprep.subr.mxu0 0.0
    %2119 = vmatpush1.msra.mxu0 0.0
    %2120 = vmatprep.subr.mxu0 0.0
    %2121 = vmatpush1.msra.mxu0 0.0
    %2122 = vmatprep.subr.mxu0 0.0
    %2123 = vmatpush1.msra.mxu0 0.0
    %2124 = vmatprep.subr.mxu0 0.0
    %2125 = vmatpush1.msra.mxu0 0.0
    %2126 = vmatprep.subr.mxu0 0.0
    %2127 = vmatpush1.msra.mxu0 0.0
    %2128 = vmatprep.subr.mxu0 0.0
    %2129 = vmatpush1.msra.mxu0 0.0
    %2130 = vmatprep.subr.mxu0 0.0
    %2131 = vmatpush1.msra.mxu0 0.0
    %2132 = vmatprep.subr.mxu0 0.0
    %2133 = vmatpush1.msra.mxu0 0.0
    %2134 = vmatprep.subr.mxu0 0.0
    %2135 = vmatpush1.msra.mxu0 0.0
    %2136 = vmatprep.subr.mxu0 0.0
    %2137 = vmatpush1.msra.mxu0 0.0
    %2138 = vmatprep.subr.mxu0 0.0
    %2139 = vmatpush1.msra.mxu0 0.0
    %2140 = vmatprep.subr.mxu0 0.0
    %2141 = vmatpush1.msra.mxu0 0.0
    %2142 = vmatprep.subr.mxu0 0.0
    %2143 = vmatpush1.msra.mxu0 0.0
    %2144 = vmatprep.subr.mxu0 0.0
    %2145 = vmatpush1.msra.mxu0 0.0
    %2146 = vmatprep.subr.mxu0 0.0
    %2147 = vmatpush1.msra.mxu0 0.0
    %2148 = vmatprep.subr.mxu0 0.0
    %2149 = vmatpush1.msra.mxu0 0.0
    %2150 = vmatprep.subr.mxu0 0.0
    %2151 = vmatpush1.msra.mxu0 0.0
    %2152 = vmatprep.subr.mxu0 0.0
    %2153 = vmatpush1.msra.mxu0 0.0
    %2154 = vmatprep.subr.mxu0 0.0
    %2155 = vmatpush1.msra.mxu0 0.0
    %2156 = vmatprep.subr.mxu0 0.0
    %2157 = vmatpush1.msra.mxu0 0.0
    %2158 = vmatprep.subr.mxu0 0.0
    %2159 = vmatpush1.msra.mxu0 0.0
    %2160 = vmatprep.subr.mxu0 0.0
    %2161 = vmatpush1.msra.mxu0 0.0
    %2162 = vmatprep.subr.mxu0 0.0
    %2163 = vmatpush1.msra.mxu0 0.0
    %2164 = vmatprep.subr.mxu0 0.0
    %2165 = vmatpush1.msra.mxu0 0.0
    %2166 = vmatprep.subr.mxu0 0.0
    %2167 = vmatpush1.msra.mxu0 0.0
    %2168 = vmatprep.mubr.f32.mxu0 0.0
    %2169 = vmatmul.mubr.f32.gmra.mrb[0].mxu0 %v2102
    %v2170 = vpop.f32.mrb[0].mxu0
    %v2171 = vadd.f32 0.0, %v2170
    %v2172 = vpop.f32.mrb[0].mxu0
    %2173 = vdwg.mxu0
    %v2174 = vadd.f32 %v2097, %v2171
    %v2175 = vmul.f32 %v2174, 0.5
    %v2176 = vtanh.pop %v2175
    %v2177 = vadd.f32 %v2176, 1.0
    %v2178 = vmul.f32 %v2177, 0.5
    %v2179 = vtanh.pop %v2174
    %2180 = vrot.lane.b32.xlu0 %v2063, 64
    %v2181 = vpop.permute.xlu0 %2180
    %v2183 = vmul.f32 %v2178, %v2181
    %2185 = vrot.lane.b32.xlu0 %v2179, 64
    %v2186 = vpop.permute.xlu0 %2185
    %v2188 = vmul.f32 %v2178, %v2186
    %2190 = vrot.lane.b32.xlu0 %v2188, 32
    %v2191 = vpop.permute.xlu0 %2190
    %v2193 = vadd.f32 %v2183, %v2191
    %v2194 = vtanh.pop %v2193
    %2196 = vrot.lane.b32.xlu0 %v2194, 64
    %v2197 = vpop.permute.xlu0 %2196
    %v2199 = vmul.f32 %v2178, %v2197
    %2201 = vrot.lane.b32.xlu0 %v2193, 64
    %v2202 = vpop.permute.xlu0 %2201
    %v2203 = vld [vmem:[#allocation13] sm:$0xff]
    %v2204 = vld [vmem:[#allocation13 + $0x8] sm:$0xff]
    %v2205 = vld [vmem:[#allocation13 + $0x10] sm:$0xff]
    %v2206 = vld [vmem:[#allocation13 + $0x18] sm:$0xff]
    %2208 = vrot.lane.b32.xlu0 %v2199, 32
    %v2209 = vpop.permute.xlu0 %2208
    %2210 = vrot.lane.b32.xlu0 %v2202, 32
    %v2211 = vpop.permute.xlu0 %2210
    %v2212 = vsel %vm140, %v2209, 0
    %v2214 = vsel %vm140, %v2211, 0
    %2216 = vmatprep.subr.mxu0 0.0
    %2217 = vmatpush1.msra.mxu0 %v2203
    %2218 = vmatprep.subr.mxu0 0.0
    %2219 = vmatpush1.msra.mxu0 %v2204
    %2220 = vmatprep.subr.mxu0 0.0
    %2221 = vmatpush1.msra.mxu0 %v2205
    %2222 = vmatprep.subr.mxu0 0.0
    %2223 = vmatpush1.msra.mxu0 %v2206
    %2224 = vmatprep.subr.mxu0 0.0
    %2225 = vmatpush1.msra.mxu0 0.0
    %2226 = vmatprep.subr.mxu0 0.0
    %2227 = vmatpush1.msra.mxu0 0.0
    %2228 = vmatprep.subr.mxu0 0.0
    %2229 = vmatpush1.msra.mxu0 0.0
    %2230 = vmatprep.subr.mxu0 0.0
    %2231 = vmatpush1.msra.mxu0 0.0
    %2232 = vmatprep.subr.mxu0 0.0
    %2233 = vmatpush1.msra.mxu0 0.0
    %2234 = vmatprep.subr.mxu0 0.0
    %2235 = vmatpush1.msra.mxu0 0.0
    %2236 = vmatprep.subr.mxu0 0.0
    %2237 = vmatpush1.msra.mxu0 0.0
    %2238 = vmatprep.subr.mxu0 0.0
    %2239 = vmatpush1.msra.mxu0 0.0
    %2240 = vmatprep.subr.mxu0 0.0
    %2241 = vmatpush1.msra.mxu0 0.0
    %2242 = vmatprep.subr.mxu0 0.0
    %2243 = vmatpush1.msra.mxu0 0.0
    %2244 = vmatprep.subr.mxu0 0.0
    %2245 = vmatpush1.msra.mxu0 0.0
    %2246 = vmatprep.subr.mxu0 0.0
    %2247 = vmatpush1.msra.mxu0 0.0
    %2248 = vmatprep.subr.mxu0 0.0
    %2249 = vmatpush1.msra.mxu0 0.0
    %2250 = vmatprep.subr.mxu0 0.0
    %2251 = vmatpush1.msra.mxu0 0.0
    %2252 = vmatprep.subr.mxu0 0.0
    %2253 = vmatpush1.msra.mxu0 0.0
    %2254 = vmatprep.subr.mxu0 0.0
    %2255 = vmatpush1.msra.mxu0 0.0
    %2256 = vmatprep.subr.mxu0 0.0
    %2257 = vmatpush1.msra.mxu0 0.0
    %2258 = vmatprep.subr.mxu0 0.0
    %2259 = vmatpush1.msra.mxu0 0.0
    %2260 = vmatprep.subr.mxu0 0.0
    %2261 = vmatpush1.msra.mxu0 0.0
    %2262 = vmatprep.subr.mxu0 0.0
    %2263 = vmatpush1.msra.mxu0 0.0
    %2264 = vmatprep.subr.mxu0 0.0
    %2265 = vmatpush1.msra.mxu0 0.0
    %2266 = vmatprep.subr.mxu0 0.0
    %2267 = vmatpush1.msra.mxu0 0.0
    %2268 = vmatprep.subr.mxu0 0.0
    %2269 = vmatpush1.msra.mxu0 0.0
    %2270 = vmatprep.subr.mxu0 0.0
    %2271 = vmatpush1.msra.mxu0 0.0
    %2272 = vmatprep.subr.mxu0 0.0
    %2273 = vmatpush1.msra.mxu0 0.0
    %2274 = vmatprep.subr.mxu0 0.0
    %2275 = vmatpush1.msra.mxu0 0.0
    %2276 = vmatprep.subr.mxu0 0.0
    %2277 = vmatpush1.msra.mxu0 0.0
    %2278 = vmatprep.subr.mxu0 0.0
    %2279 = vmatpush1.msra.mxu0 0.0
    %2280 = vmatprep.mubr.f32.mxu0 0.0
    %2281 = vmatmul.mubr.f32.gmra.mrb[0].mxu0 %v2212
    %v2282 = vpop.f32.mrb[0].mxu0
    %v2283 = vadd.f32 0.0, %v2282
    %v2284 = vpop.f32.mrb[0].mxu0
    %2285 = vmatprep.mubr.f32.mxu0 0.0
    %2286 = vmatmul.mubr.f32.gmra.mrb[0].mxu0 %v2214
    %v2287 = vpop.f32.mrb[0].mxu0
    %v2288 = vadd.f32 0.0, %v2287
    %v2289 = vpop.f32.mrb[0].mxu0
    %2290 = vdwg.mxu0
    %v2291 = vadd.f32 %v2283, %v336
    %v2292 = vadd.f32 %v2288, %v345
    %v2293 = vmax.f32 %v2291, 0.0
    %v2294 = vand.u32 2147483647, %v2291
    %v2295 = vsub.f32 0.0, %v2294
    %v2296 = vmul.f32 %v2295, 1.442695
    %v2297 = vpow.pop %v2296
    %v2298 = vadd.f32 %v2297, 1.0
    %v2299 = vlog2.pop %v2298
    %v2300 = vmul.f32 %v2299, 0.6931472
    %v2301 = vmul.f32 -0.5, %v2297
    %v2302 = vadd.f32 %v2301, 1.0
    %v2303 = vmul.f32 %v2302, %v2297
    %v2304 = vand.u32 2147483647, %v2297
    %vm2305 = vcmp.lt.f32.partialorder %v2304, 0.0004427343
    %v2306 = vsel %vm2305, %v2303, %v2300
    %v2307 = vadd.f32 %v2293, %v2306
    %v2308 = vmax.f32 %v2292, 0.0
    %v2309 = vand.u32 2147483647, %v2292
    %v2310 = vsub.f32 0.0, %v2309
    %v2311 = vmul.f32 %v2310, 1.442695
    %v2312 = vpow.pop %v2311
    %v2313 = vadd.f32 %v2312, 1.0
    %v2314 = vlog2.pop %v2313
    %v2315 = vmul.f32 %v2314, 0.6931472
    %v2316 = vmul.f32 -0.5, %v2312
    %v2317 = vadd.f32 %v2316, 1.0
    %v2318 = vmul.f32 %v2317, %v2312
    %v2319 = vand.u32 2147483647, %v2312
    %vm2320 = vcmp.lt.f32.partialorder %v2319, 0.0004427343
    %v2321 = vsel %vm2320, %v2318, %v2315
    %v2322 = vadd.f32 %v2308, %v2321
    %s2323 = scalar_lea.vmem [#allocation7], 56
    %v2324 = vld [vmem:[%s2323] sm:$0xff]
    %v2325 = vmul.f32 %v2307, %v2324
    %2327 = vrot.lane.b32.xlu0 %v2325, 32
    %v2328 = vpop.permute.xlu0 %2327
    %v2330 = vadd.f32 %v2291, %v2328
    %s2331 = scalar_lea.vmem [#allocation9], 56
    %v2332 = vld [vmem:[%s2331] sm:$0xff]
    %2334 = vrot.lane.b32.xlu0 %v2332, 64
    %v2335 = vpop.permute.xlu0 %2334
    %v2337 = vmul.f32 %v2322, %v2335
    %2339 = vrot.lane.b32.xlu0 %v2337, 32
    %v2340 = vpop.permute.xlu0 %2339
    %v2342 = vadd.f32 %v2292, %v2340
    %2344 = vrot.lane.b32.xlu0 %v2330, 96
    %v2345 = vpop.permute.xlu0 %2344
    %s2347 = scalar_lea.vmem [#allocation15], 56
    %2348 = vst.msk [vmem:[%s2347] sm:$0xff] %vm140, %v2345
    %2350 = vrot.lane.b32.xlu0 %v2342, 32
    %v2351 = vpop.permute.xlu0 %2350
    %s2353 = scalar_lea.vmem [#allocation16], 56
    %2354 = vst.msk [vmem:[%s2353] sm:$0xff] %vm140, %v2351
    %2356 = vrot.lane.b32.xlu0 %v2291, 96
    %v2357 = vpop.permute.xlu0 %2356
    %s2359 = scalar_lea.vmem [#allocation18], 56
    %2360 = vst.msk [vmem:[%s2359] sm:$0xff] %vm140, %v2357
    %s2361 = scalar_lea.vmem [#allocation19], 56
    %2362 = vst.msk [vmem:[%s2361] sm:$0xff] %vm140, %v2307
    %2364 = vrot.lane.b32.xlu0 %v2292, 32
    %v2365 = vpop.permute.xlu0 %2364
    %s2367 = scalar_lea.vmem [#allocation21], 56
    %2368 = vst.msk [vmem:[%s2367] sm:$0xff] %vm140, %v2365
    %2370 = vrot.lane.b32.xlu0 %v2322, 64
    %v2371 = vpop.permute.xlu0 %2370
    %s2373 = scalar_lea.vmem [#allocation22], 56
    %2374 = vst.msk [vmem:[%s2373] sm:$0xff] %vm140, %v2371
    %2375 = vst.msk [vmem:[#allocation2] sm:$0xff] %vm140, %v2345
    %2376 = vst.msk [vmem:[#allocation3] sm:$0xff] %vm140, %v2351
    // Predicated region
    $region66: #{tpu_custom_call.1} parent=1 // pred_check
      _
    $region67: #{tpu_custom_call.1} parent=1 // pred_check_branch
      %2378 = sbr.rel (0) target = $region69
    $region68: #{tpu_custom_call.1} parent=1 // pred_region
      %s2380 = ssub.s32 1024, 1024
      %2381 = vsyncadd [#allocation6], %s2380
      %s2382 = sshll.u32 [#allocation15], 4
      %s2383 = int_to_ptr.vmem [resolvable:$true] %s2382
      %2388 = dma.vmem_to_hbm [thread:$0]  %s2383, 1024, %s9, [#allocation6], 128, 128, 8
    $region69: #{tpu_custom_call.1} parent=1 // pred_fallthru
      _
    // Predicated region
    $region70: #{tpu_custom_call.1} parent=1 // pred_check
      _
    $region71: #{tpu_custom_call.1} parent=1 // pred_check_branch
      %2390 = sbr.rel (0) target = $region73
    $region72: #{tpu_custom_call.1} parent=1 // pred_region
      %s2392 = ssub.s32 1024, 1024
      %2393 = vsyncadd [#allocation17], %s2392
      %s2394 = sshll.u32 [#allocation16], 4
      %s2395 = int_to_ptr.vmem [resolvable:$true] %s2394
      %2400 = dma.vmem_to_hbm [thread:$0]  %s2395, 1024, %s10, [#allocation17], 128, 128, 8
    $region73: #{tpu_custom_call.1} parent=1 // pred_fallthru
      _
    // Predicated region
    $region74: #{tpu_custom_call.1} parent=1 // pred_check
      _
    $region75: #{tpu_custom_call.1} parent=1 // pred_check_branch
      %2402 = sbr.rel (0) target = $region77
    $region76: #{tpu_custom_call.1} parent=1 // pred_region
      %s2404 = ssub.s32 1024, 1024
      %2405 = vsyncadd [#allocation17], %s2404
      %s2406 = sshll.u32 [#allocation18], 4
      %s2407 = int_to_ptr.vmem [resolvable:$true] %s2406
      %2412 = dma.vmem_to_hbm [thread:$0]  %s2407, 1024, %s11, [#allocation17], 128, 128, 8
    $region77: #{tpu_custom_call.1} parent=1 // pred_fallthru
      _
    // Predicated region
    $region78: #{tpu_custom_call.1} parent=1 // pred_check
      _
    $region79: #{tpu_custom_call.1} parent=1 // pred_check_branch
      %2414 = sbr.rel (0) target = $region81
    $region80: #{tpu_custom_call.1} parent=1 // pred_region
      %s2416 = ssub.s32 1024, 1024
      %2417 = vsyncadd [#allocation20], %s2416
      %s2418 = sshll.u32 [#allocation19], 4
      %s2419 = int_to_ptr.vmem [resolvable:$true] %s2418
      %2424 = dma.vmem_to_hbm [thread:$0]  %s2419, 1024, %s12, [#allocation20], 128, 128, 8
    $region81: #{tpu_custom_call.1} parent=1 // pred_fallthru
      _
    // Predicated region
    $region82: #{tpu_custom_call.1} parent=1 // pred_check
      _
    $region83: #{tpu_custom_call.1} parent=1 // pred_check_branch
      %2426 = sbr.rel (0) target = $region85
    $region84: #{tpu_custom_call.1} parent=1 // pred_region
      %s2428 = ssub.s32 1024, 1024
      %2429 = vsyncadd [#allocation20], %s2428
      %s2430 = sshll.u32 [#allocation21], 4
      %s2431 = int_to_ptr.vmem [resolvable:$true] %s2430
      %2436 = dma.vmem_to_hbm [thread:$0]  %s2431, 1024, %s13, [#allocation20], 128, 128, 8
    $region85: #{tpu_custom_call.1} parent=1 // pred_fallthru
      _
    // Predicated region
    $region86: #{tpu_custom_call.1} parent=1 // pred_check
      _
    $region87: #{tpu_custom_call.1} parent=1 // pred_check_branch
      %2438 = sbr.rel (0) target = $region89
    $region88: #{tpu_custom_call.1} parent=1 // pred_region
      %s2440 = ssub.s32 1024, 1024
      %2441 = vsyncadd [#allocation23], %s2440
      %s2442 = sshll.u32 [#allocation22], 4
      %s2443 = int_to_ptr.vmem [resolvable:$true] %s2442
      %2448 = dma.vmem_to_hbm [thread:$0]  %s2443, 1024, %s14, [#allocation23], 128, 128, 8
    $region89: #{tpu_custom_call.1} parent=1 // pred_fallthru
      _
    // Predicated region
    $region90: #{tpu_custom_call.1} parent=1 // pred_check
      _
    $region91: #{tpu_custom_call.1} parent=1 // pred_check_branch
      %2450 = sbr.rel (0) target = $region93
    $region92: #{tpu_custom_call.1} parent=1 // pred_region
      %2451 = dma.done [#allocation6], 1024
    $region93: #{tpu_custom_call.1} parent=1 // pred_fallthru
      _
    // Predicated region
    $region94: #{tpu_custom_call.1} parent=1 // pred_check
      _
    $region95: #{tpu_custom_call.1} parent=1 // pred_check_branch
      %2453 = sbr.rel (0) target = $region97
    $region96: #{tpu_custom_call.1} parent=1 // pred_region
      %2454 = dma.done [#allocation17], 1024
    $region97: #{tpu_custom_call.1} parent=1 // pred_fallthru
      _
    // Predicated region
    $region98: #{tpu_custom_call.1} parent=1 // pred_check
      _
    $region99: #{tpu_custom_call.1} parent=1 // pred_check_branch
      %2456 = sbr.rel (0) target = $region101
    $region100: #{tpu_custom_call.1} parent=1 // pred_region
      %2457 = dma.done [#allocation17], 1024
    $region101: #{tpu_custom_call.1} parent=1 // pred_fallthru
      _
    // Predicated region
    $region102: #{tpu_custom_call.1} parent=1 // pred_check
      _
    $region103: #{tpu_custom_call.1} parent=1 // pred_check_branch
      %2459 = sbr.rel (0) target = $region105
    $region104: #{tpu_custom_call.1} parent=1 // pred_region
      %2460 = dma.done [#allocation20], 1024
    $region105: #{tpu_custom_call.1} parent=1 // pred_fallthru
      _
    // Predicated region
    $region106: #{tpu_custom_call.1} parent=1 // pred_check
      _
    $region107: #{tpu_custom_call.1} parent=1 // pred_check_branch
      %2462 = sbr.rel (0) target = $region109
    $region108: #{tpu_custom_call.1} parent=1 // pred_region
      %2463 = dma.done [#allocation20], 1024
    $region109: #{tpu_custom_call.1} parent=1 // pred_fallthru
      _
    // Predicated region
    $region110: #{tpu_custom_call.1} parent=1 // pred_check
      _
    $region111: #{tpu_custom_call.1} parent=1 // pred_check_branch
      %2465 = sbr.rel (0) target = $region113
    $region112: #{tpu_custom_call.1} parent=1 // pred_region
      %2466 = dma.done [#allocation23], 1024
    $region113: #{tpu_custom_call.1} parent=1 // pred_fallthru
      _
    %2467 = vsyncpa [#allocation5], 1
    %2468 = vsyncpa [#allocation8], 1
    %2469 = vsyncpa [#allocation11], 1
    %2470 = vsyncpa [#allocation14], 1
    %2471 = vsyncpa [#allocation6], 1
    %2472 = vsyncpa [#allocation17], 1
    %2473 = vsyncpa [#allocation20], 1
    %2474 = vsyncpa [#allocation23], 1

</llo_original>
